<compile_context>
chip_gen: v7x
topology: tpu7x:2x2x1
jax: 0.10.0
libtpu: 0.0.40
codegen_flags: <defaults>
</compile_context>

<pallas_src>
import jax
import jax.numpy as jnp
from jax.experimental import pallas as pl
from jax.experimental.pallas import tpu as pltpu


_VMEM_LIMIT = 64 * 1024 * 1024          # explicit scoped-VMEM budget (safe on all gens)


def _pick_tile(total, candidates):
    """Largest candidate that evenly divides `total` (falls back to the full dim)."""
    for c in candidates:
        if total % c == 0:
            return c
    return total


# -----------------------------------------------------------------------------
# Fused 2-layer GRU recurrence.
#
# PyTorch GRU gate order is (r, z, n):
#   r = sigmoid(Wir x + bir + Whr h + bhr)
#   z = sigmoid(Wiz x + biz + Whz h + bhz)
#   n = tanh  (Win x + bin + r * (Whn h + bhn))
#   h' = (1 - z) * n + z * h
#
# Layer 0's input-side term (x @ W_ih0 + b_ih0) is precomputed for all T
# outside the kernel (gi0).  Layer 1's input projection cannot be hoisted
# (it depends on the recurrent layer-0 output), so it runs per step on the MXU.
# -----------------------------------------------------------------------------
def _gru2_kernel(gi0_ref, whh0_ref, bhh0_ref,
                 wih1_ref, bih1_ref, whh1_ref, bhh1_ref,
                 h0_init_ref, h1_init_ref,
                 out_ref, h0_fin_ref, h1_fin_ref,
                 h0_scr, h1_scr):
    c = pl.program_id(0)
    n_chunks = pl.num_programs(0)
    t_chunk = gi0_ref.shape[0]
    H = h0_scr.shape[-1]

    @pl.when(c == 0)
    def _():
        h0_scr[...] = h0_init_ref[...].astype(jnp.float32)
        h1_scr[...] = h1_init_ref[...].astype(jnp.float32)

    def cell(gi, h, whh_ref, bhh_ref):
        # gi already contains the input-side bias; gh carries b_hh (so b_hn
        # correctly sits inside the r * (...) term, like PyTorch).
        gh = (jnp.dot(h.astype(whh_ref.dtype), whh_ref[...],
                      preferred_element_type=jnp.float32) + bhh_ref[...])
        r = jax.nn.sigmoid(gi[:, 0:H] + gh[:, 0:H])
        z = jax.nn.sigmoid(gi[:, H:2 * H] + gh[:, H:2 * H])
        n = jnp.tanh(gi[:, 2 * H:3 * H] + r * gh[:, 2 * H:3 * H])
        return (1.0 - z) * n + z * h

    def step(t, carry):
        h0, h1 = carry
        gi0_t = gi0_ref[t].astype(jnp.float32)                # (B, 3H), precomputed
        h0 = cell(gi0_t, h0, whh0_ref, bhh0_ref)
        # layer-1 input projection (inherently sequential: needs h0 at step t)
        gi1 = (jnp.dot(h0.astype(wih1_ref.dtype), wih1_ref[...],
                       preferred_element_type=jnp.float32) + bih1_ref[...])
        h1 = cell(gi1, h1, whh1_ref, bhh1_ref)
        # eval mode: inter-layer dropout(0.3) is identity.
        out_ref[t] = h1.astype(out_ref.dtype)                 # lane-dense (H % 128 == 0)
        return (h0, h1)

    # Hidden states are carried in vregs across the unrolled chunk; the VMEM
    # scratch only persists them across grid steps.
    h0, h1 = jax.lax.fori_loop(0, t_chunk, step,
                               (h0_scr[...], h1_scr[...]), unroll=True)
    h0_scr[...] = h0
    h1_scr[...] = h1

    @pl.when(c == n_chunks - 1)
    def _():
        h0_fin_ref[...] = h0.astype(h0_fin_ref.dtype)
        h1_fin_ref[...] = h1.astype(h1_fin_ref.dtype)


def fused_gru_2layer(gi0_tm, whh0, bhh0, wih1, bih1, whh1, bhh1,
                     h0_init, h1_init, *, t_chunk):
    """gi0_tm: (T, B, 3H) time-major precomputed layer-0 input gates.
    Returns (out (T, B, H) time-major, h0_final (B, H), h1_final (B, H))."""
    T, B, G = gi0_tm.shape
    H = G // 3
    assert T % t_chunk == 0
    n_chunks = T // t_chunk

    def inv(shape):       # grid-invariant block (weights, biases, initial hidden)
        return pl.BlockSpec(shape, lambda c: (0, 0))

    grid_spec = pltpu.PrefetchScalarGridSpec(
        num_scalar_prefetch=0,
        grid=(n_chunks,),
        in_specs=[
            pl.BlockSpec((t_chunk, B, 3 * H), lambda c: (c, 0, 0)),   # gi0 chunk
            inv((H, 3 * H)),      # W_hh layer 0
            inv((1, 3 * H)),      # b_hh layer 0
            inv((H, 3 * H)),      # W_ih layer 1
            inv((1, 3 * H)),      # b_ih layer 1
            inv((H, 3 * H)),      # W_hh layer 1
            inv((1, 3 * H)),      # b_hh layer 1
            inv((B, H)),          # h0 init (layer 0)
            inv((B, H)),          # h1 init (layer 1)
        ],
        out_specs=[
            pl.BlockSpec((t_chunk, B, H), lambda c: (c, 0, 0)),       # per-step layer-1 out
            inv((B, H)),                                              # final h, layer 0
            inv((B, H)),                                              # final h, layer 1
        ],
        scratch_shapes=[pltpu.VMEM((B, H), jnp.float32),
                        pltpu.VMEM((B, H), jnp.float32)],
    )

    cost = pl.CostEstimate(
        flops=int(T * (18 * B * H * H + 40 * B * H)),
        transcendentals=int(6 * T * B * H),
        bytes_accessed=int(4 * (T * B * 4 * H + 9 * H * H + 8 * B * H)),
    )

    return pl.pallas_call(
        _gru2_kernel,
        out_shape=(jax.ShapeDtypeStruct((T, B, H), jnp.float32),
                   jax.ShapeDtypeStruct((B, H), jnp.float32),
                   jax.ShapeDtypeStruct((B, H), jnp.float32)),
        grid_spec=grid_spec,
        compiler_params=pltpu.CompilerParams(
            # The time axis is a true recurrence and the final-hidden outputs are
            # last-write-wins: this axis must stay "arbitrary", never "parallel".
            dimension_semantics=("arbitrary",),
            vmem_limit_bytes=_VMEM_LIMIT),
        cost_estimate=cost,
    )(gi0_tm, whh0, bhh0, wih1, bih1, whh1, bhh1, h0_init, h1_init)


# -----------------------------------------------------------------------------
# Head: LayerNorm(H) -> ReLU -> Linear(H -> V), grid-tiled over (rows, vocab).
# Rows are order-independent, so it consumes the time-major GRU output directly.
# -----------------------------------------------------------------------------
def _head_kernel(h_ref, gamma_ref, beta_ref, wfc_ref, bfc_ref, out_ref):
    h = h_ref[...].astype(jnp.float32)                               # (tn, H)
    mean = jnp.mean(h, axis=-1, keepdims=True)
    var = jnp.mean(jnp.square(h - mean), axis=-1, keepdims=True)     # biased, like nn.LayerNorm
    hn = (h - mean) * jax.lax.rsqrt(var + 1e-5)
    hn = hn * gamma_ref[...] + beta_ref[...]
    act = jnp.maximum(hn, 0.0)                                       # ReLU
    out_ref[...] = (jnp.dot(act.astype(wfc_ref.dtype), wfc_ref[...],
                            preferred_element_type=jnp.float32)
                    + bfc_ref[...]).astype(out_ref.dtype)


def head(h2d, gamma, beta, wfc, bfc):
    N, H = h2d.shape
    V = wfc.shape[1]
    tn = _pick_tile(N, (256, 128, 64, 32, 16, 8))
    tv = _pick_tile(V, (512, 256, 128))          # lane-dense vocab tiles
    n_vt = V // tv

    grid_spec = pltpu.PrefetchScalarGridSpec(
        num_scalar_prefetch=0,
        grid=(N // tn, n_vt),
        in_specs=[
            pl.BlockSpec((tn, H), lambda i, j: (i, 0)),
            pl.BlockSpec((1, H), lambda i, j: (0, 0)),
            pl.BlockSpec((1, H), lambda i, j: (0, 0)),
            pl.BlockSpec((H, tv), lambda i, j: (0, j)),
            pl.BlockSpec((1, tv), lambda i, j: (0, j)),
        ],
        out_specs=pl.BlockSpec((tn, tv), lambda i, j: (i, j)),
    )
    cost = pl.CostEstimate(
        flops=int(2 * N * H * V + 10 * N * H * n_vt),
        transcendentals=int(N * n_vt),
        bytes_accessed=int(4 * (N * H * n_vt + H * V + N * V + V + 2 * H)),
    )
    return pl.pallas_call(
        _head_kernel,
        out_shape=jax.ShapeDtypeStruct((N, V), jnp.float32),
        grid_spec=grid_spec,
        compiler_params=pltpu.CompilerParams(
            dimension_semantics=("parallel", "parallel"),   # megacore-shardable
            vmem_limit_bytes=_VMEM_LIMIT),
        cost_estimate=cost,
    )(h2d, gamma, beta, wfc, bfc)


# -----------------------------------------------------------------------------
# Full forward pass (eval mode; Dropout layers are identity).
# -----------------------------------------------------------------------------
def rnn_net_text_generation_forward(params, x_ids, hidden=None,
                                    matmul_dtype=jnp.float32):
    """matmul_dtype=jnp.bfloat16 halves weight VMEM/HBM traffic and hits the
    bf16 MXU path on v6e/v7x; default f32 matches PyTorch numerics exactly."""
    B, T = x_ids.shape
    gru0, gru1 = params["gru"]
    H = gru0["whh"].shape[0]
    E = params["embedding"].shape[1]
    V = params["fc_w"].shape[1]

    if hidden is None:
        h0_init = jnp.zeros((B, H), jnp.float32)
        h1_init = jnp.zeros((B, H), jnp.float32)
    else:
        h0_init = hidden[0].astype(jnp.float32)
        h1_init = hidden[1].astype(jnp.float32)

    # Embedding gather directly in time-major order (transpose the tiny int ids,
    # never the float activations).
    # TODO(synk): the data-dependent row gather stays in plain XLA; a Pallas
    # DMA-gather kernel adds nothing at these sizes.
    emb_tm = jnp.take(params["embedding"], x_ids.T, axis=0)          # (T, B, E)

    # Hoisted layer-0 input projection: one (T*B, E) @ (E, 3H) matmul instead of
    # T tiny per-step matmuls inside the recurrence.
    gi0 = (jnp.dot(emb_tm.reshape(T * B, E).astype(matmul_dtype),
                   gru0["wih"].astype(matmul_dtype),
                   precision=jax.lax.Precision.HIGHEST,
                   preferred_element_type=jnp.float32).reshape(T, B, 3 * H)
           + gru0["bih"])

    t_chunk = _pick_tile(T, (16, 8, 4, 2, 1))
    out_tm, h0_fin, h1_fin = fused_gru_2layer(
        gi0,
        gru0["whh"].astype(matmul_dtype), gru0["bhh"],
        gru1["wih"].astype(matmul_dtype), gru1["bih"],
        gru1["whh"].astype(matmul_dtype), gru1["bhh"],
        h0_init, h1_init, t_chunk=t_chunk)

    # eval mode: self.dropout(output) is identity.
    # LayerNorm/ReLU/Linear are row-wise, so time-major rows feed the head
    # directly (no activation transpose); only the final logits are transposed.
    h2d = out_tm.reshape(T * B, H)
    logits_flat = head(h2d, params["ln_gamma"], params["ln_beta"],
                       params["fc_w"].astype(matmul_dtype), params["fc_b"])
    logits = jnp.transpose(logits_flat.reshape(T, B, V), (1, 0, 2))   # (B, T, V)
    hidden_out = jnp.stack([h0_fin, h1_fin], axis=0)                  # (2, B, H)
    return logits, hidden_out


# -----------------------------------------------------------------------------
# Deterministic parameter initialization (shapes from the module __init__).
# GRU weights are stored pre-transposed: W_ih (in, 3H), W_hh (H, 3H); the column
# gate order (r, z, n) matches torch.nn.GRU's weight_ih_l{k}/weight_hh_l{k}.T.
# -----------------------------------------------------------------------------
def init_params(key, vocab_size, embedding_dim, hidden_dim, num_layers=2):
    ks = iter(jax.random.split(key, 4 + 4 * num_layers + 2))

    def u(k, shape, scale=0.1):
        return jax.random.uniform(k, shape, jnp.float32, -scale, scale)

    params = {
        "embedding": jax.random.normal(next(ks), (vocab_size, embedding_dim),
                                       jnp.float32) * 0.1,
        "ln_gamma": jnp.ones((1, hidden_dim), jnp.float32),
        "ln_beta": jnp.zeros((1, hidden_dim), jnp.float32),
        "fc_w": u(next(ks), (hidden_dim, vocab_size)),   # Linear weight^T
        "fc_b": u(next(ks), (1, vocab_size)),
        "gru": [],
    }
    for layer in range(num_layers):
        in_dim = embedding_dim if layer == 0 else hidden_dim
        params["gru"].append({
            "wih": u(next(ks), (in_dim, 3 * hidden_dim)),
            "whh": u(next(ks), (hidden_dim, 3 * hidden_dim)),
            "bih": u(next(ks), (1, 3 * hidden_dim)),
            "bhh": u(next(ks), (1, 3 * hidden_dim)),
        })
    return params


# -----------------------------------------------------------------------------
# Pure-JAX reference (PyTorch eval-mode semantics) for a correctness check.
# -----------------------------------------------------------------------------
def _reference_forward(params, x_ids, hidden=None):
    hp = jax.lax.Precision.HIGHEST
    B, T = x_ids.shape
    H = params["gru"][0]["whh"].shape[0]
    emb = jnp.take(params["embedding"], x_ids, axis=0)               # (B, T, E)
    if hidden is None:
        hidden = jnp.zeros((len(params["gru"]), B, H), jnp.float32)

    def run_layer(x_bt, h0, lp):
        def cell(h, x_t):
            gi = jnp.dot(x_t, lp["wih"], precision=hp) + lp["bih"]
            gh = jnp.dot(h, lp["whh"], precision=hp) + lp["bhh"]
            r = jax.nn.sigmoid(gi[:, :H] + gh[:, :H])
            z = jax.nn.sigmoid(gi[:, H:2 * H] + gh[:, H:2 * H])
            n = jnp.tanh(gi[:, 2 * H:] + r * gh[:, 2 * H:])
            h_new = (1.0 - z) * n + z * h
            return h_new, h_new
        hT, out_tm = jax.lax.scan(cell, h0, jnp.transpose(x_bt, (1, 0, 2)))
        return jnp.transpose(out_tm, (1, 0, 2)), hT

    layer_in, finals = emb, []
    for li, lp in enumerate(params["gru"]):
        layer_in, hT = run_layer(layer_in, hidden[li], lp)
        finals.append(hT)

    out = layer_in                                                   # (B, T, H)
    mean = out.mean(-1, keepdims=True)
    var = ((out - mean) ** 2).mean(-1, keepdims=True)
    hn = (out - mean) * jax.lax.rsqrt(var + 1e-5)
    hn = hn * params["ln_gamma"] + params["ln_beta"]
    act = jnp.maximum(hn, 0.0)
    logits = jnp.einsum("bth,hv->btv", act, params["fc_w"], precision=hp) + params["fc_b"]
    return logits, jnp.stack(finals, axis=0)


if __name__ == "__main__":
    # HID is a multiple of 128 so gate slices are lane-aligned and all per-step
    # stores are lane-dense; VOCAB is a multiple of 128 for the head tiles.
    VOCAB, EMB, HID = 256, 32, 128
    B, T = 2, 24            # T=24 -> 3 chunks of 8: exercises the chunked recurrence carry

    key = jax.random.PRNGKey(0)
    k_param, k_ids = jax.random.split(key)
    params = init_params(k_param, VOCAB, EMB, HID)
    x_ids = jax.random.randint(k_ids, (B, T), 0, VOCAB, dtype=jnp.int32)

    fwd = jax.jit(lambda p, x: rnn_net_text_generation_forward(p, x))
    logits, hidden = fwd(params, x_ids)
    jax.block_until_ready((logits, hidden))

    assert logits.shape == (B, T, VOCAB), logits.shape
    assert hidden.shape == (2, B, HID), hidden.shape

    logits_ref, hidden_ref = _reference_forward(params, x_ids)
    err_l = float(jnp.max(jnp.abs(logits - logits_ref)))
    err_h = float(jnp.max(jnp.abs(hidden - hidden_ref)))
    assert err_l < 1e-2 and err_h < 1e-2, (err_l, err_h)

    print("KERNEL_OK")
</pallas_src>

<mosaic_0001>
module attributes {stable_mosaic.version = 11 : i64} {
  func.func @_head_kernel(%arg0: i32, %arg1: i32, %arg2: memref<16x128xf32, #tpu.memory_space<vmem>>, %arg3: memref<1x128xf32, #tpu.memory_space<vmem>>, %arg4: memref<1x128xf32, #tpu.memory_space<vmem>>, %arg5: memref<128x256xf32, #tpu.memory_space<vmem>>, %arg6: memref<1x256xf32, #tpu.memory_space<vmem>>, %arg7: memref<16x256xf32, #tpu.memory_space<vmem>>) attributes {dimension_semantics = [#tpu.dimension_semantics<parallel>, #tpu.dimension_semantics<parallel>], iteration_bounds = array<i64: 3, 1>, scalar_prefetch = 0 : i64, scratch_operands = 0 : i64, tpu.core_type = #tpu.core_type<tc>, window_params = [{transform_indices = @transform_0, window_bounds = array<i64: 16, 128>}, {pipeline_mode = #tpu.pipeline_mode<synchronous>, transform_indices = @transform_1, window_bounds = array<i64: 1, 128>}, {pipeline_mode = #tpu.pipeline_mode<synchronous>, transform_indices = @transform_2, window_bounds = array<i64: 1, 128>}, {transform_indices = @transform_3, window_bounds = array<i64: 128, 256>}, {transform_indices = @transform_4, window_bounds = array<i64: 1, 256>}, {transform_indices = @transform_5, window_bounds = array<i64: 16, 256>}]} {
    %c0 = arith.constant 0 : index
    %c0_0 = arith.constant 0 : index
    %0 = vector.load %arg2[%c0, %c0_0] : memref<16x128xf32, #tpu.memory_space<vmem>>, vector<16x128xf32>
    %cst = arith.constant dense<0.000000e+00> : vector<16xf32>
    %1 = vector.multi_reduction <add>, %0, %cst [1] : vector<16x128xf32> to vector<16xf32>
    %2 = vector.shape_cast %1 : vector<16xf32> to vector<16x1xf32>
    %cst_1 = arith.constant 1.280000e+02 : f32
    %3 = vector.broadcast %cst_1 : f32 to vector<16x1xf32>
    %4 = arith.divf %2, %3 : vector<16x1xf32>
    %5 = vector.broadcast %4 : vector<16x1xf32> to vector<16x128xf32>
    %6 = arith.subf %0, %5 : vector<16x128xf32>
    %7 = arith.mulf %6, %6 : vector<16x128xf32>
    %cst_2 = arith.constant dense<0.000000e+00> : vector<16xf32>
    %8 = vector.multi_reduction <add>, %7, %cst_2 [1] : vector<16x128xf32> to vector<16xf32>
    %9 = vector.shape_cast %8 : vector<16xf32> to vector<16x1xf32>
    %cst_3 = arith.constant 1.280000e+02 : f32
    %10 = vector.broadcast %cst_3 : f32 to vector<16x1xf32>
    %11 = arith.divf %9, %10 : vector<16x1xf32>
    %12 = vector.broadcast %4 : vector<16x1xf32> to vector<16x128xf32>
    %13 = arith.subf %0, %12 : vector<16x128xf32>
    %cst_4 = arith.constant 9.99999974E-6 : f32
    %14 = vector.broadcast %cst_4 : f32 to vector<16x1xf32>
    %15 = arith.addf %11, %14 : vector<16x1xf32>
    %16 = math.rsqrt %15 : vector<16x1xf32>
    %17 = vector.broadcast %16 : vector<16x1xf32> to vector<16x128xf32>
    %18 = arith.mulf %13, %17 : vector<16x128xf32>
    %c0_5 = arith.constant 0 : index
    %c0_6 = arith.constant 0 : index
    %19 = vector.load %arg3[%c0_5, %c0_6] : memref<1x128xf32, #tpu.memory_space<vmem>>, vector<1x128xf32>
    %20 = vector.broadcast %19 : vector<1x128xf32> to vector<16x128xf32>
    %21 = arith.mulf %18, %20 : vector<16x128xf32>
    %c0_7 = arith.constant 0 : index
    %c0_8 = arith.constant 0 : index
    %22 = vector.load %arg4[%c0_7, %c0_8] : memref<1x128xf32, #tpu.memory_space<vmem>>, vector<1x128xf32>
    %23 = vector.broadcast %22 : vector<1x128xf32> to vector<16x128xf32>
    %24 = arith.addf %21, %23 : vector<16x128xf32>
    %cst_9 = arith.constant 0.000000e+00 : f32
    %25 = vector.broadcast %cst_9 : f32 to vector<16x128xf32>
    %26 = arith.maximumf %24, %25 : vector<16x128xf32>
    %c0_10 = arith.constant 0 : index
    %c0_11 = arith.constant 0 : index
    %27 = vector.load %arg5[%c0_10, %c0_11] : memref<128x256xf32, #tpu.memory_space<vmem>>, vector<128x256xf32>
    %cst_12 = arith.constant dense<0.000000e+00> : vector<16x256xf32>
    %28 = tpu.matmul %26, %27, %cst_12 {dimension_numbers = #tpu.dot_dimension_numbers<[1], [0], [0], [1], [0, 0, 1, 1], [], []>} : vector<16x128xf32>, vector<128x256xf32>, vector<16x256xf32> -> vector<16x256xf32>
    %c0_13 = arith.constant 0 : index
    %c0_14 = arith.constant 0 : index
    %29 = vector.load %arg6[%c0_13, %c0_14] : memref<1x256xf32, #tpu.memory_space<vmem>>, vector<1x256xf32>
    %30 = vector.broadcast %29 : vector<1x256xf32> to vector<16x256xf32>
    %31 = arith.addf %28, %30 : vector<16x256xf32>
    %c0_15 = arith.constant 0 : index
    %c0_16 = arith.constant 0 : index
    %32 = vector.load %arg7[%c0_15, %c0_16] : memref<16x256xf32, #tpu.memory_space<vmem>>, vector<16x256xf32>
    tpu.vector_store %arg7[%c0_15, %c0_16], %31 {strides = array<i32>} : memref<16x256xf32, #tpu.memory_space<vmem>>, vector<16x256xf32>,
    return
  }
  func.func @transform_0(%arg0: i32, %arg1: i32) -> (i32, i32) {
    %c0_i32 = arith.constant 0 : i32
    %c0_i32_0 = arith.constant 0 : i32
    return %arg0, %c0_i32 : i32, i32
  }
  func.func @transform_1(%arg0: i32, %arg1: i32) -> (i32, i32) {
    %c0_i32 = arith.constant 0 : i32
    %c0_i32_0 = arith.constant 0 : i32
    %c0_i32_1 = arith.constant 0 : i32
    return %c0_i32, %c0_i32_0 : i32, i32
  }
  func.func @transform_2(%arg0: i32, %arg1: i32) -> (i32, i32) {
    %c0_i32 = arith.constant 0 : i32
    %c0_i32_0 = arith.constant 0 : i32
    %c0_i32_1 = arith.constant 0 : i32
    return %c0_i32, %c0_i32_0 : i32, i32
  }
  func.func @transform_3(%arg0: i32, %arg1: i32) -> (i32, i32) {
    %c0_i32 = arith.constant 0 : i32
    %c0_i32_0 = arith.constant 0 : i32
    return %c0_i32, %arg1 : i32, i32
  }
  func.func @transform_4(%arg0: i32, %arg1: i32) -> (i32, i32) {
    %c0_i32 = arith.constant 0 : i32
    %c0_i32_0 = arith.constant 0 : i32
    return %c0_i32, %arg1 : i32, i32
  }
  func.func @transform_5(%arg0: i32, %arg1: i32) -> (i32, i32) {
    %c0_i32 = arith.constant 0 : i32
    return %arg0, %arg1 : i32, i32
  }
}

module attributes {stable_mosaic.version = 11 : i64} {
  func.func @_gru2_kernel(%arg0: i32, %arg1: memref<8x2x384xf32, #tpu.memory_space<vmem>>, %arg2: memref<128x384xf32, #tpu.memory_space<vmem>>, %arg3: memref<1x384xf32, #tpu.memory_space<vmem>>, %arg4: memref<128x384xf32, #tpu.memory_space<vmem>>, %arg5: memref<1x384xf32, #tpu.memory_space<vmem>>, %arg6: memref<128x384xf32, #tpu.memory_space<vmem>>, %arg7: memref<1x384xf32, #tpu.memory_space<vmem>>, %arg8: memref<2x128xf32, #tpu.memory_space<vmem>>, %arg9: memref<2x128xf32, #tpu.memory_space<vmem>>, %arg10: memref<8x2x128xf32, #tpu.memory_space<vmem>>, %arg11: memref<2x128xf32, #tpu.memory_space<vmem>>, %arg12: memref<2x128xf32, #tpu.memory_space<vmem>>, %arg13: memref<2x128xf32, #tpu.memory_space<vmem>>, %arg14: memref<2x128xf32, #tpu.memory_space<vmem>>) attributes {dimension_semantics = [#tpu.dimension_semantics<arbitrary>], iteration_bounds = array<i64: 3>, scalar_prefetch = 0 : i64, scratch_operands = 2 : i64, tpu.core_type = #tpu.core_type<tc>, window_params = [{transform_indices = @transform_0, window_bounds = array<i64: 8, 2, 384>}, {pipeline_mode = #tpu.pipeline_mode<synchronous>, transform_indices = @transform_1, window_bounds = array<i64: 128, 384>}, {pipeline_mode = #tpu.pipeline_mode<synchronous>, transform_indices = @transform_2, window_bounds = array<i64: 1, 384>}, {pipeline_mode = #tpu.pipeline_mode<synchronous>, transform_indices = @transform_3, window_bounds = array<i64: 128, 384>}, {pipeline_mode = #tpu.pipeline_mode<synchronous>, transform_indices = @transform_4, window_bounds = array<i64: 1, 384>}, {pipeline_mode = #tpu.pipeline_mode<synchronous>, transform_indices = @transform_5, window_bounds = array<i64: 128, 384>}, {pipeline_mode = #tpu.pipeline_mode<synchronous>, transform_indices = @transform_6, window_bounds = array<i64: 1, 384>}, {pipeline_mode = #tpu.pipeline_mode<synchronous>, transform_indices = @transform_7, window_bounds = array<i64: 2, 128>}, {pipeline_mode = #tpu.pipeline_mode<synchronous>, transform_indices = @transform_8, window_bounds = array<i64: 2, 128>}, {transform_indices = @transform_9, window_bounds = array<i64: 8, 2, 128>}, {pipeline_mode = #tpu.pipeline_mode<synchronous>, transform_indices = @transform_10, window_bounds = array<i64: 2, 128>}, {pipeline_mode = #tpu.pipeline_mode<synchronous>, transform_indices = @transform_11, window_bounds = array<i64: 2, 128>}]} {
    %c0_i32 = arith.constant 0 : i32
    %0 = arith.cmpi eq, %arg0, %c0_i32 : i32
    %1 = arith.extui %0 : i1 to i32
    %c0_i32_0 = arith.constant 0 : i32
    %2 = arith.cmpi ne, %1, %c0_i32_0 : i32
    scf.if %2 {
      %c0_210 = arith.constant 0 : index
      %c0_211 = arith.constant 0 : index
      %602 = vector.load %arg8[%c0_210, %c0_211] : memref<2x128xf32, #tpu.memory_space<vmem>>, vector<2x128xf32>
      %c0_212 = arith.constant 0 : index
      %c0_213 = arith.constant 0 : index
      %603 = vector.load %arg13[%c0_212, %c0_213] : memref<2x128xf32, #tpu.memory_space<vmem>>, vector<2x128xf32>
      tpu.vector_store %arg13[%c0_212, %c0_213], %602 {strides = array<i32>} : memref<2x128xf32, #tpu.memory_space<vmem>>, vector<2x128xf32>,
      %c0_214 = arith.constant 0 : index
      %c0_215 = arith.constant 0 : index
      %604 = vector.load %arg9[%c0_214, %c0_215] : memref<2x128xf32, #tpu.memory_space<vmem>>, vector<2x128xf32>
      %c0_216 = arith.constant 0 : index
      %c0_217 = arith.constant 0 : index
      %605 = vector.load %arg14[%c0_216, %c0_217] : memref<2x128xf32, #tpu.memory_space<vmem>>, vector<2x128xf32>
      tpu.vector_store %arg14[%c0_216, %c0_217], %604 {strides = array<i32>} : memref<2x128xf32, #tpu.memory_space<vmem>>, vector<2x128xf32>,
    } else {
    }
    %c0 = arith.constant 0 : index
    %c0_1 = arith.constant 0 : index
    %3 = vector.load %arg13[%c0, %c0_1] : memref<2x128xf32, #tpu.memory_space<vmem>>, vector<2x128xf32>
    %c0_2 = arith.constant 0 : index
    %c0_3 = arith.constant 0 : index
    %4 = vector.load %arg14[%c0_2, %c0_3] : memref<2x128xf32, #tpu.memory_space<vmem>>, vector<2x128xf32>
    %c0_i32_4 = arith.constant 0 : i32
    %5 = arith.index_cast %c0_i32_4 : i32 to index
    %c0_5 = arith.constant 0 : index
    %c0_6 = arith.constant 0 : index
    %6 = vector.load %arg1[%5, %c0_5, %c0_6] : memref<8x2x384xf32, #tpu.memory_space<vmem>>, vector<1x2x384xf32>
    %7 = vector.shape_cast %6 : vector<1x2x384xf32> to vector<2x384xf32>
    %c0_7 = arith.constant 0 : index
    %c0_8 = arith.constant 0 : index
    %8 = vector.load %arg2[%c0_7, %c0_8] : memref<128x384xf32, #tpu.memory_space<vmem>>, vector<128x384xf32>
    %cst = arith.constant dense<0.000000e+00> : vector<2x384xf32>
    %9 = tpu.matmul %3, %8, %cst {dimension_numbers = #tpu.dot_dimension_numbers<[1], [0], [0], [1], [0, 0, 1, 1], [], []>} : vector<2x128xf32>, vector<128x384xf32>, vector<2x384xf32> -> vector<2x384xf32>
    %c0_9 = arith.constant 0 : index
    %c0_10 = arith.constant 0 : index
    %10 = vector.load %arg3[%c0_9, %c0_10] : memref<1x384xf32, #tpu.memory_space<vmem>>, vector<1x384xf32>
    %11 = vector.broadcast %10 : vector<1x384xf32> to vector<2x384xf32>
    %12 = arith.addf %9, %11 : vector<2x384xf32>
    %13 = vector.extract_strided_slice %7 {offsets = [0, 0], sizes = [2, 128], strides = [1, 1]} : vector<2x384xf32> to vector<2x128xf32>
    %14 = vector.extract_strided_slice %12 {offsets = [0, 0], sizes = [2, 128], strides = [1, 1]} : vector<2x384xf32> to vector<2x128xf32>
    %15 = arith.addf %13, %14 : vector<2x128xf32>
    %16 = arith.negf %15 : vector<2x128xf32>
    %17 = math.exp %16 : vector<2x128xf32>
    %cst_11 = arith.constant 1.000000e+00 : f32
    %18 = vector.broadcast %cst_11 : f32 to vector<2x128xf32>
    %19 = arith.addf %18, %17 : vector<2x128xf32>
    %20 = arith.divf %18, %19 : vector<2x128xf32>
    %21 = vector.extract_strided_slice %7 {offsets = [0, 128], sizes = [2, 128], strides = [1, 1]} : vector<2x384xf32> to vector<2x128xf32>
    %22 = vector.extract_strided_slice %12 {offsets = [0, 128], sizes = [2, 128], strides = [1, 1]} : vector<2x384xf32> to vector<2x128xf32>
    %23 = arith.addf %21, %22 : vector<2x128xf32>
    %24 = arith.negf %23 : vector<2x128xf32>
    %25 = math.exp %24 : vector<2x128xf32>
    %cst_12 = arith.constant 1.000000e+00 : f32
    %26 = vector.broadcast %cst_12 : f32 to vector<2x128xf32>
    %27 = arith.addf %26, %25 : vector<2x128xf32>
    %28 = arith.divf %26, %27 : vector<2x128xf32>
    %29 = vector.extract_strided_slice %7 {offsets = [0, 256], sizes = [2, 128], strides = [1, 1]} : vector<2x384xf32> to vector<2x128xf32>
    %30 = vector.extract_strided_slice %12 {offsets = [0, 256], sizes = [2, 128], strides = [1, 1]} : vector<2x384xf32> to vector<2x128xf32>
    %31 = arith.mulf %20, %30 : vector<2x128xf32>
    %32 = arith.addf %29, %31 : vector<2x128xf32>
    %33 = math.tanh %32 : vector<2x128xf32>
    %cst_13 = arith.constant 1.000000e+00 : f32
    %34 = vector.broadcast %cst_13 : f32 to vector<2x128xf32>
    %35 = arith.subf %34, %28 : vector<2x128xf32>
    %36 = arith.mulf %35, %33 : vector<2x128xf32>
    %37 = arith.mulf %28, %3 : vector<2x128xf32>
    %38 = arith.addf %36, %37 : vector<2x128xf32>
    %c0_14 = arith.constant 0 : index
    %c0_15 = arith.constant 0 : index
    %39 = vector.load %arg4[%c0_14, %c0_15] : memref<128x384xf32, #tpu.memory_space<vmem>>, vector<128x384xf32>
    %cst_16 = arith.constant dense<0.000000e+00> : vector<2x384xf32>
    %40 = tpu.matmul %38, %39, %cst_16 {dimension_numbers = #tpu.dot_dimension_numbers<[1], [0], [0], [1], [0, 0, 1, 1], [], []>} : vector<2x128xf32>, vector<128x384xf32>, vector<2x384xf32> -> vector<2x384xf32>
    %c0_17 = arith.constant 0 : index
    %c0_18 = arith.constant 0 : index
    %41 = vector.load %arg5[%c0_17, %c0_18] : memref<1x384xf32, #tpu.memory_space<vmem>>, vector<1x384xf32>
    %42 = vector.broadcast %41 : vector<1x384xf32> to vector<2x384xf32>
    %43 = arith.addf %40, %42 : vector<2x384xf32>
    %c0_19 = arith.constant 0 : index
    %c0_20 = arith.constant 0 : index
    %44 = vector.load %arg6[%c0_19, %c0_20] : memref<128x384xf32, #tpu.memory_space<vmem>>, vector<128x384xf32>
    %cst_21 = arith.constant dense<0.000000e+00> : vector<2x384xf32>
    %45 = tpu.matmul %4, %44, %cst_21 {dimension_numbers = #tpu.dot_dimension_numbers<[1], [0], [0], [1], [0, 0, 1, 1], [], []>} : vector<2x128xf32>, vector<128x384xf32>, vector<2x384xf32> -> vector<2x384xf32>
    %c0_22 = arith.constant 0 : index
    %c0_23 = arith.constant 0 : index
    %46 = vector.load %arg7[%c0_22, %c0_23] : memref<1x384xf32, #tpu.memory_space<vmem>>, vector<1x384xf32>
    %47 = vector.broadcast %46 : vector<1x384xf32> to vector<2x384xf32>
    %48 = arith.addf %45, %47 : vector<2x384xf32>
    %49 = vector.extract_strided_slice %43 {offsets = [0, 0], sizes = [2, 128], strides = [1, 1]} : vector<2x384xf32> to vector<2x128xf32>
    %50 = vector.extract_strided_slice %48 {offsets = [0, 0], sizes = [2, 128], strides = [1, 1]} : vector<2x384xf32> to vector<2x128xf32>
    %51 = arith.addf %49, %50 : vector<2x128xf32>
    %52 = arith.negf %51 : vector<2x128xf32>
    %53 = math.exp %52 : vector<2x128xf32>
    %cst_24 = arith.constant 1.000000e+00 : f32
    %54 = vector.broadcast %cst_24 : f32 to vector<2x128xf32>
    %55 = arith.addf %54, %53 : vector<2x128xf32>
    %56 = arith.divf %54, %55 : vector<2x128xf32>
    %57 = vector.extract_strided_slice %43 {offsets = [0, 128], sizes = [2, 128], strides = [1, 1]} : vector<2x384xf32> to vector<2x128xf32>
    %58 = vector.extract_strided_slice %48 {offsets = [0, 128], sizes = [2, 128], strides = [1, 1]} : vector<2x384xf32> to vector<2x128xf32>
    %59 = arith.addf %57, %58 : vector<2x128xf32>
    %60 = arith.negf %59 : vector<2x128xf32>
    %61 = math.exp %60 : vector<2x128xf32>
    %cst_25 = arith.constant 1.000000e+00 : f32
    %62 = vector.broadcast %cst_25 : f32 to vector<2x128xf32>
    %63 = arith.addf %62, %61 : vector<2x128xf32>
    %64 = arith.divf %62, %63 : vector<2x128xf32>
    %65 = vector.extract_strided_slice %43 {offsets = [0, 256], sizes = [2, 128], strides = [1, 1]} : vector<2x384xf32> to vector<2x128xf32>
    %66 = vector.extract_strided_slice %48 {offsets = [0, 256], sizes = [2, 128], strides = [1, 1]} : vector<2x384xf32> to vector<2x128xf32>
    %67 = arith.mulf %56, %66 : vector<2x128xf32>
    %68 = arith.addf %65, %67 : vector<2x128xf32>
    %69 = math.tanh %68 : vector<2x128xf32>
    %cst_26 = arith.constant 1.000000e+00 : f32
    %70 = vector.broadcast %cst_26 : f32 to vector<2x128xf32>
    %71 = arith.subf %70, %64 : vector<2x128xf32>
    %72 = arith.mulf %71, %69 : vector<2x128xf32>
    %73 = arith.mulf %64, %4 : vector<2x128xf32>
    %74 = arith.addf %72, %73 : vector<2x128xf32>
    %75 = arith.index_cast %c0_i32_4 : i32 to index
    %c0_27 = arith.constant 0 : index
    %c0_28 = arith.constant 0 : index
    %76 = vector.load %arg10[%75, %c0_27, %c0_28] : memref<8x2x128xf32, #tpu.memory_space<vmem>>, vector<1x2x128xf32>
    %77 = vector.shape_cast %76 : vector<1x2x128xf32> to vector<2x128xf32>
    %78 = vector.shape_cast %74 : vector<2x128xf32> to vector<1x2x128xf32>
    tpu.vector_store %arg10[%75, %c0_27, %c0_28], %78 {strides = array<i32>} : memref<8x2x128xf32, #tpu.memory_space<vmem>>, vector<1x2x128xf32>,
    %c1_i32 = arith.constant 1 : i32
    %79 = arith.index_cast %c1_i32 : i32 to index
    %c0_29 = arith.constant 0 : index
    %c0_30 = arith.constant 0 : index
    %80 = vector.load %arg1[%79, %c0_29, %c0_30] : memref<8x2x384xf32, #tpu.memory_space<vmem>>, vector<1x2x384xf32>
    %81 = vector.shape_cast %80 : vector<1x2x384xf32> to vector<2x384xf32>
    %c0_31 = arith.constant 0 : index
    %c0_32 = arith.constant 0 : index
    %82 = vector.load %arg2[%c0_31, %c0_32] : memref<128x384xf32, #tpu.memory_space<vmem>>, vector<128x384xf32>
    %cst_33 = arith.constant dense<0.000000e+00> : vector<2x384xf32>
    %83 = tpu.matmul %38, %82, %cst_33 {dimension_numbers = #tpu.dot_dimension_numbers<[1], [0], [0], [1], [0, 0, 1, 1], [], []>} : vector<2x128xf32>, vector<128x384xf32>, vector<2x384xf32> -> vector<2x384xf32>
    %c0_34 = arith.constant 0 : index
    %c0_35 = arith.constant 0 : index
    %84 = vector.load %arg3[%c0_34, %c0_35] : memref<1x384xf32, #tpu.memory_space<vmem>>, vector<1x384xf32>
    %85 = vector.broadcast %84 : vector<1x384xf32> to vector<2x384xf32>
    %86 = arith.addf %83, %85 : vector<2x384xf32>
    %87 = vector.extract_strided_slice %81 {offsets = [0, 0], sizes = [2, 128], strides = [1, 1]} : vector<2x384xf32> to vector<2x128xf32>
    %88 = vector.extract_strided_slice %86 {offsets = [0, 0], sizes = [2, 128], strides = [1, 1]} : vector<2x384xf32> to vector<2x128xf32>
    %89 = arith.addf %87, %88 : vector<2x128xf32>
    %90 = arith.negf %89 : vector<2x128xf32>
    %91 = math.exp %90 : vector<2x128xf32>
    %cst_36 = arith.constant 1.000000e+00 : f32
    %92 = vector.broadcast %cst_36 : f32 to vector<2x128xf32>
    %93 = arith.addf %92, %91 : vector<2x128xf32>
    %94 = arith.divf %92, %93 : vector<2x128xf32>
    %95 = vector.extract_strided_slice %81 {offsets = [0, 128], sizes = [2, 128], strides = [1, 1]} : vector<2x384xf32> to vector<2x128xf32>
    %96 = vector.extract_strided_slice %86 {offsets = [0, 128], sizes = [2, 128], strides = [1, 1]} : vector<2x384xf32> to vector<2x128xf32>
    %97 = arith.addf %95, %96 : vector<2x128xf32>
    %98 = arith.negf %97 : vector<2x128xf32>
    %99 = math.exp %98 : vector<2x128xf32>
    %cst_37 = arith.constant 1.000000e+00 : f32
    %100 = vector.broadcast %cst_37 : f32 to vector<2x128xf32>
    %101 = arith.addf %100, %99 : vector<2x128xf32>
    %102 = arith.divf %100, %101 : vector<2x128xf32>
    %103 = vector.extract_strided_slice %81 {offsets = [0, 256], sizes = [2, 128], strides = [1, 1]} : vector<2x384xf32> to vector<2x128xf32>
    %104 = vector.extract_strided_slice %86 {offsets = [0, 256], sizes = [2, 128], strides = [1, 1]} : vector<2x384xf32> to vector<2x128xf32>
    %105 = arith.mulf %94, %104 : vector<2x128xf32>
    %106 = arith.addf %103, %105 : vector<2x128xf32>
    %107 = math.tanh %106 : vector<2x128xf32>
    %cst_38 = arith.constant 1.000000e+00 : f32
    %108 = vector.broadcast %cst_38 : f32 to vector<2x128xf32>
    %109 = arith.subf %108, %102 : vector<2x128xf32>
    %110 = arith.mulf %109, %107 : vector<2x128xf32>
    %111 = arith.mulf %102, %38 : vector<2x128xf32>
    %112 = arith.addf %110, %111 : vector<2x128xf32>
    %c0_39 = arith.constant 0 : index
    %c0_40 = arith.constant 0 : index
    %113 = vector.load %arg4[%c0_39, %c0_40] : memref<128x384xf32, #tpu.memory_space<vmem>>, vector<128x384xf32>
    %cst_41 = arith.constant dense<0.000000e+00> : vector<2x384xf32>
    %114 = tpu.matmul %112, %113, %cst_41 {dimension_numbers = #tpu.dot_dimension_numbers<[1], [0], [0], [1], [0, 0, 1, 1], [], []>} : vector<2x128xf32>, vector<128x384xf32>, vector<2x384xf32> -> vector<2x384xf32>
    %c0_42 = arith.constant 0 : index
    %c0_43 = arith.constant 0 : index
    %115 = vector.load %arg5[%c0_42, %c0_43] : memref<1x384xf32, #tpu.memory_space<vmem>>, vector<1x384xf32>
    %116 = vector.broadcast %115 : vector<1x384xf32> to vector<2x384xf32>
    %117 = arith.addf %114, %116 : vector<2x384xf32>
    %c0_44 = arith.constant 0 : index
    %c0_45 = arith.constant 0 : index
    %118 = vector.load %arg6[%c0_44, %c0_45] : memref<128x384xf32, #tpu.memory_space<vmem>>, vector<128x384xf32>
    %cst_46 = arith.constant dense<0.000000e+00> : vector<2x384xf32>
    %119 = tpu.matmul %74, %118, %cst_46 {dimension_numbers = #tpu.dot_dimension_numbers<[1], [0], [0], [1], [0, 0, 1, 1], [], []>} : vector<2x128xf32>, vector<128x384xf32>, vector<2x384xf32> -> vector<2x384xf32>
    %c0_47 = arith.constant 0 : index
    %c0_48 = arith.constant 0 : index
    %120 = vector.load %arg7[%c0_47, %c0_48] : memref<1x384xf32, #tpu.memory_space<vmem>>, vector<1x384xf32>
    %121 = vector.broadcast %120 : vector<1x384xf32> to vector<2x384xf32>
    %122 = arith.addf %119, %121 : vector<2x384xf32>
    %123 = vector.extract_strided_slice %117 {offsets = [0, 0], sizes = [2, 128], strides = [1, 1]} : vector<2x384xf32> to vector<2x128xf32>
    %124 = vector.extract_strided_slice %122 {offsets = [0, 0], sizes = [2, 128], strides = [1, 1]} : vector<2x384xf32> to vector<2x128xf32>
    %125 = arith.addf %123, %124 : vector<2x128xf32>
    %126 = arith.negf %125 : vector<2x128xf32>
    %127 = math.exp %126 : vector<2x128xf32>
    %cst_49 = arith.constant 1.000000e+00 : f32
    %128 = vector.broadcast %cst_49 : f32 to vector<2x128xf32>
    %129 = arith.addf %128, %127 : vector<2x128xf32>
    %130 = arith.divf %128, %129 : vector<2x128xf32>
    %131 = vector.extract_strided_slice %117 {offsets = [0, 128], sizes = [2, 128], strides = [1, 1]} : vector<2x384xf32> to vector<2x128xf32>
    %132 = vector.extract_strided_slice %122 {offsets = [0, 128], sizes = [2, 128], strides = [1, 1]} : vector<2x384xf32> to vector<2x128xf32>
    %133 = arith.addf %131, %132 : vector<2x128xf32>
    %134 = arith.negf %133 : vector<2x128xf32>
    %135 = math.exp %134 : vector<2x128xf32>
    %cst_50 = arith.constant 1.000000e+00 : f32
    %136 = vector.broadcast %cst_50 : f32 to vector<2x128xf32>
    %137 = arith.addf %136, %135 : vector<2x128xf32>
    %138 = arith.divf %136, %137 : vector<2x128xf32>
    %139 = vector.extract_strided_slice %117 {offsets = [0, 256], sizes = [2, 128], strides = [1, 1]} : vector<2x384xf32> to vector<2x128xf32>
    %140 = vector.extract_strided_slice %122 {offsets = [0, 256], sizes = [2, 128], strides = [1, 1]} : vector<2x384xf32> to vector<2x128xf32>
    %141 = arith.mulf %130, %140 : vector<2x128xf32>
    %142 = arith.addf %139, %141 : vector<2x128xf32>
    %143 = math.tanh %142 : vector<2x128xf32>
    %cst_51 = arith.constant 1.000000e+00 : f32
    %144 = vector.broadcast %cst_51 : f32 to vector<2x128xf32>
    %145 = arith.subf %144, %138 : vector<2x128xf32>
    %146 = arith.mulf %145, %143 : vector<2x128xf32>
    %147 = arith.mulf %138, %74 : vector<2x128xf32>
    %148 = arith.addf %146, %147 : vector<2x128xf32>
    %149 = arith.index_cast %c1_i32 : i32 to index
    %c0_52 = arith.constant 0 : index
    %c0_53 = arith.constant 0 : index
    %150 = vector.load %arg10[%149, %c0_52, %c0_53] : memref<8x2x128xf32, #tpu.memory_space<vmem>>, vector<1x2x128xf32>
    %151 = vector.shape_cast %150 : vector<1x2x128xf32> to vector<2x128xf32>
    %152 = vector.shape_cast %148 : vector<2x128xf32> to vector<1x2x128xf32>
    tpu.vector_store %arg10[%149, %c0_52, %c0_53], %152 {strides = array<i32>} : memref<8x2x128xf32, #tpu.memory_space<vmem>>, vector<1x2x128xf32>,
    %c2_i32 = arith.constant 2 : i32
    %153 = arith.index_cast %c2_i32 : i32 to index
    %c0_54 = arith.constant 0 : index
    %c0_55 = arith.constant 0 : index
    %154 = vector.load %arg1[%153, %c0_54, %c0_55] : memref<8x2x384xf32, #tpu.memory_space<vmem>>, vector<1x2x384xf32>
    %155 = vector.shape_cast %154 : vector<1x2x384xf32> to vector<2x384xf32>
    %c0_56 = arith.constant 0 : index
    %c0_57 = arith.constant 0 : index
    %156 = vector.load %arg2[%c0_56, %c0_57] : memref<128x384xf32, #tpu.memory_space<vmem>>, vector<128x384xf32>
    %cst_58 = arith.constant dense<0.000000e+00> : vector<2x384xf32>
    %157 = tpu.matmul %112, %156, %cst_58 {dimension_numbers = #tpu.dot_dimension_numbers<[1], [0], [0], [1], [0, 0, 1, 1], [], []>} : vector<2x128xf32>, vector<128x384xf32>, vector<2x384xf32> -> vector<2x384xf32>
    %c0_59 = arith.constant 0 : index
    %c0_60 = arith.constant 0 : index
    %158 = vector.load %arg3[%c0_59, %c0_60] : memref<1x384xf32, #tpu.memory_space<vmem>>, vector<1x384xf32>
    %159 = vector.broadcast %158 : vector<1x384xf32> to vector<2x384xf32>
    %160 = arith.addf %157, %159 : vector<2x384xf32>
    %161 = vector.extract_strided_slice %155 {offsets = [0, 0], sizes = [2, 128], strides = [1, 1]} : vector<2x384xf32> to vector<2x128xf32>
    %162 = vector.extract_strided_slice %160 {offsets = [0, 0], sizes = [2, 128], strides = [1, 1]} : vector<2x384xf32> to vector<2x128xf32>
    %163 = arith.addf %161, %162 : vector<2x128xf32>
    %164 = arith.negf %163 : vector<2x128xf32>
    %165 = math.exp %164 : vector<2x128xf32>
    %cst_61 = arith.constant 1.000000e+00 : f32
    %166 = vector.broadcast %cst_61 : f32 to vector<2x128xf32>
    %167 = arith.addf %166, %165 : vector<2x128xf32>
    %168 = arith.divf %166, %167 : vector<2x128xf32>
    %169 = vector.extract_strided_slice %155 {offsets = [0, 128], sizes = [2, 128], strides = [1, 1]} : vector<2x384xf32> to vector<2x128xf32>
    %170 = vector.extract_strided_slice %160 {offsets = [0, 128], sizes = [2, 128], strides = [1, 1]} : vector<2x384xf32> to vector<2x128xf32>
    %171 = arith.addf %169, %170 : vector<2x128xf32>
    %172 = arith.negf %171 : vector<2x128xf32>
    %173 = math.exp %172 : vector<2x128xf32>
    %cst_62 = arith.constant 1.000000e+00 : f32
    %174 = vector.broadcast %cst_62 : f32 to vector<2x128xf32>
    %175 = arith.addf %174, %173 : vector<2x128xf32>
    %176 = arith.divf %174, %175 : vector<2x128xf32>
    %177 = vector.extract_strided_slice %155 {offsets = [0, 256], sizes = [2, 128], strides = [1, 1]} : vector<2x384xf32> to vector<2x128xf32>
    %178 = vector.extract_strided_slice %160 {offsets = [0, 256], sizes = [2, 128], strides = [1, 1]} : vector<2x384xf32> to vector<2x128xf32>
    %179 = arith.mulf %168, %178 : vector<2x128xf32>
    %180 = arith.addf %177, %179 : vector<2x128xf32>
    %181 = math.tanh %180 : vector<2x128xf32>
    %cst_63 = arith.constant 1.000000e+00 : f32
    %182 = vector.broadcast %cst_63 : f32 to vector<2x128xf32>
    %183 = arith.subf %182, %176 : vector<2x128xf32>
    %184 = arith.mulf %183, %181 : vector<2x128xf32>
    %185 = arith.mulf %176, %112 : vector<2x128xf32>
    %186 = arith.addf %184, %185 : vector<2x128xf32>
    %c0_64 = arith.constant 0 : index
    %c0_65 = arith.constant 0 : index
    %187 = vector.load %arg4[%c0_64, %c0_65] : memref<128x384xf32, #tpu.memory_space<vmem>>, vector<128x384xf32>
    %cst_66 = arith.constant dense<0.000000e+00> : vector<2x384xf32>
    %188 = tpu.matmul %186, %187, %cst_66 {dimension_numbers = #tpu.dot_dimension_numbers<[1], [0], [0], [1], [0, 0, 1, 1], [], []>} : vector<2x128xf32>, vector<128x384xf32>, vector<2x384xf32> -> vector<2x384xf32>
    %c0_67 = arith.constant 0 : index
    %c0_68 = arith.constant 0 : index
    %189 = vector.load %arg5[%c0_67, %c0_68] : memref<1x384xf32, #tpu.memory_space<vmem>>, vector<1x384xf32>
    %190 = vector.broadcast %189 : vector<1x384xf32> to vector<2x384xf32>
    %191 = arith.addf %188, %190 : vector<2x384xf32>
    %c0_69 = arith.constant 0 : index
    %c0_70 = arith.constant 0 : index
    %192 = vector.load %arg6[%c0_69, %c0_70] : memref<128x384xf32, #tpu.memory_space<vmem>>, vector<128x384xf32>
    %cst_71 = arith.constant dense<0.000000e+00> : vector<2x384xf32>
    %193 = tpu.matmul %148, %192, %cst_71 {dimension_numbers = #tpu.dot_dimension_numbers<[1], [0], [0], [1], [0, 0, 1, 1], [], []>} : vector<2x128xf32>, vector<128x384xf32>, vector<2x384xf32> -> vector<2x384xf32>
    %c0_72 = arith.constant 0 : index
    %c0_73 = arith.constant 0 : index
    %194 = vector.load %arg7[%c0_72, %c0_73] : memref<1x384xf32, #tpu.memory_space<vmem>>, vector<1x384xf32>
    %195 = vector.broadcast %194 : vector<1x384xf32> to vector<2x384xf32>
    %196 = arith.addf %193, %195 : vector<2x384xf32>
    %197 = vector.extract_strided_slice %191 {offsets = [0, 0], sizes = [2, 128], strides = [1, 1]} : vector<2x384xf32> to vector<2x128xf32>
    %198 = vector.extract_strided_slice %196 {offsets = [0, 0], sizes = [2, 128], strides = [1, 1]} : vector<2x384xf32> to vector<2x128xf32>
    %199 = arith.addf %197, %198 : vector<2x128xf32>
    %200 = arith.negf %199 : vector<2x128xf32>
    %201 = math.exp %200 : vector<2x128xf32>
    %cst_74 = arith.constant 1.000000e+00 : f32
    %202 = vector.broadcast %cst_74 : f32 to vector<2x128xf32>
    %203 = arith.addf %202, %201 : vector<2x128xf32>
    %204 = arith.divf %202, %203 : vector<2x128xf32>
    %205 = vector.extract_strided_slice %191 {offsets = [0, 128], sizes = [2, 128], strides = [1, 1]} : vector<2x384xf32> to vector<2x128xf32>
    %206 = vector.extract_strided_slice %196 {offsets = [0, 128], sizes = [2, 128], strides = [1, 1]} : vector<2x384xf32> to vector<2x128xf32>
    %207 = arith.addf %205, %206 : vector<2x128xf32>
    %208 = arith.negf %207 : vector<2x128xf32>
    %209 = math.exp %208 : vector<2x128xf32>
    %cst_75 = arith.constant 1.000000e+00 : f32
    %210 = vector.broadcast %cst_75 : f32 to vector<2x128xf32>
    %211 = arith.addf %210, %209 : vector<2x128xf32>
    %212 = arith.divf %210, %211 : vector<2x128xf32>
    %213 = vector.extract_strided_slice %191 {offsets = [0, 256], sizes = [2, 128], strides = [1, 1]} : vector<2x384xf32> to vector<2x128xf32>
    %214 = vector.extract_strided_slice %196 {offsets = [0, 256], sizes = [2, 128], strides = [1, 1]} : vector<2x384xf32> to vector<2x128xf32>
    %215 = arith.mulf %204, %214 : vector<2x128xf32>
    %216 = arith.addf %213, %215 : vector<2x128xf32>
    %217 = math.tanh %216 : vector<2x128xf32>
    %cst_76 = arith.constant 1.000000e+00 : f32
    %218 = vector.broadcast %cst_76 : f32 to vector<2x128xf32>
    %219 = arith.subf %218, %212 : vector<2x128xf32>
    %220 = arith.mulf %219, %217 : vector<2x128xf32>
    %221 = arith.mulf %212, %148 : vector<2x128xf32>
    %222 = arith.addf %220, %221 : vector<2x128xf32>
    %223 = arith.index_cast %c2_i32 : i32 to index
    %c0_77 = arith.constant 0 : index
    %c0_78 = arith.constant 0 : index
    %224 = vector.load %arg10[%223, %c0_77, %c0_78] : memref<8x2x128xf32, #tpu.memory_space<vmem>>, vector<1x2x128xf32>
    %225 = vector.shape_cast %224 : vector<1x2x128xf32> to vector<2x128xf32>
    %226 = vector.shape_cast %222 : vector<2x128xf32> to vector<1x2x128xf32>
    tpu.vector_store %arg10[%223, %c0_77, %c0_78], %226 {strides = array<i32>} : memref<8x2x128xf32, #tpu.memory_space<vmem>>, vector<1x2x128xf32>,
    %c3_i32 = arith.constant 3 : i32
    %227 = arith.index_cast %c3_i32 : i32 to index
    %c0_79 = arith.constant 0 : index
    %c0_80 = arith.constant 0 : index
    %228 = vector.load %arg1[%227, %c0_79, %c0_80] : memref<8x2x384xf32, #tpu.memory_space<vmem>>, vector<1x2x384xf32>
    %229 = vector.shape_cast %228 : vector<1x2x384xf32> to vector<2x384xf32>
    %c0_81 = arith.constant 0 : index
    %c0_82 = arith.constant 0 : index
    %230 = vector.load %arg2[%c0_81, %c0_82] : memref<128x384xf32, #tpu.memory_space<vmem>>, vector<128x384xf32>
    %cst_83 = arith.constant dense<0.000000e+00> : vector<2x384xf32>
    %231 = tpu.matmul %186, %230, %cst_83 {dimension_numbers = #tpu.dot_dimension_numbers<[1], [0], [0], [1], [0, 0, 1, 1], [], []>} : vector<2x128xf32>, vector<128x384xf32>, vector<2x384xf32> -> vector<2x384xf32>
    %c0_84 = arith.constant 0 : index
    %c0_85 = arith.constant 0 : index
    %232 = vector.load %arg3[%c0_84, %c0_85] : memref<1x384xf32, #tpu.memory_space<vmem>>, vector<1x384xf32>
    %233 = vector.broadcast %232 : vector<1x384xf32> to vector<2x384xf32>
    %234 = arith.addf %231, %233 : vector<2x384xf32>
    %235 = vector.extract_strided_slice %229 {offsets = [0, 0], sizes = [2, 128], strides = [1, 1]} : vector<2x384xf32> to vector<2x128xf32>
    %236 = vector.extract_strided_slice %234 {offsets = [0, 0], sizes = [2, 128], strides = [1, 1]} : vector<2x384xf32> to vector<2x128xf32>
    %237 = arith.addf %235, %236 : vector<2x128xf32>
    %238 = arith.negf %237 : vector<2x128xf32>
    %239 = math.exp %238 : vector<2x128xf32>
    %cst_86 = arith.constant 1.000000e+00 : f32
    %240 = vector.broadcast %cst_86 : f32 to vector<2x128xf32>
    %241 = arith.addf %240, %239 : vector<2x128xf32>
    %242 = arith.divf %240, %241 : vector<2x128xf32>
    %243 = vector.extract_strided_slice %229 {offsets = [0, 128], sizes = [2, 128], strides = [1, 1]} : vector<2x384xf32> to vector<2x128xf32>
    %244 = vector.extract_strided_slice %234 {offsets = [0, 128], sizes = [2, 128], strides = [1, 1]} : vector<2x384xf32> to vector<2x128xf32>
    %245 = arith.addf %243, %244 : vector<2x128xf32>
    %246 = arith.negf %245 : vector<2x128xf32>
    %247 = math.exp %246 : vector<2x128xf32>
    %cst_87 = arith.constant 1.000000e+00 : f32
    %248 = vector.broadcast %cst_87 : f32 to vector<2x128xf32>
    %249 = arith.addf %248, %247 : vector<2x128xf32>
    %250 = arith.divf %248, %249 : vector<2x128xf32>
    %251 = vector.extract_strided_slice %229 {offsets = [0, 256], sizes = [2, 128], strides = [1, 1]} : vector<2x384xf32> to vector<2x128xf32>
    %252 = vector.extract_strided_slice %234 {offsets = [0, 256], sizes = [2, 128], strides = [1, 1]} : vector<2x384xf32> to vector<2x128xf32>
    %253 = arith.mulf %242, %252 : vector<2x128xf32>
    %254 = arith.addf %251, %253 : vector<2x128xf32>
    %255 = math.tanh %254 : vector<2x128xf32>
    %cst_88 = arith.constant 1.000000e+00 : f32
    %256 = vector.broadcast %cst_88 : f32 to vector<2x128xf32>
    %257 = arith.subf %256, %250 : vector<2x128xf32>
    %258 = arith.mulf %257, %255 : vector<2x128xf32>
    %259 = arith.mulf %250, %186 : vector<2x128xf32>
    %260 = arith.addf %258, %259 : vector<2x128xf32>
    %c0_89 = arith.constant 0 : index
    %c0_90 = arith.constant 0 : index
    %261 = vector.load %arg4[%c0_89, %c0_90] : memref<128x384xf32, #tpu.memory_space<vmem>>, vector<128x384xf32>
    %cst_91 = arith.constant dense<0.000000e+00> : vector<2x384xf32>
    %262 = tpu.matmul %260, %261, %cst_91 {dimension_numbers = #tpu.dot_dimension_numbers<[1], [0], [0], [1], [0, 0, 1, 1], [], []>} : vector<2x128xf32>, vector<128x384xf32>, vector<2x384xf32> -> vector<2x384xf32>
    %c0_92 = arith.constant 0 : index
    %c0_93 = arith.constant 0 : index
    %263 = vector.load %arg5[%c0_92, %c0_93] : memref<1x384xf32, #tpu.memory_space<vmem>>, vector<1x384xf32>
    %264 = vector.broadcast %263 : vector<1x384xf32> to vector<2x384xf32>
    %265 = arith.addf %262, %264 : vector<2x384xf32>
    %c0_94 = arith.constant 0 : index
    %c0_95 = arith.constant 0 : index
    %266 = vector.load %arg6[%c0_94, %c0_95] : memref<128x384xf32, #tpu.memory_space<vmem>>, vector<128x384xf32>
    %cst_96 = arith.constant dense<0.000000e+00> : vector<2x384xf32>
    %267 = tpu.matmul %222, %266, %cst_96 {dimension_numbers = #tpu.dot_dimension_numbers<[1], [0], [0], [1], [0, 0, 1, 1], [], []>} : vector<2x128xf32>, vector<128x384xf32>, vector<2x384xf32> -> vector<2x384xf32>
    %c0_97 = arith.constant 0 : index
    %c0_98 = arith.constant 0 : index
    %268 = vector.load %arg7[%c0_97, %c0_98] : memref<1x384xf32, #tpu.memory_space<vmem>>, vector<1x384xf32>
    %269 = vector.broadcast %268 : vector<1x384xf32> to vector<2x384xf32>
    %270 = arith.addf %267, %269 : vector<2x384xf32>
    %271 = vector.extract_strided_slice %265 {offsets = [0, 0], sizes = [2, 128], strides = [1, 1]} : vector<2x384xf32> to vector<2x128xf32>
    %272 = vector.extract_strided_slice %270 {offsets = [0, 0], sizes = [2, 128], strides = [1, 1]} : vector<2x384xf32> to vector<2x128xf32>
    %273 = arith.addf %271, %272 : vector<2x128xf32>
    %274 = arith.negf %273 : vector<2x128xf32>
    %275 = math.exp %274 : vector<2x128xf32>
    %cst_99 = arith.constant 1.000000e+00 : f32
    %276 = vector.broadcast %cst_99 : f32 to vector<2x128xf32>
    %277 = arith.addf %276, %275 : vector<2x128xf32>
    %278 = arith.divf %276, %277 : vector<2x128xf32>
    %279 = vector.extract_strided_slice %265 {offsets = [0, 128], sizes = [2, 128], strides = [1, 1]} : vector<2x384xf32> to vector<2x128xf32>
    %280 = vector.extract_strided_slice %270 {offsets = [0, 128], sizes = [2, 128], strides = [1, 1]} : vector<2x384xf32> to vector<2x128xf32>
    %281 = arith.addf %279, %280 : vector<2x128xf32>
    %282 = arith.negf %281 : vector<2x128xf32>
    %283 = math.exp %282 : vector<2x128xf32>
    %cst_100 = arith.constant 1.000000e+00 : f32
    %284 = vector.broadcast %cst_100 : f32 to vector<2x128xf32>
    %285 = arith.addf %284, %283 : vector<2x128xf32>
    %286 = arith.divf %284, %285 : vector<2x128xf32>
    %287 = vector.extract_strided_slice %265 {offsets = [0, 256], sizes = [2, 128], strides = [1, 1]} : vector<2x384xf32> to vector<2x128xf32>
    %288 = vector.extract_strided_slice %270 {offsets = [0, 256], sizes = [2, 128], strides = [1, 1]} : vector<2x384xf32> to vector<2x128xf32>
    %289 = arith.mulf %278, %288 : vector<2x128xf32>
    %290 = arith.addf %287, %289 : vector<2x128xf32>
    %291 = math.tanh %290 : vector<2x128xf32>
    %cst_101 = arith.constant 1.000000e+00 : f32
    %292 = vector.broadcast %cst_101 : f32 to vector<2x128xf32>
    %293 = arith.subf %292, %286 : vector<2x128xf32>
    %294 = arith.mulf %293, %291 : vector<2x128xf32>
    %295 = arith.mulf %286, %222 : vector<2x128xf32>
    %296 = arith.addf %294, %295 : vector<2x128xf32>
    %297 = arith.index_cast %c3_i32 : i32 to index
    %c0_102 = arith.constant 0 : index
    %c0_103 = arith.constant 0 : index
    %298 = vector.load %arg10[%297, %c0_102, %c0_103] : memref<8x2x128xf32, #tpu.memory_space<vmem>>, vector<1x2x128xf32>
    %299 = vector.shape_cast %298 : vector<1x2x128xf32> to vector<2x128xf32>
    %300 = vector.shape_cast %296 : vector<2x128xf32> to vector<1x2x128xf32>
    tpu.vector_store %arg10[%297, %c0_102, %c0_103], %300 {strides = array<i32>} : memref<8x2x128xf32, #tpu.memory_space<vmem>>, vector<1x2x128xf32>,
    %c4_i32 = arith.constant 4 : i32
    %301 = arith.index_cast %c4_i32 : i32 to index
    %c0_104 = arith.constant 0 : index
    %c0_105 = arith.constant 0 : index
    %302 = vector.load %arg1[%301, %c0_104, %c0_105] : memref<8x2x384xf32, #tpu.memory_space<vmem>>, vector<1x2x384xf32>
    %303 = vector.shape_cast %302 : vector<1x2x384xf32> to vector<2x384xf32>
    %c0_106 = arith.constant 0 : index
    %c0_107 = arith.constant 0 : index
    %304 = vector.load %arg2[%c0_106, %c0_107] : memref<128x384xf32, #tpu.memory_space<vmem>>, vector<128x384xf32>
    %cst_108 = arith.constant dense<0.000000e+00> : vector<2x384xf32>
    %305 = tpu.matmul %260, %304, %cst_108 {dimension_numbers = #tpu.dot_dimension_numbers<[1], [0], [0], [1], [0, 0, 1, 1], [], []>} : vector<2x128xf32>, vector<128x384xf32>, vector<2x384xf32> -> vector<2x384xf32>
    %c0_109 = arith.constant 0 : index
    %c0_110 = arith.constant 0 : index
    %306 = vector.load %arg3[%c0_109, %c0_110] : memref<1x384xf32, #tpu.memory_space<vmem>>, vector<1x384xf32>
    %307 = vector.broadcast %306 : vector<1x384xf32> to vector<2x384xf32>
    %308 = arith.addf %305, %307 : vector<2x384xf32>
    %309 = vector.extract_strided_slice %303 {offsets = [0, 0], sizes = [2, 128], strides = [1, 1]} : vector<2x384xf32> to vector<2x128xf32>
    %310 = vector.extract_strided_slice %308 {offsets = [0, 0], sizes = [2, 128], strides = [1, 1]} : vector<2x384xf32> to vector<2x128xf32>
    %311 = arith.addf %309, %310 : vector<2x128xf32>
    %312 = arith.negf %311 : vector<2x128xf32>
    %313 = math.exp %312 : vector<2x128xf32>
    %cst_111 = arith.constant 1.000000e+00 : f32
    %314 = vector.broadcast %cst_111 : f32 to vector<2x128xf32>
    %315 = arith.addf %314, %313 : vector<2x128xf32>
    %316 = arith.divf %314, %315 : vector<2x128xf32>
    %317 = vector.extract_strided_slice %303 {offsets = [0, 128], sizes = [2, 128], strides = [1, 1]} : vector<2x384xf32> to vector<2x128xf32>
    %318 = vector.extract_strided_slice %308 {offsets = [0, 128], sizes = [2, 128], strides = [1, 1]} : vector<2x384xf32> to vector<2x128xf32>
    %319 = arith.addf %317, %318 : vector<2x128xf32>
    %320 = arith.negf %319 : vector<2x128xf32>
    %321 = math.exp %320 : vector<2x128xf32>
    %cst_112 = arith.constant 1.000000e+00 : f32
    %322 = vector.broadcast %cst_112 : f32 to vector<2x128xf32>
    %323 = arith.addf %322, %321 : vector<2x128xf32>
    %324 = arith.divf %322, %323 : vector<2x128xf32>
    %325 = vector.extract_strided_slice %303 {offsets = [0, 256], sizes = [2, 128], strides = [1, 1]} : vector<2x384xf32> to vector<2x128xf32>
    %326 = vector.extract_strided_slice %308 {offsets = [0, 256], sizes = [2, 128], strides = [1, 1]} : vector<2x384xf32> to vector<2x128xf32>
    %327 = arith.mulf %316, %326 : vector<2x128xf32>
    %328 = arith.addf %325, %327 : vector<2x128xf32>
    %329 = math.tanh %328 : vector<2x128xf32>
    %cst_113 = arith.constant 1.000000e+00 : f32
    %330 = vector.broadcast %cst_113 : f32 to vector<2x128xf32>
    %331 = arith.subf %330, %324 : vector<2x128xf32>
    %332 = arith.mulf %331, %329 : vector<2x128xf32>
    %333 = arith.mulf %324, %260 : vector<2x128xf32>
    %334 = arith.addf %332, %333 : vector<2x128xf32>
    %c0_114 = arith.constant 0 : index
    %c0_115 = arith.constant 0 : index
    %335 = vector.load %arg4[%c0_114, %c0_115] : memref<128x384xf32, #tpu.memory_space<vmem>>, vector<128x384xf32>
    %cst_116 = arith.constant dense<0.000000e+00> : vector<2x384xf32>
    %336 = tpu.matmul %334, %335, %cst_116 {dimension_numbers = #tpu.dot_dimension_numbers<[1], [0], [0], [1], [0, 0, 1, 1], [], []>} : vector<2x128xf32>, vector<128x384xf32>, vector<2x384xf32> -> vector<2x384xf32>
    %c0_117 = arith.constant 0 : index
    %c0_118 = arith.constant 0 : index
    %337 = vector.load %arg5[%c0_117, %c0_118] : memref<1x384xf32, #tpu.memory_space<vmem>>, vector<1x384xf32>
    %338 = vector.broadcast %337 : vector<1x384xf32> to vector<2x384xf32>
    %339 = arith.addf %336, %338 : vector<2x384xf32>
    %c0_119 = arith.constant 0 : index
    %c0_120 = arith.constant 0 : index
    %340 = vector.load %arg6[%c0_119, %c0_120] : memref<128x384xf32, #tpu.memory_space<vmem>>, vector<128x384xf32>
    %cst_121 = arith.constant dense<0.000000e+00> : vector<2x384xf32>
    %341 = tpu.matmul %296, %340, %cst_121 {dimension_numbers = #tpu.dot_dimension_numbers<[1], [0], [0], [1], [0, 0, 1, 1], [], []>} : vector<2x128xf32>, vector<128x384xf32>, vector<2x384xf32> -> vector<2x384xf32>
    %c0_122 = arith.constant 0 : index
    %c0_123 = arith.constant 0 : index
    %342 = vector.load %arg7[%c0_122, %c0_123] : memref<1x384xf32, #tpu.memory_space<vmem>>, vector<1x384xf32>
    %343 = vector.broadcast %342 : vector<1x384xf32> to vector<2x384xf32>
    %344 = arith.addf %341, %343 : vector<2x384xf32>
    %345 = vector.extract_strided_slice %339 {offsets = [0, 0], sizes = [2, 128], strides = [1, 1]} : vector<2x384xf32> to vector<2x128xf32>
    %346 = vector.extract_strided_slice %344 {offsets = [0, 0], sizes = [2, 128], strides = [1, 1]} : vector<2x384xf32> to vector<2x128xf32>
    %347 = arith.addf %345, %346 : vector<2x128xf32>
    %348 = arith.negf %347 : vector<2x128xf32>
    %349 = math.exp %348 : vector<2x128xf32>
    %cst_124 = arith.constant 1.000000e+00 : f32
    %350 = vector.broadcast %cst_124 : f32 to vector<2x128xf32>
    %351 = arith.addf %350, %349 : vector<2x128xf32>
    %352 = arith.divf %350, %351 : vector<2x128xf32>
    %353 = vector.extract_strided_slice %339 {offsets = [0, 128], sizes = [2, 128], strides = [1, 1]} : vector<2x384xf32> to vector<2x128xf32>
    %354 = vector.extract_strided_slice %344 {offsets = [0, 128], sizes = [2, 128], strides = [1, 1]} : vector<2x384xf32> to vector<2x128xf32>
    %355 = arith.addf %353, %354 : vector<2x128xf32>
    %356 = arith.negf %355 : vector<2x128xf32>
    %357 = math.exp %356 : vector<2x128xf32>
    %cst_125 = arith.constant 1.000000e+00 : f32
    %358 = vector.broadcast %cst_125 : f32 to vector<2x128xf32>
    %359 = arith.addf %358, %357 : vector<2x128xf32>
    %360 = arith.divf %358, %359 : vector<2x128xf32>
    %361 = vector.extract_strided_slice %339 {offsets = [0, 256], sizes = [2, 128], strides = [1, 1]} : vector<2x384xf32> to vector<2x128xf32>
    %362 = vector.extract_strided_slice %344 {offsets = [0, 256], sizes = [2, 128], strides = [1, 1]} : vector<2x384xf32> to vector<2x128xf32>
    %363 = arith.mulf %352, %362 : vector<2x128xf32>
    %364 = arith.addf %361, %363 : vector<2x128xf32>
    %365 = math.tanh %364 : vector<2x128xf32>
    %cst_126 = arith.constant 1.000000e+00 : f32
    %366 = vector.broadcast %cst_126 : f32 to vector<2x128xf32>
    %367 = arith.subf %366, %360 : vector<2x128xf32>
    %368 = arith.mulf %367, %365 : vector<2x128xf32>
    %369 = arith.mulf %360, %296 : vector<2x128xf32>
    %370 = arith.addf %368, %369 : vector<2x128xf32>
    %371 = arith.index_cast %c4_i32 : i32 to index
    %c0_127 = arith.constant 0 : index
    %c0_128 = arith.constant 0 : index
    %372 = vector.load %arg10[%371, %c0_127, %c0_128] : memref<8x2x128xf32, #tpu.memory_space<vmem>>, vector<1x2x128xf32>
    %373 = vector.shape_cast %372 : vector<1x2x128xf32> to vector<2x128xf32>
    %374 = vector.shape_cast %370 : vector<2x128xf32> to vector<1x2x128xf32>
    tpu.vector_store %arg10[%371, %c0_127, %c0_128], %374 {strides = array<i32>} : memref<8x2x128xf32, #tpu.memory_space<vmem>>, vector<1x2x128xf32>,
    %c5_i32 = arith.constant 5 : i32
    %375 = arith.index_cast %c5_i32 : i32 to index
    %c0_129 = arith.constant 0 : index
    %c0_130 = arith.constant 0 : index
    %376 = vector.load %arg1[%375, %c0_129, %c0_130] : memref<8x2x384xf32, #tpu.memory_space<vmem>>, vector<1x2x384xf32>
    %377 = vector.shape_cast %376 : vector<1x2x384xf32> to vector<2x384xf32>
    %c0_131 = arith.constant 0 : index
    %c0_132 = arith.constant 0 : index
    %378 = vector.load %arg2[%c0_131, %c0_132] : memref<128x384xf32, #tpu.memory_space<vmem>>, vector<128x384xf32>
    %cst_133 = arith.constant dense<0.000000e+00> : vector<2x384xf32>
    %379 = tpu.matmul %334, %378, %cst_133 {dimension_numbers = #tpu.dot_dimension_numbers<[1], [0], [0], [1], [0, 0, 1, 1], [], []>} : vector<2x128xf32>, vector<128x384xf32>, vector<2x384xf32> -> vector<2x384xf32>
    %c0_134 = arith.constant 0 : index
    %c0_135 = arith.constant 0 : index
    %380 = vector.load %arg3[%c0_134, %c0_135] : memref<1x384xf32, #tpu.memory_space<vmem>>, vector<1x384xf32>
    %381 = vector.broadcast %380 : vector<1x384xf32> to vector<2x384xf32>
    %382 = arith.addf %379, %381 : vector<2x384xf32>
    %383 = vector.extract_strided_slice %377 {offsets = [0, 0], sizes = [2, 128], strides = [1, 1]} : vector<2x384xf32> to vector<2x128xf32>
    %384 = vector.extract_strided_slice %382 {offsets = [0, 0], sizes = [2, 128], strides = [1, 1]} : vector<2x384xf32> to vector<2x128xf32>
    %385 = arith.addf %383, %384 : vector<2x128xf32>
    %386 = arith.negf %385 : vector<2x128xf32>
    %387 = math.exp %386 : vector<2x128xf32>
    %cst_136 = arith.constant 1.000000e+00 : f32
    %388 = vector.broadcast %cst_136 : f32 to vector<2x128xf32>
    %389 = arith.addf %388, %387 : vector<2x128xf32>
    %390 = arith.divf %388, %389 : vector<2x128xf32>
    %391 = vector.extract_strided_slice %377 {offsets = [0, 128], sizes = [2, 128], strides = [1, 1]} : vector<2x384xf32> to vector<2x128xf32>
    %392 = vector.extract_strided_slice %382 {offsets = [0, 128], sizes = [2, 128], strides = [1, 1]} : vector<2x384xf32> to vector<2x128xf32>
    %393 = arith.addf %391, %392 : vector<2x128xf32>
    %394 = arith.negf %393 : vector<2x128xf32>
    %395 = math.exp %394 : vector<2x128xf32>
    %cst_137 = arith.constant 1.000000e+00 : f32
    %396 = vector.broadcast %cst_137 : f32 to vector<2x128xf32>
    %397 = arith.addf %396, %395 : vector<2x128xf32>
    %398 = arith.divf %396, %397 : vector<2x128xf32>
    %399 = vector.extract_strided_slice %377 {offsets = [0, 256], sizes = [2, 128], strides = [1, 1]} : vector<2x384xf32> to vector<2x128xf32>
    %400 = vector.extract_strided_slice %382 {offsets = [0, 256], sizes = [2, 128], strides = [1, 1]} : vector<2x384xf32> to vector<2x128xf32>
    %401 = arith.mulf %390, %400 : vector<2x128xf32>
    %402 = arith.addf %399, %401 : vector<2x128xf32>
    %403 = math.tanh %402 : vector<2x128xf32>
    %cst_138 = arith.constant 1.000000e+00 : f32
    %404 = vector.broadcast %cst_138 : f32 to vector<2x128xf32>
    %405 = arith.subf %404, %398 : vector<2x128xf32>
    %406 = arith.mulf %405, %403 : vector<2x128xf32>
    %407 = arith.mulf %398, %334 : vector<2x128xf32>
    %408 = arith.addf %406, %407 : vector<2x128xf32>
    %c0_139 = arith.constant 0 : index
    %c0_140 = arith.constant 0 : index
    %409 = vector.load %arg4[%c0_139, %c0_140] : memref<128x384xf32, #tpu.memory_space<vmem>>, vector<128x384xf32>
    %cst_141 = arith.constant dense<0.000000e+00> : vector<2x384xf32>
    %410 = tpu.matmul %408, %409, %cst_141 {dimension_numbers = #tpu.dot_dimension_numbers<[1], [0], [0], [1], [0, 0, 1, 1], [], []>} : vector<2x128xf32>, vector<128x384xf32>, vector<2x384xf32> -> vector<2x384xf32>
    %c0_142 = arith.constant 0 : index
    %c0_143 = arith.constant 0 : index
    %411 = vector.load %arg5[%c0_142, %c0_143] : memref<1x384xf32, #tpu.memory_space<vmem>>, vector<1x384xf32>
    %412 = vector.broadcast %411 : vector<1x384xf32> to vector<2x384xf32>
    %413 = arith.addf %410, %412 : vector<2x384xf32>
    %c0_144 = arith.constant 0 : index
    %c0_145 = arith.constant 0 : index
    %414 = vector.load %arg6[%c0_144, %c0_145] : memref<128x384xf32, #tpu.memory_space<vmem>>, vector<128x384xf32>
    %cst_146 = arith.constant dense<0.000000e+00> : vector<2x384xf32>
    %415 = tpu.matmul %370, %414, %cst_146 {dimension_numbers = #tpu.dot_dimension_numbers<[1], [0], [0], [1], [0, 0, 1, 1], [], []>} : vector<2x128xf32>, vector<128x384xf32>, vector<2x384xf32> -> vector<2x384xf32>
    %c0_147 = arith.constant 0 : index
    %c0_148 = arith.constant 0 : index
    %416 = vector.load %arg7[%c0_147, %c0_148] : memref<1x384xf32, #tpu.memory_space<vmem>>, vector<1x384xf32>
    %417 = vector.broadcast %416 : vector<1x384xf32> to vector<2x384xf32>
    %418 = arith.addf %415, %417 : vector<2x384xf32>
    %419 = vector.extract_strided_slice %413 {offsets = [0, 0], sizes = [2, 128], strides = [1, 1]} : vector<2x384xf32> to vector<2x128xf32>
    %420 = vector.extract_strided_slice %418 {offsets = [0, 0], sizes = [2, 128], strides = [1, 1]} : vector<2x384xf32> to vector<2x128xf32>
    %421 = arith.addf %419, %420 : vector<2x128xf32>
    %422 = arith.negf %421 : vector<2x128xf32>
    %423 = math.exp %422 : vector<2x128xf32>
    %cst_149 = arith.constant 1.000000e+00 : f32
    %424 = vector.broadcast %cst_149 : f32 to vector<2x128xf32>
    %425 = arith.addf %424, %423 : vector<2x128xf32>
    %426 = arith.divf %424, %425 : vector<2x128xf32>
    %427 = vector.extract_strided_slice %413 {offsets = [0, 128], sizes = [2, 128], strides = [1, 1]} : vector<2x384xf32> to vector<2x128xf32>
    %428 = vector.extract_strided_slice %418 {offsets = [0, 128], sizes = [2, 128], strides = [1, 1]} : vector<2x384xf32> to vector<2x128xf32>
    %429 = arith.addf %427, %428 : vector<2x128xf32>
    %430 = arith.negf %429 : vector<2x128xf32>
    %431 = math.exp %430 : vector<2x128xf32>
    %cst_150 = arith.constant 1.000000e+00 : f32
    %432 = vector.broadcast %cst_150 : f32 to vector<2x128xf32>
    %433 = arith.addf %432, %431 : vector<2x128xf32>
    %434 = arith.divf %432, %433 : vector<2x128xf32>
    %435 = vector.extract_strided_slice %413 {offsets = [0, 256], sizes = [2, 128], strides = [1, 1]} : vector<2x384xf32> to vector<2x128xf32>
    %436 = vector.extract_strided_slice %418 {offsets = [0, 256], sizes = [2, 128], strides = [1, 1]} : vector<2x384xf32> to vector<2x128xf32>
    %437 = arith.mulf %426, %436 : vector<2x128xf32>
    %438 = arith.addf %435, %437 : vector<2x128xf32>
    %439 = math.tanh %438 : vector<2x128xf32>
    %cst_151 = arith.constant 1.000000e+00 : f32
    %440 = vector.broadcast %cst_151 : f32 to vector<2x128xf32>
    %441 = arith.subf %440, %434 : vector<2x128xf32>
    %442 = arith.mulf %441, %439 : vector<2x128xf32>
    %443 = arith.mulf %434, %370 : vector<2x128xf32>
    %444 = arith.addf %442, %443 : vector<2x128xf32>
    %445 = arith.index_cast %c5_i32 : i32 to index
    %c0_152 = arith.constant 0 : index
    %c0_153 = arith.constant 0 : index
    %446 = vector.load %arg10[%445, %c0_152, %c0_153] : memref<8x2x128xf32, #tpu.memory_space<vmem>>, vector<1x2x128xf32>
    %447 = vector.shape_cast %446 : vector<1x2x128xf32> to vector<2x128xf32>
    %448 = vector.shape_cast %444 : vector<2x128xf32> to vector<1x2x128xf32>
    tpu.vector_store %arg10[%445, %c0_152, %c0_153], %448 {strides = array<i32>} : memref<8x2x128xf32, #tpu.memory_space<vmem>>, vector<1x2x128xf32>,
    %c6_i32 = arith.constant 6 : i32
    %449 = arith.index_cast %c6_i32 : i32 to index
    %c0_154 = arith.constant 0 : index
    %c0_155 = arith.constant 0 : index
    %450 = vector.load %arg1[%449, %c0_154, %c0_155] : memref<8x2x384xf32, #tpu.memory_space<vmem>>, vector<1x2x384xf32>
    %451 = vector.shape_cast %450 : vector<1x2x384xf32> to vector<2x384xf32>
    %c0_156 = arith.constant 0 : index
    %c0_157 = arith.constant 0 : index
    %452 = vector.load %arg2[%c0_156, %c0_157] : memref<128x384xf32, #tpu.memory_space<vmem>>, vector<128x384xf32>
    %cst_158 = arith.constant dense<0.000000e+00> : vector<2x384xf32>
    %453 = tpu.matmul %408, %452, %cst_158 {dimension_numbers = #tpu.dot_dimension_numbers<[1], [0], [0], [1], [0, 0, 1, 1], [], []>} : vector<2x128xf32>, vector<128x384xf32>, vector<2x384xf32> -> vector<2x384xf32>
    %c0_159 = arith.constant 0 : index
    %c0_160 = arith.constant 0 : index
    %454 = vector.load %arg3[%c0_159, %c0_160] : memref<1x384xf32, #tpu.memory_space<vmem>>, vector<1x384xf32>
    %455 = vector.broadcast %454 : vector<1x384xf32> to vector<2x384xf32>
    %456 = arith.addf %453, %455 : vector<2x384xf32>
    %457 = vector.extract_strided_slice %451 {offsets = [0, 0], sizes = [2, 128], strides = [1, 1]} : vector<2x384xf32> to vector<2x128xf32>
    %458 = vector.extract_strided_slice %456 {offsets = [0, 0], sizes = [2, 128], strides = [1, 1]} : vector<2x384xf32> to vector<2x128xf32>
    %459 = arith.addf %457, %458 : vector<2x128xf32>
    %460 = arith.negf %459 : vector<2x128xf32>
    %461 = math.exp %460 : vector<2x128xf32>
    %cst_161 = arith.constant 1.000000e+00 : f32
    %462 = vector.broadcast %cst_161 : f32 to vector<2x128xf32>
    %463 = arith.addf %462, %461 : vector<2x128xf32>
    %464 = arith.divf %462, %463 : vector<2x128xf32>
    %465 = vector.extract_strided_slice %451 {offsets = [0, 128], sizes = [2, 128], strides = [1, 1]} : vector<2x384xf32> to vector<2x128xf32>
    %466 = vector.extract_strided_slice %456 {offsets = [0, 128], sizes = [2, 128], strides = [1, 1]} : vector<2x384xf32> to vector<2x128xf32>
    %467 = arith.addf %465, %466 : vector<2x128xf32>
    %468 = arith.negf %467 : vector<2x128xf32>
    %469 = math.exp %468 : vector<2x128xf32>
    %cst_162 = arith.constant 1.000000e+00 : f32
    %470 = vector.broadcast %cst_162 : f32 to vector<2x128xf32>
    %471 = arith.addf %470, %469 : vector<2x128xf32>
    %472 = arith.divf %470, %471 : vector<2x128xf32>
    %473 = vector.extract_strided_slice %451 {offsets = [0, 256], sizes = [2, 128], strides = [1, 1]} : vector<2x384xf32> to vector<2x128xf32>
    %474 = vector.extract_strided_slice %456 {offsets = [0, 256], sizes = [2, 128], strides = [1, 1]} : vector<2x384xf32> to vector<2x128xf32>
    %475 = arith.mulf %464, %474 : vector<2x128xf32>
    %476 = arith.addf %473, %475 : vector<2x128xf32>
    %477 = math.tanh %476 : vector<2x128xf32>
    %cst_163 = arith.constant 1.000000e+00 : f32
    %478 = vector.broadcast %cst_163 : f32 to vector<2x128xf32>
    %479 = arith.subf %478, %472 : vector<2x128xf32>
    %480 = arith.mulf %479, %477 : vector<2x128xf32>
    %481 = arith.mulf %472, %408 : vector<2x128xf32>
    %482 = arith.addf %480, %481 : vector<2x128xf32>
    %c0_164 = arith.constant 0 : index
    %c0_165 = arith.constant 0 : index
    %483 = vector.load %arg4[%c0_164, %c0_165] : memref<128x384xf32, #tpu.memory_space<vmem>>, vector<128x384xf32>
    %cst_166 = arith.constant dense<0.000000e+00> : vector<2x384xf32>
    %484 = tpu.matmul %482, %483, %cst_166 {dimension_numbers = #tpu.dot_dimension_numbers<[1], [0], [0], [1], [0, 0, 1, 1], [], []>} : vector<2x128xf32>, vector<128x384xf32>, vector<2x384xf32> -> vector<2x384xf32>
    %c0_167 = arith.constant 0 : index
    %c0_168 = arith.constant 0 : index
    %485 = vector.load %arg5[%c0_167, %c0_168] : memref<1x384xf32, #tpu.memory_space<vmem>>, vector<1x384xf32>
    %486 = vector.broadcast %485 : vector<1x384xf32> to vector<2x384xf32>
    %487 = arith.addf %484, %486 : vector<2x384xf32>
    %c0_169 = arith.constant 0 : index
    %c0_170 = arith.constant 0 : index
    %488 = vector.load %arg6[%c0_169, %c0_170] : memref<128x384xf32, #tpu.memory_space<vmem>>, vector<128x384xf32>
    %cst_171 = arith.constant dense<0.000000e+00> : vector<2x384xf32>
    %489 = tpu.matmul %444, %488, %cst_171 {dimension_numbers = #tpu.dot_dimension_numbers<[1], [0], [0], [1], [0, 0, 1, 1], [], []>} : vector<2x128xf32>, vector<128x384xf32>, vector<2x384xf32> -> vector<2x384xf32>
    %c0_172 = arith.constant 0 : index
    %c0_173 = arith.constant 0 : index
    %490 = vector.load %arg7[%c0_172, %c0_173] : memref<1x384xf32, #tpu.memory_space<vmem>>, vector<1x384xf32>
    %491 = vector.broadcast %490 : vector<1x384xf32> to vector<2x384xf32>
    %492 = arith.addf %489, %491 : vector<2x384xf32>
    %493 = vector.extract_strided_slice %487 {offsets = [0, 0], sizes = [2, 128], strides = [1, 1]} : vector<2x384xf32> to vector<2x128xf32>
    %494 = vector.extract_strided_slice %492 {offsets = [0, 0], sizes = [2, 128], strides = [1, 1]} : vector<2x384xf32> to vector<2x128xf32>
    %495 = arith.addf %493, %494 : vector<2x128xf32>
    %496 = arith.negf %495 : vector<2x128xf32>
    %497 = math.exp %496 : vector<2x128xf32>
    %cst_174 = arith.constant 1.000000e+00 : f32
    %498 = vector.broadcast %cst_174 : f32 to vector<2x128xf32>
    %499 = arith.addf %498, %497 : vector<2x128xf32>
    %500 = arith.divf %498, %499 : vector<2x128xf32>
    %501 = vector.extract_strided_slice %487 {offsets = [0, 128], sizes = [2, 128], strides = [1, 1]} : vector<2x384xf32> to vector<2x128xf32>
    %502 = vector.extract_strided_slice %492 {offsets = [0, 128], sizes = [2, 128], strides = [1, 1]} : vector<2x384xf32> to vector<2x128xf32>
    %503 = arith.addf %501, %502 : vector<2x128xf32>
    %504 = arith.negf %503 : vector<2x128xf32>
    %505 = math.exp %504 : vector<2x128xf32>
    %cst_175 = arith.constant 1.000000e+00 : f32
    %506 = vector.broadcast %cst_175 : f32 to vector<2x128xf32>
    %507 = arith.addf %506, %505 : vector<2x128xf32>
    %508 = arith.divf %506, %507 : vector<2x128xf32>
    %509 = vector.extract_strided_slice %487 {offsets = [0, 256], sizes = [2, 128], strides = [1, 1]} : vector<2x384xf32> to vector<2x128xf32>
    %510 = vector.extract_strided_slice %492 {offsets = [0, 256], sizes = [2, 128], strides = [1, 1]} : vector<2x384xf32> to vector<2x128xf32>
    %511 = arith.mulf %500, %510 : vector<2x128xf32>
    %512 = arith.addf %509, %511 : vector<2x128xf32>
    %513 = math.tanh %512 : vector<2x128xf32>
    %cst_176 = arith.constant 1.000000e+00 : f32
    %514 = vector.broadcast %cst_176 : f32 to vector<2x128xf32>
    %515 = arith.subf %514, %508 : vector<2x128xf32>
    %516 = arith.mulf %515, %513 : vector<2x128xf32>
    %517 = arith.mulf %508, %444 : vector<2x128xf32>
    %518 = arith.addf %516, %517 : vector<2x128xf32>
    %519 = arith.index_cast %c6_i32 : i32 to index
    %c0_177 = arith.constant 0 : index
    %c0_178 = arith.constant 0 : index
    %520 = vector.load %arg10[%519, %c0_177, %c0_178] : memref<8x2x128xf32, #tpu.memory_space<vmem>>, vector<1x2x128xf32>
    %521 = vector.shape_cast %520 : vector<1x2x128xf32> to vector<2x128xf32>
    %522 = vector.shape_cast %518 : vector<2x128xf32> to vector<1x2x128xf32>
    tpu.vector_store %arg10[%519, %c0_177, %c0_178], %522 {strides = array<i32>} : memref<8x2x128xf32, #tpu.memory_space<vmem>>, vector<1x2x128xf32>,
    %c7_i32 = arith.constant 7 : i32
    %523 = arith.index_cast %c7_i32 : i32 to index
    %c0_179 = arith.constant 0 : index
    %c0_180 = arith.constant 0 : index
    %524 = vector.load %arg1[%523, %c0_179, %c0_180] : memref<8x2x384xf32, #tpu.memory_space<vmem>>, vector<1x2x384xf32>
    %525 = vector.shape_cast %524 : vector<1x2x384xf32> to vector<2x384xf32>
    %c0_181 = arith.constant 0 : index
    %c0_182 = arith.constant 0 : index
    %526 = vector.load %arg2[%c0_181, %c0_182] : memref<128x384xf32, #tpu.memory_space<vmem>>, vector<128x384xf32>
    %cst_183 = arith.constant dense<0.000000e+00> : vector<2x384xf32>
    %527 = tpu.matmul %482, %526, %cst_183 {dimension_numbers = #tpu.dot_dimension_numbers<[1], [0], [0], [1], [0, 0, 1, 1], [], []>} : vector<2x128xf32>, vector<128x384xf32>, vector<2x384xf32> -> vector<2x384xf32>
    %c0_184 = arith.constant 0 : index
    %c0_185 = arith.constant 0 : index
    %528 = vector.load %arg3[%c0_184, %c0_185] : memref<1x384xf32, #tpu.memory_space<vmem>>, vector<1x384xf32>
    %529 = vector.broadcast %528 : vector<1x384xf32> to vector<2x384xf32>
    %530 = arith.addf %527, %529 : vector<2x384xf32>
    %531 = vector.extract_strided_slice %525 {offsets = [0, 0], sizes = [2, 128], strides = [1, 1]} : vector<2x384xf32> to vector<2x128xf32>
    %532 = vector.extract_strided_slice %530 {offsets = [0, 0], sizes = [2, 128], strides = [1, 1]} : vector<2x384xf32> to vector<2x128xf32>
    %533 = arith.addf %531, %532 : vector<2x128xf32>
    %534 = arith.negf %533 : vector<2x128xf32>
    %535 = math.exp %534 : vector<2x128xf32>
    %cst_186 = arith.constant 1.000000e+00 : f32
    %536 = vector.broadcast %cst_186 : f32 to vector<2x128xf32>
    %537 = arith.addf %536, %535 : vector<2x128xf32>
    %538 = arith.divf %536, %537 : vector<2x128xf32>
    %539 = vector.extract_strided_slice %525 {offsets = [0, 128], sizes = [2, 128], strides = [1, 1]} : vector<2x384xf32> to vector<2x128xf32>
    %540 = vector.extract_strided_slice %530 {offsets = [0, 128], sizes = [2, 128], strides = [1, 1]} : vector<2x384xf32> to vector<2x128xf32>
    %541 = arith.addf %539, %540 : vector<2x128xf32>
    %542 = arith.negf %541 : vector<2x128xf32>
    %543 = math.exp %542 : vector<2x128xf32>
    %cst_187 = arith.constant 1.000000e+00 : f32
    %544 = vector.broadcast %cst_187 : f32 to vector<2x128xf32>
    %545 = arith.addf %544, %543 : vector<2x128xf32>
    %546 = arith.divf %544, %545 : vector<2x128xf32>
    %547 = vector.extract_strided_slice %525 {offsets = [0, 256], sizes = [2, 128], strides = [1, 1]} : vector<2x384xf32> to vector<2x128xf32>
    %548 = vector.extract_strided_slice %530 {offsets = [0, 256], sizes = [2, 128], strides = [1, 1]} : vector<2x384xf32> to vector<2x128xf32>
    %549 = arith.mulf %538, %548 : vector<2x128xf32>
    %550 = arith.addf %547, %549 : vector<2x128xf32>
    %551 = math.tanh %550 : vector<2x128xf32>
    %cst_188 = arith.constant 1.000000e+00 : f32
    %552 = vector.broadcast %cst_188 : f32 to vector<2x128xf32>
    %553 = arith.subf %552, %546 : vector<2x128xf32>
    %554 = arith.mulf %553, %551 : vector<2x128xf32>
    %555 = arith.mulf %546, %482 : vector<2x128xf32>
    %556 = arith.addf %554, %555 : vector<2x128xf32>
    %c0_189 = arith.constant 0 : index
    %c0_190 = arith.constant 0 : index
    %557 = vector.load %arg4[%c0_189, %c0_190] : memref<128x384xf32, #tpu.memory_space<vmem>>, vector<128x384xf32>
    %cst_191 = arith.constant dense<0.000000e+00> : vector<2x384xf32>
    %558 = tpu.matmul %556, %557, %cst_191 {dimension_numbers = #tpu.dot_dimension_numbers<[1], [0], [0], [1], [0, 0, 1, 1], [], []>} : vector<2x128xf32>, vector<128x384xf32>, vector<2x384xf32> -> vector<2x384xf32>
    %c0_192 = arith.constant 0 : index
    %c0_193 = arith.constant 0 : index
    %559 = vector.load %arg5[%c0_192, %c0_193] : memref<1x384xf32, #tpu.memory_space<vmem>>, vector<1x384xf32>
    %560 = vector.broadcast %559 : vector<1x384xf32> to vector<2x384xf32>
    %561 = arith.addf %558, %560 : vector<2x384xf32>
    %c0_194 = arith.constant 0 : index
    %c0_195 = arith.constant 0 : index
    %562 = vector.load %arg6[%c0_194, %c0_195] : memref<128x384xf32, #tpu.memory_space<vmem>>, vector<128x384xf32>
    %cst_196 = arith.constant dense<0.000000e+00> : vector<2x384xf32>
    %563 = tpu.matmul %518, %562, %cst_196 {dimension_numbers = #tpu.dot_dimension_numbers<[1], [0], [0], [1], [0, 0, 1, 1], [], []>} : vector<2x128xf32>, vector<128x384xf32>, vector<2x384xf32> -> vector<2x384xf32>
    %c0_197 = arith.constant 0 : index
    %c0_198 = arith.constant 0 : index
    %564 = vector.load %arg7[%c0_197, %c0_198] : memref<1x384xf32, #tpu.memory_space<vmem>>, vector<1x384xf32>
    %565 = vector.broadcast %564 : vector<1x384xf32> to vector<2x384xf32>
    %566 = arith.addf %563, %565 : vector<2x384xf32>
    %567 = vector.extract_strided_slice %561 {offsets = [0, 0], sizes = [2, 128], strides = [1, 1]} : vector<2x384xf32> to vector<2x128xf32>
    %568 = vector.extract_strided_slice %566 {offsets = [0, 0], sizes = [2, 128], strides = [1, 1]} : vector<2x384xf32> to vector<2x128xf32>
    %569 = arith.addf %567, %568 : vector<2x128xf32>
    %570 = arith.negf %569 : vector<2x128xf32>
    %571 = math.exp %570 : vector<2x128xf32>
    %cst_199 = arith.constant 1.000000e+00 : f32
    %572 = vector.broadcast %cst_199 : f32 to vector<2x128xf32>
    %573 = arith.addf %572, %571 : vector<2x128xf32>
    %574 = arith.divf %572, %573 : vector<2x128xf32>
    %575 = vector.extract_strided_slice %561 {offsets = [0, 128], sizes = [2, 128], strides = [1, 1]} : vector<2x384xf32> to vector<2x128xf32>
    %576 = vector.extract_strided_slice %566 {offsets = [0, 128], sizes = [2, 128], strides = [1, 1]} : vector<2x384xf32> to vector<2x128xf32>
    %577 = arith.addf %575, %576 : vector<2x128xf32>
    %578 = arith.negf %577 : vector<2x128xf32>
    %579 = math.exp %578 : vector<2x128xf32>
    %cst_200 = arith.constant 1.000000e+00 : f32
    %580 = vector.broadcast %cst_200 : f32 to vector<2x128xf32>
    %581 = arith.addf %580, %579 : vector<2x128xf32>
    %582 = arith.divf %580, %581 : vector<2x128xf32>
    %583 = vector.extract_strided_slice %561 {offsets = [0, 256], sizes = [2, 128], strides = [1, 1]} : vector<2x384xf32> to vector<2x128xf32>
    %584 = vector.extract_strided_slice %566 {offsets = [0, 256], sizes = [2, 128], strides = [1, 1]} : vector<2x384xf32> to vector<2x128xf32>
    %585 = arith.mulf %574, %584 : vector<2x128xf32>
    %586 = arith.addf %583, %585 : vector<2x128xf32>
    %587 = math.tanh %586 : vector<2x128xf32>
    %cst_201 = arith.constant 1.000000e+00 : f32
    %588 = vector.broadcast %cst_201 : f32 to vector<2x128xf32>
    %589 = arith.subf %588, %582 : vector<2x128xf32>
    %590 = arith.mulf %589, %587 : vector<2x128xf32>
    %591 = arith.mulf %582, %518 : vector<2x128xf32>
    %592 = arith.addf %590, %591 : vector<2x128xf32>
    %593 = arith.index_cast %c7_i32 : i32 to index
    %c0_202 = arith.constant 0 : index
    %c0_203 = arith.constant 0 : index
    %594 = vector.load %arg10[%593, %c0_202, %c0_203] : memref<8x2x128xf32, #tpu.memory_space<vmem>>, vector<1x2x128xf32>
    %595 = vector.shape_cast %594 : vector<1x2x128xf32> to vector<2x128xf32>
    %596 = vector.shape_cast %592 : vector<2x128xf32> to vector<1x2x128xf32>
    tpu.vector_store %arg10[%593, %c0_202, %c0_203], %596 {strides = array<i32>} : memref<8x2x128xf32, #tpu.memory_space<vmem>>, vector<1x2x128xf32>,
    %c8_i32 = arith.constant 8 : i32
    %c0_204 = arith.constant 0 : index
    %c0_205 = arith.constant 0 : index
    %597 = vector.load %arg13[%c0_204, %c0_205] : memref<2x128xf32, #tpu.memory_space<vmem>>, vector<2x128xf32>
    tpu.vector_store %arg13[%c0_204, %c0_205], %556 {strides = array<i32>} : memref<2x128xf32, #tpu.memory_space<vmem>>, vector<2x128xf32>,
    %c0_206 = arith.constant 0 : index
    %c0_207 = arith.constant 0 : index
    %598 = vector.load %arg14[%c0_206, %c0_207] : memref<2x128xf32, #tpu.memory_space<vmem>>, vector<2x128xf32>
    tpu.vector_store %arg14[%c0_206, %c0_207], %592 {strides = array<i32>} : memref<2x128xf32, #tpu.memory_space<vmem>>, vector<2x128xf32>,
    %c2_i32_208 = arith.constant 2 : i32
    %599 = arith.cmpi eq, %arg0, %c2_i32_208 : i32
    %600 = arith.extui %599 : i1 to i32
    %c0_i32_209 = arith.constant 0 : i32
    %601 = arith.cmpi ne, %600, %c0_i32_209 : i32
    scf.if %601 {
      %c0_210 = arith.constant 0 : index
      %c0_211 = arith.constant 0 : index
      %602 = vector.load %arg11[%c0_210, %c0_211] : memref<2x128xf32, #tpu.memory_space<vmem>>, vector<2x128xf32>
      tpu.vector_store %arg11[%c0_210, %c0_211], %556 {strides = array<i32>} : memref<2x128xf32, #tpu.memory_space<vmem>>, vector<2x128xf32>,
      %c0_212 = arith.constant 0 : index
      %c0_213 = arith.constant 0 : index
      %603 = vector.load %arg12[%c0_212, %c0_213] : memref<2x128xf32, #tpu.memory_space<vmem>>, vector<2x128xf32>
      tpu.vector_store %arg12[%c0_212, %c0_213], %592 {strides = array<i32>} : memref<2x128xf32, #tpu.memory_space<vmem>>, vector<2x128xf32>,
    } else {
    }
    return
  }
  func.func @transform_0(%arg0: i32) -> (i32, i32, i32) {
    %c0_i32 = arith.constant 0 : i32
    %c0_i32_0 = arith.constant 0 : i32
    %c0_i32_1 = arith.constant 0 : i32
    return %arg0, %c0_i32, %c0_i32_0 : i32, i32, i32
  }
  func.func @transform_1(%arg0: i32) -> (i32, i32) {
    %c0_i32 = arith.constant 0 : i32
    %c0_i32_0 = arith.constant 0 : i32
    %c0_i32_1 = arith.constant 0 : i32
    return %c0_i32, %c0_i32_0 : i32, i32
  }
  func.func @transform_2(%arg0: i32) -> (i32, i32) {
    %c0_i32 = arith.constant 0 : i32
    %c0_i32_0 = arith.constant 0 : i32
    %c0_i32_1 = arith.constant 0 : i32
    return %c0_i32, %c0_i32_0 : i32, i32
  }
  func.func @transform_3(%arg0: i32) -> (i32, i32) {
    %c0_i32 = arith.constant 0 : i32
    %c0_i32_0 = arith.constant 0 : i32
    %c0_i32_1 = arith.constant 0 : i32
    return %c0_i32, %c0_i32_0 : i32, i32
  }
  func.func @transform_4(%arg0: i32) -> (i32, i32) {
    %c0_i32 = arith.constant 0 : i32
    %c0_i32_0 = arith.constant 0 : i32
    %c0_i32_1 = arith.constant 0 : i32
    return %c0_i32, %c0_i32_0 : i32, i32
  }
  func.func @transform_5(%arg0: i32) -> (i32, i32) {
    %c0_i32 = arith.constant 0 : i32
    %c0_i32_0 = arith.constant 0 : i32
    %c0_i32_1 = arith.constant 0 : i32
    return %c0_i32, %c0_i32_0 : i32, i32
  }
  func.func @transform_6(%arg0: i32) -> (i32, i32) {
    %c0_i32 = arith.constant 0 : i32
    %c0_i32_0 = arith.constant 0 : i32
    %c0_i32_1 = arith.constant 0 : i32
    return %c0_i32, %c0_i32_0 : i32, i32
  }
  func.func @transform_7(%arg0: i32) -> (i32, i32) {
    %c0_i32 = arith.constant 0 : i32
    %c0_i32_0 = arith.constant 0 : i32
    %c0_i32_1 = arith.constant 0 : i32
    return %c0_i32, %c0_i32_0 : i32, i32
  }
  func.func @transform_8(%arg0: i32) -> (i32, i32) {
    %c0_i32 = arith.constant 0 : i32
    %c0_i32_0 = arith.constant 0 : i32
    %c0_i32_1 = arith.constant 0 : i32
    return %c0_i32, %c0_i32_0 : i32, i32
  }
  func.func @transform_9(%arg0: i32) -> (i32, i32, i32) {
    %c0_i32 = arith.constant 0 : i32
    %c0_i32_0 = arith.constant 0 : i32
    %c0_i32_1 = arith.constant 0 : i32
    return %arg0, %c0_i32, %c0_i32_0 : i32, i32, i32
  }
  func.func @transform_10(%arg0: i32) -> (i32, i32) {
    %c0_i32 = arith.constant 0 : i32
    %c0_i32_0 = arith.constant 0 : i32
    %c0_i32_1 = arith.constant 0 : i32
    return %c0_i32, %c0_i32_0 : i32, i32
  }
  func.func @transform_11(%arg0: i32) -> (i32, i32) {
    %c0_i32 = arith.constant 0 : i32
    %c0_i32_0 = arith.constant 0 : i32
    %c0_i32_1 = arith.constant 0 : i32
    return %c0_i32, %c0_i32_0 : i32, i32
  }
}

</mosaic_0001>

<llo_original>
// kernel: _lambda_.3
$region0: #{_lambda_.3}
  #allocation0 [shape = 'u32[]', space=smem, size = 0x4, offset = 0x4, fixed_abs, tag = 'smem constant byte address 0x4 - core index']
  #allocation1 [shape = 'u32[144,128]{1,0:T(1,128)}', space=vmem, size = 0x12000, scoped, tag = 'internal scratch']
  %s0 = inlined_call_operand.hbm [shape: f32[48,128], index: 0, kind: input, shape index: {}]
  %s1 = inlined_call_operand.hbm [shape: f32[1,128], index: 1, kind: input, shape index: {}]
  %s2 = inlined_call_operand.hbm [shape: f32[1,128], index: 2, kind: input, shape index: {}]
  %s3 = inlined_call_operand.hbm [shape: f32[128,256], index: 3, kind: input, shape index: {}]
  %s4 = inlined_call_operand.hbm [shape: f32[1,256], index: 4, kind: input, shape index: {}]
  %s5 = inlined_call_operand.hbm [shape: f32[48,256], index: 5, kind: output, shape index: {}]
  %s6 = sld [smem:[#allocation0]]
  $region73: #{_lambda_.3} parent=0
    _
  %s8 = ssub.s32 1, %s6
  %s9 = scalar_select 0, %s8, %s6
  $region1: #{_lambda_.3} parent=0
    #allocation2 [shape = 'u8[16384]{0}', space=vmem, size = 0x4000, scoped, tag = 'input window, operand 0']
    #allocation3 [shape = 's32[2]{0}', space=sflag, size = 0x8, scoped, tag = 'scoped memory for _lambda_.3']
    #allocation4 [shape = 's32[2]{0}', space=sflag, size = 0x8, scoped, tag = 'scoped memory for _lambda_.3']
    #allocation5 [shape = 'u8[512]{0}', space=vmem, size = 0x400, scoped, tag = 'input window, operand 1, single buffered']
    #allocation6 [shape = 's32[1]{0}', space=sflag, size = 0x4, scoped, tag = 'scoped memory for _lambda_.3']
    #allocation7 [shape = 'u8[512]{0}', space=vmem, size = 0x400, scoped, tag = 'input window, operand 2, single buffered']
    #allocation8 [shape = 'u8[131072]{0}', space=vmem, size = 0x20000, scoped, tag = 'input window, operand 3, single buffered']
    #allocation9 [shape = 's32[1]{0}', space=sflag, size = 0x4, scoped, tag = 'scoped memory for _lambda_.3']
    #allocation10 [shape = 'u8[1024]{0}', space=vmem, size = 0x400, scoped, tag = 'input window, operand 4, single buffered']
    #allocation11 [shape = 'u8[32768]{0}', space=vmem, size = 0x8000, scoped, tag = 'output window, operand 0']
    %10 = vsyncpa [#allocation3], 0
    %s11 = scalar_lea.sflag [#allocation3], 1
    %12 = vsyncpa %s11, 0
    %13 = vsyncpa [#allocation6], 0
    %14 = vsyncpa [#allocation9], 0
    %15 = vsyncpa [#allocation4], 0
    %s16 = scalar_lea.sflag [#allocation4], 1
    %17 = vsyncpa %s16, 0
    loop: start=0, step=1, limit=5
    $region2: #{_lambda_.3} parent=1 // loop_pre_header
      _
    $region3: #{_lambda_.3} parent=1 // loop_header
      %s19 = sphi 0, %s23
      %p20 = scmp.ge.s32.totalorder %s19, 5
      %s26 = sphi 0, %s38
      %s27 = sphi 0, %s34
      %s28 = sphi 0, %s26
      %s29 = sphi 0, %s27
      %s30 = sphi 0, %s28
      %s31 = sphi 0, %s29
      %s41 = sphi 0, %s43
      %s44 = sphi 0, %s41
      %s45 = sphi 0, %s44
      %s61 = sphi 0, %s45
      %s65 = sphi 0, %s65
      %s67 = sphi 0, %s65
      %s68 = sphi 0, %s67
      %s82 = sphi 0, %s68
      %s86 = sphi 0, %s86
      %s88 = sphi 0, %s86
      %s89 = sphi 0, %s88
      %s103 = sphi 0, %s89
      %s109 = sphi 0, %s111
      %s112 = sphi 0, %s109
      %s113 = sphi 0, %s112
      %s129 = sphi 0, %s113
      %s135 = sphi 0, %s137
      %s138 = sphi 0, %s135
      %s139 = sphi 0, %s138
      %s155 = sphi 0, %s139
      %s163 = sphi 0, %s165
      %s166 = sphi 0, %s163
      %s167 = sphi 0, %s166
      %s183 = sphi 0, %s167
    $region4: #{_lambda_.3} parent=1 // loop_header_branch
      %22 = sbr.rel (%p20) target = $region8
    $region5: #{_lambda_.3} parent=1 // loop_body
      %s24 = ssub.s32 %s19, 1
      %s25 = ssub.s32 %s19, 2
      %s32 = sadd.s32 1, %s27
      %p33 = scmp.ge.s32.totalorder %s32, 1
      %s34 = scalar_select %p33, 0, %s32
      %s35 = sadd.s32 1, %s26
      %s36 = scalar_select %p33, %s35, %s26
      %p37 = scmp.ge.s32.totalorder %s36, 3
      %s38 = scalar_select %p37, 0, %s36
      %s39 = ssub.s32 %s26, %s38
      %p40 = scmp.eq.s32.totalorder %s39, 0
      %s42 = sadd.s32 %s41, 1
      %s43 = scalar_select %p40, %s41, %s42
      %p46 = pneg %p40
      %p47 = scmp.eq.s32.totalorder %s19, 2
      %p48 = por %p46, %p47
      %p49 = scmp.ne.s32.totalorder %s41, %s44
      %p50 = scmp.eq.s32.totalorder %s19, 0
      %p51 = por %p49, %p50
      %p52 = scmp.ne.s32.totalorder %s41, %s44
      %p53 = scmp.eq.s32.totalorder %s24, 2
      %p54 = por %p52, %p53
      %p55 = scmp.ne.s32.totalorder %s44, %s45
      %p56 = scmp.eq.s32.totalorder %s24, 0
      %p57 = por %p55, %p56
      %p58 = scmp.ne.s32.totalorder %s44, %s45
      %p59 = scmp.eq.s32.totalorder %s25, 2
      %p60 = por %p58, %p59
      %p62 = scmp.ne.s32.totalorder %s45, %s61
      %p63 = scmp.eq.s32.totalorder %s25, 0
      %p64 = por %p62, %p63
      %s66 = sadd.s32 %s65, 1
      %p69 = scmp.eq.s32.totalorder %s19, 2
      %p70 = scmp.ne.s32.totalorder %s65, %s67
      %p71 = scmp.eq.s32.totalorder %s19, 0
      %p72 = por %p70, %p71
      %p73 = scmp.ne.s32.totalorder %s65, %s67
      %p74 = scmp.eq.s32.totalorder %s24, 2
      %p75 = por %p73, %p74
      %p76 = scmp.ne.s32.totalorder %s67, %s68
      %p77 = scmp.eq.s32.totalorder %s24, 0
      %p78 = por %p76, %p77
      %p79 = scmp.ne.s32.totalorder %s67, %s68
      %p80 = scmp.eq.s32.totalorder %s25, 2
      %p81 = por %p79, %p80
      %p83 = scmp.ne.s32.totalorder %s68, %s82
      %p84 = scmp.eq.s32.totalorder %s25, 0
      %p85 = por %p83, %p84
      %s87 = sadd.s32 %s86, 1
      %p90 = scmp.eq.s32.totalorder %s19, 2
      %p91 = scmp.ne.s32.totalorder %s86, %s88
      %p92 = scmp.eq.s32.totalorder %s19, 0
      %p93 = por %p91, %p92
      %p94 = scmp.ne.s32.totalorder %s86, %s88
      %p95 = scmp.eq.s32.totalorder %s24, 2
      %p96 = por %p94, %p95
      %p97 = scmp.ne.s32.totalorder %s88, %s89
      %p98 = scmp.eq.s32.totalorder %s24, 0
      %p99 = por %p97, %p98
      %p100 = scmp.ne.s32.totalorder %s88, %s89
      %p101 = scmp.eq.s32.totalorder %s25, 2
      %p102 = por %p100, %p101
      %p104 = scmp.ne.s32.totalorder %s89, %s103
      %p105 = scmp.eq.s32.totalorder %s25, 0
      %p106 = por %p104, %p105
      %s107 = ssub.s32 %s27, %s34
      %p108 = scmp.eq.s32.totalorder %s107, 0
      %s110 = sadd.s32 %s109, 1
      %s111 = scalar_select %p108, %s109, %s110
      %p114 = pneg %p108
      %p115 = scmp.eq.s32.totalorder %s19, 2
      %p116 = por %p114, %p115
      %p117 = scmp.ne.s32.totalorder %s109, %s112
      %p118 = scmp.eq.s32.totalorder %s19, 0
      %p119 = por %p117, %p118
      %p120 = scmp.ne.s32.totalorder %s109, %s112
      %p121 = scmp.eq.s32.totalorder %s24, 2
      %p122 = por %p120, %p121
      %p123 = scmp.ne.s32.totalorder %s112, %s113
      %p124 = scmp.eq.s32.totalorder %s24, 0
      %p125 = por %p123, %p124
      %p126 = scmp.ne.s32.totalorder %s112, %s113
      %p127 = scmp.eq.s32.totalorder %s25, 2
      %p128 = por %p126, %p127
      %p130 = scmp.ne.s32.totalorder %s113, %s129
      %p131 = scmp.eq.s32.totalorder %s25, 0
      %p132 = por %p130, %p131
      %s133 = ssub.s32 %s27, %s34
      %p134 = scmp.eq.s32.totalorder %s133, 0
      %s136 = sadd.s32 %s135, 1
      %s137 = scalar_select %p134, %s135, %s136
      %p140 = pneg %p134
      %p141 = scmp.eq.s32.totalorder %s19, 2
      %p142 = por %p140, %p141
      %p143 = scmp.ne.s32.totalorder %s135, %s138
      %p144 = scmp.eq.s32.totalorder %s19, 0
      %p145 = por %p143, %p144
      %p146 = scmp.ne.s32.totalorder %s135, %s138
      %p147 = scmp.eq.s32.totalorder %s24, 2
      %p148 = por %p146, %p147
      %p149 = scmp.ne.s32.totalorder %s138, %s139
      %p150 = scmp.eq.s32.totalorder %s24, 0
      %p151 = por %p149, %p150
      %p152 = scmp.ne.s32.totalorder %s138, %s139
      %p153 = scmp.eq.s32.totalorder %s25, 2
      %p154 = por %p152, %p153
      %p156 = scmp.ne.s32.totalorder %s139, %s155
      %p157 = scmp.eq.s32.totalorder %s25, 0
      %p158 = por %p156, %p157
      %s159 = ssub.s32 %s26, %s38
      %s160 = ssub.s32 %s27, %s34
      %s161 = sor.u32 %s159, %s160
      %p162 = scmp.eq.s32.totalorder %s161, 0
      %s164 = sadd.s32 %s163, 1
      %s165 = scalar_select %p162, %s163, %s164
      %p168 = pneg %p162
      %p169 = scmp.eq.s32.totalorder %s19, 2
      %p170 = por %p168, %p169
      %p171 = scmp.ne.s32.totalorder %s163, %s166
      %p172 = scmp.eq.s32.totalorder %s19, 0
      %p173 = por %p171, %p172
      %p174 = scmp.ne.s32.totalorder %s163, %s166
      %p175 = scmp.eq.s32.totalorder %s24, 2
      %p176 = por %p174, %p175
      %p177 = scmp.ne.s32.totalorder %s166, %s167
      %p178 = scmp.eq.s32.totalorder %s24, 0
      %p179 = por %p177, %p178
      %p180 = scmp.ne.s32.totalorder %s166, %s167
      %p181 = scmp.eq.s32.totalorder %s25, 2
      %p182 = por %p180, %p181
      %p184 = scmp.ne.s32.totalorder %s167, %s183
      %p185 = scmp.eq.s32.totalorder %s25, 0
      %p186 = por %p184, %p185
      %p187 = scmp.le.s32.totalorder 1, %s19
      %p188 = scmp.lt.s32.totalorder %s19, 4
      %p189 = pnand %p187, %p188
      %p190 = pneg %p189
      // Predicated region
      $region9: #{_lambda_.3} parent=5 // pred_check
        _
      $region10: #{_lambda_.3} parent=5 // pred_check_branch
        %192 = sbr.rel (%p189) target = $region12
      $region11: #{_lambda_.3} parent=5 // pred_region
        %s193 = ssub.s32 %s19, 1
        // Predicated region
        $region13: #{_lambda_.3} parent=11 // pred_check
          %p194 = pneg %p78
        $region14: #{_lambda_.3} parent=11 // pred_check_branch
          %196 = sbr.rel (%p194) target = $region16
        $region15: #{_lambda_.3} parent=11 // pred_region
          %s198 = ssub.s32 16, 16
          %199 = vsyncadd [#allocation6], %s198
          %s201 = sshll.u32 [#allocation5], 4
          %s202 = int_to_ptr.vmem [resolvable:$true] %s201
          %204 = dma.hbm_to_vmem [thread:$0]  %s1, 16, %s202, [#allocation6]
        $region16: #{_lambda_.3} parent=11 // pred_fallthru
          _
        // Predicated region
        $region17: #{_lambda_.3} parent=11 // pred_check
          %p205 = pneg %p99
        $region18: #{_lambda_.3} parent=11 // pred_check_branch
          %207 = sbr.rel (%p205) target = $region20
        $region19: #{_lambda_.3} parent=11 // pred_region
          %s209 = ssub.s32 16, 16
          %210 = vsyncadd [#allocation6], %s209
          %s212 = sshll.u32 [#allocation7], 4
          %s213 = int_to_ptr.vmem [resolvable:$true] %s212
          %215 = dma.hbm_to_vmem [thread:$0]  %s2, 16, %s213, [#allocation6]
        $region20: #{_lambda_.3} parent=11 // pred_fallthru
          _
        // Predicated region
        $region21: #{_lambda_.3} parent=11 // pred_check
          %p216 = pneg %p125
        $region22: #{_lambda_.3} parent=11 // pred_check_branch
          %218 = sbr.rel (%p216) target = $region24
        $region23: #{_lambda_.3} parent=11 // pred_region
          %s219 = smul.u32 2, %s29
          %s221 = ssub.s32 4096, 4096
          %222 = vsyncadd [#allocation9], %s221
          %s223 = smul.addr %s219, 128
          %s224 = scalar_lea.hbm %s3, %s223
          %s225 = sshll.u32 [#allocation8], 4
          %s226 = int_to_ptr.vmem [resolvable:$true] %s225
          %231 = dma.hbm_to_vmem [thread:$0]  %s224, 4096, %s226, [#allocation9], 256, 256, 16
        $region24: #{_lambda_.3} parent=11 // pred_fallthru
          _
        // Predicated region
        $region25: #{_lambda_.3} parent=11 // pred_check
          %p232 = pneg %p151
        $region26: #{_lambda_.3} parent=11 // pred_check_branch
          %234 = sbr.rel (%p232) target = $region28
        $region27: #{_lambda_.3} parent=11 // pred_region
          %s235 = smul.u32 2, %s29
          %s237 = ssub.s32 32, 32
          %238 = vsyncadd [#allocation9], %s237
          %s239 = smul.addr %s235, 16
          %s240 = scalar_lea.hbm %s4, %s239
          %s242 = sshll.u32 [#allocation10], 4
          %s243 = int_to_ptr.vmem [resolvable:$true] %s242
          %245 = dma.hbm_to_vmem [thread:$0]  %s240, 32, %s243, [#allocation9]
        $region28: #{_lambda_.3} parent=11 // pred_fallthru
          _
      $region12: #{_lambda_.3} parent=5 // pred_fallthru
        _
      %p246 = scmp.lt.s32.totalorder %s19, 3
      // Predicated region
      $region29: #{_lambda_.3} parent=5 // pred_check
        %p247 = pneg %p246
      $region30: #{_lambda_.3} parent=5 // pred_check_branch
        %249 = sbr.rel (%p247) target = $region32
      $region31: #{_lambda_.3} parent=5 // pred_region
        // Predicated region
        $region33: #{_lambda_.3} parent=31 // pred_check
          %p250 = pneg %p51
        $region34: #{_lambda_.3} parent=31 // pred_check_branch
          %252 = sbr.rel (%p250) target = $region36
        $region35: #{_lambda_.3} parent=31 // pred_region
          %s253 = sand.u32 %s41, 1
          %s254 = scalar_lea.sflag [#allocation3], %s253
          %s255 = sand.u32 %s41, 1
          %s256 = smul.addr %s255, 16
          %s257 = scalar_lea.vmem [#allocation2], %s256
          %s258 = smul.u32 2, %s26
          %s260 = ssub.s32 256, 256
          %261 = vsyncadd %s254, %s260
          %s262 = smul.addr %s258, 128
          %s263 = scalar_lea.hbm %s0, %s262
          %s264 = sshll.u32 %s257, 4
          %s265 = int_to_ptr.vmem [resolvable:$true] %s264
          %270 = dma.hbm_to_vmem [thread:$0]  %s263, 256, %s265, %s254, 128, 128, 8
        $region36: #{_lambda_.3} parent=31 // pred_fallthru
          _
      $region32: #{_lambda_.3} parent=5 // pred_fallthru
        _
      %p271 = scmp.le.s32.totalorder 1, %s19
      %p272 = scmp.lt.s32.totalorder %s19, 4
      %p273 = pnand %p271, %p272
      %p274 = pneg %p273
      // Predicated region
      $region37: #{_lambda_.3} parent=5 // pred_check
        _
      $region38: #{_lambda_.3} parent=5 // pred_check_branch
        %276 = sbr.rel (%p273) target = $region40
      $region39: #{_lambda_.3} parent=5 // pred_region
        %s277 = ssub.s32 %s19, 1
        %s278 = sand.u32 %s44, 1
        %s279 = scalar_lea.sflag [#allocation3], %s278
        %s280 = sand.u32 %s44, 1
        %s281 = smul.addr %s280, 16
        %s282 = scalar_lea.vmem [#allocation2], %s281
        // Predicated region
        $region41: #{_lambda_.3} parent=39 // pred_check
          %p283 = pneg %p57
        $region42: #{_lambda_.3} parent=39 // pred_check_branch
          %285 = sbr.rel (%p283) target = $region44
        $region43: #{_lambda_.3} parent=39 // pred_region
          %286 = dma.done %s279, 256
        $region44: #{_lambda_.3} parent=39 // pred_fallthru
          _
        // Predicated region
        $region45: #{_lambda_.3} parent=39 // pred_check
          %p287 = pneg %p78
        $region46: #{_lambda_.3} parent=39 // pred_check_branch
          %289 = sbr.rel (%p287) target = $region48
        $region47: #{_lambda_.3} parent=39 // pred_region
          %290 = dma.done [#allocation6], 16
        $region48: #{_lambda_.3} parent=39 // pred_fallthru
          _
        // Predicated region
        $region49: #{_lambda_.3} parent=39 // pred_check
          %p291 = pneg %p99
        $region50: #{_lambda_.3} parent=39 // pred_check_branch
          %293 = sbr.rel (%p291) target = $region52
        $region51: #{_lambda_.3} parent=39 // pred_region
          %294 = dma.done [#allocation6], 16
        $region52: #{_lambda_.3} parent=39 // pred_fallthru
          _
        // Predicated region
        $region53: #{_lambda_.3} parent=39 // pred_check
          %p295 = pneg %p125
        $region54: #{_lambda_.3} parent=39 // pred_check_branch
          %297 = sbr.rel (%p295) target = $region56
        $region55: #{_lambda_.3} parent=39 // pred_region
          %298 = dma.done [#allocation9], 4096
        $region56: #{_lambda_.3} parent=39 // pred_fallthru
          _
        // Predicated region
        $region57: #{_lambda_.3} parent=39 // pred_check
          %p299 = pneg %p151
        $region58: #{_lambda_.3} parent=39 // pred_check_branch
          %301 = sbr.rel (%p299) target = $region60
        $region59: #{_lambda_.3} parent=39 // pred_region
          %302 = dma.done [#allocation9], 32
        $region60: #{_lambda_.3} parent=39 // pred_fallthru
          _
        %s303 = sand.u32 %s44, 1
        %s304 = scalar_lea.sflag [#allocation3], %s303
        %s305 = sand.u32 %s44, 1
        %s306 = smul.addr %s305, 16
        %s307 = scalar_lea.vmem [#allocation2], %s306
        %p308 = pneg %p57
        %p309 = pneg %p54
        %p310 = pneg %p78
        %p311 = pneg %p75
        %p312 = pneg %p99
        %p313 = pneg %p96
        %p314 = pneg %p125
        %p315 = pneg %p122
        %p316 = pneg %p151
        %p317 = pneg %p148
        %p318 = pneg %p179
        %p319 = pneg %p176
        %s320 = sand.u32 %s166, 1
        %s321 = scalar_lea.sflag [#allocation4], %s320
        %s322 = sand.u32 %s166, 1
        %s323 = smul.addr %s322, 32
        %s324 = scalar_lea.vmem [#allocation11], %s323
        %s325 = smul.u32 2, %s28
        %s326 = smul.u32 2, %s29
        %s327 = smul.u32 2, %s29
        %s328 = smul.u32 2, %s28
        %s329 = smul.u32 2, %s29
        %v330 = vld [vmem:[%s282] sm:$0xff]
        %v331 = vld [vmem:[%s282 + $0x8] sm:$0xff]
        %332 = vadd.xlane.f32.xlu0 %v330
        %v333 = vpop.xlane.xlu0 %332
        %334 = vadd.xlane.f32.xlu0 %v331
        %v335 = vpop.xlane.xlu0 %334
        %v336 = vrcp.pop 128.0
        %v337 = vmul.f32 %v333, %v336
        %v338 = vmul.f32 %v335, %v336
        %v339 = vsub.f32 %v330, %v337
        %v340 = vsub.f32 %v331, %v338
        %v341 = vmul.f32 %v339, %v339
        %v342 = vmul.f32 %v340, %v340
        %343 = vadd.xlane.f32.xlu0 %v341
        %v344 = vpop.xlane.xlu0 %343
        %345 = vadd.xlane.f32.xlu0 %v342
        %v346 = vpop.xlane.xlu0 %345
        %v347 = vmul.f32 %v344, %v336
        %v348 = vmul.f32 %v346, %v336
        %v349 = vadd.f32 %v347, 1e-05
        %v350 = vadd.f32 %v348, 1e-05
        %v351 = vrsqrt.pop %v349
        %v352 = vrsqrt.pop %v350
        %v353 = vmul.f32 %v339, %v351
        %v354 = vmul.f32 %v340, %v352
        %v355 = vld [vmem:[#allocation5] sm:$0x1]
        %v357 = vlaneseq
        %v358 = vshrl.u32 %v357, 7
        %v359 = vsub.s32 0, %v358
        %v360 = vrot.slane %v355, %v359
        %v362 = vmul.f32 %v353, %v360
        %v363 = vmul.f32 %v354, %v360
        %v364 = vld [vmem:[#allocation7] sm:$0x1]
        %v366 = vlaneseq
        %v367 = vshrl.u32 %v366, 7
        %v368 = vsub.s32 0, %v367
        %v369 = vrot.slane %v364, %v368
        %v371 = vadd.f32 %v362, %v369
        %v372 = vadd.f32 %v363, %v369
        %v373 = vmax.f32 %v371, 0.0
        %v374 = vmax.f32 %v372, 0.0
        %v375 = vld [vmem:[#allocation8] sm:$0xff]
        %v376 = vld [vmem:[#allocation8 + $0x8] sm:$0xff]
        %v377 = vld [vmem:[#allocation8 + $0x10] sm:$0xff]
        %v378 = vld [vmem:[#allocation8 + $0x18] sm:$0xff]
        %v379 = vld [vmem:[#allocation8 + $0x20] sm:$0xff]
        %v380 = vld [vmem:[#allocation8 + $0x28] sm:$0xff]
        %v381 = vld [vmem:[#allocation8 + $0x30] sm:$0xff]
        %v382 = vld [vmem:[#allocation8 + $0x38] sm:$0xff]
        %v383 = vld [vmem:[#allocation8 + $0x40] sm:$0xff]
        %v384 = vld [vmem:[#allocation8 + $0x48] sm:$0xff]
        %v385 = vld [vmem:[#allocation8 + $0x50] sm:$0xff]
        %v386 = vld [vmem:[#allocation8 + $0x58] sm:$0xff]
        %v387 = vld [vmem:[#allocation8 + $0x60] sm:$0xff]
        %v388 = vld [vmem:[#allocation8 + $0x68] sm:$0xff]
        %v389 = vld [vmem:[#allocation8 + $0x70] sm:$0xff]
        %v390 = vld [vmem:[#allocation8 + $0x78] sm:$0xff]
        %v391 = vld [vmem:[#allocation8 + $0x80] sm:$0xff]
        %v392 = vld [vmem:[#allocation8 + $0x88] sm:$0xff]
        %v393 = vld [vmem:[#allocation8 + $0x90] sm:$0xff]
        %v394 = vld [vmem:[#allocation8 + $0x98] sm:$0xff]
        %v395 = vld [vmem:[#allocation8 + $0xa0] sm:$0xff]
        %v396 = vld [vmem:[#allocation8 + $0xa8] sm:$0xff]
        %v397 = vld [vmem:[#allocation8 + $0xb0] sm:$0xff]
        %v398 = vld [vmem:[#allocation8 + $0xb8] sm:$0xff]
        %v399 = vld [vmem:[#allocation8 + $0xc0] sm:$0xff]
        %v400 = vld [vmem:[#allocation8 + $0xc8] sm:$0xff]
        %v401 = vld [vmem:[#allocation8 + $0xd0] sm:$0xff]
        %v402 = vld [vmem:[#allocation8 + $0xd8] sm:$0xff]
        %v403 = vld [vmem:[#allocation8 + $0xe0] sm:$0xff]
        %v404 = vld [vmem:[#allocation8 + $0xe8] sm:$0xff]
        %v405 = vld [vmem:[#allocation8 + $0xf0] sm:$0xff]
        %v406 = vld [vmem:[#allocation8 + $0xf8] sm:$0xff]
        %v407 = vld [vmem:[#allocation10] sm:$0x3]
        %v409 = vlaneseq
        %v410 = vshrl.u32 %v409, 7
        %v411 = vsub.s32 0, %v410
        %v412 = vrot.slane %v407, %v411
        %v413 = vlaneseq
        %v414 = vshrl.u32 %v413, 7
        %v415 = vsub.s32 1, %v414
        %v416 = vrot.slane %v407, %v415
        %419 = vmatprep.subr.mxu0 %v376
        %420 = vmatpush1.msra.mxu0 %v375
        %421 = vmatprep.subr.mxu0 %v378
        %422 = vmatpush1.msra.mxu0 %v377
        %423 = vmatprep.subr.mxu0 %v380
        %424 = vmatpush1.msra.mxu0 %v379
        %425 = vmatprep.subr.mxu0 %v382
        %426 = vmatpush1.msra.mxu0 %v381
        %427 = vmatprep.subr.mxu0 %v384
        %428 = vmatpush1.msra.mxu0 %v383
        %429 = vmatprep.subr.mxu0 %v386
        %430 = vmatpush1.msra.mxu0 %v385
        %431 = vmatprep.subr.mxu0 %v388
        %432 = vmatpush1.msra.mxu0 %v387
        %433 = vmatprep.subr.mxu0 %v390
        %434 = vmatpush1.msra.mxu0 %v389
        %435 = vmatprep.subr.mxu0 %v392
        %436 = vmatpush1.msra.mxu0 %v391
        %437 = vmatprep.subr.mxu0 %v394
        %438 = vmatpush1.msra.mxu0 %v393
        %439 = vmatprep.subr.mxu0 %v396
        %440 = vmatpush1.msra.mxu0 %v395
        %441 = vmatprep.subr.mxu0 %v398
        %442 = vmatpush1.msra.mxu0 %v397
        %443 = vmatprep.subr.mxu0 %v400
        %444 = vmatpush1.msra.mxu0 %v399
        %445 = vmatprep.subr.mxu0 %v402
        %446 = vmatpush1.msra.mxu0 %v401
        %447 = vmatprep.subr.mxu0 %v404
        %448 = vmatpush1.msra.mxu0 %v403
        %449 = vmatprep.subr.mxu0 %v406
        %450 = vmatpush1.msra.mxu0 %v405
        %451 = vmatprep.subr.mxu0 0.0
        %452 = vmatpush1.msra.mxu0 0.0
        %453 = vmatprep.subr.mxu0 0.0
        %454 = vmatpush1.msra.mxu0 0.0
        %455 = vmatprep.subr.mxu0 0.0
        %456 = vmatpush1.msra.mxu0 0.0
        %457 = vmatprep.subr.mxu0 0.0
        %458 = vmatpush1.msra.mxu0 0.0
        %459 = vmatprep.subr.mxu0 0.0
        %460 = vmatpush1.msra.mxu0 0.0
        %461 = vmatprep.subr.mxu0 0.0
        %462 = vmatpush1.msra.mxu0 0.0
        %463 = vmatprep.subr.mxu0 0.0
        %464 = vmatpush1.msra.mxu0 0.0
        %465 = vmatprep.subr.mxu0 0.0
        %466 = vmatpush1.msra.mxu0 0.0
        %467 = vmatprep.subr.mxu0 0.0
        %468 = vmatpush1.msra.mxu0 0.0
        %469 = vmatprep.subr.mxu0 0.0
        %470 = vmatpush1.msra.mxu0 0.0
        %471 = vmatprep.subr.mxu0 0.0
        %472 = vmatpush1.msra.mxu0 0.0
        %473 = vmatprep.subr.mxu0 0.0
        %474 = vmatpush1.msra.mxu0 0.0
        %475 = vmatprep.subr.mxu0 0.0
        %476 = vmatpush1.msra.mxu0 0.0
        %477 = vmatprep.subr.mxu0 0.0
        %478 = vmatpush1.msra.mxu0 0.0
        %479 = vmatprep.subr.mxu0 0.0
        %480 = vmatpush1.msra.mxu0 0.0
        %481 = vmatprep.subr.mxu0 0.0
        %482 = vmatpush1.msra.mxu0 0.0
        %483 = vmatprep.mubr.f32.mxu0 0.0
        %484 = vmatmul.mubr.f32.gmra.mrb[0].mxu0 %v373
        %v485 = vpop.f32.mrb[0].mxu0
        %v486 = vadd.f32 %v412, %v485
        %v487 = vpop.f32.mrb[0].mxu0
        %v488 = vadd.f32 %v416, %v487
        %489 = vmatprep.mubr.f32.mxu0 0.0
        %490 = vmatmul.mubr.f32.gmra.mrb[0].mxu0 %v374
        %v491 = vpop.f32.mrb[0].mxu0
        %v492 = vadd.f32 %v412, %v491
        %v493 = vpop.f32.mrb[0].mxu0
        %v494 = vadd.f32 %v416, %v493
        %495 = vdwg.mxu0
        %496 = vst [vmem:[%s324] sm:$0xff] %v486
        %497 = vst [vmem:[%s324 + $0x8] sm:$0xff] %v488
        %498 = vst [vmem:[%s324 + $0x10] sm:$0xff] %v492
        %499 = vst [vmem:[%s324 + $0x18] sm:$0xff] %v494
        %s500 = sand.u32 %s166, 1
        %s501 = scalar_lea.sflag [#allocation4], %s500
        %s502 = sand.u32 %s166, 1
        %s503 = smul.addr %s502, 32
        %s504 = scalar_lea.vmem [#allocation11], %s503
        // Predicated region
        $region61: #{_lambda_.3} parent=39 // pred_check
          %p505 = pneg %p176
        $region62: #{_lambda_.3} parent=39 // pred_check_branch
          %507 = sbr.rel (%p505) target = $region64
        $region63: #{_lambda_.3} parent=39 // pred_region
          %s508 = smul.u32 2, %s28
          %s509 = smul.u32 2, %s29
          %s511 = ssub.s32 512, 512
          %512 = vsyncadd %s501, %s511
          %s513 = smul.addr %s508, 2
          %s514 = sadd.s32 %s509, %s513
          %s515 = smul.addr %s514, 128
          %s516 = scalar_lea.hbm %s5, %s515
          %s517 = sshll.u32 %s504, 4
          %s518 = int_to_ptr.vmem [resolvable:$true] %s517
          %523 = dma.vmem_to_hbm [thread:$0]  %s518, 512, %s516, %s501, 256, 256, 16
        $region64: #{_lambda_.3} parent=39 // pred_fallthru
          _
      $region40: #{_lambda_.3} parent=5 // pred_fallthru
        _
      %p524 = scmp.le.s32.totalorder 2, %s19
      // Predicated region
      $region65: #{_lambda_.3} parent=5 // pred_check
        %p525 = pneg %p524
      $region66: #{_lambda_.3} parent=5 // pred_check_branch
        %527 = sbr.rel (%p525) target = $region68
      $region67: #{_lambda_.3} parent=5 // pred_region
        %s528 = ssub.s32 %s19, 2
        // Predicated region
        $region69: #{_lambda_.3} parent=67 // pred_check
          %p529 = pneg %p182
        $region70: #{_lambda_.3} parent=67 // pred_check_branch
          %531 = sbr.rel (%p529) target = $region72
        $region71: #{_lambda_.3} parent=67 // pred_region
          %s532 = sand.u32 %s167, 1
          %s533 = scalar_lea.sflag [#allocation4], %s532
          %s534 = sand.u32 %s167, 1
          %s535 = smul.addr %s534, 32
          %s536 = scalar_lea.vmem [#allocation11], %s535
          %537 = dma.done %s533, 512
        $region72: #{_lambda_.3} parent=67 // pred_fallthru
          _
      $region68: #{_lambda_.3} parent=5 // pred_fallthru
        _
    $region6: #{_lambda_.3} parent=1 // loop_footer
      %s23 = sadd.s32 1, %s19
    $region7: #{_lambda_.3} parent=1 // loop_footer_branch
      %18 = sbr.rel target = $region3
    $region8: #{_lambda_.3} parent=1 // loop_exit
      _
    %538 = vsyncpa [#allocation3], 1
    %s539 = scalar_lea.sflag [#allocation3], 1
    %540 = vsyncpa %s539, 1
    %541 = vsyncpa [#allocation6], 1
    %542 = vsyncpa [#allocation9], 1
    %543 = vsyncpa [#allocation4], 1
    %s544 = scalar_lea.sflag [#allocation4], 1
    %545 = vsyncpa %s544, 1

// kernel: _lambda_.2
$region0: #{_lambda_.2}
  #allocation0 [shape = 'u32[]', space=smem, size = 0x4, offset = 0x4, fixed_abs, tag = 'smem constant byte address 0x4 - core index']
  #allocation1 [shape = 'u32[144,128]{1,0:T(1,128)}', space=vmem, size = 0x12000, scoped, tag = 'internal scratch']
  #allocation2 [shape = 'f32[2,128]{1,0:T(2,128)}', space=vmem, size = 0x400, scoped, tag = 'scratch operand']
  #allocation3 [shape = 'f32[2,128]{1,0:T(2,128)}', space=vmem, size = 0x400, scoped, tag = 'scratch operand']
  %s0 = inlined_call_operand.hbm [shape: f32[24,2,384], index: 0, kind: input, shape index: {}]
  %s1 = inlined_call_operand.hbm [shape: f32[128,384], index: 1, kind: input, shape index: {}]
  %s2 = inlined_call_operand.hbm [shape: f32[1,384], index: 2, kind: input, shape index: {}]
  %s3 = inlined_call_operand.hbm [shape: f32[128,384], index: 3, kind: input, shape index: {}]
  %s4 = inlined_call_operand.hbm [shape: f32[1,384], index: 4, kind: input, shape index: {}]
  %s5 = inlined_call_operand.hbm [shape: f32[128,384], index: 5, kind: input, shape index: {}]
  %s6 = inlined_call_operand.hbm [shape: f32[1,384], index: 6, kind: input, shape index: {}]
  %s7 = inlined_call_operand.hbm [shape: f32[2,128], index: 7, kind: input, shape index: {}, may-alias: {7,8}]
  %s8 = inlined_call_operand.hbm [shape: f32[2,128], index: 8, kind: input, shape index: {}, may-alias: {7,8}]
  %s9 = inlined_call_operand.hbm [shape: f32[24,2,128], index: 9, kind: output, shape index: {0}]
  %s10 = inlined_call_operand.hbm [shape: f32[2,128], index: 10, kind: output, shape index: {1}]
  %s11 = inlined_call_operand.hbm [shape: f32[2,128], index: 11, kind: output, shape index: {2}]
  %12 = xla_tuple %s9, %s10, %s11
  %s13 = sld [smem:[#allocation0]]
  $region129: #{_lambda_.2} parent=0
    _
  %s15 = ssub.s32 1, %s13
  %s16 = scalar_select 0, %s15, %s13
  $region1: #{_lambda_.2} parent=0
    #allocation4 [shape = 'u8[49152]{0}', space=vmem, size = 0xc000, scoped, tag = 'input window, operand 0']
    #allocation5 [shape = 's32[2]{0}', space=sflag, size = 0x8, scoped, tag = 'scoped memory for _lambda_.2']
    #allocation6 [shape = 's32[2]{0}', space=sflag, size = 0x8, scoped, tag = 'scoped memory for _lambda_.2']
    #allocation7 [shape = 'u8[196608]{0}', space=vmem, size = 0x30000, scoped, tag = 'input window, operand 1, single buffered']
    #allocation8 [shape = 's32[1]{0}', space=sflag, size = 0x4, scoped, tag = 'scoped memory for _lambda_.2']
    #allocation9 [shape = 'u8[1536]{0}', space=vmem, size = 0x800, scoped, tag = 'input window, operand 2, single buffered']
    #allocation10 [shape = 'u8[196608]{0}', space=vmem, size = 0x30000, scoped, tag = 'input window, operand 3, single buffered']
    #allocation11 [shape = 's32[1]{0}', space=sflag, size = 0x4, scoped, tag = 'scoped memory for _lambda_.2']
    #allocation12 [shape = 'u8[1536]{0}', space=vmem, size = 0x800, scoped, tag = 'input window, operand 4, single buffered']
    #allocation13 [shape = 'u8[196608]{0}', space=vmem, size = 0x30000, scoped, tag = 'input window, operand 5, single buffered']
    #allocation14 [shape = 's32[1]{0}', space=sflag, size = 0x4, scoped, tag = 'scoped memory for _lambda_.2']
    #allocation15 [shape = 'u8[1536]{0}', space=vmem, size = 0x800, scoped, tag = 'input window, operand 6, single buffered']
    #allocation16 [shape = 'u8[1024]{0}', space=vmem, size = 0x400, scoped, tag = 'input window, operand 7, single buffered']
    #allocation17 [shape = 's32[1]{0}', space=sflag, size = 0x4, scoped, tag = 'scoped memory for _lambda_.2']
    #allocation18 [shape = 'u8[1024]{0}', space=vmem, size = 0x400, scoped, tag = 'input window, operand 8, single buffered']
    #allocation19 [shape = 'u8[16384]{0}', space=vmem, size = 0x4000, scoped, tag = 'output window, operand 0']
    #allocation20 [shape = 'u8[1024]{0}', space=vmem, size = 0x400, scoped, tag = 'output window, operand 1, single buffered']
    #allocation21 [shape = 's32[1]{0}', space=sflag, size = 0x4, scoped, tag = 'scoped memory for _lambda_.2']
    #allocation22 [shape = 'u8[1024]{0}', space=vmem, size = 0x400, scoped, tag = 'output window, operand 2, single buffered']
    %17 = vsyncpa [#allocation5], 0
    %s18 = scalar_lea.sflag [#allocation5], 1
    %19 = vsyncpa %s18, 0
    %20 = vsyncpa [#allocation8], 0
    %21 = vsyncpa [#allocation11], 0
    %22 = vsyncpa [#allocation14], 0
    %23 = vsyncpa [#allocation17], 0
    %24 = vsyncpa [#allocation6], 0
    %s25 = scalar_lea.sflag [#allocation6], 1
    %26 = vsyncpa %s25, 0
    %27 = vsyncpa [#allocation21], 0
    loop: start=0, step=1, limit=5
    $region2: #{_lambda_.2} parent=1 // loop_pre_header
      _
    $region3: #{_lambda_.2} parent=1 // loop_header
      %s29 = sphi 0, %s33
      %p30 = scmp.ge.s32.totalorder %s29, 5
      %s39 = sphi 0, %s41
      %s42 = sphi 0, %s39
      %s43 = sphi 0, %s42
      %s59 = sphi 0, %s43
      %s63 = sphi 0, %s63
      %s65 = sphi 0, %s63
      %s66 = sphi 0, %s65
      %s80 = sphi 0, %s66
      %s84 = sphi 0, %s84
      %s86 = sphi 0, %s84
      %s87 = sphi 0, %s86
      %s101 = sphi 0, %s87
      %s105 = sphi 0, %s105
      %s107 = sphi 0, %s105
      %s108 = sphi 0, %s107
      %s122 = sphi 0, %s108
      %s126 = sphi 0, %s126
      %s128 = sphi 0, %s126
      %s129 = sphi 0, %s128
      %s143 = sphi 0, %s129
      %s147 = sphi 0, %s147
      %s149 = sphi 0, %s147
      %s150 = sphi 0, %s149
      %s164 = sphi 0, %s150
      %s168 = sphi 0, %s168
      %s170 = sphi 0, %s168
      %s171 = sphi 0, %s170
      %s185 = sphi 0, %s171
      %s189 = sphi 0, %s189
      %s191 = sphi 0, %s189
      %s192 = sphi 0, %s191
      %s206 = sphi 0, %s192
      %s210 = sphi 0, %s210
      %s212 = sphi 0, %s210
      %s213 = sphi 0, %s212
      %s227 = sphi 0, %s213
      %s233 = sphi 0, %s235
      %s236 = sphi 0, %s233
      %s237 = sphi 0, %s236
      %s253 = sphi 0, %s237
      %s257 = sphi 0, %s257
      %s259 = sphi 0, %s257
      %s260 = sphi 0, %s259
      %s274 = sphi 0, %s260
      %s278 = sphi 0, %s278
      %s280 = sphi 0, %s278
      %s281 = sphi 0, %s280
      %s295 = sphi 0, %s281
    $region4: #{_lambda_.2} parent=1 // loop_header_branch
      %32 = sbr.rel (%p30) target = $region8
    $region5: #{_lambda_.2} parent=1 // loop_body
      %s34 = ssub.s32 %s29, 1
      %s35 = ssub.s32 %s29, 2
      %s36 = sadd.s32 %s29, 1
      %s37 = ssub.s32 %s29, %s36
      %p38 = scmp.eq.s32.totalorder %s37, 0
      %s40 = sadd.s32 %s39, 1
      %s41 = scalar_select %p38, %s39, %s40
      %p44 = pneg %p38
      %p45 = scmp.eq.s32.totalorder %s29, 2
      %p46 = por %p44, %p45
      %p47 = scmp.ne.s32.totalorder %s39, %s42
      %p48 = scmp.eq.s32.totalorder %s29, 0
      %p49 = por %p47, %p48
      %p50 = scmp.ne.s32.totalorder %s39, %s42
      %p51 = scmp.eq.s32.totalorder %s34, 2
      %p52 = por %p50, %p51
      %p53 = scmp.ne.s32.totalorder %s42, %s43
      %p54 = scmp.eq.s32.totalorder %s34, 0
      %p55 = por %p53, %p54
      %p56 = scmp.ne.s32.totalorder %s42, %s43
      %p57 = scmp.eq.s32.totalorder %s35, 2
      %p58 = por %p56, %p57
      %p60 = scmp.ne.s32.totalorder %s43, %s59
      %p61 = scmp.eq.s32.totalorder %s35, 0
      %p62 = por %p60, %p61
      %s64 = sadd.s32 %s63, 1
      %p67 = scmp.eq.s32.totalorder %s29, 2
      %p68 = scmp.ne.s32.totalorder %s63, %s65
      %p69 = scmp.eq.s32.totalorder %s29, 0
      %p70 = por %p68, %p69
      %p71 = scmp.ne.s32.totalorder %s63, %s65
      %p72 = scmp.eq.s32.totalorder %s34, 2
      %p73 = por %p71, %p72
      %p74 = scmp.ne.s32.totalorder %s65, %s66
      %p75 = scmp.eq.s32.totalorder %s34, 0
      %p76 = por %p74, %p75
      %p77 = scmp.ne.s32.totalorder %s65, %s66
      %p78 = scmp.eq.s32.totalorder %s35, 2
      %p79 = por %p77, %p78
      %p81 = scmp.ne.s32.totalorder %s66, %s80
      %p82 = scmp.eq.s32.totalorder %s35, 0
      %p83 = por %p81, %p82
      %s85 = sadd.s32 %s84, 1
      %p88 = scmp.eq.s32.totalorder %s29, 2
      %p89 = scmp.ne.s32.totalorder %s84, %s86
      %p90 = scmp.eq.s32.totalorder %s29, 0
      %p91 = por %p89, %p90
      %p92 = scmp.ne.s32.totalorder %s84, %s86
      %p93 = scmp.eq.s32.totalorder %s34, 2
      %p94 = por %p92, %p93
      %p95 = scmp.ne.s32.totalorder %s86, %s87
      %p96 = scmp.eq.s32.totalorder %s34, 0
      %p97 = por %p95, %p96
      %p98 = scmp.ne.s32.totalorder %s86, %s87
      %p99 = scmp.eq.s32.totalorder %s35, 2
      %p100 = por %p98, %p99
      %p102 = scmp.ne.s32.totalorder %s87, %s101
      %p103 = scmp.eq.s32.totalorder %s35, 0
      %p104 = por %p102, %p103
      %s106 = sadd.s32 %s105, 1
      %p109 = scmp.eq.s32.totalorder %s29, 2
      %p110 = scmp.ne.s32.totalorder %s105, %s107
      %p111 = scmp.eq.s32.totalorder %s29, 0
      %p112 = por %p110, %p111
      %p113 = scmp.ne.s32.totalorder %s105, %s107
      %p114 = scmp.eq.s32.totalorder %s34, 2
      %p115 = por %p113, %p114
      %p116 = scmp.ne.s32.totalorder %s107, %s108
      %p117 = scmp.eq.s32.totalorder %s34, 0
      %p118 = por %p116, %p117
      %p119 = scmp.ne.s32.totalorder %s107, %s108
      %p120 = scmp.eq.s32.totalorder %s35, 2
      %p121 = por %p119, %p120
      %p123 = scmp.ne.s32.totalorder %s108, %s122
      %p124 = scmp.eq.s32.totalorder %s35, 0
      %p125 = por %p123, %p124
      %s127 = sadd.s32 %s126, 1
      %p130 = scmp.eq.s32.totalorder %s29, 2
      %p131 = scmp.ne.s32.totalorder %s126, %s128
      %p132 = scmp.eq.s32.totalorder %s29, 0
      %p133 = por %p131, %p132
      %p134 = scmp.ne.s32.totalorder %s126, %s128
      %p135 = scmp.eq.s32.totalorder %s34, 2
      %p136 = por %p134, %p135
      %p137 = scmp.ne.s32.totalorder %s128, %s129
      %p138 = scmp.eq.s32.totalorder %s34, 0
      %p139 = por %p137, %p138
      %p140 = scmp.ne.s32.totalorder %s128, %s129
      %p141 = scmp.eq.s32.totalorder %s35, 2
      %p142 = por %p140, %p141
      %p144 = scmp.ne.s32.totalorder %s129, %s143
      %p145 = scmp.eq.s32.totalorder %s35, 0
      %p146 = por %p144, %p145
      %s148 = sadd.s32 %s147, 1
      %p151 = scmp.eq.s32.totalorder %s29, 2
      %p152 = scmp.ne.s32.totalorder %s147, %s149
      %p153 = scmp.eq.s32.totalorder %s29, 0
      %p154 = por %p152, %p153
      %p155 = scmp.ne.s32.totalorder %s147, %s149
      %p156 = scmp.eq.s32.totalorder %s34, 2
      %p157 = por %p155, %p156
      %p158 = scmp.ne.s32.totalorder %s149, %s150
      %p159 = scmp.eq.s32.totalorder %s34, 0
      %p160 = por %p158, %p159
      %p161 = scmp.ne.s32.totalorder %s149, %s150
      %p162 = scmp.eq.s32.totalorder %s35, 2
      %p163 = por %p161, %p162
      %p165 = scmp.ne.s32.totalorder %s150, %s164
      %p166 = scmp.eq.s32.totalorder %s35, 0
      %p167 = por %p165, %p166
      %s169 = sadd.s32 %s168, 1
      %p172 = scmp.eq.s32.totalorder %s29, 2
      %p173 = scmp.ne.s32.totalorder %s168, %s170
      %p174 = scmp.eq.s32.totalorder %s29, 0
      %p175 = por %p173, %p174
      %p176 = scmp.ne.s32.totalorder %s168, %s170
      %p177 = scmp.eq.s32.totalorder %s34, 2
      %p178 = por %p176, %p177
      %p179 = scmp.ne.s32.totalorder %s170, %s171
      %p180 = scmp.eq.s32.totalorder %s34, 0
      %p181 = por %p179, %p180
      %p182 = scmp.ne.s32.totalorder %s170, %s171
      %p183 = scmp.eq.s32.totalorder %s35, 2
      %p184 = por %p182, %p183
      %p186 = scmp.ne.s32.totalorder %s171, %s185
      %p187 = scmp.eq.s32.totalorder %s35, 0
      %p188 = por %p186, %p187
      %s190 = sadd.s32 %s189, 1
      %p193 = scmp.eq.s32.totalorder %s29, 2
      %p194 = scmp.ne.s32.totalorder %s189, %s191
      %p195 = scmp.eq.s32.totalorder %s29, 0
      %p196 = por %p194, %p195
      %p197 = scmp.ne.s32.totalorder %s189, %s191
      %p198 = scmp.eq.s32.totalorder %s34, 2
      %p199 = por %p197, %p198
      %p200 = scmp.ne.s32.totalorder %s191, %s192
      %p201 = scmp.eq.s32.totalorder %s34, 0
      %p202 = por %p200, %p201
      %p203 = scmp.ne.s32.totalorder %s191, %s192
      %p204 = scmp.eq.s32.totalorder %s35, 2
      %p205 = por %p203, %p204
      %p207 = scmp.ne.s32.totalorder %s192, %s206
      %p208 = scmp.eq.s32.totalorder %s35, 0
      %p209 = por %p207, %p208
      %s211 = sadd.s32 %s210, 1
      %p214 = scmp.eq.s32.totalorder %s29, 2
      %p215 = scmp.ne.s32.totalorder %s210, %s212
      %p216 = scmp.eq.s32.totalorder %s29, 0
      %p217 = por %p215, %p216
      %p218 = scmp.ne.s32.totalorder %s210, %s212
      %p219 = scmp.eq.s32.totalorder %s34, 2
      %p220 = por %p218, %p219
      %p221 = scmp.ne.s32.totalorder %s212, %s213
      %p222 = scmp.eq.s32.totalorder %s34, 0
      %p223 = por %p221, %p222
      %p224 = scmp.ne.s32.totalorder %s212, %s213
      %p225 = scmp.eq.s32.totalorder %s35, 2
      %p226 = por %p224, %p225
      %p228 = scmp.ne.s32.totalorder %s213, %s227
      %p229 = scmp.eq.s32.totalorder %s35, 0
      %p230 = por %p228, %p229
      %s231 = ssub.s32 %s29, %s36
      %p232 = scmp.eq.s32.totalorder %s231, 0
      %s234 = sadd.s32 %s233, 1
      %s235 = scalar_select %p232, %s233, %s234
      %p238 = pneg %p232
      %p239 = scmp.eq.s32.totalorder %s29, 2
      %p240 = por %p238, %p239
      %p241 = scmp.ne.s32.totalorder %s233, %s236
      %p242 = scmp.eq.s32.totalorder %s29, 0
      %p243 = por %p241, %p242
      %p244 = scmp.ne.s32.totalorder %s233, %s236
      %p245 = scmp.eq.s32.totalorder %s34, 2
      %p246 = por %p244, %p245
      %p247 = scmp.ne.s32.totalorder %s236, %s237
      %p248 = scmp.eq.s32.totalorder %s34, 0
      %p249 = por %p247, %p248
      %p250 = scmp.ne.s32.totalorder %s236, %s237
      %p251 = scmp.eq.s32.totalorder %s35, 2
      %p252 = por %p250, %p251
      %p254 = scmp.ne.s32.totalorder %s237, %s253
      %p255 = scmp.eq.s32.totalorder %s35, 0
      %p256 = por %p254, %p255
      %s258 = sadd.s32 %s257, 1
      %p261 = scmp.eq.s32.totalorder %s29, 2
      %p262 = scmp.ne.s32.totalorder %s257, %s259
      %p263 = scmp.eq.s32.totalorder %s29, 0
      %p264 = por %p262, %p263
      %p265 = scmp.ne.s32.totalorder %s257, %s259
      %p266 = scmp.eq.s32.totalorder %s34, 2
      %p267 = por %p265, %p266
      %p268 = scmp.ne.s32.totalorder %s259, %s260
      %p269 = scmp.eq.s32.totalorder %s34, 0
      %p270 = por %p268, %p269
      %p271 = scmp.ne.s32.totalorder %s259, %s260
      %p272 = scmp.eq.s32.totalorder %s35, 2
      %p273 = por %p271, %p272
      %p275 = scmp.ne.s32.totalorder %s260, %s274
      %p276 = scmp.eq.s32.totalorder %s35, 0
      %p277 = por %p275, %p276
      %s279 = sadd.s32 %s278, 1
      %p282 = scmp.eq.s32.totalorder %s29, 2
      %p283 = scmp.ne.s32.totalorder %s278, %s280
      %p284 = scmp.eq.s32.totalorder %s29, 0
      %p285 = por %p283, %p284
      %p286 = scmp.ne.s32.totalorder %s278, %s280
      %p287 = scmp.eq.s32.totalorder %s34, 2
      %p288 = por %p286, %p287
      %p289 = scmp.ne.s32.totalorder %s280, %s281
      %p290 = scmp.eq.s32.totalorder %s34, 0
      %p291 = por %p289, %p290
      %p292 = scmp.ne.s32.totalorder %s280, %s281
      %p293 = scmp.eq.s32.totalorder %s35, 2
      %p294 = por %p292, %p293
      %p296 = scmp.ne.s32.totalorder %s281, %s295
      %p297 = scmp.eq.s32.totalorder %s35, 0
      %p298 = por %p296, %p297
      %p299 = scmp.le.s32.totalorder 1, %s29
      %p300 = scmp.lt.s32.totalorder %s29, 4
      %p301 = pnand %p299, %p300
      %p302 = pneg %p301
      // Predicated region
      $region9: #{_lambda_.2} parent=5 // pred_check
        _
      $region10: #{_lambda_.2} parent=5 // pred_check_branch
        %304 = sbr.rel (%p301) target = $region12
      $region11: #{_lambda_.2} parent=5 // pred_region
        %s305 = ssub.s32 %s29, 1
        // Predicated region
        $region13: #{_lambda_.2} parent=11 // pred_check
          %p306 = pneg %p76
        $region14: #{_lambda_.2} parent=11 // pred_check_branch
          %308 = sbr.rel (%p306) target = $region16
        $region15: #{_lambda_.2} parent=11 // pred_region
          %s310 = ssub.s32 6144, 6144
          %311 = vsyncadd [#allocation8], %s310
          %s312 = sshll.u32 [#allocation7], 4
          %s313 = int_to_ptr.vmem [resolvable:$true] %s312
          %318 = dma.hbm_to_vmem [thread:$0]  %s1, 6144, %s313, [#allocation8], 384, 384, 24
        $region16: #{_lambda_.2} parent=11 // pred_fallthru
          _
        // Predicated region
        $region17: #{_lambda_.2} parent=11 // pred_check
          %p319 = pneg %p97
        $region18: #{_lambda_.2} parent=11 // pred_check_branch
          %321 = sbr.rel (%p319) target = $region20
        $region19: #{_lambda_.2} parent=11 // pred_region
          %s323 = ssub.s32 48, 48
          %324 = vsyncadd [#allocation8], %s323
          %s326 = sshll.u32 [#allocation9], 4
          %s327 = int_to_ptr.vmem [resolvable:$true] %s326
          %329 = dma.hbm_to_vmem [thread:$0]  %s2, 48, %s327, [#allocation8]
        $region20: #{_lambda_.2} parent=11 // pred_fallthru
          _
        // Predicated region
        $region21: #{_lambda_.2} parent=11 // pred_check
          %p330 = pneg %p118
        $region22: #{_lambda_.2} parent=11 // pred_check_branch
          %332 = sbr.rel (%p330) target = $region24
        $region23: #{_lambda_.2} parent=11 // pred_region
          %s334 = ssub.s32 6144, 6144
          %335 = vsyncadd [#allocation11], %s334
          %s336 = sshll.u32 [#allocation10], 4
          %s337 = int_to_ptr.vmem [resolvable:$true] %s336
          %342 = dma.hbm_to_vmem [thread:$0]  %s3, 6144, %s337, [#allocation11], 384, 384, 24
        $region24: #{_lambda_.2} parent=11 // pred_fallthru
          _
        // Predicated region
        $region25: #{_lambda_.2} parent=11 // pred_check
          %p343 = pneg %p139
        $region26: #{_lambda_.2} parent=11 // pred_check_branch
          %345 = sbr.rel (%p343) target = $region28
        $region27: #{_lambda_.2} parent=11 // pred_region
          %s347 = ssub.s32 48, 48
          %348 = vsyncadd [#allocation11], %s347
          %s350 = sshll.u32 [#allocation12], 4
          %s351 = int_to_ptr.vmem [resolvable:$true] %s350
          %353 = dma.hbm_to_vmem [thread:$0]  %s4, 48, %s351, [#allocation11]
        $region28: #{_lambda_.2} parent=11 // pred_fallthru
          _
        // Predicated region
        $region29: #{_lambda_.2} parent=11 // pred_check
          %p354 = pneg %p160
        $region30: #{_lambda_.2} parent=11 // pred_check_branch
          %356 = sbr.rel (%p354) target = $region32
        $region31: #{_lambda_.2} parent=11 // pred_region
          %s358 = ssub.s32 6144, 6144
          %359 = vsyncadd [#allocation14], %s358
          %s360 = sshll.u32 [#allocation13], 4
          %s361 = int_to_ptr.vmem [resolvable:$true] %s360
          %366 = dma.hbm_to_vmem [thread:$0]  %s5, 6144, %s361, [#allocation14], 384, 384, 24
        $region32: #{_lambda_.2} parent=11 // pred_fallthru
          _
        // Predicated region
        $region33: #{_lambda_.2} parent=11 // pred_check
          %p367 = pneg %p181
        $region34: #{_lambda_.2} parent=11 // pred_check_branch
          %369 = sbr.rel (%p367) target = $region36
        $region35: #{_lambda_.2} parent=11 // pred_region
          %s371 = ssub.s32 48, 48
          %372 = vsyncadd [#allocation14], %s371
          %s374 = sshll.u32 [#allocation15], 4
          %s375 = int_to_ptr.vmem [resolvable:$true] %s374
          %377 = dma.hbm_to_vmem [thread:$0]  %s6, 48, %s375, [#allocation14]
        $region36: #{_lambda_.2} parent=11 // pred_fallthru
          _
        // Predicated region
        $region37: #{_lambda_.2} parent=11 // pred_check
          %p378 = pneg %p202
        $region38: #{_lambda_.2} parent=11 // pred_check_branch
          %380 = sbr.rel (%p378) target = $region40
        $region39: #{_lambda_.2} parent=11 // pred_region
          %s382 = ssub.s32 32, 32
          %383 = vsyncadd [#allocation17], %s382
          %s385 = sshll.u32 [#allocation16], 4
          %s386 = int_to_ptr.vmem [resolvable:$true] %s385
          %388 = dma.hbm_to_vmem [thread:$0]  %s7, 32, %s386, [#allocation17]
        $region40: #{_lambda_.2} parent=11 // pred_fallthru
          _
        // Predicated region
        $region41: #{_lambda_.2} parent=11 // pred_check
          %p389 = pneg %p223
        $region42: #{_lambda_.2} parent=11 // pred_check_branch
          %391 = sbr.rel (%p389) target = $region44
        $region43: #{_lambda_.2} parent=11 // pred_region
          %s393 = ssub.s32 32, 32
          %394 = vsyncadd [#allocation17], %s393
          %s396 = sshll.u32 [#allocation18], 4
          %s397 = int_to_ptr.vmem [resolvable:$true] %s396
          %399 = dma.hbm_to_vmem [thread:$0]  %s8, 32, %s397, [#allocation17]
        $region44: #{_lambda_.2} parent=11 // pred_fallthru
          _
      $region12: #{_lambda_.2} parent=5 // pred_fallthru
        _
      %p400 = scmp.lt.s32.totalorder %s29, 3
      // Predicated region
      $region45: #{_lambda_.2} parent=5 // pred_check
        %p401 = pneg %p400
      $region46: #{_lambda_.2} parent=5 // pred_check_branch
        %403 = sbr.rel (%p401) target = $region48
      $region47: #{_lambda_.2} parent=5 // pred_region
        // Predicated region
        $region49: #{_lambda_.2} parent=47 // pred_check
          %p404 = pneg %p49
        $region50: #{_lambda_.2} parent=47 // pred_check_branch
          %406 = sbr.rel (%p404) target = $region52
        $region51: #{_lambda_.2} parent=47 // pred_region
          %s407 = sand.u32 %s39, 1
          %s408 = scalar_lea.sflag [#allocation5], %s407
          %s409 = sand.u32 %s39, 1
          %s410 = smul.addr %s409, 48
          %s411 = scalar_lea.vmem [#allocation4], %s410
          %s412 = smul.u32 8, %s29
          %s414 = ssub.s32 768, 768
          %415 = vsyncadd %s408, %s414
          %s416 = smul.addr %s412, 3
          %s417 = smul.addr %s416, 32
          %s418 = scalar_lea.hbm %s0, %s417
          %s419 = sshll.u32 %s411, 4
          %s420 = int_to_ptr.vmem [resolvable:$true] %s419
          %425 = dma.hbm_to_vmem [thread:$0]  %s418, 768, %s420, %s408, 96, 96, 6
        $region52: #{_lambda_.2} parent=47 // pred_fallthru
          _
      $region48: #{_lambda_.2} parent=5 // pred_fallthru
        _
      %p426 = scmp.le.s32.totalorder 1, %s29
      %p427 = scmp.lt.s32.totalorder %s29, 4
      %p428 = pnand %p426, %p427
      %p429 = pneg %p428
      // Predicated region
      $region53: #{_lambda_.2} parent=5 // pred_check
        _
      $region54: #{_lambda_.2} parent=5 // pred_check_branch
        %431 = sbr.rel (%p428) target = $region56
      $region55: #{_lambda_.2} parent=5 // pred_region
        %s432 = ssub.s32 %s29, 1
        %s433 = sand.u32 %s42, 1
        %s434 = scalar_lea.sflag [#allocation5], %s433
        %s435 = sand.u32 %s42, 1
        %s436 = smul.addr %s435, 48
        %s437 = scalar_lea.vmem [#allocation4], %s436
        // Predicated region
        $region57: #{_lambda_.2} parent=55 // pred_check
          %p438 = pneg %p55
        $region58: #{_lambda_.2} parent=55 // pred_check_branch
          %440 = sbr.rel (%p438) target = $region60
        $region59: #{_lambda_.2} parent=55 // pred_region
          %441 = dma.done %s434, 768
        $region60: #{_lambda_.2} parent=55 // pred_fallthru
          _
        // Predicated region
        $region61: #{_lambda_.2} parent=55 // pred_check
          %p442 = pneg %p76
        $region62: #{_lambda_.2} parent=55 // pred_check_branch
          %444 = sbr.rel (%p442) target = $region64
        $region63: #{_lambda_.2} parent=55 // pred_region
          %445 = dma.done [#allocation8], 6144
        $region64: #{_lambda_.2} parent=55 // pred_fallthru
          _
        // Predicated region
        $region65: #{_lambda_.2} parent=55 // pred_check
          %p446 = pneg %p97
        $region66: #{_lambda_.2} parent=55 // pred_check_branch
          %448 = sbr.rel (%p446) target = $region68
        $region67: #{_lambda_.2} parent=55 // pred_region
          %449 = dma.done [#allocation8], 48
        $region68: #{_lambda_.2} parent=55 // pred_fallthru
          _
        // Predicated region
        $region69: #{_lambda_.2} parent=55 // pred_check
          %p450 = pneg %p118
        $region70: #{_lambda_.2} parent=55 // pred_check_branch
          %452 = sbr.rel (%p450) target = $region72
        $region71: #{_lambda_.2} parent=55 // pred_region
          %453 = dma.done [#allocation11], 6144
        $region72: #{_lambda_.2} parent=55 // pred_fallthru
          _
        // Predicated region
        $region73: #{_lambda_.2} parent=55 // pred_check
          %p454 = pneg %p139
        $region74: #{_lambda_.2} parent=55 // pred_check_branch
          %456 = sbr.rel (%p454) target = $region76
        $region75: #{_lambda_.2} parent=55 // pred_region
          %457 = dma.done [#allocation11], 48
        $region76: #{_lambda_.2} parent=55 // pred_fallthru
          _
        // Predicated region
        $region77: #{_lambda_.2} parent=55 // pred_check
          %p458 = pneg %p160
        $region78: #{_lambda_.2} parent=55 // pred_check_branch
          %460 = sbr.rel (%p458) target = $region80
        $region79: #{_lambda_.2} parent=55 // pred_region
          %461 = dma.done [#allocation14], 6144
        $region80: #{_lambda_.2} parent=55 // pred_fallthru
          _
        // Predicated region
        $region81: #{_lambda_.2} parent=55 // pred_check
          %p462 = pneg %p181
        $region82: #{_lambda_.2} parent=55 // pred_check_branch
          %464 = sbr.rel (%p462) target = $region84
        $region83: #{_lambda_.2} parent=55 // pred_region
          %465 = dma.done [#allocation14], 48
        $region84: #{_lambda_.2} parent=55 // pred_fallthru
          _
        // Predicated region
        $region85: #{_lambda_.2} parent=55 // pred_check
          %p466 = pneg %p202
        $region86: #{_lambda_.2} parent=55 // pred_check_branch
          %468 = sbr.rel (%p466) target = $region88
        $region87: #{_lambda_.2} parent=55 // pred_region
          %469 = dma.done [#allocation17], 32
        $region88: #{_lambda_.2} parent=55 // pred_fallthru
          _
        // Predicated region
        $region89: #{_lambda_.2} parent=55 // pred_check
          %p470 = pneg %p223
        $region90: #{_lambda_.2} parent=55 // pred_check_branch
          %472 = sbr.rel (%p470) target = $region92
        $region91: #{_lambda_.2} parent=55 // pred_region
          %473 = dma.done [#allocation17], 32
        $region92: #{_lambda_.2} parent=55 // pred_fallthru
          _
        %s474 = sand.u32 %s42, 1
        %s475 = scalar_lea.sflag [#allocation5], %s474
        %s476 = sand.u32 %s42, 1
        %s477 = smul.addr %s476, 48
        %s478 = scalar_lea.vmem [#allocation4], %s477
        %p479 = pneg %p55
        %p480 = pneg %p52
        %p481 = pneg %p76
        %p482 = pneg %p73
        %p483 = pneg %p97
        %p484 = pneg %p94
        %p485 = pneg %p118
        %p486 = pneg %p115
        %p487 = pneg %p139
        %p488 = pneg %p136
        %p489 = pneg %p160
        %p490 = pneg %p157
        %p491 = pneg %p181
        %p492 = pneg %p178
        %p493 = pneg %p202
        %p494 = pneg %p199
        %p495 = pneg %p223
        %p496 = pneg %p220
        %p497 = pneg %p249
        %p498 = pneg %p246
        %s499 = sand.u32 %s236, 1
        %s500 = scalar_lea.sflag [#allocation6], %s499
        %s501 = sand.u32 %s236, 1
        %s502 = smul.addr %s501, 16
        %s503 = scalar_lea.vmem [#allocation19], %s502
        %p504 = pneg %p270
        %p505 = pneg %p267
        %p506 = pneg %p291
        %p507 = pneg %p288
        %s508 = smul.u32 8, %s34
        %s509 = smul.u32 8, %s34
        %p510 = scmp.eq.s32.totalorder %s34, 0
        // Predicated region
        $region93: #{_lambda_.2} parent=55 // pred_check
          %p511 = pneg %p510
        $region94: #{_lambda_.2} parent=55 // pred_check_branch
          %513 = sbr.rel (%p511) target = $region96
        $region95: #{_lambda_.2} parent=55 // pred_region
          %v514 = vld [vmem:[#allocation16] sm:$0x3]
          %515 = vst [vmem:[#allocation2] sm:$0x3] %v514
          %v516 = vld [vmem:[#allocation18] sm:$0x3]
          %517 = vst [vmem:[#allocation3] sm:$0x3] %v516
        $region96: #{_lambda_.2} parent=55 // pred_fallthru
          _
        %v518 = vld [vmem:[#allocation2] sm:$0x3]
        %v519 = vld [vmem:[#allocation3] sm:$0x3]
        %v520 = vld [vmem:[%s437] sm:$0x3f]
        %v521 = vld [vmem:[#allocation7] sm:$0xff]
        %v522 = vld [vmem:[#allocation7 + $0x8] sm:$0xff]
        %v523 = vld [vmem:[#allocation7 + $0x10] sm:$0xff]
        %v524 = vld [vmem:[#allocation7 + $0x18] sm:$0xff]
        %v525 = vld [vmem:[#allocation7 + $0x20] sm:$0xff]
        %v526 = vld [vmem:[#allocation7 + $0x28] sm:$0xff]
        %v527 = vld [vmem:[#allocation7 + $0x30] sm:$0xff]
        %v528 = vld [vmem:[#allocation7 + $0x38] sm:$0xff]
        %v529 = vld [vmem:[#allocation7 + $0x40] sm:$0xff]
        %v530 = vld [vmem:[#allocation7 + $0x48] sm:$0xff]
        %v531 = vld [vmem:[#allocation7 + $0x50] sm:$0xff]
        %v532 = vld [vmem:[#allocation7 + $0x58] sm:$0xff]
        %v533 = vld [vmem:[#allocation7 + $0x60] sm:$0xff]
        %v534 = vld [vmem:[#allocation7 + $0x68] sm:$0xff]
        %v535 = vld [vmem:[#allocation7 + $0x70] sm:$0xff]
        %v536 = vld [vmem:[#allocation7 + $0x78] sm:$0xff]
        %v537 = vld [vmem:[#allocation7 + $0x80] sm:$0xff]
        %v538 = vld [vmem:[#allocation7 + $0x88] sm:$0xff]
        %v539 = vld [vmem:[#allocation7 + $0x90] sm:$0xff]
        %v540 = vld [vmem:[#allocation7 + $0x98] sm:$0xff]
        %v541 = vld [vmem:[#allocation7 + $0xa0] sm:$0xff]
        %v542 = vld [vmem:[#allocation7 + $0xa8] sm:$0xff]
        %v543 = vld [vmem:[#allocation7 + $0xb0] sm:$0xff]
        %v544 = vld [vmem:[#allocation7 + $0xb8] sm:$0xff]
        %v545 = vld [vmem:[#allocation7 + $0xc0] sm:$0xff]
        %v546 = vld [vmem:[#allocation7 + $0xc8] sm:$0xff]
        %v547 = vld [vmem:[#allocation7 + $0xd0] sm:$0xff]
        %v548 = vld [vmem:[#allocation7 + $0xd8] sm:$0xff]
        %v549 = vld [vmem:[#allocation7 + $0xe0] sm:$0xff]
        %v550 = vld [vmem:[#allocation7 + $0xe8] sm:$0xff]
        %v551 = vld [vmem:[#allocation7 + $0xf0] sm:$0xff]
        %v552 = vld [vmem:[#allocation7 + $0xf8] sm:$0xff]
        %v553 = vld [vmem:[#allocation7 + $0x100] sm:$0xff]
        %v554 = vld [vmem:[#allocation7 + $0x108] sm:$0xff]
        %v555 = vld [vmem:[#allocation7 + $0x110] sm:$0xff]
        %v556 = vld [vmem:[#allocation7 + $0x118] sm:$0xff]
        %v557 = vld [vmem:[#allocation7 + $0x120] sm:$0xff]
        %v558 = vld [vmem:[#allocation7 + $0x128] sm:$0xff]
        %v559 = vld [vmem:[#allocation7 + $0x130] sm:$0xff]
        %v560 = vld [vmem:[#allocation7 + $0x138] sm:$0xff]
        %v561 = vld [vmem:[#allocation7 + $0x140] sm:$0xff]
        %v562 = vld [vmem:[#allocation7 + $0x148] sm:$0xff]
        %v563 = vld [vmem:[#allocation7 + $0x150] sm:$0xff]
        %v564 = vld [vmem:[#allocation7 + $0x158] sm:$0xff]
        %v565 = vld [vmem:[#allocation7 + $0x160] sm:$0xff]
        %v566 = vld [vmem:[#allocation7 + $0x168] sm:$0xff]
        %v567 = vld [vmem:[#allocation7 + $0x170] sm:$0xff]
        %v568 = vld [vmem:[#allocation7 + $0x178] sm:$0xff]
        %v569 = vld [vmem:[#allocation9] sm:$0x7]
        %v571 = vlaneseq
        %v572 = vshrl.u32 %v571, 7
        %v573 = vsub.s32 0, %v572
        %v574 = vrot.slane %v569, %v573
        %v575 = vlaneseq
        %v576 = vshrl.u32 %v575, 7
        %v577 = vsub.s32 1, %v576
        %v578 = vrot.slane %v569, %v577
        %v579 = vlaneseq
        %v580 = vshrl.u32 %v579, 7
        %v581 = vsub.s32 2, %v580
        %v582 = vrot.slane %v569, %v581
        %586 = vmatprep.subr.mxu0 %v522
        %587 = vmatpush1.msra.mxu0 %v521
        %588 = vmatprep.subr.mxu0 %v525
        %589 = vmatpush1.msra.mxu0 %v524
        %590 = vmatprep.subr.mxu0 %v528
        %591 = vmatpush1.msra.mxu0 %v527
        %592 = vmatprep.subr.mxu0 %v531
        %593 = vmatpush1.msra.mxu0 %v530
        %594 = vmatprep.subr.mxu0 %v534
        %595 = vmatpush1.msra.mxu0 %v533
        %596 = vmatprep.subr.mxu0 %v537
        %597 = vmatpush1.msra.mxu0 %v536
        %598 = vmatprep.subr.mxu0 %v540
        %599 = vmatpush1.msra.mxu0 %v539
        %600 = vmatprep.subr.mxu0 %v543
        %601 = vmatpush1.msra.mxu0 %v542
        %602 = vmatprep.subr.mxu0 %v546
        %603 = vmatpush1.msra.mxu0 %v545
        %604 = vmatprep.subr.mxu0 %v549
        %605 = vmatpush1.msra.mxu0 %v548
        %606 = vmatprep.subr.mxu0 %v552
        %607 = vmatpush1.msra.mxu0 %v551
        %608 = vmatprep.subr.mxu0 %v555
        %609 = vmatpush1.msra.mxu0 %v554
        %610 = vmatprep.subr.mxu0 %v558
        %611 = vmatpush1.msra.mxu0 %v557
        %612 = vmatprep.subr.mxu0 %v561
        %613 = vmatpush1.msra.mxu0 %v560
        %614 = vmatprep.subr.mxu0 %v564
        %615 = vmatpush1.msra.mxu0 %v563
        %616 = vmatprep.subr.mxu0 %v567
        %617 = vmatpush1.msra.mxu0 %v566
        %618 = vmatprep.subr.mxu0 0.0
        %619 = vmatpush1.msra.mxu0 0.0
        %620 = vmatprep.subr.mxu0 0.0
        %621 = vmatpush1.msra.mxu0 0.0
        %622 = vmatprep.subr.mxu0 0.0
        %623 = vmatpush1.msra.mxu0 0.0
        %624 = vmatprep.subr.mxu0 0.0
        %625 = vmatpush1.msra.mxu0 0.0
        %626 = vmatprep.subr.mxu0 0.0
        %627 = vmatpush1.msra.mxu0 0.0
        %628 = vmatprep.subr.mxu0 0.0
        %629 = vmatpush1.msra.mxu0 0.0
        %630 = vmatprep.subr.mxu0 0.0
        %631 = vmatpush1.msra.mxu0 0.0
        %632 = vmatprep.subr.mxu0 0.0
        %633 = vmatpush1.msra.mxu0 0.0
        %634 = vmatprep.subr.mxu0 0.0
        %635 = vmatpush1.msra.mxu0 0.0
        %636 = vmatprep.subr.mxu0 0.0
        %637 = vmatpush1.msra.mxu0 0.0
        %638 = vmatprep.subr.mxu0 0.0
        %639 = vmatpush1.msra.mxu0 0.0
        %640 = vmatprep.subr.mxu0 0.0
        %641 = vmatpush1.msra.mxu0 0.0
        %642 = vmatprep.subr.mxu0 0.0
        %643 = vmatpush1.msra.mxu0 0.0
        %644 = vmatprep.subr.mxu0 0.0
        %645 = vmatpush1.msra.mxu0 0.0
        %646 = vmatprep.subr.mxu0 0.0
        %647 = vmatpush1.msra.mxu0 0.0
        %648 = vmatprep.subr.mxu0 0.0
        %649 = vmatpush1.msra.mxu0 0.0
        %650 = vmatprep.mubr.f32.mxu0 0.0
        %651 = vmatmul.mubr.f32.gmra.mrb[0].mxu0 %v518
        %v652 = vpop.f32.mrb[0].mxu0
        %v653 = vadd.f32 %v574, %v652
        %v654 = vpop.f32.mrb[0].mxu0
        %v655 = vadd.f32 %v578, %v654
        %656 = vdwg.mxu0
        %657 = vmatprep.subr.mxu0 0.0
        %658 = vmatpush1.msra.mxu0 %v523
        %659 = vmatprep.subr.mxu0 0.0
        %660 = vmatpush1.msra.mxu0 %v526
        %661 = vmatprep.subr.mxu0 0.0
        %662 = vmatpush1.msra.mxu0 %v529
        %663 = vmatprep.subr.mxu0 0.0
        %664 = vmatpush1.msra.mxu0 %v532
        %665 = vmatprep.subr.mxu0 0.0
        %666 = vmatpush1.msra.mxu0 %v535
        %667 = vmatprep.subr.mxu0 0.0
        %668 = vmatpush1.msra.mxu0 %v538
        %669 = vmatprep.subr.mxu0 0.0
        %670 = vmatpush1.msra.mxu0 %v541
        %671 = vmatprep.subr.mxu0 0.0
        %672 = vmatpush1.msra.mxu0 %v544
        %673 = vmatprep.subr.mxu0 0.0
        %674 = vmatpush1.msra.mxu0 %v547
        %675 = vmatprep.subr.mxu0 0.0
        %676 = vmatpush1.msra.mxu0 %v550
        %677 = vmatprep.subr.mxu0 0.0
        %678 = vmatpush1.msra.mxu0 %v553
        %679 = vmatprep.subr.mxu0 0.0
        %680 = vmatpush1.msra.mxu0 %v556
        %681 = vmatprep.subr.mxu0 0.0
        %682 = vmatpush1.msra.mxu0 %v559
        %683 = vmatprep.subr.mxu0 0.0
        %684 = vmatpush1.msra.mxu0 %v562
        %685 = vmatprep.subr.mxu0 0.0
        %686 = vmatpush1.msra.mxu0 %v565
        %687 = vmatprep.subr.mxu0 0.0
        %688 = vmatpush1.msra.mxu0 %v568
        %689 = vmatprep.subr.mxu0 0.0
        %690 = vmatpush1.msra.mxu0 0.0
        %691 = vmatprep.subr.mxu0 0.0
        %692 = vmatpush1.msra.mxu0 0.0
        %693 = vmatprep.subr.mxu0 0.0
        %694 = vmatpush1.msra.mxu0 0.0
        %695 = vmatprep.subr.mxu0 0.0
        %696 = vmatpush1.msra.mxu0 0.0
        %697 = vmatprep.subr.mxu0 0.0
        %698 = vmatpush1.msra.mxu0 0.0
        %699 = vmatprep.subr.mxu0 0.0
        %700 = vmatpush1.msra.mxu0 0.0
        %701 = vmatprep.subr.mxu0 0.0
        %702 = vmatpush1.msra.mxu0 0.0
        %703 = vmatprep.subr.mxu0 0.0
        %704 = vmatpush1.msra.mxu0 0.0
        %705 = vmatprep.subr.mxu0 0.0
        %706 = vmatpush1.msra.mxu0 0.0
        %707 = vmatprep.subr.mxu0 0.0
        %708 = vmatpush1.msra.mxu0 0.0
        %709 = vmatprep.subr.mxu0 0.0
        %710 = vmatpush1.msra.mxu0 0.0
        %711 = vmatprep.subr.mxu0 0.0
        %712 = vmatpush1.msra.mxu0 0.0
        %713 = vmatprep.subr.mxu0 0.0
        %714 = vmatpush1.msra.mxu0 0.0
        %715 = vmatprep.subr.mxu0 0.0
        %716 = vmatpush1.msra.mxu0 0.0
        %717 = vmatprep.subr.mxu0 0.0
        %718 = vmatpush1.msra.mxu0 0.0
        %719 = vmatprep.subr.mxu0 0.0
        %720 = vmatpush1.msra.mxu0 0.0
        %721 = vmatprep.mubr.f32.mxu0 0.0
        %722 = vmatmul.mubr.f32.gmra.mrb[0].mxu0 %v518
        %v723 = vpop.f32.mrb[0].mxu0
        %v724 = vadd.f32 %v582, %v723
        %v725 = vpop.f32.mrb[0].mxu0
        %726 = vdwg.mxu0
        %v727 = vadd.f32 %v520, %v653
        %v728 = vxor.u32 %v727, 2147483648
        %v729 = vmul.f32 %v728, 1.442695
        %v730 = vpow.pop %v729
        %v731 = vadd.f32 %v730, 1.0
        %v732 = vrcp.pop %v731
        %v733 = vmul.f32 1.0, %v732
        %v735 = vrot.slane %v520, 2
        %v737 = vadd.f32 %v735, %v655
        %v738 = vxor.u32 %v737, 2147483648
        %v739 = vmul.f32 %v738, 1.442695
        %v740 = vpow.pop %v739
        %v741 = vadd.f32 %v740, 1.0
        %v742 = vrcp.pop %v741
        %v743 = vmul.f32 1.0, %v742
        %v744 = vmul.f32 %v733, %v724
        %v745 = vrot.slane %v520, 4
        %v747 = vadd.f32 %v745, %v744
        %v748 = vtanh.pop %v747
        %v749 = vsub.f32 1.0, %v743
        %v750 = vmul.f32 %v749, %v748
        %v751 = vmul.f32 %v743, %v518
        %v752 = vadd.f32 %v750, %v751
        %v753 = vld [vmem:[#allocation10] sm:$0xff]
        %v754 = vld [vmem:[#allocation10 + $0x8] sm:$0xff]
        %v755 = vld [vmem:[#allocation10 + $0x10] sm:$0xff]
        %v756 = vld [vmem:[#allocation10 + $0x18] sm:$0xff]
        %v757 = vld [vmem:[#allocation10 + $0x20] sm:$0xff]
        %v758 = vld [vmem:[#allocation10 + $0x28] sm:$0xff]
        %v759 = vld [vmem:[#allocation10 + $0x30] sm:$0xff]
        %v760 = vld [vmem:[#allocation10 + $0x38] sm:$0xff]
        %v761 = vld [vmem:[#allocation10 + $0x40] sm:$0xff]
        %v762 = vld [vmem:[#allocation10 + $0x48] sm:$0xff]
        %v763 = vld [vmem:[#allocation10 + $0x50] sm:$0xff]
        %v764 = vld [vmem:[#allocation10 + $0x58] sm:$0xff]
        %v765 = vld [vmem:[#allocation10 + $0x60] sm:$0xff]
        %v766 = vld [vmem:[#allocation10 + $0x68] sm:$0xff]
        %v767 = vld [vmem:[#allocation10 + $0x70] sm:$0xff]
        %v768 = vld [vmem:[#allocation10 + $0x78] sm:$0xff]
        %v769 = vld [vmem:[#allocation10 + $0x80] sm:$0xff]
        %v770 = vld [vmem:[#allocation10 + $0x88] sm:$0xff]
        %v771 = vld [vmem:[#allocation10 + $0x90] sm:$0xff]
        %v772 = vld [vmem:[#allocation10 + $0x98] sm:$0xff]
        %v773 = vld [vmem:[#allocation10 + $0xa0] sm:$0xff]
        %v774 = vld [vmem:[#allocation10 + $0xa8] sm:$0xff]
        %v775 = vld [vmem:[#allocation10 + $0xb0] sm:$0xff]
        %v776 = vld [vmem:[#allocation10 + $0xb8] sm:$0xff]
        %v777 = vld [vmem:[#allocation10 + $0xc0] sm:$0xff]
        %v778 = vld [vmem:[#allocation10 + $0xc8] sm:$0xff]
        %v779 = vld [vmem:[#allocation10 + $0xd0] sm:$0xff]
        %v780 = vld [vmem:[#allocation10 + $0xd8] sm:$0xff]
        %v781 = vld [vmem:[#allocation10 + $0xe0] sm:$0xff]
        %v782 = vld [vmem:[#allocation10 + $0xe8] sm:$0xff]
        %v783 = vld [vmem:[#allocation10 + $0xf0] sm:$0xff]
        %v784 = vld [vmem:[#allocation10 + $0xf8] sm:$0xff]
        %v785 = vld [vmem:[#allocation10 + $0x100] sm:$0xff]
        %v786 = vld [vmem:[#allocation10 + $0x108] sm:$0xff]
        %v787 = vld [vmem:[#allocation10 + $0x110] sm:$0xff]
        %v788 = vld [vmem:[#allocation10 + $0x118] sm:$0xff]
        %v789 = vld [vmem:[#allocation10 + $0x120] sm:$0xff]
        %v790 = vld [vmem:[#allocation10 + $0x128] sm:$0xff]
        %v791 = vld [vmem:[#allocation10 + $0x130] sm:$0xff]
        %v792 = vld [vmem:[#allocation10 + $0x138] sm:$0xff]
        %v793 = vld [vmem:[#allocation10 + $0x140] sm:$0xff]
        %v794 = vld [vmem:[#allocation10 + $0x148] sm:$0xff]
        %v795 = vld [vmem:[#allocation10 + $0x150] sm:$0xff]
        %v796 = vld [vmem:[#allocation10 + $0x158] sm:$0xff]
        %v797 = vld [vmem:[#allocation10 + $0x160] sm:$0xff]
        %v798 = vld [vmem:[#allocation10 + $0x168] sm:$0xff]
        %v799 = vld [vmem:[#allocation10 + $0x170] sm:$0xff]
        %v800 = vld [vmem:[#allocation10 + $0x178] sm:$0xff]
        %v801 = vld [vmem:[#allocation12] sm:$0x7]
        %v803 = vlaneseq
        %v804 = vshrl.u32 %v803, 7
        %v805 = vsub.s32 0, %v804
        %v806 = vrot.slane %v801, %v805
        %v807 = vlaneseq
        %v808 = vshrl.u32 %v807, 7
        %v809 = vsub.s32 1, %v808
        %v810 = vrot.slane %v801, %v809
        %v811 = vlaneseq
        %v812 = vshrl.u32 %v811, 7
        %v813 = vsub.s32 2, %v812
        %v814 = vrot.slane %v801, %v813
        %818 = vmatprep.subr.mxu0 %v754
        %819 = vmatpush1.msra.mxu0 %v753
        %820 = vmatprep.subr.mxu0 %v757
        %821 = vmatpush1.msra.mxu0 %v756
        %822 = vmatprep.subr.mxu0 %v760
        %823 = vmatpush1.msra.mxu0 %v759
        %824 = vmatprep.subr.mxu0 %v763
        %825 = vmatpush1.msra.mxu0 %v762
        %826 = vmatprep.subr.mxu0 %v766
        %827 = vmatpush1.msra.mxu0 %v765
        %828 = vmatprep.subr.mxu0 %v769
        %829 = vmatpush1.msra.mxu0 %v768
        %830 = vmatprep.subr.mxu0 %v772
        %831 = vmatpush1.msra.mxu0 %v771
        %832 = vmatprep.subr.mxu0 %v775
        %833 = vmatpush1.msra.mxu0 %v774
        %834 = vmatprep.subr.mxu0 %v778
        %835 = vmatpush1.msra.mxu0 %v777
        %836 = vmatprep.subr.mxu0 %v781
        %837 = vmatpush1.msra.mxu0 %v780
        %838 = vmatprep.subr.mxu0 %v784
        %839 = vmatpush1.msra.mxu0 %v783
        %840 = vmatprep.subr.mxu0 %v787
        %841 = vmatpush1.msra.mxu0 %v786
        %842 = vmatprep.subr.mxu0 %v790
        %843 = vmatpush1.msra.mxu0 %v789
        %844 = vmatprep.subr.mxu0 %v793
        %845 = vmatpush1.msra.mxu0 %v792
        %846 = vmatprep.subr.mxu0 %v796
        %847 = vmatpush1.msra.mxu0 %v795
        %848 = vmatprep.subr.mxu0 %v799
        %849 = vmatpush1.msra.mxu0 %v798
        %850 = vmatprep.subr.mxu0 0.0
        %851 = vmatpush1.msra.mxu0 0.0
        %852 = vmatprep.subr.mxu0 0.0
        %853 = vmatpush1.msra.mxu0 0.0
        %854 = vmatprep.subr.mxu0 0.0
        %855 = vmatpush1.msra.mxu0 0.0
        %856 = vmatprep.subr.mxu0 0.0
        %857 = vmatpush1.msra.mxu0 0.0
        %858 = vmatprep.subr.mxu0 0.0
        %859 = vmatpush1.msra.mxu0 0.0
        %860 = vmatprep.subr.mxu0 0.0
        %861 = vmatpush1.msra.mxu0 0.0
        %862 = vmatprep.subr.mxu0 0.0
        %863 = vmatpush1.msra.mxu0 0.0
        %864 = vmatprep.subr.mxu0 0.0
        %865 = vmatpush1.msra.mxu0 0.0
        %866 = vmatprep.subr.mxu0 0.0
        %867 = vmatpush1.msra.mxu0 0.0
        %868 = vmatprep.subr.mxu0 0.0
        %869 = vmatpush1.msra.mxu0 0.0
        %870 = vmatprep.subr.mxu0 0.0
        %871 = vmatpush1.msra.mxu0 0.0
        %872 = vmatprep.subr.mxu0 0.0
        %873 = vmatpush1.msra.mxu0 0.0
        %874 = vmatprep.subr.mxu0 0.0
        %875 = vmatpush1.msra.mxu0 0.0
        %876 = vmatprep.subr.mxu0 0.0
        %877 = vmatpush1.msra.mxu0 0.0
        %878 = vmatprep.subr.mxu0 0.0
        %879 = vmatpush1.msra.mxu0 0.0
        %880 = vmatprep.subr.mxu0 0.0
        %881 = vmatpush1.msra.mxu0 0.0
        %882 = vmatprep.mubr.f32.mxu0 0.0
        %883 = vmatmul.mubr.f32.gmra.mrb[0].mxu0 %v752
        %v884 = vpop.f32.mrb[0].mxu0
        %v885 = vadd.f32 %v806, %v884
        %v886 = vpop.f32.mrb[0].mxu0
        %v887 = vadd.f32 %v810, %v886
        %888 = vdwg.mxu0
        %889 = vmatprep.subr.mxu0 0.0
        %890 = vmatpush1.msra.mxu0 %v755
        %891 = vmatprep.subr.mxu0 0.0
        %892 = vmatpush1.msra.mxu0 %v758
        %893 = vmatprep.subr.mxu0 0.0
        %894 = vmatpush1.msra.mxu0 %v761
        %895 = vmatprep.subr.mxu0 0.0
        %896 = vmatpush1.msra.mxu0 %v764
        %897 = vmatprep.subr.mxu0 0.0
        %898 = vmatpush1.msra.mxu0 %v767
        %899 = vmatprep.subr.mxu0 0.0
        %900 = vmatpush1.msra.mxu0 %v770
        %901 = vmatprep.subr.mxu0 0.0
        %902 = vmatpush1.msra.mxu0 %v773
        %903 = vmatprep.subr.mxu0 0.0
        %904 = vmatpush1.msra.mxu0 %v776
        %905 = vmatprep.subr.mxu0 0.0
        %906 = vmatpush1.msra.mxu0 %v779
        %907 = vmatprep.subr.mxu0 0.0
        %908 = vmatpush1.msra.mxu0 %v782
        %909 = vmatprep.subr.mxu0 0.0
        %910 = vmatpush1.msra.mxu0 %v785
        %911 = vmatprep.subr.mxu0 0.0
        %912 = vmatpush1.msra.mxu0 %v788
        %913 = vmatprep.subr.mxu0 0.0
        %914 = vmatpush1.msra.mxu0 %v791
        %915 = vmatprep.subr.mxu0 0.0
        %916 = vmatpush1.msra.mxu0 %v794
        %917 = vmatprep.subr.mxu0 0.0
        %918 = vmatpush1.msra.mxu0 %v797
        %919 = vmatprep.subr.mxu0 0.0
        %920 = vmatpush1.msra.mxu0 %v800
        %921 = vmatprep.subr.mxu0 0.0
        %922 = vmatpush1.msra.mxu0 0.0
        %923 = vmatprep.subr.mxu0 0.0
        %924 = vmatpush1.msra.mxu0 0.0
        %925 = vmatprep.subr.mxu0 0.0
        %926 = vmatpush1.msra.mxu0 0.0
        %927 = vmatprep.subr.mxu0 0.0
        %928 = vmatpush1.msra.mxu0 0.0
        %929 = vmatprep.subr.mxu0 0.0
        %930 = vmatpush1.msra.mxu0 0.0
        %931 = vmatprep.subr.mxu0 0.0
        %932 = vmatpush1.msra.mxu0 0.0
        %933 = vmatprep.subr.mxu0 0.0
        %934 = vmatpush1.msra.mxu0 0.0
        %935 = vmatprep.subr.mxu0 0.0
        %936 = vmatpush1.msra.mxu0 0.0
        %937 = vmatprep.subr.mxu0 0.0
        %938 = vmatpush1.msra.mxu0 0.0
        %939 = vmatprep.subr.mxu0 0.0
        %940 = vmatpush1.msra.mxu0 0.0
        %941 = vmatprep.subr.mxu0 0.0
        %942 = vmatpush1.msra.mxu0 0.0
        %943 = vmatprep.subr.mxu0 0.0
        %944 = vmatpush1.msra.mxu0 0.0
        %945 = vmatprep.subr.mxu0 0.0
        %946 = vmatpush1.msra.mxu0 0.0
        %947 = vmatprep.subr.mxu0 0.0
        %948 = vmatpush1.msra.mxu0 0.0
        %949 = vmatprep.subr.mxu0 0.0
        %950 = vmatpush1.msra.mxu0 0.0
        %951 = vmatprep.subr.mxu0 0.0
        %952 = vmatpush1.msra.mxu0 0.0
        %953 = vmatprep.mubr.f32.mxu0 0.0
        %954 = vmatmul.mubr.f32.gmra.mrb[0].mxu0 %v752
        %v955 = vpop.f32.mrb[0].mxu0
        %v956 = vadd.f32 %v814, %v955
        %v957 = vpop.f32.mrb[0].mxu0
        %958 = vdwg.mxu0
        %v959 = vld [vmem:[#allocation13] sm:$0xff]
        %v960 = vld [vmem:[#allocation13 + $0x8] sm:$0xff]
        %v961 = vld [vmem:[#allocation13 + $0x10] sm:$0xff]
        %v962 = vld [vmem:[#allocation13 + $0x18] sm:$0xff]
        %v963 = vld [vmem:[#allocation13 + $0x20] sm:$0xff]
        %v964 = vld [vmem:[#allocation13 + $0x28] sm:$0xff]
        %v965 = vld [vmem:[#allocation13 + $0x30] sm:$0xff]
        %v966 = vld [vmem:[#allocation13 + $0x38] sm:$0xff]
        %v967 = vld [vmem:[#allocation13 + $0x40] sm:$0xff]
        %v968 = vld [vmem:[#allocation13 + $0x48] sm:$0xff]
        %v969 = vld [vmem:[#allocation13 + $0x50] sm:$0xff]
        %v970 = vld [vmem:[#allocation13 + $0x58] sm:$0xff]
        %v971 = vld [vmem:[#allocation13 + $0x60] sm:$0xff]
        %v972 = vld [vmem:[#allocation13 + $0x68] sm:$0xff]
        %v973 = vld [vmem:[#allocation13 + $0x70] sm:$0xff]
        %v974 = vld [vmem:[#allocation13 + $0x78] sm:$0xff]
        %v975 = vld [vmem:[#allocation13 + $0x80] sm:$0xff]
        %v976 = vld [vmem:[#allocation13 + $0x88] sm:$0xff]
        %v977 = vld [vmem:[#allocation13 + $0x90] sm:$0xff]
        %v978 = vld [vmem:[#allocation13 + $0x98] sm:$0xff]
        %v979 = vld [vmem:[#allocation13 + $0xa0] sm:$0xff]
        %v980 = vld [vmem:[#allocation13 + $0xa8] sm:$0xff]
        %v981 = vld [vmem:[#allocation13 + $0xb0] sm:$0xff]
        %v982 = vld [vmem:[#allocation13 + $0xb8] sm:$0xff]
        %v983 = vld [vmem:[#allocation13 + $0xc0] sm:$0xff]
        %v984 = vld [vmem:[#allocation13 + $0xc8] sm:$0xff]
        %v985 = vld [vmem:[#allocation13 + $0xd0] sm:$0xff]
        %v986 = vld [vmem:[#allocation13 + $0xd8] sm:$0xff]
        %v987 = vld [vmem:[#allocation13 + $0xe0] sm:$0xff]
        %v988 = vld [vmem:[#allocation13 + $0xe8] sm:$0xff]
        %v989 = vld [vmem:[#allocation13 + $0xf0] sm:$0xff]
        %v990 = vld [vmem:[#allocation13 + $0xf8] sm:$0xff]
        %v991 = vld [vmem:[#allocation13 + $0x100] sm:$0xff]
        %v992 = vld [vmem:[#allocation13 + $0x108] sm:$0xff]
        %v993 = vld [vmem:[#allocation13 + $0x110] sm:$0xff]
        %v994 = vld [vmem:[#allocation13 + $0x118] sm:$0xff]
        %v995 = vld [vmem:[#allocation13 + $0x120] sm:$0xff]
        %v996 = vld [vmem:[#allocation13 + $0x128] sm:$0xff]
        %v997 = vld [vmem:[#allocation13 + $0x130] sm:$0xff]
        %v998 = vld [vmem:[#allocation13 + $0x138] sm:$0xff]
        %v999 = vld [vmem:[#allocation13 + $0x140] sm:$0xff]
        %v1000 = vld [vmem:[#allocation13 + $0x148] sm:$0xff]
        %v1001 = vld [vmem:[#allocation13 + $0x150] sm:$0xff]
        %v1002 = vld [vmem:[#allocation13 + $0x158] sm:$0xff]
        %v1003 = vld [vmem:[#allocation13 + $0x160] sm:$0xff]
        %v1004 = vld [vmem:[#allocation13 + $0x168] sm:$0xff]
        %v1005 = vld [vmem:[#allocation13 + $0x170] sm:$0xff]
        %v1006 = vld [vmem:[#allocation13 + $0x178] sm:$0xff]
        %v1007 = vld [vmem:[#allocation15] sm:$0x7]
        %v1009 = vlaneseq
        %v1010 = vshrl.u32 %v1009, 7
        %v1011 = vsub.s32 0, %v1010
        %v1012 = vrot.slane %v1007, %v1011
        %v1013 = vlaneseq
        %v1014 = vshrl.u32 %v1013, 7
        %v1015 = vsub.s32 1, %v1014
        %v1016 = vrot.slane %v1007, %v1015
        %v1017 = vlaneseq
        %v1018 = vshrl.u32 %v1017, 7
        %v1019 = vsub.s32 2, %v1018
        %v1020 = vrot.slane %v1007, %v1019
        %1024 = vmatprep.subr.mxu0 %v960
        %1025 = vmatpush1.msra.mxu0 %v959
        %1026 = vmatprep.subr.mxu0 %v963
        %1027 = vmatpush1.msra.mxu0 %v962
        %1028 = vmatprep.subr.mxu0 %v966
        %1029 = vmatpush1.msra.mxu0 %v965
        %1030 = vmatprep.subr.mxu0 %v969
        %1031 = vmatpush1.msra.mxu0 %v968
        %1032 = vmatprep.subr.mxu0 %v972
        %1033 = vmatpush1.msra.mxu0 %v971
        %1034 = vmatprep.subr.mxu0 %v975
        %1035 = vmatpush1.msra.mxu0 %v974
        %1036 = vmatprep.subr.mxu0 %v978
        %1037 = vmatpush1.msra.mxu0 %v977
        %1038 = vmatprep.subr.mxu0 %v981
        %1039 = vmatpush1.msra.mxu0 %v980
        %1040 = vmatprep.subr.mxu0 %v984
        %1041 = vmatpush1.msra.mxu0 %v983
        %1042 = vmatprep.subr.mxu0 %v987
        %1043 = vmatpush1.msra.mxu0 %v986
        %1044 = vmatprep.subr.mxu0 %v990
        %1045 = vmatpush1.msra.mxu0 %v989
        %1046 = vmatprep.subr.mxu0 %v993
        %1047 = vmatpush1.msra.mxu0 %v992
        %1048 = vmatprep.subr.mxu0 %v996
        %1049 = vmatpush1.msra.mxu0 %v995
        %1050 = vmatprep.subr.mxu0 %v999
        %1051 = vmatpush1.msra.mxu0 %v998
        %1052 = vmatprep.subr.mxu0 %v1002
        %1053 = vmatpush1.msra.mxu0 %v1001
        %1054 = vmatprep.subr.mxu0 %v1005
        %1055 = vmatpush1.msra.mxu0 %v1004
        %1056 = vmatprep.subr.mxu0 0.0
        %1057 = vmatpush1.msra.mxu0 0.0
        %1058 = vmatprep.subr.mxu0 0.0
        %1059 = vmatpush1.msra.mxu0 0.0
        %1060 = vmatprep.subr.mxu0 0.0
        %1061 = vmatpush1.msra.mxu0 0.0
        %1062 = vmatprep.subr.mxu0 0.0
        %1063 = vmatpush1.msra.mxu0 0.0
        %1064 = vmatprep.subr.mxu0 0.0
        %1065 = vmatpush1.msra.mxu0 0.0
        %1066 = vmatprep.subr.mxu0 0.0
        %1067 = vmatpush1.msra.mxu0 0.0
        %1068 = vmatprep.subr.mxu0 0.0
        %1069 = vmatpush1.msra.mxu0 0.0
        %1070 = vmatprep.subr.mxu0 0.0
        %1071 = vmatpush1.msra.mxu0 0.0
        %1072 = vmatprep.subr.mxu0 0.0
        %1073 = vmatpush1.msra.mxu0 0.0
        %1074 = vmatprep.subr.mxu0 0.0
        %1075 = vmatpush1.msra.mxu0 0.0
        %1076 = vmatprep.subr.mxu0 0.0
        %1077 = vmatpush1.msra.mxu0 0.0
        %1078 = vmatprep.subr.mxu0 0.0
        %1079 = vmatpush1.msra.mxu0 0.0
        %1080 = vmatprep.subr.mxu0 0.0
        %1081 = vmatpush1.msra.mxu0 0.0
        %1082 = vmatprep.subr.mxu0 0.0
        %1083 = vmatpush1.msra.mxu0 0.0
        %1084 = vmatprep.subr.mxu0 0.0
        %1085 = vmatpush1.msra.mxu0 0.0
        %1086 = vmatprep.subr.mxu0 0.0
        %1087 = vmatpush1.msra.mxu0 0.0
        %1088 = vmatprep.mubr.f32.mxu0 0.0
        %1089 = vmatmul.mubr.f32.gmra.mrb[0].mxu0 %v519
        %v1090 = vpop.f32.mrb[0].mxu0
        %v1091 = vadd.f32 %v1012, %v1090
        %v1092 = vpop.f32.mrb[0].mxu0
        %v1093 = vadd.f32 %v1016, %v1092
        %1094 = vdwg.mxu0
        %1095 = vmatprep.subr.mxu0 0.0
        %1096 = vmatpush1.msra.mxu0 %v961
        %1097 = vmatprep.subr.mxu0 0.0
        %1098 = vmatpush1.msra.mxu0 %v964
        %1099 = vmatprep.subr.mxu0 0.0
        %1100 = vmatpush1.msra.mxu0 %v967
        %1101 = vmatprep.subr.mxu0 0.0
        %1102 = vmatpush1.msra.mxu0 %v970
        %1103 = vmatprep.subr.mxu0 0.0
        %1104 = vmatpush1.msra.mxu0 %v973
        %1105 = vmatprep.subr.mxu0 0.0
        %1106 = vmatpush1.msra.mxu0 %v976
        %1107 = vmatprep.subr.mxu0 0.0
        %1108 = vmatpush1.msra.mxu0 %v979
        %1109 = vmatprep.subr.mxu0 0.0
        %1110 = vmatpush1.msra.mxu0 %v982
        %1111 = vmatprep.subr.mxu0 0.0
        %1112 = vmatpush1.msra.mxu0 %v985
        %1113 = vmatprep.subr.mxu0 0.0
        %1114 = vmatpush1.msra.mxu0 %v988
        %1115 = vmatprep.subr.mxu0 0.0
        %1116 = vmatpush1.msra.mxu0 %v991
        %1117 = vmatprep.subr.mxu0 0.0
        %1118 = vmatpush1.msra.mxu0 %v994
        %1119 = vmatprep.subr.mxu0 0.0
        %1120 = vmatpush1.msra.mxu0 %v997
        %1121 = vmatprep.subr.mxu0 0.0
        %1122 = vmatpush1.msra.mxu0 %v1000
        %1123 = vmatprep.subr.mxu0 0.0
        %1124 = vmatpush1.msra.mxu0 %v1003
        %1125 = vmatprep.subr.mxu0 0.0
        %1126 = vmatpush1.msra.mxu0 %v1006
        %1127 = vmatprep.subr.mxu0 0.0
        %1128 = vmatpush1.msra.mxu0 0.0
        %1129 = vmatprep.subr.mxu0 0.0
        %1130 = vmatpush1.msra.mxu0 0.0
        %1131 = vmatprep.subr.mxu0 0.0
        %1132 = vmatpush1.msra.mxu0 0.0
        %1133 = vmatprep.subr.mxu0 0.0
        %1134 = vmatpush1.msra.mxu0 0.0
        %1135 = vmatprep.subr.mxu0 0.0
        %1136 = vmatpush1.msra.mxu0 0.0
        %1137 = vmatprep.subr.mxu0 0.0
        %1138 = vmatpush1.msra.mxu0 0.0
        %1139 = vmatprep.subr.mxu0 0.0
        %1140 = vmatpush1.msra.mxu0 0.0
        %1141 = vmatprep.subr.mxu0 0.0
        %1142 = vmatpush1.msra.mxu0 0.0
        %1143 = vmatprep.subr.mxu0 0.0
        %1144 = vmatpush1.msra.mxu0 0.0
        %1145 = vmatprep.subr.mxu0 0.0
        %1146 = vmatpush1.msra.mxu0 0.0
        %1147 = vmatprep.subr.mxu0 0.0
        %1148 = vmatpush1.msra.mxu0 0.0
        %1149 = vmatprep.subr.mxu0 0.0
        %1150 = vmatpush1.msra.mxu0 0.0
        %1151 = vmatprep.subr.mxu0 0.0
        %1152 = vmatpush1.msra.mxu0 0.0
        %1153 = vmatprep.subr.mxu0 0.0
        %1154 = vmatpush1.msra.mxu0 0.0
        %1155 = vmatprep.subr.mxu0 0.0
        %1156 = vmatpush1.msra.mxu0 0.0
        %1157 = vmatprep.subr.mxu0 0.0
        %1158 = vmatpush1.msra.mxu0 0.0
        %1159 = vmatprep.mubr.f32.mxu0 0.0
        %1160 = vmatmul.mubr.f32.gmra.mrb[0].mxu0 %v519
        %v1161 = vpop.f32.mrb[0].mxu0
        %v1162 = vadd.f32 %v1020, %v1161
        %v1163 = vpop.f32.mrb[0].mxu0
        %1164 = vdwg.mxu0
        %v1165 = vadd.f32 %v885, %v1091
        %v1166 = vxor.u32 %v1165, 2147483648
        %v1167 = vmul.f32 %v1166, 1.442695
        %v1168 = vpow.pop %v1167
        %v1169 = vadd.f32 %v1168, 1.0
        %v1170 = vrcp.pop %v1169
        %v1171 = vmul.f32 1.0, %v1170
        %v1172 = vadd.f32 %v887, %v1093
        %v1173 = vxor.u32 %v1172, 2147483648
        %v1174 = vmul.f32 %v1173, 1.442695
        %v1175 = vpow.pop %v1174
        %v1176 = vadd.f32 %v1175, 1.0
        %v1177 = vrcp.pop %v1176
        %v1178 = vmul.f32 1.0, %v1177
        %v1179 = vmul.f32 %v1171, %v1162
        %v1180 = vadd.f32 %v956, %v1179
        %v1181 = vtanh.pop %v1180
        %v1182 = vsub.f32 1.0, %v1178
        %v1183 = vmul.f32 %v1182, %v1181
        %v1184 = vmul.f32 %v1178, %v519
        %v1185 = vadd.f32 %v1183, %v1184
        %1186 = vst [vmem:[%s503] sm:$0x3] %v1185
        %s1187 = scalar_lea.vmem %s437, 6 [#allocation4]
        %v1188 = vld [vmem:[%s1187] sm:$0x3f]
        %v1189 = vld [vmem:[#allocation7] sm:$0xff]
        %v1190 = vld [vmem:[#allocation7 + $0x8] sm:$0xff]
        %v1191 = vld [vmem:[#allocation7 + $0x10] sm:$0xff]
        %v1192 = vld [vmem:[#allocation7 + $0x18] sm:$0xff]
        %v1193 = vld [vmem:[#allocation7 + $0x20] sm:$0xff]
        %v1194 = vld [vmem:[#allocation7 + $0x28] sm:$0xff]
        %v1195 = vld [vmem:[#allocation7 + $0x30] sm:$0xff]
        %v1196 = vld [vmem:[#allocation7 + $0x38] sm:$0xff]
        %v1197 = vld [vmem:[#allocation7 + $0x40] sm:$0xff]
        %v1198 = vld [vmem:[#allocation7 + $0x48] sm:$0xff]
        %v1199 = vld [vmem:[#allocation7 + $0x50] sm:$0xff]
        %v1200 = vld [vmem:[#allocation7 + $0x58] sm:$0xff]
        %v1201 = vld [vmem:[#allocation7 + $0x60] sm:$0xff]
        %v1202 = vld [vmem:[#allocation7 + $0x68] sm:$0xff]
        %v1203 = vld [vmem:[#allocation7 + $0x70] sm:$0xff]
        %v1204 = vld [vmem:[#allocation7 + $0x78] sm:$0xff]
        %v1205 = vld [vmem:[#allocation7 + $0x80] sm:$0xff]
        %v1206 = vld [vmem:[#allocation7 + $0x88] sm:$0xff]
        %v1207 = vld [vmem:[#allocation7 + $0x90] sm:$0xff]
        %v1208 = vld [vmem:[#allocation7 + $0x98] sm:$0xff]
        %v1209 = vld [vmem:[#allocation7 + $0xa0] sm:$0xff]
        %v1210 = vld [vmem:[#allocation7 + $0xa8] sm:$0xff]
        %v1211 = vld [vmem:[#allocation7 + $0xb0] sm:$0xff]
        %v1212 = vld [vmem:[#allocation7 + $0xb8] sm:$0xff]
        %v1213 = vld [vmem:[#allocation7 + $0xc0] sm:$0xff]
        %v1214 = vld [vmem:[#allocation7 + $0xc8] sm:$0xff]
        %v1215 = vld [vmem:[#allocation7 + $0xd0] sm:$0xff]
        %v1216 = vld [vmem:[#allocation7 + $0xd8] sm:$0xff]
        %v1217 = vld [vmem:[#allocation7 + $0xe0] sm:$0xff]
        %v1218 = vld [vmem:[#allocation7 + $0xe8] sm:$0xff]
        %v1219 = vld [vmem:[#allocation7 + $0xf0] sm:$0xff]
        %v1220 = vld [vmem:[#allocation7 + $0xf8] sm:$0xff]
        %v1221 = vld [vmem:[#allocation7 + $0x100] sm:$0xff]
        %v1222 = vld [vmem:[#allocation7 + $0x108] sm:$0xff]
        %v1223 = vld [vmem:[#allocation7 + $0x110] sm:$0xff]
        %v1224 = vld [vmem:[#allocation7 + $0x118] sm:$0xff]
        %v1225 = vld [vmem:[#allocation7 + $0x120] sm:$0xff]
        %v1226 = vld [vmem:[#allocation7 + $0x128] sm:$0xff]
        %v1227 = vld [vmem:[#allocation7 + $0x130] sm:$0xff]
        %v1228 = vld [vmem:[#allocation7 + $0x138] sm:$0xff]
        %v1229 = vld [vmem:[#allocation7 + $0x140] sm:$0xff]
        %v1230 = vld [vmem:[#allocation7 + $0x148] sm:$0xff]
        %v1231 = vld [vmem:[#allocation7 + $0x150] sm:$0xff]
        %v1232 = vld [vmem:[#allocation7 + $0x158] sm:$0xff]
        %v1233 = vld [vmem:[#allocation7 + $0x160] sm:$0xff]
        %v1234 = vld [vmem:[#allocation7 + $0x168] sm:$0xff]
        %v1235 = vld [vmem:[#allocation7 + $0x170] sm:$0xff]
        %v1236 = vld [vmem:[#allocation7 + $0x178] sm:$0xff]
        %v1237 = vld [vmem:[#allocation9] sm:$0x7]
        %v1239 = vlaneseq
        %v1240 = vshrl.u32 %v1239, 7
        %v1241 = vsub.s32 0, %v1240
        %v1242 = vrot.slane %v1237, %v1241
        %v1243 = vlaneseq
        %v1244 = vshrl.u32 %v1243, 7
        %v1245 = vsub.s32 1, %v1244
        %v1246 = vrot.slane %v1237, %v1245
        %v1247 = vlaneseq
        %v1248 = vshrl.u32 %v1247, 7
        %v1249 = vsub.s32 2, %v1248
        %v1250 = vrot.slane %v1237, %v1249
        %1254 = vmatprep.subr.mxu0 %v1190
        %1255 = vmatpush1.msra.mxu0 %v1189
        %1256 = vmatprep.subr.mxu0 %v1193
        %1257 = vmatpush1.msra.mxu0 %v1192
        %1258 = vmatprep.subr.mxu0 %v1196
        %1259 = vmatpush1.msra.mxu0 %v1195
        %1260 = vmatprep.subr.mxu0 %v1199
        %1261 = vmatpush1.msra.mxu0 %v1198
        %1262 = vmatprep.subr.mxu0 %v1202
        %1263 = vmatpush1.msra.mxu0 %v1201
        %1264 = vmatprep.subr.mxu0 %v1205
        %1265 = vmatpush1.msra.mxu0 %v1204
        %1266 = vmatprep.subr.mxu0 %v1208
        %1267 = vmatpush1.msra.mxu0 %v1207
        %1268 = vmatprep.subr.mxu0 %v1211
        %1269 = vmatpush1.msra.mxu0 %v1210
        %1270 = vmatprep.subr.mxu0 %v1214
        %1271 = vmatpush1.msra.mxu0 %v1213
        %1272 = vmatprep.subr.mxu0 %v1217
        %1273 = vmatpush1.msra.mxu0 %v1216
        %1274 = vmatprep.subr.mxu0 %v1220
        %1275 = vmatpush1.msra.mxu0 %v1219
        %1276 = vmatprep.subr.mxu0 %v1223
        %1277 = vmatpush1.msra.mxu0 %v1222
        %1278 = vmatprep.subr.mxu0 %v1226
        %1279 = vmatpush1.msra.mxu0 %v1225
        %1280 = vmatprep.subr.mxu0 %v1229
        %1281 = vmatpush1.msra.mxu0 %v1228
        %1282 = vmatprep.subr.mxu0 %v1232
        %1283 = vmatpush1.msra.mxu0 %v1231
        %1284 = vmatprep.subr.mxu0 %v1235
        %1285 = vmatpush1.msra.mxu0 %v1234
        %1286 = vmatprep.subr.mxu0 0.0
        %1287 = vmatpush1.msra.mxu0 0.0
        %1288 = vmatprep.subr.mxu0 0.0
        %1289 = vmatpush1.msra.mxu0 0.0
        %1290 = vmatprep.subr.mxu0 0.0
        %1291 = vmatpush1.msra.mxu0 0.0
        %1292 = vmatprep.subr.mxu0 0.0
        %1293 = vmatpush1.msra.mxu0 0.0
        %1294 = vmatprep.subr.mxu0 0.0
        %1295 = vmatpush1.msra.mxu0 0.0
        %1296 = vmatprep.subr.mxu0 0.0
        %1297 = vmatpush1.msra.mxu0 0.0
        %1298 = vmatprep.subr.mxu0 0.0
        %1299 = vmatpush1.msra.mxu0 0.0
        %1300 = vmatprep.subr.mxu0 0.0
        %1301 = vmatpush1.msra.mxu0 0.0
        %1302 = vmatprep.subr.mxu0 0.0
        %1303 = vmatpush1.msra.mxu0 0.0
        %1304 = vmatprep.subr.mxu0 0.0
        %1305 = vmatpush1.msra.mxu0 0.0
        %1306 = vmatprep.subr.mxu0 0.0
        %1307 = vmatpush1.msra.mxu0 0.0
        %1308 = vmatprep.subr.mxu0 0.0
        %1309 = vmatpush1.msra.mxu0 0.0
        %1310 = vmatprep.subr.mxu0 0.0
        %1311 = vmatpush1.msra.mxu0 0.0
        %1312 = vmatprep.subr.mxu0 0.0
        %1313 = vmatpush1.msra.mxu0 0.0
        %1314 = vmatprep.subr.mxu0 0.0
        %1315 = vmatpush1.msra.mxu0 0.0
        %1316 = vmatprep.subr.mxu0 0.0
        %1317 = vmatpush1.msra.mxu0 0.0
        %1318 = vmatprep.mubr.f32.mxu0 0.0
        %1319 = vmatmul.mubr.f32.gmra.mrb[0].mxu0 %v752
        %v1320 = vpop.f32.mrb[0].mxu0
        %v1321 = vadd.f32 %v1242, %v1320
        %v1322 = vpop.f32.mrb[0].mxu0
        %v1323 = vadd.f32 %v1246, %v1322
        %1324 = vdwg.mxu0
        %1325 = vmatprep.subr.mxu0 0.0
        %1326 = vmatpush1.msra.mxu0 %v1191
        %1327 = vmatprep.subr.mxu0 0.0
        %1328 = vmatpush1.msra.mxu0 %v1194
        %1329 = vmatprep.subr.mxu0 0.0
        %1330 = vmatpush1.msra.mxu0 %v1197
        %1331 = vmatprep.subr.mxu0 0.0
        %1332 = vmatpush1.msra.mxu0 %v1200
        %1333 = vmatprep.subr.mxu0 0.0
        %1334 = vmatpush1.msra.mxu0 %v1203
        %1335 = vmatprep.subr.mxu0 0.0
        %1336 = vmatpush1.msra.mxu0 %v1206
        %1337 = vmatprep.subr.mxu0 0.0
        %1338 = vmatpush1.msra.mxu0 %v1209
        %1339 = vmatprep.subr.mxu0 0.0
        %1340 = vmatpush1.msra.mxu0 %v1212
        %1341 = vmatprep.subr.mxu0 0.0
        %1342 = vmatpush1.msra.mxu0 %v1215
        %1343 = vmatprep.subr.mxu0 0.0
        %1344 = vmatpush1.msra.mxu0 %v1218
        %1345 = vmatprep.subr.mxu0 0.0
        %1346 = vmatpush1.msra.mxu0 %v1221
        %1347 = vmatprep.subr.mxu0 0.0
        %1348 = vmatpush1.msra.mxu0 %v1224
        %1349 = vmatprep.subr.mxu0 0.0
        %1350 = vmatpush1.msra.mxu0 %v1227
        %1351 = vmatprep.subr.mxu0 0.0
        %1352 = vmatpush1.msra.mxu0 %v1230
        %1353 = vmatprep.subr.mxu0 0.0
        %1354 = vmatpush1.msra.mxu0 %v1233
        %1355 = vmatprep.subr.mxu0 0.0
        %1356 = vmatpush1.msra.mxu0 %v1236
        %1357 = vmatprep.subr.mxu0 0.0
        %1358 = vmatpush1.msra.mxu0 0.0
        %1359 = vmatprep.subr.mxu0 0.0
        %1360 = vmatpush1.msra.mxu0 0.0
        %1361 = vmatprep.subr.mxu0 0.0
        %1362 = vmatpush1.msra.mxu0 0.0
        %1363 = vmatprep.subr.mxu0 0.0
        %1364 = vmatpush1.msra.mxu0 0.0
        %1365 = vmatprep.subr.mxu0 0.0
        %1366 = vmatpush1.msra.mxu0 0.0
        %1367 = vmatprep.subr.mxu0 0.0
        %1368 = vmatpush1.msra.mxu0 0.0
        %1369 = vmatprep.subr.mxu0 0.0
        %1370 = vmatpush1.msra.mxu0 0.0
        %1371 = vmatprep.subr.mxu0 0.0
        %1372 = vmatpush1.msra.mxu0 0.0
        %1373 = vmatprep.subr.mxu0 0.0
        %1374 = vmatpush1.msra.mxu0 0.0
        %1375 = vmatprep.subr.mxu0 0.0
        %1376 = vmatpush1.msra.mxu0 0.0
        %1377 = vmatprep.subr.mxu0 0.0
        %1378 = vmatpush1.msra.mxu0 0.0
        %1379 = vmatprep.subr.mxu0 0.0
        %1380 = vmatpush1.msra.mxu0 0.0
        %1381 = vmatprep.subr.mxu0 0.0
        %1382 = vmatpush1.msra.mxu0 0.0
        %1383 = vmatprep.subr.mxu0 0.0
        %1384 = vmatpush1.msra.mxu0 0.0
        %1385 = vmatprep.subr.mxu0 0.0
        %1386 = vmatpush1.msra.mxu0 0.0
        %1387 = vmatprep.subr.mxu0 0.0
        %1388 = vmatpush1.msra.mxu0 0.0
        %1389 = vmatprep.mubr.f32.mxu0 0.0
        %1390 = vmatmul.mubr.f32.gmra.mrb[0].mxu0 %v752
        %v1391 = vpop.f32.mrb[0].mxu0
        %v1392 = vadd.f32 %v1250, %v1391
        %v1393 = vpop.f32.mrb[0].mxu0
        %1394 = vdwg.mxu0
        %v1395 = vadd.f32 %v1188, %v1321
        %v1396 = vxor.u32 %v1395, 2147483648
        %v1397 = vmul.f32 %v1396, 1.442695
        %v1398 = vpow.pop %v1397
        %v1399 = vadd.f32 %v1398, 1.0
        %v1400 = vrcp.pop %v1399
        %v1401 = vmul.f32 1.0, %v1400
        %v1403 = vrot.slane %v1188, 2
        %v1405 = vadd.f32 %v1403, %v1323
        %v1406 = vxor.u32 %v1405, 2147483648
        %v1407 = vmul.f32 %v1406, 1.442695
        %v1408 = vpow.pop %v1407
        %v1409 = vadd.f32 %v1408, 1.0
        %v1410 = vrcp.pop %v1409
        %v1411 = vmul.f32 1.0, %v1410
        %v1412 = vmul.f32 %v1401, %v1392
        %v1413 = vrot.slane %v1188, 4
        %v1415 = vadd.f32 %v1413, %v1412
        %v1416 = vtanh.pop %v1415
        %v1417 = vsub.f32 1.0, %v1411
        %v1418 = vmul.f32 %v1417, %v1416
        %v1419 = vmul.f32 %v1411, %v752
        %v1420 = vadd.f32 %v1418, %v1419
        %v1421 = vld [vmem:[#allocation10] sm:$0xff]
        %v1422 = vld [vmem:[#allocation10 + $0x8] sm:$0xff]
        %v1423 = vld [vmem:[#allocation10 + $0x10] sm:$0xff]
        %v1424 = vld [vmem:[#allocation10 + $0x18] sm:$0xff]
        %v1425 = vld [vmem:[#allocation10 + $0x20] sm:$0xff]
        %v1426 = vld [vmem:[#allocation10 + $0x28] sm:$0xff]
        %v1427 = vld [vmem:[#allocation10 + $0x30] sm:$0xff]
        %v1428 = vld [vmem:[#allocation10 + $0x38] sm:$0xff]
        %v1429 = vld [vmem:[#allocation10 + $0x40] sm:$0xff]
        %v1430 = vld [vmem:[#allocation10 + $0x48] sm:$0xff]
        %v1431 = vld [vmem:[#allocation10 + $0x50] sm:$0xff]
        %v1432 = vld [vmem:[#allocation10 + $0x58] sm:$0xff]
        %v1433 = vld [vmem:[#allocation10 + $0x60] sm:$0xff]
        %v1434 = vld [vmem:[#allocation10 + $0x68] sm:$0xff]
        %v1435 = vld [vmem:[#allocation10 + $0x70] sm:$0xff]
        %v1436 = vld [vmem:[#allocation10 + $0x78] sm:$0xff]
        %v1437 = vld [vmem:[#allocation10 + $0x80] sm:$0xff]
        %v1438 = vld [vmem:[#allocation10 + $0x88] sm:$0xff]
        %v1439 = vld [vmem:[#allocation10 + $0x90] sm:$0xff]
        %v1440 = vld [vmem:[#allocation10 + $0x98] sm:$0xff]
        %v1441 = vld [vmem:[#allocation10 + $0xa0] sm:$0xff]
        %v1442 = vld [vmem:[#allocation10 + $0xa8] sm:$0xff]
        %v1443 = vld [vmem:[#allocation10 + $0xb0] sm:$0xff]
        %v1444 = vld [vmem:[#allocation10 + $0xb8] sm:$0xff]
        %v1445 = vld [vmem:[#allocation10 + $0xc0] sm:$0xff]
        %v1446 = vld [vmem:[#allocation10 + $0xc8] sm:$0xff]
        %v1447 = vld [vmem:[#allocation10 + $0xd0] sm:$0xff]
        %v1448 = vld [vmem:[#allocation10 + $0xd8] sm:$0xff]
        %v1449 = vld [vmem:[#allocation10 + $0xe0] sm:$0xff]
        %v1450 = vld [vmem:[#allocation10 + $0xe8] sm:$0xff]
        %v1451 = vld [vmem:[#allocation10 + $0xf0] sm:$0xff]
        %v1452 = vld [vmem:[#allocation10 + $0xf8] sm:$0xff]
        %v1453 = vld [vmem:[#allocation10 + $0x100] sm:$0xff]
        %v1454 = vld [vmem:[#allocation10 + $0x108] sm:$0xff]
        %v1455 = vld [vmem:[#allocation10 + $0x110] sm:$0xff]
        %v1456 = vld [vmem:[#allocation10 + $0x118] sm:$0xff]
        %v1457 = vld [vmem:[#allocation10 + $0x120] sm:$0xff]
        %v1458 = vld [vmem:[#allocation10 + $0x128] sm:$0xff]
        %v1459 = vld [vmem:[#allocation10 + $0x130] sm:$0xff]
        %v1460 = vld [vmem:[#allocation10 + $0x138] sm:$0xff]
        %v1461 = vld [vmem:[#allocation10 + $0x140] sm:$0xff]
        %v1462 = vld [vmem:[#allocation10 + $0x148] sm:$0xff]
        %v1463 = vld [vmem:[#allocation10 + $0x150] sm:$0xff]
        %v1464 = vld [vmem:[#allocation10 + $0x158] sm:$0xff]
        %v1465 = vld [vmem:[#allocation10 + $0x160] sm:$0xff]
        %v1466 = vld [vmem:[#allocation10 + $0x168] sm:$0xff]
        %v1467 = vld [vmem:[#allocation10 + $0x170] sm:$0xff]
        %v1468 = vld [vmem:[#allocation10 + $0x178] sm:$0xff]
        %v1469 = vld [vmem:[#allocation12] sm:$0x7]
        %v1471 = vlaneseq
        %v1472 = vshrl.u32 %v1471, 7
        %v1473 = vsub.s32 0, %v1472
        %v1474 = vrot.slane %v1469, %v1473
        %v1475 = vlaneseq
        %v1476 = vshrl.u32 %v1475, 7
        %v1477 = vsub.s32 1, %v1476
        %v1478 = vrot.slane %v1469, %v1477
        %v1479 = vlaneseq
        %v1480 = vshrl.u32 %v1479, 7
        %v1481 = vsub.s32 2, %v1480
        %v1482 = vrot.slane %v1469, %v1481
        %1486 = vmatprep.subr.mxu0 %v1422
        %1487 = vmatpush1.msra.mxu0 %v1421
        %1488 = vmatprep.subr.mxu0 %v1425
        %1489 = vmatpush1.msra.mxu0 %v1424
        %1490 = vmatprep.subr.mxu0 %v1428
        %1491 = vmatpush1.msra.mxu0 %v1427
        %1492 = vmatprep.subr.mxu0 %v1431
        %1493 = vmatpush1.msra.mxu0 %v1430
        %1494 = vmatprep.subr.mxu0 %v1434
        %1495 = vmatpush1.msra.mxu0 %v1433
        %1496 = vmatprep.subr.mxu0 %v1437
        %1497 = vmatpush1.msra.mxu0 %v1436
        %1498 = vmatprep.subr.mxu0 %v1440
        %1499 = vmatpush1.msra.mxu0 %v1439
        %1500 = vmatprep.subr.mxu0 %v1443
        %1501 = vmatpush1.msra.mxu0 %v1442
        %1502 = vmatprep.subr.mxu0 %v1446
        %1503 = vmatpush1.msra.mxu0 %v1445
        %1504 = vmatprep.subr.mxu0 %v1449
        %1505 = vmatpush1.msra.mxu0 %v1448
        %1506 = vmatprep.subr.mxu0 %v1452
        %1507 = vmatpush1.msra.mxu0 %v1451
        %1508 = vmatprep.subr.mxu0 %v1455
        %1509 = vmatpush1.msra.mxu0 %v1454
        %1510 = vmatprep.subr.mxu0 %v1458
        %1511 = vmatpush1.msra.mxu0 %v1457
        %1512 = vmatprep.subr.mxu0 %v1461
        %1513 = vmatpush1.msra.mxu0 %v1460
        %1514 = vmatprep.subr.mxu0 %v1464
        %1515 = vmatpush1.msra.mxu0 %v1463
        %1516 = vmatprep.subr.mxu0 %v1467
        %1517 = vmatpush1.msra.mxu0 %v1466
        %1518 = vmatprep.subr.mxu0 0.0
        %1519 = vmatpush1.msra.mxu0 0.0
        %1520 = vmatprep.subr.mxu0 0.0
        %1521 = vmatpush1.msra.mxu0 0.0
        %1522 = vmatprep.subr.mxu0 0.0
        %1523 = vmatpush1.msra.mxu0 0.0
        %1524 = vmatprep.subr.mxu0 0.0
        %1525 = vmatpush1.msra.mxu0 0.0
        %1526 = vmatprep.subr.mxu0 0.0
        %1527 = vmatpush1.msra.mxu0 0.0
        %1528 = vmatprep.subr.mxu0 0.0
        %1529 = vmatpush1.msra.mxu0 0.0
        %1530 = vmatprep.subr.mxu0 0.0
        %1531 = vmatpush1.msra.mxu0 0.0
        %1532 = vmatprep.subr.mxu0 0.0
        %1533 = vmatpush1.msra.mxu0 0.0
        %1534 = vmatprep.subr.mxu0 0.0
        %1535 = vmatpush1.msra.mxu0 0.0
        %1536 = vmatprep.subr.mxu0 0.0
        %1537 = vmatpush1.msra.mxu0 0.0
        %1538 = vmatprep.subr.mxu0 0.0
        %1539 = vmatpush1.msra.mxu0 0.0
        %1540 = vmatprep.subr.mxu0 0.0
        %1541 = vmatpush1.msra.mxu0 0.0
        %1542 = vmatprep.subr.mxu0 0.0
        %1543 = vmatpush1.msra.mxu0 0.0
        %1544 = vmatprep.subr.mxu0 0.0
        %1545 = vmatpush1.msra.mxu0 0.0
        %1546 = vmatprep.subr.mxu0 0.0
        %1547 = vmatpush1.msra.mxu0 0.0
        %1548 = vmatprep.subr.mxu0 0.0
        %1549 = vmatpush1.msra.mxu0 0.0
        %1550 = vmatprep.mubr.f32.mxu0 0.0
        %1551 = vmatmul.mubr.f32.gmra.mrb[0].mxu0 %v1420
        %v1552 = vpop.f32.mrb[0].mxu0
        %v1553 = vadd.f32 %v1474, %v1552
        %v1554 = vpop.f32.mrb[0].mxu0
        %v1555 = vadd.f32 %v1478, %v1554
        %1556 = vdwg.mxu0
        %1557 = vmatprep.subr.mxu0 0.0
        %1558 = vmatpush1.msra.mxu0 %v1423
        %1559 = vmatprep.subr.mxu0 0.0
        %1560 = vmatpush1.msra.mxu0 %v1426
        %1561 = vmatprep.subr.mxu0 0.0
        %1562 = vmatpush1.msra.mxu0 %v1429
        %1563 = vmatprep.subr.mxu0 0.0
        %1564 = vmatpush1.msra.mxu0 %v1432
        %1565 = vmatprep.subr.mxu0 0.0
        %1566 = vmatpush1.msra.mxu0 %v1435
        %1567 = vmatprep.subr.mxu0 0.0
        %1568 = vmatpush1.msra.mxu0 %v1438
        %1569 = vmatprep.subr.mxu0 0.0
        %1570 = vmatpush1.msra.mxu0 %v1441
        %1571 = vmatprep.subr.mxu0 0.0
        %1572 = vmatpush1.msra.mxu0 %v1444
        %1573 = vmatprep.subr.mxu0 0.0
        %1574 = vmatpush1.msra.mxu0 %v1447
        %1575 = vmatprep.subr.mxu0 0.0
        %1576 = vmatpush1.msra.mxu0 %v1450
        %1577 = vmatprep.subr.mxu0 0.0
        %1578 = vmatpush1.msra.mxu0 %v1453
        %1579 = vmatprep.subr.mxu0 0.0
        %1580 = vmatpush1.msra.mxu0 %v1456
        %1581 = vmatprep.subr.mxu0 0.0
        %1582 = vmatpush1.msra.mxu0 %v1459
        %1583 = vmatprep.subr.mxu0 0.0
        %1584 = vmatpush1.msra.mxu0 %v1462
        %1585 = vmatprep.subr.mxu0 0.0
        %1586 = vmatpush1.msra.mxu0 %v1465
        %1587 = vmatprep.subr.mxu0 0.0
        %1588 = vmatpush1.msra.mxu0 %v1468
        %1589 = vmatprep.subr.mxu0 0.0
        %1590 = vmatpush1.msra.mxu0 0.0
        %1591 = vmatprep.subr.mxu0 0.0
        %1592 = vmatpush1.msra.mxu0 0.0
        %1593 = vmatprep.subr.mxu0 0.0
        %1594 = vmatpush1.msra.mxu0 0.0
        %1595 = vmatprep.subr.mxu0 0.0
        %1596 = vmatpush1.msra.mxu0 0.0
        %1597 = vmatprep.subr.mxu0 0.0
        %1598 = vmatpush1.msra.mxu0 0.0
        %1599 = vmatprep.subr.mxu0 0.0
        %1600 = vmatpush1.msra.mxu0 0.0
        %1601 = vmatprep.subr.mxu0 0.0
        %1602 = vmatpush1.msra.mxu0 0.0
        %1603 = vmatprep.subr.mxu0 0.0
        %1604 = vmatpush1.msra.mxu0 0.0
        %1605 = vmatprep.subr.mxu0 0.0
        %1606 = vmatpush1.msra.mxu0 0.0
        %1607 = vmatprep.subr.mxu0 0.0
        %1608 = vmatpush1.msra.mxu0 0.0
        %1609 = vmatprep.subr.mxu0 0.0
        %1610 = vmatpush1.msra.mxu0 0.0
        %1611 = vmatprep.subr.mxu0 0.0
        %1612 = vmatpush1.msra.mxu0 0.0
        %1613 = vmatprep.subr.mxu0 0.0
        %1614 = vmatpush1.msra.mxu0 0.0
        %1615 = vmatprep.subr.mxu0 0.0
        %1616 = vmatpush1.msra.mxu0 0.0
        %1617 = vmatprep.subr.mxu0 0.0
        %1618 = vmatpush1.msra.mxu0 0.0
        %1619 = vmatprep.subr.mxu0 0.0
        %1620 = vmatpush1.msra.mxu0 0.0
        %1621 = vmatprep.mubr.f32.mxu0 0.0
        %1622 = vmatmul.mubr.f32.gmra.mrb[0].mxu0 %v1420
        %v1623 = vpop.f32.mrb[0].mxu0
        %v1624 = vadd.f32 %v1482, %v1623
        %v1625 = vpop.f32.mrb[0].mxu0
        %1626 = vdwg.mxu0
        %v1627 = vld [vmem:[#allocation13] sm:$0xff]
        %v1628 = vld [vmem:[#allocation13 + $0x8] sm:$0xff]
        %v1629 = vld [vmem:[#allocation13 + $0x10] sm:$0xff]
        %v1630 = vld [vmem:[#allocation13 + $0x18] sm:$0xff]
        %v1631 = vld [vmem:[#allocation13 + $0x20] sm:$0xff]
        %v1632 = vld [vmem:[#allocation13 + $0x28] sm:$0xff]
        %v1633 = vld [vmem:[#allocation13 + $0x30] sm:$0xff]
        %v1634 = vld [vmem:[#allocation13 + $0x38] sm:$0xff]
        %v1635 = vld [vmem:[#allocation13 + $0x40] sm:$0xff]
        %v1636 = vld [vmem:[#allocation13 + $0x48] sm:$0xff]
        %v1637 = vld [vmem:[#allocation13 + $0x50] sm:$0xff]
        %v1638 = vld [vmem:[#allocation13 + $0x58] sm:$0xff]
        %v1639 = vld [vmem:[#allocation13 + $0x60] sm:$0xff]
        %v1640 = vld [vmem:[#allocation13 + $0x68] sm:$0xff]
        %v1641 = vld [vmem:[#allocation13 + $0x70] sm:$0xff]
        %v1642 = vld [vmem:[#allocation13 + $0x78] sm:$0xff]
        %v1643 = vld [vmem:[#allocation13 + $0x80] sm:$0xff]
        %v1644 = vld [vmem:[#allocation13 + $0x88] sm:$0xff]
        %v1645 = vld [vmem:[#allocation13 + $0x90] sm:$0xff]
        %v1646 = vld [vmem:[#allocation13 + $0x98] sm:$0xff]
        %v1647 = vld [vmem:[#allocation13 + $0xa0] sm:$0xff]
        %v1648 = vld [vmem:[#allocation13 + $0xa8] sm:$0xff]
        %v1649 = vld [vmem:[#allocation13 + $0xb0] sm:$0xff]
        %v1650 = vld [vmem:[#allocation13 + $0xb8] sm:$0xff]
        %v1651 = vld [vmem:[#allocation13 + $0xc0] sm:$0xff]
        %v1652 = vld [vmem:[#allocation13 + $0xc8] sm:$0xff]
        %v1653 = vld [vmem:[#allocation13 + $0xd0] sm:$0xff]
        %v1654 = vld [vmem:[#allocation13 + $0xd8] sm:$0xff]
        %v1655 = vld [vmem:[#allocation13 + $0xe0] sm:$0xff]
        %v1656 = vld [vmem:[#allocation13 + $0xe8] sm:$0xff]
        %v1657 = vld [vmem:[#allocation13 + $0xf0] sm:$0xff]
        %v1658 = vld [vmem:[#allocation13 + $0xf8] sm:$0xff]
        %v1659 = vld [vmem:[#allocation13 + $0x100] sm:$0xff]
        %v1660 = vld [vmem:[#allocation13 + $0x108] sm:$0xff]
        %v1661 = vld [vmem:[#allocation13 + $0x110] sm:$0xff]
        %v1662 = vld [vmem:[#allocation13 + $0x118] sm:$0xff]
        %v1663 = vld [vmem:[#allocation13 + $0x120] sm:$0xff]
        %v1664 = vld [vmem:[#allocation13 + $0x128] sm:$0xff]
        %v1665 = vld [vmem:[#allocation13 + $0x130] sm:$0xff]
        %v1666 = vld [vmem:[#allocation13 + $0x138] sm:$0xff]
        %v1667 = vld [vmem:[#allocation13 + $0x140] sm:$0xff]
        %v1668 = vld [vmem:[#allocation13 + $0x148] sm:$0xff]
        %v1669 = vld [vmem:[#allocation13 + $0x150] sm:$0xff]
        %v1670 = vld [vmem:[#allocation13 + $0x158] sm:$0xff]
        %v1671 = vld [vmem:[#allocation13 + $0x160] sm:$0xff]
        %v1672 = vld [vmem:[#allocation13 + $0x168] sm:$0xff]
        %v1673 = vld [vmem:[#allocation13 + $0x170] sm:$0xff]
        %v1674 = vld [vmem:[#allocation13 + $0x178] sm:$0xff]
        %v1675 = vld [vmem:[#allocation15] sm:$0x7]
        %v1677 = vlaneseq
        %v1678 = vshrl.u32 %v1677, 7
        %v1679 = vsub.s32 0, %v1678
        %v1680 = vrot.slane %v1675, %v1679
        %v1681 = vlaneseq
        %v1682 = vshrl.u32 %v1681, 7
        %v1683 = vsub.s32 1, %v1682
        %v1684 = vrot.slane %v1675, %v1683
        %v1685 = vlaneseq
        %v1686 = vshrl.u32 %v1685, 7
        %v1687 = vsub.s32 2, %v1686
        %v1688 = vrot.slane %v1675, %v1687
        %1692 = vmatprep.subr.mxu0 %v1628
        %1693 = vmatpush1.msra.mxu0 %v1627
        %1694 = vmatprep.subr.mxu0 %v1631
        %1695 = vmatpush1.msra.mxu0 %v1630
        %1696 = vmatprep.subr.mxu0 %v1634
        %1697 = vmatpush1.msra.mxu0 %v1633
        %1698 = vmatprep.subr.mxu0 %v1637
        %1699 = vmatpush1.msra.mxu0 %v1636
        %1700 = vmatprep.subr.mxu0 %v1640
        %1701 = vmatpush1.msra.mxu0 %v1639
        %1702 = vmatprep.subr.mxu0 %v1643
        %1703 = vmatpush1.msra.mxu0 %v1642
        %1704 = vmatprep.subr.mxu0 %v1646
        %1705 = vmatpush1.msra.mxu0 %v1645
        %1706 = vmatprep.subr.mxu0 %v1649
        %1707 = vmatpush1.msra.mxu0 %v1648
        %1708 = vmatprep.subr.mxu0 %v1652
        %1709 = vmatpush1.msra.mxu0 %v1651
        %1710 = vmatprep.subr.mxu0 %v1655
        %1711 = vmatpush1.msra.mxu0 %v1654
        %1712 = vmatprep.subr.mxu0 %v1658
        %1713 = vmatpush1.msra.mxu0 %v1657
        %1714 = vmatprep.subr.mxu0 %v1661
        %1715 = vmatpush1.msra.mxu0 %v1660
        %1716 = vmatprep.subr.mxu0 %v1664
        %1717 = vmatpush1.msra.mxu0 %v1663
        %1718 = vmatprep.subr.mxu0 %v1667
        %1719 = vmatpush1.msra.mxu0 %v1666
        %1720 = vmatprep.subr.mxu0 %v1670
        %1721 = vmatpush1.msra.mxu0 %v1669
        %1722 = vmatprep.subr.mxu0 %v1673
        %1723 = vmatpush1.msra.mxu0 %v1672
        %1724 = vmatprep.subr.mxu0 0.0
        %1725 = vmatpush1.msra.mxu0 0.0
        %1726 = vmatprep.subr.mxu0 0.0
        %1727 = vmatpush1.msra.mxu0 0.0
        %1728 = vmatprep.subr.mxu0 0.0
        %1729 = vmatpush1.msra.mxu0 0.0
        %1730 = vmatprep.subr.mxu0 0.0
        %1731 = vmatpush1.msra.mxu0 0.0
        %1732 = vmatprep.subr.mxu0 0.0
        %1733 = vmatpush1.msra.mxu0 0.0
        %1734 = vmatprep.subr.mxu0 0.0
        %1735 = vmatpush1.msra.mxu0 0.0
        %1736 = vmatprep.subr.mxu0 0.0
        %1737 = vmatpush1.msra.mxu0 0.0
        %1738 = vmatprep.subr.mxu0 0.0
        %1739 = vmatpush1.msra.mxu0 0.0
        %1740 = vmatprep.subr.mxu0 0.0
        %1741 = vmatpush1.msra.mxu0 0.0
        %1742 = vmatprep.subr.mxu0 0.0
        %1743 = vmatpush1.msra.mxu0 0.0
        %1744 = vmatprep.subr.mxu0 0.0
        %1745 = vmatpush1.msra.mxu0 0.0
        %1746 = vmatprep.subr.mxu0 0.0
        %1747 = vmatpush1.msra.mxu0 0.0
        %1748 = vmatprep.subr.mxu0 0.0
        %1749 = vmatpush1.msra.mxu0 0.0
        %1750 = vmatprep.subr.mxu0 0.0
        %1751 = vmatpush1.msra.mxu0 0.0
        %1752 = vmatprep.subr.mxu0 0.0
        %1753 = vmatpush1.msra.mxu0 0.0
        %1754 = vmatprep.subr.mxu0 0.0
        %1755 = vmatpush1.msra.mxu0 0.0
        %1756 = vmatprep.mubr.f32.mxu0 0.0
        %1757 = vmatmul.mubr.f32.gmra.mrb[0].mxu0 %v1185
        %v1758 = vpop.f32.mrb[0].mxu0
        %v1759 = vadd.f32 %v1680, %v1758
        %v1760 = vpop.f32.mrb[0].mxu0
        %v1761 = vadd.f32 %v1684, %v1760
        %1762 = vdwg.mxu0
        %1763 = vmatprep.subr.mxu0 0.0
        %1764 = vmatpush1.msra.mxu0 %v1629
        %1765 = vmatprep.subr.mxu0 0.0
        %1766 = vmatpush1.msra.mxu0 %v1632
        %1767 = vmatprep.subr.mxu0 0.0
        %1768 = vmatpush1.msra.mxu0 %v1635
        %1769 = vmatprep.subr.mxu0 0.0
        %1770 = vmatpush1.msra.mxu0 %v1638
        %1771 = vmatprep.subr.mxu0 0.0
        %1772 = vmatpush1.msra.mxu0 %v1641
        %1773 = vmatprep.subr.mxu0 0.0
        %1774 = vmatpush1.msra.mxu0 %v1644
        %1775 = vmatprep.subr.mxu0 0.0
        %1776 = vmatpush1.msra.mxu0 %v1647
        %1777 = vmatprep.subr.mxu0 0.0
        %1778 = vmatpush1.msra.mxu0 %v1650
        %1779 = vmatprep.subr.mxu0 0.0
        %1780 = vmatpush1.msra.mxu0 %v1653
        %1781 = vmatprep.subr.mxu0 0.0
        %1782 = vmatpush1.msra.mxu0 %v1656
        %1783 = vmatprep.subr.mxu0 0.0
        %1784 = vmatpush1.msra.mxu0 %v1659
        %1785 = vmatprep.subr.mxu0 0.0
        %1786 = vmatpush1.msra.mxu0 %v1662
        %1787 = vmatprep.subr.mxu0 0.0
        %1788 = vmatpush1.msra.mxu0 %v1665
        %1789 = vmatprep.subr.mxu0 0.0
        %1790 = vmatpush1.msra.mxu0 %v1668
        %1791 = vmatprep.subr.mxu0 0.0
        %1792 = vmatpush1.msra.mxu0 %v1671
        %1793 = vmatprep.subr.mxu0 0.0
        %1794 = vmatpush1.msra.mxu0 %v1674
        %1795 = vmatprep.subr.mxu0 0.0
        %1796 = vmatpush1.msra.mxu0 0.0
        %1797 = vmatprep.subr.mxu0 0.0
        %1798 = vmatpush1.msra.mxu0 0.0
        %1799 = vmatprep.subr.mxu0 0.0
        %1800 = vmatpush1.msra.mxu0 0.0
        %1801 = vmatprep.subr.mxu0 0.0
        %1802 = vmatpush1.msra.mxu0 0.0
        %1803 = vmatprep.subr.mxu0 0.0
        %1804 = vmatpush1.msra.mxu0 0.0
        %1805 = vmatprep.subr.mxu0 0.0
        %1806 = vmatpush1.msra.mxu0 0.0
        %1807 = vmatprep.subr.mxu0 0.0
        %1808 = vmatpush1.msra.mxu0 0.0
        %1809 = vmatprep.subr.mxu0 0.0
        %1810 = vmatpush1.msra.mxu0 0.0
        %1811 = vmatprep.subr.mxu0 0.0
        %1812 = vmatpush1.msra.mxu0 0.0
        %1813 = vmatprep.subr.mxu0 0.0
        %1814 = vmatpush1.msra.mxu0 0.0
        %1815 = vmatprep.subr.mxu0 0.0
        %1816 = vmatpush1.msra.mxu0 0.0
        %1817 = vmatprep.subr.mxu0 0.0
        %1818 = vmatpush1.msra.mxu0 0.0
        %1819 = vmatprep.subr.mxu0 0.0
        %1820 = vmatpush1.msra.mxu0 0.0
        %1821 = vmatprep.subr.mxu0 0.0
        %1822 = vmatpush1.msra.mxu0 0.0
        %1823 = vmatprep.subr.mxu0 0.0
        %1824 = vmatpush1.msra.mxu0 0.0
        %1825 = vmatprep.subr.mxu0 0.0
        %1826 = vmatpush1.msra.mxu0 0.0
        %1827 = vmatprep.mubr.f32.mxu0 0.0
        %1828 = vmatmul.mubr.f32.gmra.mrb[0].mxu0 %v1185
        %v1829 = vpop.f32.mrb[0].mxu0
        %v1830 = vadd.f32 %v1688, %v1829
        %v1831 = vpop.f32.mrb[0].mxu0
        %1832 = vdwg.mxu0
        %v1833 = vadd.f32 %v1553, %v1759
        %v1834 = vxor.u32 %v1833, 2147483648
        %v1835 = vmul.f32 %v1834, 1.442695
        %v1836 = vpow.pop %v1835
        %v1837 = vadd.f32 %v1836, 1.0
        %v1838 = vrcp.pop %v1837
        %v1839 = vmul.f32 1.0, %v1838
        %v1840 = vadd.f32 %v1555, %v1761
        %v1841 = vxor.u32 %v1840, 2147483648
        %v1842 = vmul.f32 %v1841, 1.442695
        %v1843 = vpow.pop %v1842
        %v1844 = vadd.f32 %v1843, 1.0
        %v1845 = vrcp.pop %v1844
        %v1846 = vmul.f32 1.0, %v1845
        %v1847 = vmul.f32 %v1839, %v1830
        %v1848 = vadd.f32 %v1624, %v1847
        %v1849 = vtanh.pop %v1848
        %v1850 = vsub.f32 1.0, %v1846
        %v1851 = vmul.f32 %v1850, %v1849
        %v1852 = vmul.f32 %v1846, %v1185
        %v1853 = vadd.f32 %v1851, %v1852
        %s1854 = scalar_lea.vmem %s503, 2 [#allocation19]
        %1855 = vst [vmem:[%s1854] sm:$0x3] %v1853
        %s1856 = scalar_lea.vmem %s437, 12 [#allocation4]
        %v1857 = vld [vmem:[%s1856] sm:$0x3f]
        %v1858 = vld [vmem:[#allocation7] sm:$0xff]
        %v1859 = vld [vmem:[#allocation7 + $0x8] sm:$0xff]
        %v1860 = vld [vmem:[#allocation7 + $0x10] sm:$0xff]
        %v1861 = vld [vmem:[#allocation7 + $0x18] sm:$0xff]
        %v1862 = vld [vmem:[#allocation7 + $0x20] sm:$0xff]
        %v1863 = vld [vmem:[#allocation7 + $0x28] sm:$0xff]
        %v1864 = vld [vmem:[#allocation7 + $0x30] sm:$0xff]
        %v1865 = vld [vmem:[#allocation7 + $0x38] sm:$0xff]
        %v1866 = vld [vmem:[#allocation7 + $0x40] sm:$0xff]
        %v1867 = vld [vmem:[#allocation7 + $0x48] sm:$0xff]
        %v1868 = vld [vmem:[#allocation7 + $0x50] sm:$0xff]
        %v1869 = vld [vmem:[#allocation7 + $0x58] sm:$0xff]
        %v1870 = vld [vmem:[#allocation7 + $0x60] sm:$0xff]
        %v1871 = vld [vmem:[#allocation7 + $0x68] sm:$0xff]
        %v1872 = vld [vmem:[#allocation7 + $0x70] sm:$0xff]
        %v1873 = vld [vmem:[#allocation7 + $0x78] sm:$0xff]
        %v1874 = vld [vmem:[#allocation7 + $0x80] sm:$0xff]
        %v1875 = vld [vmem:[#allocation7 + $0x88] sm:$0xff]
        %v1876 = vld [vmem:[#allocation7 + $0x90] sm:$0xff]
        %v1877 = vld [vmem:[#allocation7 + $0x98] sm:$0xff]
        %v1878 = vld [vmem:[#allocation7 + $0xa0] sm:$0xff]
        %v1879 = vld [vmem:[#allocation7 + $0xa8] sm:$0xff]
        %v1880 = vld [vmem:[#allocation7 + $0xb0] sm:$0xff]
        %v1881 = vld [vmem:[#allocation7 + $0xb8] sm:$0xff]
        %v1882 = vld [vmem:[#allocation7 + $0xc0] sm:$0xff]
        %v1883 = vld [vmem:[#allocation7 + $0xc8] sm:$0xff]
        %v1884 = vld [vmem:[#allocation7 + $0xd0] sm:$0xff]
        %v1885 = vld [vmem:[#allocation7 + $0xd8] sm:$0xff]
        %v1886 = vld [vmem:[#allocation7 + $0xe0] sm:$0xff]
        %v1887 = vld [vmem:[#allocation7 + $0xe8] sm:$0xff]
        %v1888 = vld [vmem:[#allocation7 + $0xf0] sm:$0xff]
        %v1889 = vld [vmem:[#allocation7 + $0xf8] sm:$0xff]
        %v1890 = vld [vmem:[#allocation7 + $0x100] sm:$0xff]
        %v1891 = vld [vmem:[#allocation7 + $0x108] sm:$0xff]
        %v1892 = vld [vmem:[#allocation7 + $0x110] sm:$0xff]
        %v1893 = vld [vmem:[#allocation7 + $0x118] sm:$0xff]
        %v1894 = vld [vmem:[#allocation7 + $0x120] sm:$0xff]
        %v1895 = vld [vmem:[#allocation7 + $0x128] sm:$0xff]
        %v1896 = vld [vmem:[#allocation7 + $0x130] sm:$0xff]
        %v1897 = vld [vmem:[#allocation7 + $0x138] sm:$0xff]
        %v1898 = vld [vmem:[#allocation7 + $0x140] sm:$0xff]
        %v1899 = vld [vmem:[#allocation7 + $0x148] sm:$0xff]
        %v1900 = vld [vmem:[#allocation7 + $0x150] sm:$0xff]
        %v1901 = vld [vmem:[#allocation7 + $0x158] sm:$0xff]
        %v1902 = vld [vmem:[#allocation7 + $0x160] sm:$0xff]
        %v1903 = vld [vmem:[#allocation7 + $0x168] sm:$0xff]
        %v1904 = vld [vmem:[#allocation7 + $0x170] sm:$0xff]
        %v1905 = vld [vmem:[#allocation7 + $0x178] sm:$0xff]
        %v1906 = vld [vmem:[#allocation9] sm:$0x7]
        %v1908 = vlaneseq
        %v1909 = vshrl.u32 %v1908, 7
        %v1910 = vsub.s32 0, %v1909
        %v1911 = vrot.slane %v1906, %v1910
        %v1912 = vlaneseq
        %v1913 = vshrl.u32 %v1912, 7
        %v1914 = vsub.s32 1, %v1913
        %v1915 = vrot.slane %v1906, %v1914
        %v1916 = vlaneseq
        %v1917 = vshrl.u32 %v1916, 7
        %v1918 = vsub.s32 2, %v1917
        %v1919 = vrot.slane %v1906, %v1918
        %1923 = vmatprep.subr.mxu0 %v1859
        %1924 = vmatpush1.msra.mxu0 %v1858
        %1925 = vmatprep.subr.mxu0 %v1862
        %1926 = vmatpush1.msra.mxu0 %v1861
        %1927 = vmatprep.subr.mxu0 %v1865
        %1928 = vmatpush1.msra.mxu0 %v1864
        %1929 = vmatprep.subr.mxu0 %v1868
        %1930 = vmatpush1.msra.mxu0 %v1867
        %1931 = vmatprep.subr.mxu0 %v1871
        %1932 = vmatpush1.msra.mxu0 %v1870
        %1933 = vmatprep.subr.mxu0 %v1874
        %1934 = vmatpush1.msra.mxu0 %v1873
        %1935 = vmatprep.subr.mxu0 %v1877
        %1936 = vmatpush1.msra.mxu0 %v1876
        %1937 = vmatprep.subr.mxu0 %v1880
        %1938 = vmatpush1.msra.mxu0 %v1879
        %1939 = vmatprep.subr.mxu0 %v1883
        %1940 = vmatpush1.msra.mxu0 %v1882
        %1941 = vmatprep.subr.mxu0 %v1886
        %1942 = vmatpush1.msra.mxu0 %v1885
        %1943 = vmatprep.subr.mxu0 %v1889
        %1944 = vmatpush1.msra.mxu0 %v1888
        %1945 = vmatprep.subr.mxu0 %v1892
        %1946 = vmatpush1.msra.mxu0 %v1891
        %1947 = vmatprep.subr.mxu0 %v1895
        %1948 = vmatpush1.msra.mxu0 %v1894
        %1949 = vmatprep.subr.mxu0 %v1898
        %1950 = vmatpush1.msra.mxu0 %v1897
        %1951 = vmatprep.subr.mxu0 %v1901
        %1952 = vmatpush1.msra.mxu0 %v1900
        %1953 = vmatprep.subr.mxu0 %v1904
        %1954 = vmatpush1.msra.mxu0 %v1903
        %1955 = vmatprep.subr.mxu0 0.0
        %1956 = vmatpush1.msra.mxu0 0.0
        %1957 = vmatprep.subr.mxu0 0.0
        %1958 = vmatpush1.msra.mxu0 0.0
        %1959 = vmatprep.subr.mxu0 0.0
        %1960 = vmatpush1.msra.mxu0 0.0
        %1961 = vmatprep.subr.mxu0 0.0
        %1962 = vmatpush1.msra.mxu0 0.0
        %1963 = vmatprep.subr.mxu0 0.0
        %1964 = vmatpush1.msra.mxu0 0.0
        %1965 = vmatprep.subr.mxu0 0.0
        %1966 = vmatpush1.msra.mxu0 0.0
        %1967 = vmatprep.subr.mxu0 0.0
        %1968 = vmatpush1.msra.mxu0 0.0
        %1969 = vmatprep.subr.mxu0 0.0
        %1970 = vmatpush1.msra.mxu0 0.0
        %1971 = vmatprep.subr.mxu0 0.0
        %1972 = vmatpush1.msra.mxu0 0.0
        %1973 = vmatprep.subr.mxu0 0.0
        %1974 = vmatpush1.msra.mxu0 0.0
        %1975 = vmatprep.subr.mxu0 0.0
        %1976 = vmatpush1.msra.mxu0 0.0
        %1977 = vmatprep.subr.mxu0 0.0
        %1978 = vmatpush1.msra.mxu0 0.0
        %1979 = vmatprep.subr.mxu0 0.0
        %1980 = vmatpush1.msra.mxu0 0.0
        %1981 = vmatprep.subr.mxu0 0.0
        %1982 = vmatpush1.msra.mxu0 0.0
        %1983 = vmatprep.subr.mxu0 0.0
        %1984 = vmatpush1.msra.mxu0 0.0
        %1985 = vmatprep.subr.mxu0 0.0
        %1986 = vmatpush1.msra.mxu0 0.0
        %1987 = vmatprep.mubr.f32.mxu0 0.0
        %1988 = vmatmul.mubr.f32.gmra.mrb[0].mxu0 %v1420
        %v1989 = vpop.f32.mrb[0].mxu0
        %v1990 = vadd.f32 %v1911, %v1989
        %v1991 = vpop.f32.mrb[0].mxu0
        %v1992 = vadd.f32 %v1915, %v1991
        %1993 = vdwg.mxu0
        %1994 = vmatprep.subr.mxu0 0.0
        %1995 = vmatpush1.msra.mxu0 %v1860
        %1996 = vmatprep.subr.mxu0 0.0
        %1997 = vmatpush1.msra.mxu0 %v1863
        %1998 = vmatprep.subr.mxu0 0.0
        %1999 = vmatpush1.msra.mxu0 %v1866
        %2000 = vmatprep.subr.mxu0 0.0
        %2001 = vmatpush1.msra.mxu0 %v1869
        %2002 = vmatprep.subr.mxu0 0.0
        %2003 = vmatpush1.msra.mxu0 %v1872
        %2004 = vmatprep.subr.mxu0 0.0
        %2005 = vmatpush1.msra.mxu0 %v1875
        %2006 = vmatprep.subr.mxu0 0.0
        %2007 = vmatpush1.msra.mxu0 %v1878
        %2008 = vmatprep.subr.mxu0 0.0
        %2009 = vmatpush1.msra.mxu0 %v1881
        %2010 = vmatprep.subr.mxu0 0.0
        %2011 = vmatpush1.msra.mxu0 %v1884
        %2012 = vmatprep.subr.mxu0 0.0
        %2013 = vmatpush1.msra.mxu0 %v1887
        %2014 = vmatprep.subr.mxu0 0.0
        %2015 = vmatpush1.msra.mxu0 %v1890
        %2016 = vmatprep.subr.mxu0 0.0
        %2017 = vmatpush1.msra.mxu0 %v1893
        %2018 = vmatprep.subr.mxu0 0.0
        %2019 = vmatpush1.msra.mxu0 %v1896
        %2020 = vmatprep.subr.mxu0 0.0
        %2021 = vmatpush1.msra.mxu0 %v1899
        %2022 = vmatprep.subr.mxu0 0.0
        %2023 = vmatpush1.msra.mxu0 %v1902
        %2024 = vmatprep.subr.mxu0 0.0
        %2025 = vmatpush1.msra.mxu0 %v1905
        %2026 = vmatprep.subr.mxu0 0.0
        %2027 = vmatpush1.msra.mxu0 0.0
        %2028 = vmatprep.subr.mxu0 0.0
        %2029 = vmatpush1.msra.mxu0 0.0
        %2030 = vmatprep.subr.mxu0 0.0
        %2031 = vmatpush1.msra.mxu0 0.0
        %2032 = vmatprep.subr.mxu0 0.0
        %2033 = vmatpush1.msra.mxu0 0.0
        %2034 = vmatprep.subr.mxu0 0.0
        %2035 = vmatpush1.msra.mxu0 0.0
        %2036 = vmatprep.subr.mxu0 0.0
        %2037 = vmatpush1.msra.mxu0 0.0
        %2038 = vmatprep.subr.mxu0 0.0
        %2039 = vmatpush1.msra.mxu0 0.0
        %2040 = vmatprep.subr.mxu0 0.0
        %2041 = vmatpush1.msra.mxu0 0.0
        %2042 = vmatprep.subr.mxu0 0.0
        %2043 = vmatpush1.msra.mxu0 0.0
        %2044 = vmatprep.subr.mxu0 0.0
        %2045 = vmatpush1.msra.mxu0 0.0
        %2046 = vmatprep.subr.mxu0 0.0
        %2047 = vmatpush1.msra.mxu0 0.0
        %2048 = vmatprep.subr.mxu0 0.0
        %2049 = vmatpush1.msra.mxu0 0.0
        %2050 = vmatprep.subr.mxu0 0.0
        %2051 = vmatpush1.msra.mxu0 0.0
        %2052 = vmatprep.subr.mxu0 0.0
        %2053 = vmatpush1.msra.mxu0 0.0
        %2054 = vmatprep.subr.mxu0 0.0
        %2055 = vmatpush1.msra.mxu0 0.0
        %2056 = vmatprep.subr.mxu0 0.0
        %2057 = vmatpush1.msra.mxu0 0.0
        %2058 = vmatprep.mubr.f32.mxu0 0.0
        %2059 = vmatmul.mubr.f32.gmra.mrb[0].mxu0 %v1420
        %v2060 = vpop.f32.mrb[0].mxu0
        %v2061 = vadd.f32 %v1919, %v2060
        %v2062 = vpop.f32.mrb[0].mxu0
        %2063 = vdwg.mxu0
        %v2064 = vadd.f32 %v1857, %v1990
        %v2065 = vxor.u32 %v2064, 2147483648
        %v2066 = vmul.f32 %v2065, 1.442695
        %v2067 = vpow.pop %v2066
        %v2068 = vadd.f32 %v2067, 1.0
        %v2069 = vrcp.pop %v2068
        %v2070 = vmul.f32 1.0, %v2069
        %v2072 = vrot.slane %v1857, 2
        %v2074 = vadd.f32 %v2072, %v1992
        %v2075 = vxor.u32 %v2074, 2147483648
        %v2076 = vmul.f32 %v2075, 1.442695
        %v2077 = vpow.pop %v2076
        %v2078 = vadd.f32 %v2077, 1.0
        %v2079 = vrcp.pop %v2078
        %v2080 = vmul.f32 1.0, %v2079
        %v2081 = vmul.f32 %v2070, %v2061
        %v2082 = vrot.slane %v1857, 4
        %v2084 = vadd.f32 %v2082, %v2081
        %v2085 = vtanh.pop %v2084
        %v2086 = vsub.f32 1.0, %v2080
        %v2087 = vmul.f32 %v2086, %v2085
        %v2088 = vmul.f32 %v2080, %v1420
        %v2089 = vadd.f32 %v2087, %v2088
        %v2090 = vld [vmem:[#allocation10] sm:$0xff]
        %v2091 = vld [vmem:[#allocation10 + $0x8] sm:$0xff]
        %v2092 = vld [vmem:[#allocation10 + $0x10] sm:$0xff]
        %v2093 = vld [vmem:[#allocation10 + $0x18] sm:$0xff]
        %v2094 = vld [vmem:[#allocation10 + $0x20] sm:$0xff]
        %v2095 = vld [vmem:[#allocation10 + $0x28] sm:$0xff]
        %v2096 = vld [vmem:[#allocation10 + $0x30] sm:$0xff]
        %v2097 = vld [vmem:[#allocation10 + $0x38] sm:$0xff]
        %v2098 = vld [vmem:[#allocation10 + $0x40] sm:$0xff]
        %v2099 = vld [vmem:[#allocation10 + $0x48] sm:$0xff]
        %v2100 = vld [vmem:[#allocation10 + $0x50] sm:$0xff]
        %v2101 = vld [vmem:[#allocation10 + $0x58] sm:$0xff]
        %v2102 = vld [vmem:[#allocation10 + $0x60] sm:$0xff]
        %v2103 = vld [vmem:[#allocation10 + $0x68] sm:$0xff]
        %v2104 = vld [vmem:[#allocation10 + $0x70] sm:$0xff]
        %v2105 = vld [vmem:[#allocation10 + $0x78] sm:$0xff]
        %v2106 = vld [vmem:[#allocation10 + $0x80] sm:$0xff]
        %v2107 = vld [vmem:[#allocation10 + $0x88] sm:$0xff]
        %v2108 = vld [vmem:[#allocation10 + $0x90] sm:$0xff]
        %v2109 = vld [vmem:[#allocation10 + $0x98] sm:$0xff]
        %v2110 = vld [vmem:[#allocation10 + $0xa0] sm:$0xff]
        %v2111 = vld [vmem:[#allocation10 + $0xa8] sm:$0xff]
        %v2112 = vld [vmem:[#allocation10 + $0xb0] sm:$0xff]
        %v2113 = vld [vmem:[#allocation10 + $0xb8] sm:$0xff]
        %v2114 = vld [vmem:[#allocation10 + $0xc0] sm:$0xff]
        %v2115 = vld [vmem:[#allocation10 + $0xc8] sm:$0xff]
        %v2116 = vld [vmem:[#allocation10 + $0xd0] sm:$0xff]
        %v2117 = vld [vmem:[#allocation10 + $0xd8] sm:$0xff]
        %v2118 = vld [vmem:[#allocation10 + $0xe0] sm:$0xff]
        %v2119 = vld [vmem:[#allocation10 + $0xe8] sm:$0xff]
        %v2120 = vld [vmem:[#allocation10 + $0xf0] sm:$0xff]
        %v2121 = vld [vmem:[#allocation10 + $0xf8] sm:$0xff]
        %v2122 = vld [vmem:[#allocation10 + $0x100] sm:$0xff]
        %v2123 = vld [vmem:[#allocation10 + $0x108] sm:$0xff]
        %v2124 = vld [vmem:[#allocation10 + $0x110] sm:$0xff]
        %v2125 = vld [vmem:[#allocation10 + $0x118] sm:$0xff]
        %v2126 = vld [vmem:[#allocation10 + $0x120] sm:$0xff]
        %v2127 = vld [vmem:[#allocation10 + $0x128] sm:$0xff]
        %v2128 = vld [vmem:[#allocation10 + $0x130] sm:$0xff]
        %v2129 = vld [vmem:[#allocation10 + $0x138] sm:$0xff]
        %v2130 = vld [vmem:[#allocation10 + $0x140] sm:$0xff]
        %v2131 = vld [vmem:[#allocation10 + $0x148] sm:$0xff]
        %v2132 = vld [vmem:[#allocation10 + $0x150] sm:$0xff]
        %v2133 = vld [vmem:[#allocation10 + $0x158] sm:$0xff]
        %v2134 = vld [vmem:[#allocation10 + $0x160] sm:$0xff]
        %v2135 = vld [vmem:[#allocation10 + $0x168] sm:$0xff]
        %v2136 = vld [vmem:[#allocation10 + $0x170] sm:$0xff]
        %v2137 = vld [vmem:[#allocation10 + $0x178] sm:$0xff]
        %v2138 = vld [vmem:[#allocation12] sm:$0x7]
        %v2140 = vlaneseq
        %v2141 = vshrl.u32 %v2140, 7
        %v2142 = vsub.s32 0, %v2141
        %v2143 = vrot.slane %v2138, %v2142
        %v2144 = vlaneseq
        %v2145 = vshrl.u32 %v2144, 7
        %v2146 = vsub.s32 1, %v2145
        %v2147 = vrot.slane %v2138, %v2146
        %v2148 = vlaneseq
        %v2149 = vshrl.u32 %v2148, 7
        %v2150 = vsub.s32 2, %v2149
        %v2151 = vrot.slane %v2138, %v2150
        %2155 = vmatprep.subr.mxu0 %v2091
        %2156 = vmatpush1.msra.mxu0 %v2090
        %2157 = vmatprep.subr.mxu0 %v2094
        %2158 = vmatpush1.msra.mxu0 %v2093
        %2159 = vmatprep.subr.mxu0 %v2097
        %2160 = vmatpush1.msra.mxu0 %v2096
        %2161 = vmatprep.subr.mxu0 %v2100
        %2162 = vmatpush1.msra.mxu0 %v2099
        %2163 = vmatprep.subr.mxu0 %v2103
        %2164 = vmatpush1.msra.mxu0 %v2102
        %2165 = vmatprep.subr.mxu0 %v2106
        %2166 = vmatpush1.msra.mxu0 %v2105
        %2167 = vmatprep.subr.mxu0 %v2109
        %2168 = vmatpush1.msra.mxu0 %v2108
        %2169 = vmatprep.subr.mxu0 %v2112
        %2170 = vmatpush1.msra.mxu0 %v2111
        %2171 = vmatprep.subr.mxu0 %v2115
        %2172 = vmatpush1.msra.mxu0 %v2114
        %2173 = vmatprep.subr.mxu0 %v2118
        %2174 = vmatpush1.msra.mxu0 %v2117
        %2175 = vmatprep.subr.mxu0 %v2121
        %2176 = vmatpush1.msra.mxu0 %v2120
        %2177 = vmatprep.subr.mxu0 %v2124
        %2178 = vmatpush1.msra.mxu0 %v2123
        %2179 = vmatprep.subr.mxu0 %v2127
        %2180 = vmatpush1.msra.mxu0 %v2126
        %2181 = vmatprep.subr.mxu0 %v2130
        %2182 = vmatpush1.msra.mxu0 %v2129
        %2183 = vmatprep.subr.mxu0 %v2133
        %2184 = vmatpush1.msra.mxu0 %v2132
        %2185 = vmatprep.subr.mxu0 %v2136
        %2186 = vmatpush1.msra.mxu0 %v2135
        %2187 = vmatprep.subr.mxu0 0.0
        %2188 = vmatpush1.msra.mxu0 0.0
        %2189 = vmatprep.subr.mxu0 0.0
        %2190 = vmatpush1.msra.mxu0 0.0
        %2191 = vmatprep.subr.mxu0 0.0
        %2192 = vmatpush1.msra.mxu0 0.0
        %2193 = vmatprep.subr.mxu0 0.0
        %2194 = vmatpush1.msra.mxu0 0.0
        %2195 = vmatprep.subr.mxu0 0.0
        %2196 = vmatpush1.msra.mxu0 0.0
        %2197 = vmatprep.subr.mxu0 0.0
        %2198 = vmatpush1.msra.mxu0 0.0
        %2199 = vmatprep.subr.mxu0 0.0
        %2200 = vmatpush1.msra.mxu0 0.0
        %2201 = vmatprep.subr.mxu0 0.0
        %2202 = vmatpush1.msra.mxu0 0.0
        %2203 = vmatprep.subr.mxu0 0.0
        %2204 = vmatpush1.msra.mxu0 0.0
        %2205 = vmatprep.subr.mxu0 0.0
        %2206 = vmatpush1.msra.mxu0 0.0
        %2207 = vmatprep.subr.mxu0 0.0
        %2208 = vmatpush1.msra.mxu0 0.0
        %2209 = vmatprep.subr.mxu0 0.0
        %2210 = vmatpush1.msra.mxu0 0.0
        %2211 = vmatprep.subr.mxu0 0.0
        %2212 = vmatpush1.msra.mxu0 0.0
        %2213 = vmatprep.subr.mxu0 0.0
        %2214 = vmatpush1.msra.mxu0 0.0
        %2215 = vmatprep.subr.mxu0 0.0
        %2216 = vmatpush1.msra.mxu0 0.0
        %2217 = vmatprep.subr.mxu0 0.0
        %2218 = vmatpush1.msra.mxu0 0.0
        %2219 = vmatprep.mubr.f32.mxu0 0.0
        %2220 = vmatmul.mubr.f32.gmra.mrb[0].mxu0 %v2089
        %v2221 = vpop.f32.mrb[0].mxu0
        %v2222 = vadd.f32 %v2143, %v2221
        %v2223 = vpop.f32.mrb[0].mxu0
        %v2224 = vadd.f32 %v2147, %v2223
        %2225 = vdwg.mxu0
        %2226 = vmatprep.subr.mxu0 0.0
        %2227 = vmatpush1.msra.mxu0 %v2092
        %2228 = vmatprep.subr.mxu0 0.0
        %2229 = vmatpush1.msra.mxu0 %v2095
        %2230 = vmatprep.subr.mxu0 0.0
        %2231 = vmatpush1.msra.mxu0 %v2098
        %2232 = vmatprep.subr.mxu0 0.0
        %2233 = vmatpush1.msra.mxu0 %v2101
        %2234 = vmatprep.subr.mxu0 0.0
        %2235 = vmatpush1.msra.mxu0 %v2104
        %2236 = vmatprep.subr.mxu0 0.0
        %2237 = vmatpush1.msra.mxu0 %v2107
        %2238 = vmatprep.subr.mxu0 0.0
        %2239 = vmatpush1.msra.mxu0 %v2110
        %2240 = vmatprep.subr.mxu0 0.0
        %2241 = vmatpush1.msra.mxu0 %v2113
        %2242 = vmatprep.subr.mxu0 0.0
        %2243 = vmatpush1.msra.mxu0 %v2116
        %2244 = vmatprep.subr.mxu0 0.0
        %2245 = vmatpush1.msra.mxu0 %v2119
        %2246 = vmatprep.subr.mxu0 0.0
        %2247 = vmatpush1.msra.mxu0 %v2122
        %2248 = vmatprep.subr.mxu0 0.0
        %2249 = vmatpush1.msra.mxu0 %v2125
        %2250 = vmatprep.subr.mxu0 0.0
        %2251 = vmatpush1.msra.mxu0 %v2128
        %2252 = vmatprep.subr.mxu0 0.0
        %2253 = vmatpush1.msra.mxu0 %v2131
        %2254 = vmatprep.subr.mxu0 0.0
        %2255 = vmatpush1.msra.mxu0 %v2134
        %2256 = vmatprep.subr.mxu0 0.0
        %2257 = vmatpush1.msra.mxu0 %v2137
        %2258 = vmatprep.subr.mxu0 0.0
        %2259 = vmatpush1.msra.mxu0 0.0
        %2260 = vmatprep.subr.mxu0 0.0
        %2261 = vmatpush1.msra.mxu0 0.0
        %2262 = vmatprep.subr.mxu0 0.0
        %2263 = vmatpush1.msra.mxu0 0.0
        %2264 = vmatprep.subr.mxu0 0.0
        %2265 = vmatpush1.msra.mxu0 0.0
        %2266 = vmatprep.subr.mxu0 0.0
        %2267 = vmatpush1.msra.mxu0 0.0
        %2268 = vmatprep.subr.mxu0 0.0
        %2269 = vmatpush1.msra.mxu0 0.0
        %2270 = vmatprep.subr.mxu0 0.0
        %2271 = vmatpush1.msra.mxu0 0.0
        %2272 = vmatprep.subr.mxu0 0.0
        %2273 = vmatpush1.msra.mxu0 0.0
        %2274 = vmatprep.subr.mxu0 0.0
        %2275 = vmatpush1.msra.mxu0 0.0
        %2276 = vmatprep.subr.mxu0 0.0
        %2277 = vmatpush1.msra.mxu0 0.0
        %2278 = vmatprep.subr.mxu0 0.0
        %2279 = vmatpush1.msra.mxu0 0.0
        %2280 = vmatprep.subr.mxu0 0.0
        %2281 = vmatpush1.msra.mxu0 0.0
        %2282 = vmatprep.subr.mxu0 0.0
        %2283 = vmatpush1.msra.mxu0 0.0
        %2284 = vmatprep.subr.mxu0 0.0
        %2285 = vmatpush1.msra.mxu0 0.0
        %2286 = vmatprep.subr.mxu0 0.0
        %2287 = vmatpush1.msra.mxu0 0.0
        %2288 = vmatprep.subr.mxu0 0.0
        %2289 = vmatpush1.msra.mxu0 0.0
        %2290 = vmatprep.mubr.f32.mxu0 0.0
        %2291 = vmatmul.mubr.f32.gmra.mrb[0].mxu0 %v2089
        %v2292 = vpop.f32.mrb[0].mxu0
        %v2293 = vadd.f32 %v2151, %v2292
        %v2294 = vpop.f32.mrb[0].mxu0
        %2295 = vdwg.mxu0
        %v2296 = vld [vmem:[#allocation13] sm:$0xff]
        %v2297 = vld [vmem:[#allocation13 + $0x8] sm:$0xff]
        %v2298 = vld [vmem:[#allocation13 + $0x10] sm:$0xff]
        %v2299 = vld [vmem:[#allocation13 + $0x18] sm:$0xff]
        %v2300 = vld [vmem:[#allocation13 + $0x20] sm:$0xff]
        %v2301 = vld [vmem:[#allocation13 + $0x28] sm:$0xff]
        %v2302 = vld [vmem:[#allocation13 + $0x30] sm:$0xff]
        %v2303 = vld [vmem:[#allocation13 + $0x38] sm:$0xff]
        %v2304 = vld [vmem:[#allocation13 + $0x40] sm:$0xff]
        %v2305 = vld [vmem:[#allocation13 + $0x48] sm:$0xff]
        %v2306 = vld [vmem:[#allocation13 + $0x50] sm:$0xff]
        %v2307 = vld [vmem:[#allocation13 + $0x58] sm:$0xff]
        %v2308 = vld [vmem:[#allocation13 + $0x60] sm:$0xff]
        %v2309 = vld [vmem:[#allocation13 + $0x68] sm:$0xff]
        %v2310 = vld [vmem:[#allocation13 + $0x70] sm:$0xff]
        %v2311 = vld [vmem:[#allocation13 + $0x78] sm:$0xff]
        %v2312 = vld [vmem:[#allocation13 + $0x80] sm:$0xff]
        %v2313 = vld [vmem:[#allocation13 + $0x88] sm:$0xff]
        %v2314 = vld [vmem:[#allocation13 + $0x90] sm:$0xff]
        %v2315 = vld [vmem:[#allocation13 + $0x98] sm:$0xff]
        %v2316 = vld [vmem:[#allocation13 + $0xa0] sm:$0xff]
        %v2317 = vld [vmem:[#allocation13 + $0xa8] sm:$0xff]
        %v2318 = vld [vmem:[#allocation13 + $0xb0] sm:$0xff]
        %v2319 = vld [vmem:[#allocation13 + $0xb8] sm:$0xff]
        %v2320 = vld [vmem:[#allocation13 + $0xc0] sm:$0xff]
        %v2321 = vld [vmem:[#allocation13 + $0xc8] sm:$0xff]
        %v2322 = vld [vmem:[#allocation13 + $0xd0] sm:$0xff]
        %v2323 = vld [vmem:[#allocation13 + $0xd8] sm:$0xff]
        %v2324 = vld [vmem:[#allocation13 + $0xe0] sm:$0xff]
        %v2325 = vld [vmem:[#allocation13 + $0xe8] sm:$0xff]
        %v2326 = vld [vmem:[#allocation13 + $0xf0] sm:$0xff]
        %v2327 = vld [vmem:[#allocation13 + $0xf8] sm:$0xff]
        %v2328 = vld [vmem:[#allocation13 + $0x100] sm:$0xff]
        %v2329 = vld [vmem:[#allocation13 + $0x108] sm:$0xff]
        %v2330 = vld [vmem:[#allocation13 + $0x110] sm:$0xff]
        %v2331 = vld [vmem:[#allocation13 + $0x118] sm:$0xff]
        %v2332 = vld [vmem:[#allocation13 + $0x120] sm:$0xff]
        %v2333 = vld [vmem:[#allocation13 + $0x128] sm:$0xff]
        %v2334 = vld [vmem:[#allocation13 + $0x130] sm:$0xff]
        %v2335 = vld [vmem:[#allocation13 + $0x138] sm:$0xff]
        %v2336 = vld [vmem:[#allocation13 + $0x140] sm:$0xff]
        %v2337 = vld [vmem:[#allocation13 + $0x148] sm:$0xff]
        %v2338 = vld [vmem:[#allocation13 + $0x150] sm:$0xff]
        %v2339 = vld [vmem:[#allocation13 + $0x158] sm:$0xff]
        %v2340 = vld [vmem:[#allocation13 + $0x160] sm:$0xff]
        %v2341 = vld [vmem:[#allocation13 + $0x168] sm:$0xff]
        %v2342 = vld [vmem:[#allocation13 + $0x170] sm:$0xff]
        %v2343 = vld [vmem:[#allocation13 + $0x178] sm:$0xff]
        %v2344 = vld [vmem:[#allocation15] sm:$0x7]
        %v2346 = vlaneseq
        %v2347 = vshrl.u32 %v2346, 7
        %v2348 = vsub.s32 0, %v2347
        %v2349 = vrot.slane %v2344, %v2348
        %v2350 = vlaneseq
        %v2351 = vshrl.u32 %v2350, 7
        %v2352 = vsub.s32 1, %v2351
        %v2353 = vrot.slane %v2344, %v2352
        %v2354 = vlaneseq
        %v2355 = vshrl.u32 %v2354, 7
        %v2356 = vsub.s32 2, %v2355
        %v2357 = vrot.slane %v2344, %v2356
        %2361 = vmatprep.subr.mxu0 %v2297
        %2362 = vmatpush1.msra.mxu0 %v2296
        %2363 = vmatprep.subr.mxu0 %v2300
        %2364 = vmatpush1.msra.mxu0 %v2299
        %2365 = vmatprep.subr.mxu0 %v2303
        %2366 = vmatpush1.msra.mxu0 %v2302
        %2367 = vmatprep.subr.mxu0 %v2306
        %2368 = vmatpush1.msra.mxu0 %v2305
        %2369 = vmatprep.subr.mxu0 %v2309
        %2370 = vmatpush1.msra.mxu0 %v2308
        %2371 = vmatprep.subr.mxu0 %v2312
        %2372 = vmatpush1.msra.mxu0 %v2311
        %2373 = vmatprep.subr.mxu0 %v2315
        %2374 = vmatpush1.msra.mxu0 %v2314
        %2375 = vmatprep.subr.mxu0 %v2318
        %2376 = vmatpush1.msra.mxu0 %v2317
        %2377 = vmatprep.subr.mxu0 %v2321
        %2378 = vmatpush1.msra.mxu0 %v2320
        %2379 = vmatprep.subr.mxu0 %v2324
        %2380 = vmatpush1.msra.mxu0 %v2323
        %2381 = vmatprep.subr.mxu0 %v2327
        %2382 = vmatpush1.msra.mxu0 %v2326
        %2383 = vmatprep.subr.mxu0 %v2330
        %2384 = vmatpush1.msra.mxu0 %v2329
        %2385 = vmatprep.subr.mxu0 %v2333
        %2386 = vmatpush1.msra.mxu0 %v2332
        %2387 = vmatprep.subr.mxu0 %v2336
        %2388 = vmatpush1.msra.mxu0 %v2335
        %2389 = vmatprep.subr.mxu0 %v2339
        %2390 = vmatpush1.msra.mxu0 %v2338
        %2391 = vmatprep.subr.mxu0 %v2342
        %2392 = vmatpush1.msra.mxu0 %v2341
        %2393 = vmatprep.subr.mxu0 0.0
        %2394 = vmatpush1.msra.mxu0 0.0
        %2395 = vmatprep.subr.mxu0 0.0
        %2396 = vmatpush1.msra.mxu0 0.0
        %2397 = vmatprep.subr.mxu0 0.0
        %2398 = vmatpush1.msra.mxu0 0.0
        %2399 = vmatprep.subr.mxu0 0.0
        %2400 = vmatpush1.msra.mxu0 0.0
        %2401 = vmatprep.subr.mxu0 0.0
        %2402 = vmatpush1.msra.mxu0 0.0
        %2403 = vmatprep.subr.mxu0 0.0
        %2404 = vmatpush1.msra.mxu0 0.0
        %2405 = vmatprep.subr.mxu0 0.0
        %2406 = vmatpush1.msra.mxu0 0.0
        %2407 = vmatprep.subr.mxu0 0.0
        %2408 = vmatpush1.msra.mxu0 0.0
        %2409 = vmatprep.subr.mxu0 0.0
        %2410 = vmatpush1.msra.mxu0 0.0
        %2411 = vmatprep.subr.mxu0 0.0
        %2412 = vmatpush1.msra.mxu0 0.0
        %2413 = vmatprep.subr.mxu0 0.0
        %2414 = vmatpush1.msra.mxu0 0.0
        %2415 = vmatprep.subr.mxu0 0.0
        %2416 = vmatpush1.msra.mxu0 0.0
        %2417 = vmatprep.subr.mxu0 0.0
        %2418 = vmatpush1.msra.mxu0 0.0
        %2419 = vmatprep.subr.mxu0 0.0
        %2420 = vmatpush1.msra.mxu0 0.0
        %2421 = vmatprep.subr.mxu0 0.0
        %2422 = vmatpush1.msra.mxu0 0.0
        %2423 = vmatprep.subr.mxu0 0.0
        %2424 = vmatpush1.msra.mxu0 0.0
        %2425 = vmatprep.mubr.f32.mxu0 0.0
        %2426 = vmatmul.mubr.f32.gmra.mrb[0].mxu0 %v1853
        %v2427 = vpop.f32.mrb[0].mxu0
        %v2428 = vadd.f32 %v2349, %v2427
        %v2429 = vpop.f32.mrb[0].mxu0
        %v2430 = vadd.f32 %v2353, %v2429
        %2431 = vdwg.mxu0
        %2432 = vmatprep.subr.mxu0 0.0
        %2433 = vmatpush1.msra.mxu0 %v2298
        %2434 = vmatprep.subr.mxu0 0.0
        %2435 = vmatpush1.msra.mxu0 %v2301
        %2436 = vmatprep.subr.mxu0 0.0
        %2437 = vmatpush1.msra.mxu0 %v2304
        %2438 = vmatprep.subr.mxu0 0.0
        %2439 = vmatpush1.msra.mxu0 %v2307
        %2440 = vmatprep.subr.mxu0 0.0
        %2441 = vmatpush1.msra.mxu0 %v2310
        %2442 = vmatprep.subr.mxu0 0.0
        %2443 = vmatpush1.msra.mxu0 %v2313
        %2444 = vmatprep.subr.mxu0 0.0
        %2445 = vmatpush1.msra.mxu0 %v2316
        %2446 = vmatprep.subr.mxu0 0.0
        %2447 = vmatpush1.msra.mxu0 %v2319
        %2448 = vmatprep.subr.mxu0 0.0
        %2449 = vmatpush1.msra.mxu0 %v2322
        %2450 = vmatprep.subr.mxu0 0.0
        %2451 = vmatpush1.msra.mxu0 %v2325
        %2452 = vmatprep.subr.mxu0 0.0
        %2453 = vmatpush1.msra.mxu0 %v2328
        %2454 = vmatprep.subr.mxu0 0.0
        %2455 = vmatpush1.msra.mxu0 %v2331
        %2456 = vmatprep.subr.mxu0 0.0
        %2457 = vmatpush1.msra.mxu0 %v2334
        %2458 = vmatprep.subr.mxu0 0.0
        %2459 = vmatpush1.msra.mxu0 %v2337
        %2460 = vmatprep.subr.mxu0 0.0
        %2461 = vmatpush1.msra.mxu0 %v2340
        %2462 = vmatprep.subr.mxu0 0.0
        %2463 = vmatpush1.msra.mxu0 %v2343
        %2464 = vmatprep.subr.mxu0 0.0
        %2465 = vmatpush1.msra.mxu0 0.0
        %2466 = vmatprep.subr.mxu0 0.0
        %2467 = vmatpush1.msra.mxu0 0.0
        %2468 = vmatprep.subr.mxu0 0.0
        %2469 = vmatpush1.msra.mxu0 0.0
        %2470 = vmatprep.subr.mxu0 0.0
        %2471 = vmatpush1.msra.mxu0 0.0
        %2472 = vmatprep.subr.mxu0 0.0
        %2473 = vmatpush1.msra.mxu0 0.0
        %2474 = vmatprep.subr.mxu0 0.0
        %2475 = vmatpush1.msra.mxu0 0.0
        %2476 = vmatprep.subr.mxu0 0.0
        %2477 = vmatpush1.msra.mxu0 0.0
        %2478 = vmatprep.subr.mxu0 0.0
        %2479 = vmatpush1.msra.mxu0 0.0
        %2480 = vmatprep.subr.mxu0 0.0
        %2481 = vmatpush1.msra.mxu0 0.0
        %2482 = vmatprep.subr.mxu0 0.0
        %2483 = vmatpush1.msra.mxu0 0.0
        %2484 = vmatprep.subr.mxu0 0.0
        %2485 = vmatpush1.msra.mxu0 0.0
        %2486 = vmatprep.subr.mxu0 0.0
        %2487 = vmatpush1.msra.mxu0 0.0
        %2488 = vmatprep.subr.mxu0 0.0
        %2489 = vmatpush1.msra.mxu0 0.0
        %2490 = vmatprep.subr.mxu0 0.0
        %2491 = vmatpush1.msra.mxu0 0.0
        %2492 = vmatprep.subr.mxu0 0.0
        %2493 = vmatpush1.msra.mxu0 0.0
        %2494 = vmatprep.subr.mxu0 0.0
        %2495 = vmatpush1.msra.mxu0 0.0
        %2496 = vmatprep.mubr.f32.mxu0 0.0
        %2497 = vmatmul.mubr.f32.gmra.mrb[0].mxu0 %v1853
        %v2498 = vpop.f32.mrb[0].mxu0
        %v2499 = vadd.f32 %v2357, %v2498
        %v2500 = vpop.f32.mrb[0].mxu0
        %2501 = vdwg.mxu0
        %v2502 = vadd.f32 %v2222, %v2428
        %v2503 = vxor.u32 %v2502, 2147483648
        %v2504 = vmul.f32 %v2503, 1.442695
        %v2505 = vpow.pop %v2504
        %v2506 = vadd.f32 %v2505, 1.0
        %v2507 = vrcp.pop %v2506
        %v2508 = vmul.f32 1.0, %v2507
        %v2509 = vadd.f32 %v2224, %v2430
        %v2510 = vxor.u32 %v2509, 2147483648
        %v2511 = vmul.f32 %v2510, 1.442695
        %v2512 = vpow.pop %v2511
        %v2513 = vadd.f32 %v2512, 1.0
        %v2514 = vrcp.pop %v2513
        %v2515 = vmul.f32 1.0, %v2514
        %v2516 = vmul.f32 %v2508, %v2499
        %v2517 = vadd.f32 %v2293, %v2516
        %v2518 = vtanh.pop %v2517
        %v2519 = vsub.f32 1.0, %v2515
        %v2520 = vmul.f32 %v2519, %v2518
        %v2521 = vmul.f32 %v2515, %v1853
        %v2522 = vadd.f32 %v2520, %v2521
        %s2523 = scalar_lea.vmem %s503, 4 [#allocation19]
        %2524 = vst [vmem:[%s2523] sm:$0x3] %v2522
        %s2525 = scalar_lea.vmem %s437, 18 [#allocation4]
        %v2526 = vld [vmem:[%s2525] sm:$0x3f]
        %v2527 = vld [vmem:[#allocation7] sm:$0xff]
        %v2528 = vld [vmem:[#allocation7 + $0x8] sm:$0xff]
        %v2529 = vld [vmem:[#allocation7 + $0x10] sm:$0xff]
        %v2530 = vld [vmem:[#allocation7 + $0x18] sm:$0xff]
        %v2531 = vld [vmem:[#allocation7 + $0x20] sm:$0xff]
        %v2532 = vld [vmem:[#allocation7 + $0x28] sm:$0xff]
        %v2533 = vld [vmem:[#allocation7 + $0x30] sm:$0xff]
        %v2534 = vld [vmem:[#allocation7 + $0x38] sm:$0xff]
        %v2535 = vld [vmem:[#allocation7 + $0x40] sm:$0xff]
        %v2536 = vld [vmem:[#allocation7 + $0x48] sm:$0xff]
        %v2537 = vld [vmem:[#allocation7 + $0x50] sm:$0xff]
        %v2538 = vld [vmem:[#allocation7 + $0x58] sm:$0xff]
        %v2539 = vld [vmem:[#allocation7 + $0x60] sm:$0xff]
        %v2540 = vld [vmem:[#allocation7 + $0x68] sm:$0xff]
        %v2541 = vld [vmem:[#allocation7 + $0x70] sm:$0xff]
        %v2542 = vld [vmem:[#allocation7 + $0x78] sm:$0xff]
        %v2543 = vld [vmem:[#allocation7 + $0x80] sm:$0xff]
        %v2544 = vld [vmem:[#allocation7 + $0x88] sm:$0xff]
        %v2545 = vld [vmem:[#allocation7 + $0x90] sm:$0xff]
        %v2546 = vld [vmem:[#allocation7 + $0x98] sm:$0xff]
        %v2547 = vld [vmem:[#allocation7 + $0xa0] sm:$0xff]
        %v2548 = vld [vmem:[#allocation7 + $0xa8] sm:$0xff]
        %v2549 = vld [vmem:[#allocation7 + $0xb0] sm:$0xff]
        %v2550 = vld [vmem:[#allocation7 + $0xb8] sm:$0xff]
        %v2551 = vld [vmem:[#allocation7 + $0xc0] sm:$0xff]
        %v2552 = vld [vmem:[#allocation7 + $0xc8] sm:$0xff]
        %v2553 = vld [vmem:[#allocation7 + $0xd0] sm:$0xff]
        %v2554 = vld [vmem:[#allocation7 + $0xd8] sm:$0xff]
        %v2555 = vld [vmem:[#allocation7 + $0xe0] sm:$0xff]
        %v2556 = vld [vmem:[#allocation7 + $0xe8] sm:$0xff]
        %v2557 = vld [vmem:[#allocation7 + $0xf0] sm:$0xff]
        %v2558 = vld [vmem:[#allocation7 + $0xf8] sm:$0xff]
        %v2559 = vld [vmem:[#allocation7 + $0x100] sm:$0xff]
        %v2560 = vld [vmem:[#allocation7 + $0x108] sm:$0xff]
        %v2561 = vld [vmem:[#allocation7 + $0x110] sm:$0xff]
        %v2562 = vld [vmem:[#allocation7 + $0x118] sm:$0xff]
        %v2563 = vld [vmem:[#allocation7 + $0x120] sm:$0xff]
        %v2564 = vld [vmem:[#allocation7 + $0x128] sm:$0xff]
        %v2565 = vld [vmem:[#allocation7 + $0x130] sm:$0xff]
        %v2566 = vld [vmem:[#allocation7 + $0x138] sm:$0xff]
        %v2567 = vld [vmem:[#allocation7 + $0x140] sm:$0xff]
        %v2568 = vld [vmem:[#allocation7 + $0x148] sm:$0xff]
        %v2569 = vld [vmem:[#allocation7 + $0x150] sm:$0xff]
        %v2570 = vld [vmem:[#allocation7 + $0x158] sm:$0xff]
        %v2571 = vld [vmem:[#allocation7 + $0x160] sm:$0xff]
        %v2572 = vld [vmem:[#allocation7 + $0x168] sm:$0xff]
        %v2573 = vld [vmem:[#allocation7 + $0x170] sm:$0xff]
        %v2574 = vld [vmem:[#allocation7 + $0x178] sm:$0xff]
        %v2575 = vld [vmem:[#allocation9] sm:$0x7]
        %v2577 = vlaneseq
        %v2578 = vshrl.u32 %v2577, 7
        %v2579 = vsub.s32 0, %v2578
        %v2580 = vrot.slane %v2575, %v2579
        %v2581 = vlaneseq
        %v2582 = vshrl.u32 %v2581, 7
        %v2583 = vsub.s32 1, %v2582
        %v2584 = vrot.slane %v2575, %v2583
        %v2585 = vlaneseq
        %v2586 = vshrl.u32 %v2585, 7
        %v2587 = vsub.s32 2, %v2586
        %v2588 = vrot.slane %v2575, %v2587
        %2592 = vmatprep.subr.mxu0 %v2528
        %2593 = vmatpush1.msra.mxu0 %v2527
        %2594 = vmatprep.subr.mxu0 %v2531
        %2595 = vmatpush1.msra.mxu0 %v2530
        %2596 = vmatprep.subr.mxu0 %v2534
        %2597 = vmatpush1.msra.mxu0 %v2533
        %2598 = vmatprep.subr.mxu0 %v2537
        %2599 = vmatpush1.msra.mxu0 %v2536
        %2600 = vmatprep.subr.mxu0 %v2540
        %2601 = vmatpush1.msra.mxu0 %v2539
        %2602 = vmatprep.subr.mxu0 %v2543
        %2603 = vmatpush1.msra.mxu0 %v2542
        %2604 = vmatprep.subr.mxu0 %v2546
        %2605 = vmatpush1.msra.mxu0 %v2545
        %2606 = vmatprep.subr.mxu0 %v2549
        %2607 = vmatpush1.msra.mxu0 %v2548
        %2608 = vmatprep.subr.mxu0 %v2552
        %2609 = vmatpush1.msra.mxu0 %v2551
        %2610 = vmatprep.subr.mxu0 %v2555
        %2611 = vmatpush1.msra.mxu0 %v2554
        %2612 = vmatprep.subr.mxu0 %v2558
        %2613 = vmatpush1.msra.mxu0 %v2557
        %2614 = vmatprep.subr.mxu0 %v2561
        %2615 = vmatpush1.msra.mxu0 %v2560
        %2616 = vmatprep.subr.mxu0 %v2564
        %2617 = vmatpush1.msra.mxu0 %v2563
        %2618 = vmatprep.subr.mxu0 %v2567
        %2619 = vmatpush1.msra.mxu0 %v2566
        %2620 = vmatprep.subr.mxu0 %v2570
        %2621 = vmatpush1.msra.mxu0 %v2569
        %2622 = vmatprep.subr.mxu0 %v2573
        %2623 = vmatpush1.msra.mxu0 %v2572
        %2624 = vmatprep.subr.mxu0 0.0
        %2625 = vmatpush1.msra.mxu0 0.0
        %2626 = vmatprep.subr.mxu0 0.0
        %2627 = vmatpush1.msra.mxu0 0.0
        %2628 = vmatprep.subr.mxu0 0.0
        %2629 = vmatpush1.msra.mxu0 0.0
        %2630 = vmatprep.subr.mxu0 0.0
        %2631 = vmatpush1.msra.mxu0 0.0
        %2632 = vmatprep.subr.mxu0 0.0
        %2633 = vmatpush1.msra.mxu0 0.0
        %2634 = vmatprep.subr.mxu0 0.0
        %2635 = vmatpush1.msra.mxu0 0.0
        %2636 = vmatprep.subr.mxu0 0.0
        %2637 = vmatpush1.msra.mxu0 0.0
        %2638 = vmatprep.subr.mxu0 0.0
        %2639 = vmatpush1.msra.mxu0 0.0
        %2640 = vmatprep.subr.mxu0 0.0
        %2641 = vmatpush1.msra.mxu0 0.0
        %2642 = vmatprep.subr.mxu0 0.0
        %2643 = vmatpush1.msra.mxu0 0.0
        %2644 = vmatprep.subr.mxu0 0.0
        %2645 = vmatpush1.msra.mxu0 0.0
        %2646 = vmatprep.subr.mxu0 0.0
        %2647 = vmatpush1.msra.mxu0 0.0
        %2648 = vmatprep.subr.mxu0 0.0
        %2649 = vmatpush1.msra.mxu0 0.0
        %2650 = vmatprep.subr.mxu0 0.0
        %2651 = vmatpush1.msra.mxu0 0.0
        %2652 = vmatprep.subr.mxu0 0.0
        %2653 = vmatpush1.msra.mxu0 0.0
        %2654 = vmatprep.subr.mxu0 0.0
        %2655 = vmatpush1.msra.mxu0 0.0
        %2656 = vmatprep.mubr.f32.mxu0 0.0
        %2657 = vmatmul.mubr.f32.gmra.mrb[0].mxu0 %v2089
        %v2658 = vpop.f32.mrb[0].mxu0
        %v2659 = vadd.f32 %v2580, %v2658
        %v2660 = vpop.f32.mrb[0].mxu0
        %v2661 = vadd.f32 %v2584, %v2660
        %2662 = vdwg.mxu0
        %2663 = vmatprep.subr.mxu0 0.0
        %2664 = vmatpush1.msra.mxu0 %v2529
        %2665 = vmatprep.subr.mxu0 0.0
        %2666 = vmatpush1.msra.mxu0 %v2532
        %2667 = vmatprep.subr.mxu0 0.0
        %2668 = vmatpush1.msra.mxu0 %v2535
        %2669 = vmatprep.subr.mxu0 0.0
        %2670 = vmatpush1.msra.mxu0 %v2538
        %2671 = vmatprep.subr.mxu0 0.0
        %2672 = vmatpush1.msra.mxu0 %v2541
        %2673 = vmatprep.subr.mxu0 0.0
        %2674 = vmatpush1.msra.mxu0 %v2544
        %2675 = vmatprep.subr.mxu0 0.0
        %2676 = vmatpush1.msra.mxu0 %v2547
        %2677 = vmatprep.subr.mxu0 0.0
        %2678 = vmatpush1.msra.mxu0 %v2550
        %2679 = vmatprep.subr.mxu0 0.0
        %2680 = vmatpush1.msra.mxu0 %v2553
        %2681 = vmatprep.subr.mxu0 0.0
        %2682 = vmatpush1.msra.mxu0 %v2556
        %2683 = vmatprep.subr.mxu0 0.0
        %2684 = vmatpush1.msra.mxu0 %v2559
        %2685 = vmatprep.subr.mxu0 0.0
        %2686 = vmatpush1.msra.mxu0 %v2562
        %2687 = vmatprep.subr.mxu0 0.0
        %2688 = vmatpush1.msra.mxu0 %v2565
        %2689 = vmatprep.subr.mxu0 0.0
        %2690 = vmatpush1.msra.mxu0 %v2568
        %2691 = vmatprep.subr.mxu0 0.0
        %2692 = vmatpush1.msra.mxu0 %v2571
        %2693 = vmatprep.subr.mxu0 0.0
        %2694 = vmatpush1.msra.mxu0 %v2574
        %2695 = vmatprep.subr.mxu0 0.0
        %2696 = vmatpush1.msra.mxu0 0.0
        %2697 = vmatprep.subr.mxu0 0.0
        %2698 = vmatpush1.msra.mxu0 0.0
        %2699 = vmatprep.subr.mxu0 0.0
        %2700 = vmatpush1.msra.mxu0 0.0
        %2701 = vmatprep.subr.mxu0 0.0
        %2702 = vmatpush1.msra.mxu0 0.0
        %2703 = vmatprep.subr.mxu0 0.0
        %2704 = vmatpush1.msra.mxu0 0.0
        %2705 = vmatprep.subr.mxu0 0.0
        %2706 = vmatpush1.msra.mxu0 0.0
        %2707 = vmatprep.subr.mxu0 0.0
        %2708 = vmatpush1.msra.mxu0 0.0
        %2709 = vmatprep.subr.mxu0 0.0
        %2710 = vmatpush1.msra.mxu0 0.0
        %2711 = vmatprep.subr.mxu0 0.0
        %2712 = vmatpush1.msra.mxu0 0.0
        %2713 = vmatprep.subr.mxu0 0.0
        %2714 = vmatpush1.msra.mxu0 0.0
        %2715 = vmatprep.subr.mxu0 0.0
        %2716 = vmatpush1.msra.mxu0 0.0
        %2717 = vmatprep.subr.mxu0 0.0
        %2718 = vmatpush1.msra.mxu0 0.0
        %2719 = vmatprep.subr.mxu0 0.0
        %2720 = vmatpush1.msra.mxu0 0.0
        %2721 = vmatprep.subr.mxu0 0.0
        %2722 = vmatpush1.msra.mxu0 0.0
        %2723 = vmatprep.subr.mxu0 0.0
        %2724 = vmatpush1.msra.mxu0 0.0
        %2725 = vmatprep.subr.mxu0 0.0
        %2726 = vmatpush1.msra.mxu0 0.0
        %2727 = vmatprep.mubr.f32.mxu0 0.0
        %2728 = vmatmul.mubr.f32.gmra.mrb[0].mxu0 %v2089
        %v2729 = vpop.f32.mrb[0].mxu0
        %v2730 = vadd.f32 %v2588, %v2729
        %v2731 = vpop.f32.mrb[0].mxu0
        %2732 = vdwg.mxu0
        %v2733 = vadd.f32 %v2526, %v2659
        %v2734 = vxor.u32 %v2733, 2147483648
        %v2735 = vmul.f32 %v2734, 1.442695
        %v2736 = vpow.pop %v2735
        %v2737 = vadd.f32 %v2736, 1.0
        %v2738 = vrcp.pop %v2737
        %v2739 = vmul.f32 1.0, %v2738
        %v2741 = vrot.slane %v2526, 2
        %v2743 = vadd.f32 %v2741, %v2661
        %v2744 = vxor.u32 %v2743, 2147483648
        %v2745 = vmul.f32 %v2744, 1.442695
        %v2746 = vpow.pop %v2745
        %v2747 = vadd.f32 %v2746, 1.0
        %v2748 = vrcp.pop %v2747
        %v2749 = vmul.f32 1.0, %v2748
        %v2750 = vmul.f32 %v2739, %v2730
        %v2751 = vrot.slane %v2526, 4
        %v2753 = vadd.f32 %v2751, %v2750
        %v2754 = vtanh.pop %v2753
        %v2755 = vsub.f32 1.0, %v2749
        %v2756 = vmul.f32 %v2755, %v2754
        %v2757 = vmul.f32 %v2749, %v2089
        %v2758 = vadd.f32 %v2756, %v2757
        %v2759 = vld [vmem:[#allocation10] sm:$0xff]
        %v2760 = vld [vmem:[#allocation10 + $0x8] sm:$0xff]
        %v2761 = vld [vmem:[#allocation10 + $0x10] sm:$0xff]
        %v2762 = vld [vmem:[#allocation10 + $0x18] sm:$0xff]
        %v2763 = vld [vmem:[#allocation10 + $0x20] sm:$0xff]
        %v2764 = vld [vmem:[#allocation10 + $0x28] sm:$0xff]
        %v2765 = vld [vmem:[#allocation10 + $0x30] sm:$0xff]
        %v2766 = vld [vmem:[#allocation10 + $0x38] sm:$0xff]
        %v2767 = vld [vmem:[#allocation10 + $0x40] sm:$0xff]
        %v2768 = vld [vmem:[#allocation10 + $0x48] sm:$0xff]
        %v2769 = vld [vmem:[#allocation10 + $0x50] sm:$0xff]
        %v2770 = vld [vmem:[#allocation10 + $0x58] sm:$0xff]
        %v2771 = vld [vmem:[#allocation10 + $0x60] sm:$0xff]
        %v2772 = vld [vmem:[#allocation10 + $0x68] sm:$0xff]
        %v2773 = vld [vmem:[#allocation10 + $0x70] sm:$0xff]
        %v2774 = vld [vmem:[#allocation10 + $0x78] sm:$0xff]
        %v2775 = vld [vmem:[#allocation10 + $0x80] sm:$0xff]
        %v2776 = vld [vmem:[#allocation10 + $0x88] sm:$0xff]
        %v2777 = vld [vmem:[#allocation10 + $0x90] sm:$0xff]
        %v2778 = vld [vmem:[#allocation10 + $0x98] sm:$0xff]
        %v2779 = vld [vmem:[#allocation10 + $0xa0] sm:$0xff]
        %v2780 = vld [vmem:[#allocation10 + $0xa8] sm:$0xff]
        %v2781 = vld [vmem:[#allocation10 + $0xb0] sm:$0xff]
        %v2782 = vld [vmem:[#allocation10 + $0xb8] sm:$0xff]
        %v2783 = vld [vmem:[#allocation10 + $0xc0] sm:$0xff]
        %v2784 = vld [vmem:[#allocation10 + $0xc8] sm:$0xff]
        %v2785 = vld [vmem:[#allocation10 + $0xd0] sm:$0xff]
        %v2786 = vld [vmem:[#allocation10 + $0xd8] sm:$0xff]
        %v2787 = vld [vmem:[#allocation10 + $0xe0] sm:$0xff]
        %v2788 = vld [vmem:[#allocation10 + $0xe8] sm:$0xff]
        %v2789 = vld [vmem:[#allocation10 + $0xf0] sm:$0xff]
        %v2790 = vld [vmem:[#allocation10 + $0xf8] sm:$0xff]
        %v2791 = vld [vmem:[#allocation10 + $0x100] sm:$0xff]
        %v2792 = vld [vmem:[#allocation10 + $0x108] sm:$0xff]
        %v2793 = vld [vmem:[#allocation10 + $0x110] sm:$0xff]
        %v2794 = vld [vmem:[#allocation10 + $0x118] sm:$0xff]
        %v2795 = vld [vmem:[#allocation10 + $0x120] sm:$0xff]
        %v2796 = vld [vmem:[#allocation10 + $0x128] sm:$0xff]
        %v2797 = vld [vmem:[#allocation10 + $0x130] sm:$0xff]
        %v2798 = vld [vmem:[#allocation10 + $0x138] sm:$0xff]
        %v2799 = vld [vmem:[#allocation10 + $0x140] sm:$0xff]
        %v2800 = vld [vmem:[#allocation10 + $0x148] sm:$0xff]
        %v2801 = vld [vmem:[#allocation10 + $0x150] sm:$0xff]
        %v2802 = vld [vmem:[#allocation10 + $0x158] sm:$0xff]
        %v2803 = vld [vmem:[#allocation10 + $0x160] sm:$0xff]
        %v2804 = vld [vmem:[#allocation10 + $0x168] sm:$0xff]
        %v2805 = vld [vmem:[#allocation10 + $0x170] sm:$0xff]
        %v2806 = vld [vmem:[#allocation10 + $0x178] sm:$0xff]
        %v2807 = vld [vmem:[#allocation12] sm:$0x7]
        %v2809 = vlaneseq
        %v2810 = vshrl.u32 %v2809, 7
        %v2811 = vsub.s32 0, %v2810
        %v2812 = vrot.slane %v2807, %v2811
        %v2813 = vlaneseq
        %v2814 = vshrl.u32 %v2813, 7
        %v2815 = vsub.s32 1, %v2814
        %v2816 = vrot.slane %v2807, %v2815
        %v2817 = vlaneseq
        %v2818 = vshrl.u32 %v2817, 7
        %v2819 = vsub.s32 2, %v2818
        %v2820 = vrot.slane %v2807, %v2819
        %2824 = vmatprep.subr.mxu0 %v2760
        %2825 = vmatpush1.msra.mxu0 %v2759
        %2826 = vmatprep.subr.mxu0 %v2763
        %2827 = vmatpush1.msra.mxu0 %v2762
        %2828 = vmatprep.subr.mxu0 %v2766
        %2829 = vmatpush1.msra.mxu0 %v2765
        %2830 = vmatprep.subr.mxu0 %v2769
        %2831 = vmatpush1.msra.mxu0 %v2768
        %2832 = vmatprep.subr.mxu0 %v2772
        %2833 = vmatpush1.msra.mxu0 %v2771
        %2834 = vmatprep.subr.mxu0 %v2775
        %2835 = vmatpush1.msra.mxu0 %v2774
        %2836 = vmatprep.subr.mxu0 %v2778
        %2837 = vmatpush1.msra.mxu0 %v2777
        %2838 = vmatprep.subr.mxu0 %v2781
        %2839 = vmatpush1.msra.mxu0 %v2780
        %2840 = vmatprep.subr.mxu0 %v2784
        %2841 = vmatpush1.msra.mxu0 %v2783
        %2842 = vmatprep.subr.mxu0 %v2787
        %2843 = vmatpush1.msra.mxu0 %v2786
        %2844 = vmatprep.subr.mxu0 %v2790
        %2845 = vmatpush1.msra.mxu0 %v2789
        %2846 = vmatprep.subr.mxu0 %v2793
        %2847 = vmatpush1.msra.mxu0 %v2792
        %2848 = vmatprep.subr.mxu0 %v2796
        %2849 = vmatpush1.msra.mxu0 %v2795
        %2850 = vmatprep.subr.mxu0 %v2799
        %2851 = vmatpush1.msra.mxu0 %v2798
        %2852 = vmatprep.subr.mxu0 %v2802
        %2853 = vmatpush1.msra.mxu0 %v2801
        %2854 = vmatprep.subr.mxu0 %v2805
        %2855 = vmatpush1.msra.mxu0 %v2804
        %2856 = vmatprep.subr.mxu0 0.0
        %2857 = vmatpush1.msra.mxu0 0.0
        %2858 = vmatprep.subr.mxu0 0.0
        %2859 = vmatpush1.msra.mxu0 0.0
        %2860 = vmatprep.subr.mxu0 0.0
        %2861 = vmatpush1.msra.mxu0 0.0
        %2862 = vmatprep.subr.mxu0 0.0
        %2863 = vmatpush1.msra.mxu0 0.0
        %2864 = vmatprep.subr.mxu0 0.0
        %2865 = vmatpush1.msra.mxu0 0.0
        %2866 = vmatprep.subr.mxu0 0.0
        %2867 = vmatpush1.msra.mxu0 0.0
        %2868 = vmatprep.subr.mxu0 0.0
        %2869 = vmatpush1.msra.mxu0 0.0
        %2870 = vmatprep.subr.mxu0 0.0
        %2871 = vmatpush1.msra.mxu0 0.0
        %2872 = vmatprep.subr.mxu0 0.0
        %2873 = vmatpush1.msra.mxu0 0.0
        %2874 = vmatprep.subr.mxu0 0.0
        %2875 = vmatpush1.msra.mxu0 0.0
        %2876 = vmatprep.subr.mxu0 0.0
        %2877 = vmatpush1.msra.mxu0 0.0
        %2878 = vmatprep.subr.mxu0 0.0
        %2879 = vmatpush1.msra.mxu0 0.0
        %2880 = vmatprep.subr.mxu0 0.0
        %2881 = vmatpush1.msra.mxu0 0.0
        %2882 = vmatprep.subr.mxu0 0.0
        %2883 = vmatpush1.msra.mxu0 0.0
        %2884 = vmatprep.subr.mxu0 0.0
        %2885 = vmatpush1.msra.mxu0 0.0
        %2886 = vmatprep.subr.mxu0 0.0
        %2887 = vmatpush1.msra.mxu0 0.0
        %2888 = vmatprep.mubr.f32.mxu0 0.0
        %2889 = vmatmul.mubr.f32.gmra.mrb[0].mxu0 %v2758
        %v2890 = vpop.f32.mrb[0].mxu0
        %v2891 = vadd.f32 %v2812, %v2890
        %v2892 = vpop.f32.mrb[0].mxu0
        %v2893 = vadd.f32 %v2816, %v2892
        %2894 = vdwg.mxu0
        %2895 = vmatprep.subr.mxu0 0.0
        %2896 = vmatpush1.msra.mxu0 %v2761
        %2897 = vmatprep.subr.mxu0 0.0
        %2898 = vmatpush1.msra.mxu0 %v2764
        %2899 = vmatprep.subr.mxu0 0.0
        %2900 = vmatpush1.msra.mxu0 %v2767
        %2901 = vmatprep.subr.mxu0 0.0
        %2902 = vmatpush1.msra.mxu0 %v2770
        %2903 = vmatprep.subr.mxu0 0.0
        %2904 = vmatpush1.msra.mxu0 %v2773
        %2905 = vmatprep.subr.mxu0 0.0
        %2906 = vmatpush1.msra.mxu0 %v2776
        %2907 = vmatprep.subr.mxu0 0.0
        %2908 = vmatpush1.msra.mxu0 %v2779
        %2909 = vmatprep.subr.mxu0 0.0
        %2910 = vmatpush1.msra.mxu0 %v2782
        %2911 = vmatprep.subr.mxu0 0.0
        %2912 = vmatpush1.msra.mxu0 %v2785
        %2913 = vmatprep.subr.mxu0 0.0
        %2914 = vmatpush1.msra.mxu0 %v2788
        %2915 = vmatprep.subr.mxu0 0.0
        %2916 = vmatpush1.msra.mxu0 %v2791
        %2917 = vmatprep.subr.mxu0 0.0
        %2918 = vmatpush1.msra.mxu0 %v2794
        %2919 = vmatprep.subr.mxu0 0.0
        %2920 = vmatpush1.msra.mxu0 %v2797
        %2921 = vmatprep.subr.mxu0 0.0
        %2922 = vmatpush1.msra.mxu0 %v2800
        %2923 = vmatprep.subr.mxu0 0.0
        %2924 = vmatpush1.msra.mxu0 %v2803
        %2925 = vmatprep.subr.mxu0 0.0
        %2926 = vmatpush1.msra.mxu0 %v2806
        %2927 = vmatprep.subr.mxu0 0.0
        %2928 = vmatpush1.msra.mxu0 0.0
        %2929 = vmatprep.subr.mxu0 0.0
        %2930 = vmatpush1.msra.mxu0 0.0
        %2931 = vmatprep.subr.mxu0 0.0
        %2932 = vmatpush1.msra.mxu0 0.0
        %2933 = vmatprep.subr.mxu0 0.0
        %2934 = vmatpush1.msra.mxu0 0.0
        %2935 = vmatprep.subr.mxu0 0.0
        %2936 = vmatpush1.msra.mxu0 0.0
        %2937 = vmatprep.subr.mxu0 0.0
        %2938 = vmatpush1.msra.mxu0 0.0
        %2939 = vmatprep.subr.mxu0 0.0
        %2940 = vmatpush1.msra.mxu0 0.0
        %2941 = vmatprep.subr.mxu0 0.0
        %2942 = vmatpush1.msra.mxu0 0.0
        %2943 = vmatprep.subr.mxu0 0.0
        %2944 = vmatpush1.msra.mxu0 0.0
        %2945 = vmatprep.subr.mxu0 0.0
        %2946 = vmatpush1.msra.mxu0 0.0
        %2947 = vmatprep.subr.mxu0 0.0
        %2948 = vmatpush1.msra.mxu0 0.0
        %2949 = vmatprep.subr.mxu0 0.0
        %2950 = vmatpush1.msra.mxu0 0.0
        %2951 = vmatprep.subr.mxu0 0.0
        %2952 = vmatpush1.msra.mxu0 0.0
        %2953 = vmatprep.subr.mxu0 0.0
        %2954 = vmatpush1.msra.mxu0 0.0
        %2955 = vmatprep.subr.mxu0 0.0
        %2956 = vmatpush1.msra.mxu0 0.0
        %2957 = vmatprep.subr.mxu0 0.0
        %2958 = vmatpush1.msra.mxu0 0.0
        %2959 = vmatprep.mubr.f32.mxu0 0.0
        %2960 = vmatmul.mubr.f32.gmra.mrb[0].mxu0 %v2758
        %v2961 = vpop.f32.mrb[0].mxu0
        %v2962 = vadd.f32 %v2820, %v2961
        %v2963 = vpop.f32.mrb[0].mxu0
        %2964 = vdwg.mxu0
        %v2965 = vld [vmem:[#allocation13] sm:$0xff]
        %v2966 = vld [vmem:[#allocation13 + $0x8] sm:$0xff]
        %v2967 = vld [vmem:[#allocation13 + $0x10] sm:$0xff]
        %v2968 = vld [vmem:[#allocation13 + $0x18] sm:$0xff]
        %v2969 = vld [vmem:[#allocation13 + $0x20] sm:$0xff]
        %v2970 = vld [vmem:[#allocation13 + $0x28] sm:$0xff]
        %v2971 = vld [vmem:[#allocation13 + $0x30] sm:$0xff]
        %v2972 = vld [vmem:[#allocation13 + $0x38] sm:$0xff]
        %v2973 = vld [vmem:[#allocation13 + $0x40] sm:$0xff]
        %v2974 = vld [vmem:[#allocation13 + $0x48] sm:$0xff]
        %v2975 = vld [vmem:[#allocation13 + $0x50] sm:$0xff]
        %v2976 = vld [vmem:[#allocation13 + $0x58] sm:$0xff]
        %v2977 = vld [vmem:[#allocation13 + $0x60] sm:$0xff]
        %v2978 = vld [vmem:[#allocation13 + $0x68] sm:$0xff]
        %v2979 = vld [vmem:[#allocation13 + $0x70] sm:$0xff]
        %v2980 = vld [vmem:[#allocation13 + $0x78] sm:$0xff]
        %v2981 = vld [vmem:[#allocation13 + $0x80] sm:$0xff]
        %v2982 = vld [vmem:[#allocation13 + $0x88] sm:$0xff]
        %v2983 = vld [vmem:[#allocation13 + $0x90] sm:$0xff]
        %v2984 = vld [vmem:[#allocation13 + $0x98] sm:$0xff]
        %v2985 = vld [vmem:[#allocation13 + $0xa0] sm:$0xff]
        %v2986 = vld [vmem:[#allocation13 + $0xa8] sm:$0xff]
        %v2987 = vld [vmem:[#allocation13 + $0xb0] sm:$0xff]
        %v2988 = vld [vmem:[#allocation13 + $0xb8] sm:$0xff]
        %v2989 = vld [vmem:[#allocation13 + $0xc0] sm:$0xff]
        %v2990 = vld [vmem:[#allocation13 + $0xc8] sm:$0xff]
        %v2991 = vld [vmem:[#allocation13 + $0xd0] sm:$0xff]
        %v2992 = vld [vmem:[#allocation13 + $0xd8] sm:$0xff]
        %v2993 = vld [vmem:[#allocation13 + $0xe0] sm:$0xff]
        %v2994 = vld [vmem:[#allocation13 + $0xe8] sm:$0xff]
        %v2995 = vld [vmem:[#allocation13 + $0xf0] sm:$0xff]
        %v2996 = vld [vmem:[#allocation13 + $0xf8] sm:$0xff]
        %v2997 = vld [vmem:[#allocation13 + $0x100] sm:$0xff]
        %v2998 = vld [vmem:[#allocation13 + $0x108] sm:$0xff]
        %v2999 = vld [vmem:[#allocation13 + $0x110] sm:$0xff]
        %v3000 = vld [vmem:[#allocation13 + $0x118] sm:$0xff]
        %v3001 = vld [vmem:[#allocation13 + $0x120] sm:$0xff]
        %v3002 = vld [vmem:[#allocation13 + $0x128] sm:$0xff]
        %v3003 = vld [vmem:[#allocation13 + $0x130] sm:$0xff]
        %v3004 = vld [vmem:[#allocation13 + $0x138] sm:$0xff]
        %v3005 = vld [vmem:[#allocation13 + $0x140] sm:$0xff]
        %v3006 = vld [vmem:[#allocation13 + $0x148] sm:$0xff]
        %v3007 = vld [vmem:[#allocation13 + $0x150] sm:$0xff]
        %v3008 = vld [vmem:[#allocation13 + $0x158] sm:$0xff]
        %v3009 = vld [vmem:[#allocation13 + $0x160] sm:$0xff]
        %v3010 = vld [vmem:[#allocation13 + $0x168] sm:$0xff]
        %v3011 = vld [vmem:[#allocation13 + $0x170] sm:$0xff]
        %v3012 = vld [vmem:[#allocation13 + $0x178] sm:$0xff]
        %v3013 = vld [vmem:[#allocation15] sm:$0x7]
        %v3015 = vlaneseq
        %v3016 = vshrl.u32 %v3015, 7
        %v3017 = vsub.s32 0, %v3016
        %v3018 = vrot.slane %v3013, %v3017
        %v3019 = vlaneseq
        %v3020 = vshrl.u32 %v3019, 7
        %v3021 = vsub.s32 1, %v3020
        %v3022 = vrot.slane %v3013, %v3021
        %v3023 = vlaneseq
        %v3024 = vshrl.u32 %v3023, 7
        %v3025 = vsub.s32 2, %v3024
        %v3026 = vrot.slane %v3013, %v3025
        %3030 = vmatprep.subr.mxu0 %v2966
        %3031 = vmatpush1.msra.mxu0 %v2965
        %3032 = vmatprep.subr.mxu0 %v2969
        %3033 = vmatpush1.msra.mxu0 %v2968
        %3034 = vmatprep.subr.mxu0 %v2972
        %3035 = vmatpush1.msra.mxu0 %v2971
        %3036 = vmatprep.subr.mxu0 %v2975
        %3037 = vmatpush1.msra.mxu0 %v2974
        %3038 = vmatprep.subr.mxu0 %v2978
        %3039 = vmatpush1.msra.mxu0 %v2977
        %3040 = vmatprep.subr.mxu0 %v2981
        %3041 = vmatpush1.msra.mxu0 %v2980
        %3042 = vmatprep.subr.mxu0 %v2984
        %3043 = vmatpush1.msra.mxu0 %v2983
        %3044 = vmatprep.subr.mxu0 %v2987
        %3045 = vmatpush1.msra.mxu0 %v2986
        %3046 = vmatprep.subr.mxu0 %v2990
        %3047 = vmatpush1.msra.mxu0 %v2989
        %3048 = vmatprep.subr.mxu0 %v2993
        %3049 = vmatpush1.msra.mxu0 %v2992
        %3050 = vmatprep.subr.mxu0 %v2996
        %3051 = vmatpush1.msra.mxu0 %v2995
        %3052 = vmatprep.subr.mxu0 %v2999
        %3053 = vmatpush1.msra.mxu0 %v2998
        %3054 = vmatprep.subr.mxu0 %v3002
        %3055 = vmatpush1.msra.mxu0 %v3001
        %3056 = vmatprep.subr.mxu0 %v3005
        %3057 = vmatpush1.msra.mxu0 %v3004
        %3058 = vmatprep.subr.mxu0 %v3008
        %3059 = vmatpush1.msra.mxu0 %v3007
        %3060 = vmatprep.subr.mxu0 %v3011
        %3061 = vmatpush1.msra.mxu0 %v3010
        %3062 = vmatprep.subr.mxu0 0.0
        %3063 = vmatpush1.msra.mxu0 0.0
        %3064 = vmatprep.subr.mxu0 0.0
        %3065 = vmatpush1.msra.mxu0 0.0
        %3066 = vmatprep.subr.mxu0 0.0
        %3067 = vmatpush1.msra.mxu0 0.0
        %3068 = vmatprep.subr.mxu0 0.0
        %3069 = vmatpush1.msra.mxu0 0.0
        %3070 = vmatprep.subr.mxu0 0.0
        %3071 = vmatpush1.msra.mxu0 0.0
        %3072 = vmatprep.subr.mxu0 0.0
        %3073 = vmatpush1.msra.mxu0 0.0
        %3074 = vmatprep.subr.mxu0 0.0
        %3075 = vmatpush1.msra.mxu0 0.0
        %3076 = vmatprep.subr.mxu0 0.0
        %3077 = vmatpush1.msra.mxu0 0.0
        %3078 = vmatprep.subr.mxu0 0.0
        %3079 = vmatpush1.msra.mxu0 0.0
        %3080 = vmatprep.subr.mxu0 0.0
        %3081 = vmatpush1.msra.mxu0 0.0
        %3082 = vmatprep.subr.mxu0 0.0
        %3083 = vmatpush1.msra.mxu0 0.0
        %3084 = vmatprep.subr.mxu0 0.0
        %3085 = vmatpush1.msra.mxu0 0.0
        %3086 = vmatprep.subr.mxu0 0.0
        %3087 = vmatpush1.msra.mxu0 0.0
        %3088 = vmatprep.subr.mxu0 0.0
        %3089 = vmatpush1.msra.mxu0 0.0
        %3090 = vmatprep.subr.mxu0 0.0
        %3091 = vmatpush1.msra.mxu0 0.0
        %3092 = vmatprep.subr.mxu0 0.0
        %3093 = vmatpush1.msra.mxu0 0.0
        %3094 = vmatprep.mubr.f32.mxu0 0.0
        %3095 = vmatmul.mubr.f32.gmra.mrb[0].mxu0 %v2522
        %v3096 = vpop.f32.mrb[0].mxu0
        %v3097 = vadd.f32 %v3018, %v3096
        %v3098 = vpop.f32.mrb[0].mxu0
        %v3099 = vadd.f32 %v3022, %v3098
        %3100 = vdwg.mxu0
        %3101 = vmatprep.subr.mxu0 0.0
        %3102 = vmatpush1.msra.mxu0 %v2967
        %3103 = vmatprep.subr.mxu0 0.0
        %3104 = vmatpush1.msra.mxu0 %v2970
        %3105 = vmatprep.subr.mxu0 0.0
        %3106 = vmatpush1.msra.mxu0 %v2973
        %3107 = vmatprep.subr.mxu0 0.0
        %3108 = vmatpush1.msra.mxu0 %v2976
        %3109 = vmatprep.subr.mxu0 0.0
        %3110 = vmatpush1.msra.mxu0 %v2979
        %3111 = vmatprep.subr.mxu0 0.0
        %3112 = vmatpush1.msra.mxu0 %v2982
        %3113 = vmatprep.subr.mxu0 0.0
        %3114 = vmatpush1.msra.mxu0 %v2985
        %3115 = vmatprep.subr.mxu0 0.0
        %3116 = vmatpush1.msra.mxu0 %v2988
        %3117 = vmatprep.subr.mxu0 0.0
        %3118 = vmatpush1.msra.mxu0 %v2991
        %3119 = vmatprep.subr.mxu0 0.0
        %3120 = vmatpush1.msra.mxu0 %v2994
        %3121 = vmatprep.subr.mxu0 0.0
        %3122 = vmatpush1.msra.mxu0 %v2997
        %3123 = vmatprep.subr.mxu0 0.0
        %3124 = vmatpush1.msra.mxu0 %v3000
        %3125 = vmatprep.subr.mxu0 0.0
        %3126 = vmatpush1.msra.mxu0 %v3003
        %3127 = vmatprep.subr.mxu0 0.0
        %3128 = vmatpush1.msra.mxu0 %v3006
        %3129 = vmatprep.subr.mxu0 0.0
        %3130 = vmatpush1.msra.mxu0 %v3009
        %3131 = vmatprep.subr.mxu0 0.0
        %3132 = vmatpush1.msra.mxu0 %v3012
        %3133 = vmatprep.subr.mxu0 0.0
        %3134 = vmatpush1.msra.mxu0 0.0
        %3135 = vmatprep.subr.mxu0 0.0
        %3136 = vmatpush1.msra.mxu0 0.0
        %3137 = vmatprep.subr.mxu0 0.0
        %3138 = vmatpush1.msra.mxu0 0.0
        %3139 = vmatprep.subr.mxu0 0.0
        %3140 = vmatpush1.msra.mxu0 0.0
        %3141 = vmatprep.subr.mxu0 0.0
        %3142 = vmatpush1.msra.mxu0 0.0
        %3143 = vmatprep.subr.mxu0 0.0
        %3144 = vmatpush1.msra.mxu0 0.0
        %3145 = vmatprep.subr.mxu0 0.0
        %3146 = vmatpush1.msra.mxu0 0.0
        %3147 = vmatprep.subr.mxu0 0.0
        %3148 = vmatpush1.msra.mxu0 0.0
        %3149 = vmatprep.subr.mxu0 0.0
        %3150 = vmatpush1.msra.mxu0 0.0
        %3151 = vmatprep.subr.mxu0 0.0
        %3152 = vmatpush1.msra.mxu0 0.0
        %3153 = vmatprep.subr.mxu0 0.0
        %3154 = vmatpush1.msra.mxu0 0.0
        %3155 = vmatprep.subr.mxu0 0.0
        %3156 = vmatpush1.msra.mxu0 0.0
        %3157 = vmatprep.subr.mxu0 0.0
        %3158 = vmatpush1.msra.mxu0 0.0
        %3159 = vmatprep.subr.mxu0 0.0
        %3160 = vmatpush1.msra.mxu0 0.0
        %3161 = vmatprep.subr.mxu0 0.0
        %3162 = vmatpush1.msra.mxu0 0.0
        %3163 = vmatprep.subr.mxu0 0.0
        %3164 = vmatpush1.msra.mxu0 0.0
        %3165 = vmatprep.mubr.f32.mxu0 0.0
        %3166 = vmatmul.mubr.f32.gmra.mrb[0].mxu0 %v2522
        %v3167 = vpop.f32.mrb[0].mxu0
        %v3168 = vadd.f32 %v3026, %v3167
        %v3169 = vpop.f32.mrb[0].mxu0
        %3170 = vdwg.mxu0
        %v3171 = vadd.f32 %v2891, %v3097
        %v3172 = vxor.u32 %v3171, 2147483648
        %v3173 = vmul.f32 %v3172, 1.442695
        %v3174 = vpow.pop %v3173
        %v3175 = vadd.f32 %v3174, 1.0
        %v3176 = vrcp.pop %v3175
        %v3177 = vmul.f32 1.0, %v3176
        %v3178 = vadd.f32 %v2893, %v3099
        %v3179 = vxor.u32 %v3178, 2147483648
        %v3180 = vmul.f32 %v3179, 1.442695
        %v3181 = vpow.pop %v3180
        %v3182 = vadd.f32 %v3181, 1.0
        %v3183 = vrcp.pop %v3182
        %v3184 = vmul.f32 1.0, %v3183
        %v3185 = vmul.f32 %v3177, %v3168
        %v3186 = vadd.f32 %v2962, %v3185
        %v3187 = vtanh.pop %v3186
        %v3188 = vsub.f32 1.0, %v3184
        %v3189 = vmul.f32 %v3188, %v3187
        %v3190 = vmul.f32 %v3184, %v2522
        %v3191 = vadd.f32 %v3189, %v3190
        %s3192 = scalar_lea.vmem %s503, 6 [#allocation19]
        %3193 = vst [vmem:[%s3192] sm:$0x3] %v3191
        %s3194 = scalar_lea.vmem %s437, 24 [#allocation4]
        %v3195 = vld [vmem:[%s3194] sm:$0x3f]
        %v3196 = vld [vmem:[#allocation7] sm:$0xff]
        %v3197 = vld [vmem:[#allocation7 + $0x8] sm:$0xff]
        %v3198 = vld [vmem:[#allocation7 + $0x10] sm:$0xff]
        %v3199 = vld [vmem:[#allocation7 + $0x18] sm:$0xff]
        %v3200 = vld [vmem:[#allocation7 + $0x20] sm:$0xff]
        %v3201 = vld [vmem:[#allocation7 + $0x28] sm:$0xff]
        %v3202 = vld [vmem:[#allocation7 + $0x30] sm:$0xff]
        %v3203 = vld [vmem:[#allocation7 + $0x38] sm:$0xff]
        %v3204 = vld [vmem:[#allocation7 + $0x40] sm:$0xff]
        %v3205 = vld [vmem:[#allocation7 + $0x48] sm:$0xff]
        %v3206 = vld [vmem:[#allocation7 + $0x50] sm:$0xff]
        %v3207 = vld [vmem:[#allocation7 + $0x58] sm:$0xff]
        %v3208 = vld [vmem:[#allocation7 + $0x60] sm:$0xff]
        %v3209 = vld [vmem:[#allocation7 + $0x68] sm:$0xff]
        %v3210 = vld [vmem:[#allocation7 + $0x70] sm:$0xff]
        %v3211 = vld [vmem:[#allocation7 + $0x78] sm:$0xff]
        %v3212 = vld [vmem:[#allocation7 + $0x80] sm:$0xff]
        %v3213 = vld [vmem:[#allocation7 + $0x88] sm:$0xff]
        %v3214 = vld [vmem:[#allocation7 + $0x90] sm:$0xff]
        %v3215 = vld [vmem:[#allocation7 + $0x98] sm:$0xff]
        %v3216 = vld [vmem:[#allocation7 + $0xa0] sm:$0xff]
        %v3217 = vld [vmem:[#allocation7 + $0xa8] sm:$0xff]
        %v3218 = vld [vmem:[#allocation7 + $0xb0] sm:$0xff]
        %v3219 = vld [vmem:[#allocation7 + $0xb8] sm:$0xff]
        %v3220 = vld [vmem:[#allocation7 + $0xc0] sm:$0xff]
        %v3221 = vld [vmem:[#allocation7 + $0xc8] sm:$0xff]
        %v3222 = vld [vmem:[#allocation7 + $0xd0] sm:$0xff]
        %v3223 = vld [vmem:[#allocation7 + $0xd8] sm:$0xff]
        %v3224 = vld [vmem:[#allocation7 + $0xe0] sm:$0xff]
        %v3225 = vld [vmem:[#allocation7 + $0xe8] sm:$0xff]
        %v3226 = vld [vmem:[#allocation7 + $0xf0] sm:$0xff]
        %v3227 = vld [vmem:[#allocation7 + $0xf8] sm:$0xff]
        %v3228 = vld [vmem:[#allocation7 + $0x100] sm:$0xff]
        %v3229 = vld [vmem:[#allocation7 + $0x108] sm:$0xff]
        %v3230 = vld [vmem:[#allocation7 + $0x110] sm:$0xff]
        %v3231 = vld [vmem:[#allocation7 + $0x118] sm:$0xff]
        %v3232 = vld [vmem:[#allocation7 + $0x120] sm:$0xff]
        %v3233 = vld [vmem:[#allocation7 + $0x128] sm:$0xff]
        %v3234 = vld [vmem:[#allocation7 + $0x130] sm:$0xff]
        %v3235 = vld [vmem:[#allocation7 + $0x138] sm:$0xff]
        %v3236 = vld [vmem:[#allocation7 + $0x140] sm:$0xff]
        %v3237 = vld [vmem:[#allocation7 + $0x148] sm:$0xff]
        %v3238 = vld [vmem:[#allocation7 + $0x150] sm:$0xff]
        %v3239 = vld [vmem:[#allocation7 + $0x158] sm:$0xff]
        %v3240 = vld [vmem:[#allocation7 + $0x160] sm:$0xff]
        %v3241 = vld [vmem:[#allocation7 + $0x168] sm:$0xff]
        %v3242 = vld [vmem:[#allocation7 + $0x170] sm:$0xff]
        %v3243 = vld [vmem:[#allocation7 + $0x178] sm:$0xff]
        %v3244 = vld [vmem:[#allocation9] sm:$0x7]
        %v3246 = vlaneseq
        %v3247 = vshrl.u32 %v3246, 7
        %v3248 = vsub.s32 0, %v3247
        %v3249 = vrot.slane %v3244, %v3248
        %v3250 = vlaneseq
        %v3251 = vshrl.u32 %v3250, 7
        %v3252 = vsub.s32 1, %v3251
        %v3253 = vrot.slane %v3244, %v3252
        %v3254 = vlaneseq
        %v3255 = vshrl.u32 %v3254, 7
        %v3256 = vsub.s32 2, %v3255
        %v3257 = vrot.slane %v3244, %v3256
        %3261 = vmatprep.subr.mxu0 %v3197
        %3262 = vmatpush1.msra.mxu0 %v3196
        %3263 = vmatprep.subr.mxu0 %v3200
        %3264 = vmatpush1.msra.mxu0 %v3199
        %3265 = vmatprep.subr.mxu0 %v3203
        %3266 = vmatpush1.msra.mxu0 %v3202
        %3267 = vmatprep.subr.mxu0 %v3206
        %3268 = vmatpush1.msra.mxu0 %v3205
        %3269 = vmatprep.subr.mxu0 %v3209
        %3270 = vmatpush1.msra.mxu0 %v3208
        %3271 = vmatprep.subr.mxu0 %v3212
        %3272 = vmatpush1.msra.mxu0 %v3211
        %3273 = vmatprep.subr.mxu0 %v3215
        %3274 = vmatpush1.msra.mxu0 %v3214
        %3275 = vmatprep.subr.mxu0 %v3218
        %3276 = vmatpush1.msra.mxu0 %v3217
        %3277 = vmatprep.subr.mxu0 %v3221
        %3278 = vmatpush1.msra.mxu0 %v3220
        %3279 = vmatprep.subr.mxu0 %v3224
        %3280 = vmatpush1.msra.mxu0 %v3223
        %3281 = vmatprep.subr.mxu0 %v3227
        %3282 = vmatpush1.msra.mxu0 %v3226
        %3283 = vmatprep.subr.mxu0 %v3230
        %3284 = vmatpush1.msra.mxu0 %v3229
        %3285 = vmatprep.subr.mxu0 %v3233
        %3286 = vmatpush1.msra.mxu0 %v3232
        %3287 = vmatprep.subr.mxu0 %v3236
        %3288 = vmatpush1.msra.mxu0 %v3235
        %3289 = vmatprep.subr.mxu0 %v3239
        %3290 = vmatpush1.msra.mxu0 %v3238
        %3291 = vmatprep.subr.mxu0 %v3242
        %3292 = vmatpush1.msra.mxu0 %v3241
        %3293 = vmatprep.subr.mxu0 0.0
        %3294 = vmatpush1.msra.mxu0 0.0
        %3295 = vmatprep.subr.mxu0 0.0
        %3296 = vmatpush1.msra.mxu0 0.0
        %3297 = vmatprep.subr.mxu0 0.0
        %3298 = vmatpush1.msra.mxu0 0.0
        %3299 = vmatprep.subr.mxu0 0.0
        %3300 = vmatpush1.msra.mxu0 0.0
        %3301 = vmatprep.subr.mxu0 0.0
        %3302 = vmatpush1.msra.mxu0 0.0
        %3303 = vmatprep.subr.mxu0 0.0
        %3304 = vmatpush1.msra.mxu0 0.0
        %3305 = vmatprep.subr.mxu0 0.0
        %3306 = vmatpush1.msra.mxu0 0.0
        %3307 = vmatprep.subr.mxu0 0.0
        %3308 = vmatpush1.msra.mxu0 0.0
        %3309 = vmatprep.subr.mxu0 0.0
        %3310 = vmatpush1.msra.mxu0 0.0
        %3311 = vmatprep.subr.mxu0 0.0
        %3312 = vmatpush1.msra.mxu0 0.0
        %3313 = vmatprep.subr.mxu0 0.0
        %3314 = vmatpush1.msra.mxu0 0.0
        %3315 = vmatprep.subr.mxu0 0.0
        %3316 = vmatpush1.msra.mxu0 0.0
        %3317 = vmatprep.subr.mxu0 0.0
        %3318 = vmatpush1.msra.mxu0 0.0
        %3319 = vmatprep.subr.mxu0 0.0
        %3320 = vmatpush1.msra.mxu0 0.0
        %3321 = vmatprep.subr.mxu0 0.0
        %3322 = vmatpush1.msra.mxu0 0.0
        %3323 = vmatprep.subr.mxu0 0.0
        %3324 = vmatpush1.msra.mxu0 0.0
        %3325 = vmatprep.mubr.f32.mxu0 0.0
        %3326 = vmatmul.mubr.f32.gmra.mrb[0].mxu0 %v2758
        %v3327 = vpop.f32.mrb[0].mxu0
        %v3328 = vadd.f32 %v3249, %v3327
        %v3329 = vpop.f32.mrb[0].mxu0
        %v3330 = vadd.f32 %v3253, %v3329
        %3331 = vdwg.mxu0
        %3332 = vmatprep.subr.mxu0 0.0
        %3333 = vmatpush1.msra.mxu0 %v3198
        %3334 = vmatprep.subr.mxu0 0.0
        %3335 = vmatpush1.msra.mxu0 %v3201
        %3336 = vmatprep.subr.mxu0 0.0
        %3337 = vmatpush1.msra.mxu0 %v3204
        %3338 = vmatprep.subr.mxu0 0.0
        %3339 = vmatpush1.msra.mxu0 %v3207
        %3340 = vmatprep.subr.mxu0 0.0
        %3341 = vmatpush1.msra.mxu0 %v3210
        %3342 = vmatprep.subr.mxu0 0.0
        %3343 = vmatpush1.msra.mxu0 %v3213
        %3344 = vmatprep.subr.mxu0 0.0
        %3345 = vmatpush1.msra.mxu0 %v3216
        %3346 = vmatprep.subr.mxu0 0.0
        %3347 = vmatpush1.msra.mxu0 %v3219
        %3348 = vmatprep.subr.mxu0 0.0
        %3349 = vmatpush1.msra.mxu0 %v3222
        %3350 = vmatprep.subr.mxu0 0.0
        %3351 = vmatpush1.msra.mxu0 %v3225
        %3352 = vmatprep.subr.mxu0 0.0
        %3353 = vmatpush1.msra.mxu0 %v3228
        %3354 = vmatprep.subr.mxu0 0.0
        %3355 = vmatpush1.msra.mxu0 %v3231
        %3356 = vmatprep.subr.mxu0 0.0
        %3357 = vmatpush1.msra.mxu0 %v3234
        %3358 = vmatprep.subr.mxu0 0.0
        %3359 = vmatpush1.msra.mxu0 %v3237
        %3360 = vmatprep.subr.mxu0 0.0
        %3361 = vmatpush1.msra.mxu0 %v3240
        %3362 = vmatprep.subr.mxu0 0.0
        %3363 = vmatpush1.msra.mxu0 %v3243
        %3364 = vmatprep.subr.mxu0 0.0
        %3365 = vmatpush1.msra.mxu0 0.0
        %3366 = vmatprep.subr.mxu0 0.0
        %3367 = vmatpush1.msra.mxu0 0.0
        %3368 = vmatprep.subr.mxu0 0.0
        %3369 = vmatpush1.msra.mxu0 0.0
        %3370 = vmatprep.subr.mxu0 0.0
        %3371 = vmatpush1.msra.mxu0 0.0
        %3372 = vmatprep.subr.mxu0 0.0
        %3373 = vmatpush1.msra.mxu0 0.0
        %3374 = vmatprep.subr.mxu0 0.0
        %3375 = vmatpush1.msra.mxu0 0.0
        %3376 = vmatprep.subr.mxu0 0.0
        %3377 = vmatpush1.msra.mxu0 0.0
        %3378 = vmatprep.subr.mxu0 0.0
        %3379 = vmatpush1.msra.mxu0 0.0
        %3380 = vmatprep.subr.mxu0 0.0
        %3381 = vmatpush1.msra.mxu0 0.0
        %3382 = vmatprep.subr.mxu0 0.0
        %3383 = vmatpush1.msra.mxu0 0.0
        %3384 = vmatprep.subr.mxu0 0.0
        %3385 = vmatpush1.msra.mxu0 0.0
        %3386 = vmatprep.subr.mxu0 0.0
        %3387 = vmatpush1.msra.mxu0 0.0
        %3388 = vmatprep.subr.mxu0 0.0
        %3389 = vmatpush1.msra.mxu0 0.0
        %3390 = vmatprep.subr.mxu0 0.0
        %3391 = vmatpush1.msra.mxu0 0.0
        %3392 = vmatprep.subr.mxu0 0.0
        %3393 = vmatpush1.msra.mxu0 0.0
        %3394 = vmatprep.subr.mxu0 0.0
        %3395 = vmatpush1.msra.mxu0 0.0
        %3396 = vmatprep.mubr.f32.mxu0 0.0
        %3397 = vmatmul.mubr.f32.gmra.mrb[0].mxu0 %v2758
        %v3398 = vpop.f32.mrb[0].mxu0
        %v3399 = vadd.f32 %v3257, %v3398
        %v3400 = vpop.f32.mrb[0].mxu0
        %3401 = vdwg.mxu0
        %v3402 = vadd.f32 %v3195, %v3328
        %v3403 = vxor.u32 %v3402, 2147483648
        %v3404 = vmul.f32 %v3403, 1.442695
        %v3405 = vpow.pop %v3404
        %v3406 = vadd.f32 %v3405, 1.0
        %v3407 = vrcp.pop %v3406
        %v3408 = vmul.f32 1.0, %v3407
        %v3410 = vrot.slane %v3195, 2
        %v3412 = vadd.f32 %v3410, %v3330
        %v3413 = vxor.u32 %v3412, 2147483648
        %v3414 = vmul.f32 %v3413, 1.442695
        %v3415 = vpow.pop %v3414
        %v3416 = vadd.f32 %v3415, 1.0
        %v3417 = vrcp.pop %v3416
        %v3418 = vmul.f32 1.0, %v3417
        %v3419 = vmul.f32 %v3408, %v3399
        %v3420 = vrot.slane %v3195, 4
        %v3422 = vadd.f32 %v3420, %v3419
        %v3423 = vtanh.pop %v3422
        %v3424 = vsub.f32 1.0, %v3418
        %v3425 = vmul.f32 %v3424, %v3423
        %v3426 = vmul.f32 %v3418, %v2758
        %v3427 = vadd.f32 %v3425, %v3426
        %v3428 = vld [vmem:[#allocation10] sm:$0xff]
        %v3429 = vld [vmem:[#allocation10 + $0x8] sm:$0xff]
        %v3430 = vld [vmem:[#allocation10 + $0x10] sm:$0xff]
        %v3431 = vld [vmem:[#allocation10 + $0x18] sm:$0xff]
        %v3432 = vld [vmem:[#allocation10 + $0x20] sm:$0xff]
        %v3433 = vld [vmem:[#allocation10 + $0x28] sm:$0xff]
        %v3434 = vld [vmem:[#allocation10 + $0x30] sm:$0xff]
        %v3435 = vld [vmem:[#allocation10 + $0x38] sm:$0xff]
        %v3436 = vld [vmem:[#allocation10 + $0x40] sm:$0xff]
        %v3437 = vld [vmem:[#allocation10 + $0x48] sm:$0xff]
        %v3438 = vld [vmem:[#allocation10 + $0x50] sm:$0xff]
        %v3439 = vld [vmem:[#allocation10 + $0x58] sm:$0xff]
        %v3440 = vld [vmem:[#allocation10 + $0x60] sm:$0xff]
        %v3441 = vld [vmem:[#allocation10 + $0x68] sm:$0xff]
        %v3442 = vld [vmem:[#allocation10 + $0x70] sm:$0xff]
        %v3443 = vld [vmem:[#allocation10 + $0x78] sm:$0xff]
        %v3444 = vld [vmem:[#allocation10 + $0x80] sm:$0xff]
        %v3445 = vld [vmem:[#allocation10 + $0x88] sm:$0xff]
        %v3446 = vld [vmem:[#allocation10 + $0x90] sm:$0xff]
        %v3447 = vld [vmem:[#allocation10 + $0x98] sm:$0xff]
        %v3448 = vld [vmem:[#allocation10 + $0xa0] sm:$0xff]
        %v3449 = vld [vmem:[#allocation10 + $0xa8] sm:$0xff]
        %v3450 = vld [vmem:[#allocation10 + $0xb0] sm:$0xff]
        %v3451 = vld [vmem:[#allocation10 + $0xb8] sm:$0xff]
        %v3452 = vld [vmem:[#allocation10 + $0xc0] sm:$0xff]
        %v3453 = vld [vmem:[#allocation10 + $0xc8] sm:$0xff]
        %v3454 = vld [vmem:[#allocation10 + $0xd0] sm:$0xff]
        %v3455 = vld [vmem:[#allocation10 + $0xd8] sm:$0xff]
        %v3456 = vld [vmem:[#allocation10 + $0xe0] sm:$0xff]
        %v3457 = vld [vmem:[#allocation10 + $0xe8] sm:$0xff]
        %v3458 = vld [vmem:[#allocation10 + $0xf0] sm:$0xff]
        %v3459 = vld [vmem:[#allocation10 + $0xf8] sm:$0xff]
        %v3460 = vld [vmem:[#allocation10 + $0x100] sm:$0xff]
        %v3461 = vld [vmem:[#allocation10 + $0x108] sm:$0xff]
        %v3462 = vld [vmem:[#allocation10 + $0x110] sm:$0xff]
        %v3463 = vld [vmem:[#allocation10 + $0x118] sm:$0xff]
        %v3464 = vld [vmem:[#allocation10 + $0x120] sm:$0xff]
        %v3465 = vld [vmem:[#allocation10 + $0x128] sm:$0xff]
        %v3466 = vld [vmem:[#allocation10 + $0x130] sm:$0xff]
        %v3467 = vld [vmem:[#allocation10 + $0x138] sm:$0xff]
        %v3468 = vld [vmem:[#allocation10 + $0x140] sm:$0xff]
        %v3469 = vld [vmem:[#allocation10 + $0x148] sm:$0xff]
        %v3470 = vld [vmem:[#allocation10 + $0x150] sm:$0xff]
        %v3471 = vld [vmem:[#allocation10 + $0x158] sm:$0xff]
        %v3472 = vld [vmem:[#allocation10 + $0x160] sm:$0xff]
        %v3473 = vld [vmem:[#allocation10 + $0x168] sm:$0xff]
        %v3474 = vld [vmem:[#allocation10 + $0x170] sm:$0xff]
        %v3475 = vld [vmem:[#allocation10 + $0x178] sm:$0xff]
        %v3476 = vld [vmem:[#allocation12] sm:$0x7]
        %v3478 = vlaneseq
        %v3479 = vshrl.u32 %v3478, 7
        %v3480 = vsub.s32 0, %v3479
        %v3481 = vrot.slane %v3476, %v3480
        %v3482 = vlaneseq
        %v3483 = vshrl.u32 %v3482, 7
        %v3484 = vsub.s32 1, %v3483
        %v3485 = vrot.slane %v3476, %v3484
        %v3486 = vlaneseq
        %v3487 = vshrl.u32 %v3486, 7
        %v3488 = vsub.s32 2, %v3487
        %v3489 = vrot.slane %v3476, %v3488
        %3493 = vmatprep.subr.mxu0 %v3429
        %3494 = vmatpush1.msra.mxu0 %v3428
        %3495 = vmatprep.subr.mxu0 %v3432
        %3496 = vmatpush1.msra.mxu0 %v3431
        %3497 = vmatprep.subr.mxu0 %v3435
        %3498 = vmatpush1.msra.mxu0 %v3434
        %3499 = vmatprep.subr.mxu0 %v3438
        %3500 = vmatpush1.msra.mxu0 %v3437
        %3501 = vmatprep.subr.mxu0 %v3441
        %3502 = vmatpush1.msra.mxu0 %v3440
        %3503 = vmatprep.subr.mxu0 %v3444
        %3504 = vmatpush1.msra.mxu0 %v3443
        %3505 = vmatprep.subr.mxu0 %v3447
        %3506 = vmatpush1.msra.mxu0 %v3446
        %3507 = vmatprep.subr.mxu0 %v3450
        %3508 = vmatpush1.msra.mxu0 %v3449
        %3509 = vmatprep.subr.mxu0 %v3453
        %3510 = vmatpush1.msra.mxu0 %v3452
        %3511 = vmatprep.subr.mxu0 %v3456
        %3512 = vmatpush1.msra.mxu0 %v3455
        %3513 = vmatprep.subr.mxu0 %v3459
        %3514 = vmatpush1.msra.mxu0 %v3458
        %3515 = vmatprep.subr.mxu0 %v3462
        %3516 = vmatpush1.msra.mxu0 %v3461
        %3517 = vmatprep.subr.mxu0 %v3465
        %3518 = vmatpush1.msra.mxu0 %v3464
        %3519 = vmatprep.subr.mxu0 %v3468
        %3520 = vmatpush1.msra.mxu0 %v3467
        %3521 = vmatprep.subr.mxu0 %v3471
        %3522 = vmatpush1.msra.mxu0 %v3470
        %3523 = vmatprep.subr.mxu0 %v3474
        %3524 = vmatpush1.msra.mxu0 %v3473
        %3525 = vmatprep.subr.mxu0 0.0
        %3526 = vmatpush1.msra.mxu0 0.0
        %3527 = vmatprep.subr.mxu0 0.0
        %3528 = vmatpush1.msra.mxu0 0.0
        %3529 = vmatprep.subr.mxu0 0.0
        %3530 = vmatpush1.msra.mxu0 0.0
        %3531 = vmatprep.subr.mxu0 0.0
        %3532 = vmatpush1.msra.mxu0 0.0
        %3533 = vmatprep.subr.mxu0 0.0
        %3534 = vmatpush1.msra.mxu0 0.0
        %3535 = vmatprep.subr.mxu0 0.0
        %3536 = vmatpush1.msra.mxu0 0.0
        %3537 = vmatprep.subr.mxu0 0.0
        %3538 = vmatpush1.msra.mxu0 0.0
        %3539 = vmatprep.subr.mxu0 0.0
        %3540 = vmatpush1.msra.mxu0 0.0
        %3541 = vmatprep.subr.mxu0 0.0
        %3542 = vmatpush1.msra.mxu0 0.0
        %3543 = vmatprep.subr.mxu0 0.0
        %3544 = vmatpush1.msra.mxu0 0.0
        %3545 = vmatprep.subr.mxu0 0.0
        %3546 = vmatpush1.msra.mxu0 0.0
        %3547 = vmatprep.subr.mxu0 0.0
        %3548 = vmatpush1.msra.mxu0 0.0
        %3549 = vmatprep.subr.mxu0 0.0
        %3550 = vmatpush1.msra.mxu0 0.0
        %3551 = vmatprep.subr.mxu0 0.0
        %3552 = vmatpush1.msra.mxu0 0.0
        %3553 = vmatprep.subr.mxu0 0.0
        %3554 = vmatpush1.msra.mxu0 0.0
        %3555 = vmatprep.subr.mxu0 0.0
        %3556 = vmatpush1.msra.mxu0 0.0
        %3557 = vmatprep.mubr.f32.mxu0 0.0
        %3558 = vmatmul.mubr.f32.gmra.mrb[0].mxu0 %v3427
        %v3559 = vpop.f32.mrb[0].mxu0
        %v3560 = vadd.f32 %v3481, %v3559
        %v3561 = vpop.f32.mrb[0].mxu0
        %v3562 = vadd.f32 %v3485, %v3561
        %3563 = vdwg.mxu0
        %3564 = vmatprep.subr.mxu0 0.0
        %3565 = vmatpush1.msra.mxu0 %v3430
        %3566 = vmatprep.subr.mxu0 0.0
        %3567 = vmatpush1.msra.mxu0 %v3433
        %3568 = vmatprep.subr.mxu0 0.0
        %3569 = vmatpush1.msra.mxu0 %v3436
        %3570 = vmatprep.subr.mxu0 0.0
        %3571 = vmatpush1.msra.mxu0 %v3439
        %3572 = vmatprep.subr.mxu0 0.0
        %3573 = vmatpush1.msra.mxu0 %v3442
        %3574 = vmatprep.subr.mxu0 0.0
        %3575 = vmatpush1.msra.mxu0 %v3445
        %3576 = vmatprep.subr.mxu0 0.0
        %3577 = vmatpush1.msra.mxu0 %v3448
        %3578 = vmatprep.subr.mxu0 0.0
        %3579 = vmatpush1.msra.mxu0 %v3451
        %3580 = vmatprep.subr.mxu0 0.0
        %3581 = vmatpush1.msra.mxu0 %v3454
        %3582 = vmatprep.subr.mxu0 0.0
        %3583 = vmatpush1.msra.mxu0 %v3457
        %3584 = vmatprep.subr.mxu0 0.0
        %3585 = vmatpush1.msra.mxu0 %v3460
        %3586 = vmatprep.subr.mxu0 0.0
        %3587 = vmatpush1.msra.mxu0 %v3463
        %3588 = vmatprep.subr.mxu0 0.0
        %3589 = vmatpush1.msra.mxu0 %v3466
        %3590 = vmatprep.subr.mxu0 0.0
        %3591 = vmatpush1.msra.mxu0 %v3469
        %3592 = vmatprep.subr.mxu0 0.0
        %3593 = vmatpush1.msra.mxu0 %v3472
        %3594 = vmatprep.subr.mxu0 0.0
        %3595 = vmatpush1.msra.mxu0 %v3475
        %3596 = vmatprep.subr.mxu0 0.0
        %3597 = vmatpush1.msra.mxu0 0.0
        %3598 = vmatprep.subr.mxu0 0.0
        %3599 = vmatpush1.msra.mxu0 0.0
        %3600 = vmatprep.subr.mxu0 0.0
        %3601 = vmatpush1.msra.mxu0 0.0
        %3602 = vmatprep.subr.mxu0 0.0
        %3603 = vmatpush1.msra.mxu0 0.0
        %3604 = vmatprep.subr.mxu0 0.0
        %3605 = vmatpush1.msra.mxu0 0.0
        %3606 = vmatprep.subr.mxu0 0.0
        %3607 = vmatpush1.msra.mxu0 0.0
        %3608 = vmatprep.subr.mxu0 0.0
        %3609 = vmatpush1.msra.mxu0 0.0
        %3610 = vmatprep.subr.mxu0 0.0
        %3611 = vmatpush1.msra.mxu0 0.0
        %3612 = vmatprep.subr.mxu0 0.0
        %3613 = vmatpush1.msra.mxu0 0.0
        %3614 = vmatprep.subr.mxu0 0.0
        %3615 = vmatpush1.msra.mxu0 0.0
        %3616 = vmatprep.subr.mxu0 0.0
        %3617 = vmatpush1.msra.mxu0 0.0
        %3618 = vmatprep.subr.mxu0 0.0
        %3619 = vmatpush1.msra.mxu0 0.0
        %3620 = vmatprep.subr.mxu0 0.0
        %3621 = vmatpush1.msra.mxu0 0.0
        %3622 = vmatprep.subr.mxu0 0.0
        %3623 = vmatpush1.msra.mxu0 0.0
        %3624 = vmatprep.subr.mxu0 0.0
        %3625 = vmatpush1.msra.mxu0 0.0
        %3626 = vmatprep.subr.mxu0 0.0
        %3627 = vmatpush1.msra.mxu0 0.0
        %3628 = vmatprep.mubr.f32.mxu0 0.0
        %3629 = vmatmul.mubr.f32.gmra.mrb[0].mxu0 %v3427
        %v3630 = vpop.f32.mrb[0].mxu0
        %v3631 = vadd.f32 %v3489, %v3630
        %v3632 = vpop.f32.mrb[0].mxu0
        %3633 = vdwg.mxu0
        %v3634 = vld [vmem:[#allocation13] sm:$0xff]
        %v3635 = vld [vmem:[#allocation13 + $0x8] sm:$0xff]
        %v3636 = vld [vmem:[#allocation13 + $0x10] sm:$0xff]
        %v3637 = vld [vmem:[#allocation13 + $0x18] sm:$0xff]
        %v3638 = vld [vmem:[#allocation13 + $0x20] sm:$0xff]
        %v3639 = vld [vmem:[#allocation13 + $0x28] sm:$0xff]
        %v3640 = vld [vmem:[#allocation13 + $0x30] sm:$0xff]
        %v3641 = vld [vmem:[#allocation13 + $0x38] sm:$0xff]
        %v3642 = vld [vmem:[#allocation13 + $0x40] sm:$0xff]
        %v3643 = vld [vmem:[#allocation13 + $0x48] sm:$0xff]
        %v3644 = vld [vmem:[#allocation13 + $0x50] sm:$0xff]
        %v3645 = vld [vmem:[#allocation13 + $0x58] sm:$0xff]
        %v3646 = vld [vmem:[#allocation13 + $0x60] sm:$0xff]
        %v3647 = vld [vmem:[#allocation13 + $0x68] sm:$0xff]
        %v3648 = vld [vmem:[#allocation13 + $0x70] sm:$0xff]
        %v3649 = vld [vmem:[#allocation13 + $0x78] sm:$0xff]
        %v3650 = vld [vmem:[#allocation13 + $0x80] sm:$0xff]
        %v3651 = vld [vmem:[#allocation13 + $0x88] sm:$0xff]
        %v3652 = vld [vmem:[#allocation13 + $0x90] sm:$0xff]
        %v3653 = vld [vmem:[#allocation13 + $0x98] sm:$0xff]
        %v3654 = vld [vmem:[#allocation13 + $0xa0] sm:$0xff]
        %v3655 = vld [vmem:[#allocation13 + $0xa8] sm:$0xff]
        %v3656 = vld [vmem:[#allocation13 + $0xb0] sm:$0xff]
        %v3657 = vld [vmem:[#allocation13 + $0xb8] sm:$0xff]
        %v3658 = vld [vmem:[#allocation13 + $0xc0] sm:$0xff]
        %v3659 = vld [vmem:[#allocation13 + $0xc8] sm:$0xff]
        %v3660 = vld [vmem:[#allocation13 + $0xd0] sm:$0xff]
        %v3661 = vld [vmem:[#allocation13 + $0xd8] sm:$0xff]
        %v3662 = vld [vmem:[#allocation13 + $0xe0] sm:$0xff]
        %v3663 = vld [vmem:[#allocation13 + $0xe8] sm:$0xff]
        %v3664 = vld [vmem:[#allocation13 + $0xf0] sm:$0xff]
        %v3665 = vld [vmem:[#allocation13 + $0xf8] sm:$0xff]
        %v3666 = vld [vmem:[#allocation13 + $0x100] sm:$0xff]
        %v3667 = vld [vmem:[#allocation13 + $0x108] sm:$0xff]
        %v3668 = vld [vmem:[#allocation13 + $0x110] sm:$0xff]
        %v3669 = vld [vmem:[#allocation13 + $0x118] sm:$0xff]
        %v3670 = vld [vmem:[#allocation13 + $0x120] sm:$0xff]
        %v3671 = vld [vmem:[#allocation13 + $0x128] sm:$0xff]
        %v3672 = vld [vmem:[#allocation13 + $0x130] sm:$0xff]
        %v3673 = vld [vmem:[#allocation13 + $0x138] sm:$0xff]
        %v3674 = vld [vmem:[#allocation13 + $0x140] sm:$0xff]
        %v3675 = vld [vmem:[#allocation13 + $0x148] sm:$0xff]
        %v3676 = vld [vmem:[#allocation13 + $0x150] sm:$0xff]
        %v3677 = vld [vmem:[#allocation13 + $0x158] sm:$0xff]
        %v3678 = vld [vmem:[#allocation13 + $0x160] sm:$0xff]
        %v3679 = vld [vmem:[#allocation13 + $0x168] sm:$0xff]
        %v3680 = vld [vmem:[#allocation13 + $0x170] sm:$0xff]
        %v3681 = vld [vmem:[#allocation13 + $0x178] sm:$0xff]
        %v3682 = vld [vmem:[#allocation15] sm:$0x7]
        %v3684 = vlaneseq
        %v3685 = vshrl.u32 %v3684, 7
        %v3686 = vsub.s32 0, %v3685
        %v3687 = vrot.slane %v3682, %v3686
        %v3688 = vlaneseq
        %v3689 = vshrl.u32 %v3688, 7
        %v3690 = vsub.s32 1, %v3689
        %v3691 = vrot.slane %v3682, %v3690
        %v3692 = vlaneseq
        %v3693 = vshrl.u32 %v3692, 7
        %v3694 = vsub.s32 2, %v3693
        %v3695 = vrot.slane %v3682, %v3694
        %3699 = vmatprep.subr.mxu0 %v3635
        %3700 = vmatpush1.msra.mxu0 %v3634
        %3701 = vmatprep.subr.mxu0 %v3638
        %3702 = vmatpush1.msra.mxu0 %v3637
        %3703 = vmatprep.subr.mxu0 %v3641
        %3704 = vmatpush1.msra.mxu0 %v3640
        %3705 = vmatprep.subr.mxu0 %v3644
        %3706 = vmatpush1.msra.mxu0 %v3643
        %3707 = vmatprep.subr.mxu0 %v3647
        %3708 = vmatpush1.msra.mxu0 %v3646
        %3709 = vmatprep.subr.mxu0 %v3650
        %3710 = vmatpush1.msra.mxu0 %v3649
        %3711 = vmatprep.subr.mxu0 %v3653
        %3712 = vmatpush1.msra.mxu0 %v3652
        %3713 = vmatprep.subr.mxu0 %v3656
        %3714 = vmatpush1.msra.mxu0 %v3655
        %3715 = vmatprep.subr.mxu0 %v3659
        %3716 = vmatpush1.msra.mxu0 %v3658
        %3717 = vmatprep.subr.mxu0 %v3662
        %3718 = vmatpush1.msra.mxu0 %v3661
        %3719 = vmatprep.subr.mxu0 %v3665
        %3720 = vmatpush1.msra.mxu0 %v3664
        %3721 = vmatprep.subr.mxu0 %v3668
        %3722 = vmatpush1.msra.mxu0 %v3667
        %3723 = vmatprep.subr.mxu0 %v3671
        %3724 = vmatpush1.msra.mxu0 %v3670
        %3725 = vmatprep.subr.mxu0 %v3674
        %3726 = vmatpush1.msra.mxu0 %v3673
        %3727 = vmatprep.subr.mxu0 %v3677
        %3728 = vmatpush1.msra.mxu0 %v3676
        %3729 = vmatprep.subr.mxu0 %v3680
        %3730 = vmatpush1.msra.mxu0 %v3679
        %3731 = vmatprep.subr.mxu0 0.0
        %3732 = vmatpush1.msra.mxu0 0.0
        %3733 = vmatprep.subr.mxu0 0.0
        %3734 = vmatpush1.msra.mxu0 0.0
        %3735 = vmatprep.subr.mxu0 0.0
        %3736 = vmatpush1.msra.mxu0 0.0
        %3737 = vmatprep.subr.mxu0 0.0
        %3738 = vmatpush1.msra.mxu0 0.0
        %3739 = vmatprep.subr.mxu0 0.0
        %3740 = vmatpush1.msra.mxu0 0.0
        %3741 = vmatprep.subr.mxu0 0.0
        %3742 = vmatpush1.msra.mxu0 0.0
        %3743 = vmatprep.subr.mxu0 0.0
        %3744 = vmatpush1.msra.mxu0 0.0
        %3745 = vmatprep.subr.mxu0 0.0
        %3746 = vmatpush1.msra.mxu0 0.0
        %3747 = vmatprep.subr.mxu0 0.0
        %3748 = vmatpush1.msra.mxu0 0.0
        %3749 = vmatprep.subr.mxu0 0.0
        %3750 = vmatpush1.msra.mxu0 0.0
        %3751 = vmatprep.subr.mxu0 0.0
        %3752 = vmatpush1.msra.mxu0 0.0
        %3753 = vmatprep.subr.mxu0 0.0
        %3754 = vmatpush1.msra.mxu0 0.0
        %3755 = vmatprep.subr.mxu0 0.0
        %3756 = vmatpush1.msra.mxu0 0.0
        %3757 = vmatprep.subr.mxu0 0.0
        %3758 = vmatpush1.msra.mxu0 0.0
        %3759 = vmatprep.subr.mxu0 0.0
        %3760 = vmatpush1.msra.mxu0 0.0
        %3761 = vmatprep.subr.mxu0 0.0
        %3762 = vmatpush1.msra.mxu0 0.0
        %3763 = vmatprep.mubr.f32.mxu0 0.0
        %3764 = vmatmul.mubr.f32.gmra.mrb[0].mxu0 %v3191
        %v3765 = vpop.f32.mrb[0].mxu0
        %v3766 = vadd.f32 %v3687, %v3765
        %v3767 = vpop.f32.mrb[0].mxu0
        %v3768 = vadd.f32 %v3691, %v3767
        %3769 = vdwg.mxu0
        %3770 = vmatprep.subr.mxu0 0.0
        %3771 = vmatpush1.msra.mxu0 %v3636
        %3772 = vmatprep.subr.mxu0 0.0
        %3773 = vmatpush1.msra.mxu0 %v3639
        %3774 = vmatprep.subr.mxu0 0.0
        %3775 = vmatpush1.msra.mxu0 %v3642
        %3776 = vmatprep.subr.mxu0 0.0
        %3777 = vmatpush1.msra.mxu0 %v3645
        %3778 = vmatprep.subr.mxu0 0.0
        %3779 = vmatpush1.msra.mxu0 %v3648
        %3780 = vmatprep.subr.mxu0 0.0
        %3781 = vmatpush1.msra.mxu0 %v3651
        %3782 = vmatprep.subr.mxu0 0.0
        %3783 = vmatpush1.msra.mxu0 %v3654
        %3784 = vmatprep.subr.mxu0 0.0
        %3785 = vmatpush1.msra.mxu0 %v3657
        %3786 = vmatprep.subr.mxu0 0.0
        %3787 = vmatpush1.msra.mxu0 %v3660
        %3788 = vmatprep.subr.mxu0 0.0
        %3789 = vmatpush1.msra.mxu0 %v3663
        %3790 = vmatprep.subr.mxu0 0.0
        %3791 = vmatpush1.msra.mxu0 %v3666
        %3792 = vmatprep.subr.mxu0 0.0
        %3793 = vmatpush1.msra.mxu0 %v3669
        %3794 = vmatprep.subr.mxu0 0.0
        %3795 = vmatpush1.msra.mxu0 %v3672
        %3796 = vmatprep.subr.mxu0 0.0
        %3797 = vmatpush1.msra.mxu0 %v3675
        %3798 = vmatprep.subr.mxu0 0.0
        %3799 = vmatpush1.msra.mxu0 %v3678
        %3800 = vmatprep.subr.mxu0 0.0
        %3801 = vmatpush1.msra.mxu0 %v3681
        %3802 = vmatprep.subr.mxu0 0.0
        %3803 = vmatpush1.msra.mxu0 0.0
        %3804 = vmatprep.subr.mxu0 0.0
        %3805 = vmatpush1.msra.mxu0 0.0
        %3806 = vmatprep.subr.mxu0 0.0
        %3807 = vmatpush1.msra.mxu0 0.0
        %3808 = vmatprep.subr.mxu0 0.0
        %3809 = vmatpush1.msra.mxu0 0.0
        %3810 = vmatprep.subr.mxu0 0.0
        %3811 = vmatpush1.msra.mxu0 0.0
        %3812 = vmatprep.subr.mxu0 0.0
        %3813 = vmatpush1.msra.mxu0 0.0
        %3814 = vmatprep.subr.mxu0 0.0
        %3815 = vmatpush1.msra.mxu0 0.0
        %3816 = vmatprep.subr.mxu0 0.0
        %3817 = vmatpush1.msra.mxu0 0.0
        %3818 = vmatprep.subr.mxu0 0.0
        %3819 = vmatpush1.msra.mxu0 0.0
        %3820 = vmatprep.subr.mxu0 0.0
        %3821 = vmatpush1.msra.mxu0 0.0
        %3822 = vmatprep.subr.mxu0 0.0
        %3823 = vmatpush1.msra.mxu0 0.0
        %3824 = vmatprep.subr.mxu0 0.0
        %3825 = vmatpush1.msra.mxu0 0.0
        %3826 = vmatprep.subr.mxu0 0.0
        %3827 = vmatpush1.msra.mxu0 0.0
        %3828 = vmatprep.subr.mxu0 0.0
        %3829 = vmatpush1.msra.mxu0 0.0
        %3830 = vmatprep.subr.mxu0 0.0
        %3831 = vmatpush1.msra.mxu0 0.0
        %3832 = vmatprep.subr.mxu0 0.0
        %3833 = vmatpush1.msra.mxu0 0.0
        %3834 = vmatprep.mubr.f32.mxu0 0.0
        %3835 = vmatmul.mubr.f32.gmra.mrb[0].mxu0 %v3191
        %v3836 = vpop.f32.mrb[0].mxu0
        %v3837 = vadd.f32 %v3695, %v3836
        %v3838 = vpop.f32.mrb[0].mxu0
        %3839 = vdwg.mxu0
        %v3840 = vadd.f32 %v3560, %v3766
        %v3841 = vxor.u32 %v3840, 2147483648
        %v3842 = vmul.f32 %v3841, 1.442695
        %v3843 = vpow.pop %v3842
        %v3844 = vadd.f32 %v3843, 1.0
        %v3845 = vrcp.pop %v3844
        %v3846 = vmul.f32 1.0, %v3845
        %v3847 = vadd.f32 %v3562, %v3768
        %v3848 = vxor.u32 %v3847, 2147483648
        %v3849 = vmul.f32 %v3848, 1.442695
        %v3850 = vpow.pop %v3849
        %v3851 = vadd.f32 %v3850, 1.0
        %v3852 = vrcp.pop %v3851
        %v3853 = vmul.f32 1.0, %v3852
        %v3854 = vmul.f32 %v3846, %v3837
        %v3855 = vadd.f32 %v3631, %v3854
        %v3856 = vtanh.pop %v3855
        %v3857 = vsub.f32 1.0, %v3853
        %v3858 = vmul.f32 %v3857, %v3856
        %v3859 = vmul.f32 %v3853, %v3191
        %v3860 = vadd.f32 %v3858, %v3859
        %s3861 = scalar_lea.vmem %s503, 8 [#allocation19]
        %3862 = vst [vmem:[%s3861] sm:$0x3] %v3860
        %s3863 = scalar_lea.vmem %s437, 30 [#allocation4]
        %v3864 = vld [vmem:[%s3863] sm:$0x3f]
        %v3865 = vld [vmem:[#allocation7] sm:$0xff]
        %v3866 = vld [vmem:[#allocation7 + $0x8] sm:$0xff]
        %v3867 = vld [vmem:[#allocation7 + $0x10] sm:$0xff]
        %v3868 = vld [vmem:[#allocation7 + $0x18] sm:$0xff]
        %v3869 = vld [vmem:[#allocation7 + $0x20] sm:$0xff]
        %v3870 = vld [vmem:[#allocation7 + $0x28] sm:$0xff]
        %v3871 = vld [vmem:[#allocation7 + $0x30] sm:$0xff]
        %v3872 = vld [vmem:[#allocation7 + $0x38] sm:$0xff]
        %v3873 = vld [vmem:[#allocation7 + $0x40] sm:$0xff]
        %v3874 = vld [vmem:[#allocation7 + $0x48] sm:$0xff]
        %v3875 = vld [vmem:[#allocation7 + $0x50] sm:$0xff]
        %v3876 = vld [vmem:[#allocation7 + $0x58] sm:$0xff]
        %v3877 = vld [vmem:[#allocation7 + $0x60] sm:$0xff]
        %v3878 = vld [vmem:[#allocation7 + $0x68] sm:$0xff]
        %v3879 = vld [vmem:[#allocation7 + $0x70] sm:$0xff]
        %v3880 = vld [vmem:[#allocation7 + $0x78] sm:$0xff]
        %v3881 = vld [vmem:[#allocation7 + $0x80] sm:$0xff]
        %v3882 = vld [vmem:[#allocation7 + $0x88] sm:$0xff]
        %v3883 = vld [vmem:[#allocation7 + $0x90] sm:$0xff]
        %v3884 = vld [vmem:[#allocation7 + $0x98] sm:$0xff]
        %v3885 = vld [vmem:[#allocation7 + $0xa0] sm:$0xff]
        %v3886 = vld [vmem:[#allocation7 + $0xa8] sm:$0xff]
        %v3887 = vld [vmem:[#allocation7 + $0xb0] sm:$0xff]
        %v3888 = vld [vmem:[#allocation7 + $0xb8] sm:$0xff]
        %v3889 = vld [vmem:[#allocation7 + $0xc0] sm:$0xff]
        %v3890 = vld [vmem:[#allocation7 + $0xc8] sm:$0xff]
        %v3891 = vld [vmem:[#allocation7 + $0xd0] sm:$0xff]
        %v3892 = vld [vmem:[#allocation7 + $0xd8] sm:$0xff]
        %v3893 = vld [vmem:[#allocation7 + $0xe0] sm:$0xff]
        %v3894 = vld [vmem:[#allocation7 + $0xe8] sm:$0xff]
        %v3895 = vld [vmem:[#allocation7 + $0xf0] sm:$0xff]
        %v3896 = vld [vmem:[#allocation7 + $0xf8] sm:$0xff]
        %v3897 = vld [vmem:[#allocation7 + $0x100] sm:$0xff]
        %v3898 = vld [vmem:[#allocation7 + $0x108] sm:$0xff]
        %v3899 = vld [vmem:[#allocation7 + $0x110] sm:$0xff]
        %v3900 = vld [vmem:[#allocation7 + $0x118] sm:$0xff]
        %v3901 = vld [vmem:[#allocation7 + $0x120] sm:$0xff]
        %v3902 = vld [vmem:[#allocation7 + $0x128] sm:$0xff]
        %v3903 = vld [vmem:[#allocation7 + $0x130] sm:$0xff]
        %v3904 = vld [vmem:[#allocation7 + $0x138] sm:$0xff]
        %v3905 = vld [vmem:[#allocation7 + $0x140] sm:$0xff]
        %v3906 = vld [vmem:[#allocation7 + $0x148] sm:$0xff]
        %v3907 = vld [vmem:[#allocation7 + $0x150] sm:$0xff]
        %v3908 = vld [vmem:[#allocation7 + $0x158] sm:$0xff]
        %v3909 = vld [vmem:[#allocation7 + $0x160] sm:$0xff]
        %v3910 = vld [vmem:[#allocation7 + $0x168] sm:$0xff]
        %v3911 = vld [vmem:[#allocation7 + $0x170] sm:$0xff]
        %v3912 = vld [vmem:[#allocation7 + $0x178] sm:$0xff]
        %v3913 = vld [vmem:[#allocation9] sm:$0x7]
        %v3915 = vlaneseq
        %v3916 = vshrl.u32 %v3915, 7
        %v3917 = vsub.s32 0, %v3916
        %v3918 = vrot.slane %v3913, %v3917
        %v3919 = vlaneseq
        %v3920 = vshrl.u32 %v3919, 7
        %v3921 = vsub.s32 1, %v3920
        %v3922 = vrot.slane %v3913, %v3921
        %v3923 = vlaneseq
        %v3924 = vshrl.u32 %v3923, 7
        %v3925 = vsub.s32 2, %v3924
        %v3926 = vrot.slane %v3913, %v3925
        %3930 = vmatprep.subr.mxu0 %v3866
        %3931 = vmatpush1.msra.mxu0 %v3865
        %3932 = vmatprep.subr.mxu0 %v3869
        %3933 = vmatpush1.msra.mxu0 %v3868
        %3934 = vmatprep.subr.mxu0 %v3872
        %3935 = vmatpush1.msra.mxu0 %v3871
        %3936 = vmatprep.subr.mxu0 %v3875
        %3937 = vmatpush1.msra.mxu0 %v3874
        %3938 = vmatprep.subr.mxu0 %v3878
        %3939 = vmatpush1.msra.mxu0 %v3877
        %3940 = vmatprep.subr.mxu0 %v3881
        %3941 = vmatpush1.msra.mxu0 %v3880
        %3942 = vmatprep.subr.mxu0 %v3884
        %3943 = vmatpush1.msra.mxu0 %v3883
        %3944 = vmatprep.subr.mxu0 %v3887
        %3945 = vmatpush1.msra.mxu0 %v3886
        %3946 = vmatprep.subr.mxu0 %v3890
        %3947 = vmatpush1.msra.mxu0 %v3889
        %3948 = vmatprep.subr.mxu0 %v3893
        %3949 = vmatpush1.msra.mxu0 %v3892
        %3950 = vmatprep.subr.mxu0 %v3896
        %3951 = vmatpush1.msra.mxu0 %v3895
        %3952 = vmatprep.subr.mxu0 %v3899
        %3953 = vmatpush1.msra.mxu0 %v3898
        %3954 = vmatprep.subr.mxu0 %v3902
        %3955 = vmatpush1.msra.mxu0 %v3901
        %3956 = vmatprep.subr.mxu0 %v3905
        %3957 = vmatpush1.msra.mxu0 %v3904
        %3958 = vmatprep.subr.mxu0 %v3908
        %3959 = vmatpush1.msra.mxu0 %v3907
        %3960 = vmatprep.subr.mxu0 %v3911
        %3961 = vmatpush1.msra.mxu0 %v3910
        %3962 = vmatprep.subr.mxu0 0.0
        %3963 = vmatpush1.msra.mxu0 0.0
        %3964 = vmatprep.subr.mxu0 0.0
        %3965 = vmatpush1.msra.mxu0 0.0
        %3966 = vmatprep.subr.mxu0 0.0
        %3967 = vmatpush1.msra.mxu0 0.0
        %3968 = vmatprep.subr.mxu0 0.0
        %3969 = vmatpush1.msra.mxu0 0.0
        %3970 = vmatprep.subr.mxu0 0.0
        %3971 = vmatpush1.msra.mxu0 0.0
        %3972 = vmatprep.subr.mxu0 0.0
        %3973 = vmatpush1.msra.mxu0 0.0
        %3974 = vmatprep.subr.mxu0 0.0
        %3975 = vmatpush1.msra.mxu0 0.0
        %3976 = vmatprep.subr.mxu0 0.0
        %3977 = vmatpush1.msra.mxu0 0.0
        %3978 = vmatprep.subr.mxu0 0.0
        %3979 = vmatpush1.msra.mxu0 0.0
        %3980 = vmatprep.subr.mxu0 0.0
        %3981 = vmatpush1.msra.mxu0 0.0
        %3982 = vmatprep.subr.mxu0 0.0
        %3983 = vmatpush1.msra.mxu0 0.0
        %3984 = vmatprep.subr.mxu0 0.0
        %3985 = vmatpush1.msra.mxu0 0.0
        %3986 = vmatprep.subr.mxu0 0.0
        %3987 = vmatpush1.msra.mxu0 0.0
        %3988 = vmatprep.subr.mxu0 0.0
        %3989 = vmatpush1.msra.mxu0 0.0
        %3990 = vmatprep.subr.mxu0 0.0
        %3991 = vmatpush1.msra.mxu0 0.0
        %3992 = vmatprep.subr.mxu0 0.0
        %3993 = vmatpush1.msra.mxu0 0.0
        %3994 = vmatprep.mubr.f32.mxu0 0.0
        %3995 = vmatmul.mubr.f32.gmra.mrb[0].mxu0 %v3427
        %v3996 = vpop.f32.mrb[0].mxu0
        %v3997 = vadd.f32 %v3918, %v3996
        %v3998 = vpop.f32.mrb[0].mxu0
        %v3999 = vadd.f32 %v3922, %v3998
        %4000 = vdwg.mxu0
        %4001 = vmatprep.subr.mxu0 0.0
        %4002 = vmatpush1.msra.mxu0 %v3867
        %4003 = vmatprep.subr.mxu0 0.0
        %4004 = vmatpush1.msra.mxu0 %v3870
        %4005 = vmatprep.subr.mxu0 0.0
        %4006 = vmatpush1.msra.mxu0 %v3873
        %4007 = vmatprep.subr.mxu0 0.0
        %4008 = vmatpush1.msra.mxu0 %v3876
        %4009 = vmatprep.subr.mxu0 0.0
        %4010 = vmatpush1.msra.mxu0 %v3879
        %4011 = vmatprep.subr.mxu0 0.0
        %4012 = vmatpush1.msra.mxu0 %v3882
        %4013 = vmatprep.subr.mxu0 0.0
        %4014 = vmatpush1.msra.mxu0 %v3885
        %4015 = vmatprep.subr.mxu0 0.0
        %4016 = vmatpush1.msra.mxu0 %v3888
        %4017 = vmatprep.subr.mxu0 0.0
        %4018 = vmatpush1.msra.mxu0 %v3891
        %4019 = vmatprep.subr.mxu0 0.0
        %4020 = vmatpush1.msra.mxu0 %v3894
        %4021 = vmatprep.subr.mxu0 0.0
        %4022 = vmatpush1.msra.mxu0 %v3897
        %4023 = vmatprep.subr.mxu0 0.0
        %4024 = vmatpush1.msra.mxu0 %v3900
        %4025 = vmatprep.subr.mxu0 0.0
        %4026 = vmatpush1.msra.mxu0 %v3903
        %4027 = vmatprep.subr.mxu0 0.0
        %4028 = vmatpush1.msra.mxu0 %v3906
        %4029 = vmatprep.subr.mxu0 0.0
        %4030 = vmatpush1.msra.mxu0 %v3909
        %4031 = vmatprep.subr.mxu0 0.0
        %4032 = vmatpush1.msra.mxu0 %v3912
        %4033 = vmatprep.subr.mxu0 0.0
        %4034 = vmatpush1.msra.mxu0 0.0
        %4035 = vmatprep.subr.mxu0 0.0
        %4036 = vmatpush1.msra.mxu0 0.0
        %4037 = vmatprep.subr.mxu0 0.0
        %4038 = vmatpush1.msra.mxu0 0.0
        %4039 = vmatprep.subr.mxu0 0.0
        %4040 = vmatpush1.msra.mxu0 0.0
        %4041 = vmatprep.subr.mxu0 0.0
        %4042 = vmatpush1.msra.mxu0 0.0
        %4043 = vmatprep.subr.mxu0 0.0
        %4044 = vmatpush1.msra.mxu0 0.0
        %4045 = vmatprep.subr.mxu0 0.0
        %4046 = vmatpush1.msra.mxu0 0.0
        %4047 = vmatprep.subr.mxu0 0.0
        %4048 = vmatpush1.msra.mxu0 0.0
        %4049 = vmatprep.subr.mxu0 0.0
        %4050 = vmatpush1.msra.mxu0 0.0
        %4051 = vmatprep.subr.mxu0 0.0
        %4052 = vmatpush1.msra.mxu0 0.0
        %4053 = vmatprep.subr.mxu0 0.0
        %4054 = vmatpush1.msra.mxu0 0.0
        %4055 = vmatprep.subr.mxu0 0.0
        %4056 = vmatpush1.msra.mxu0 0.0
        %4057 = vmatprep.subr.mxu0 0.0
        %4058 = vmatpush1.msra.mxu0 0.0
        %4059 = vmatprep.subr.mxu0 0.0
        %4060 = vmatpush1.msra.mxu0 0.0
        %4061 = vmatprep.subr.mxu0 0.0
        %4062 = vmatpush1.msra.mxu0 0.0
        %4063 = vmatprep.subr.mxu0 0.0
        %4064 = vmatpush1.msra.mxu0 0.0
        %4065 = vmatprep.mubr.f32.mxu0 0.0
        %4066 = vmatmul.mubr.f32.gmra.mrb[0].mxu0 %v3427
        %v4067 = vpop.f32.mrb[0].mxu0
        %v4068 = vadd.f32 %v3926, %v4067
        %v4069 = vpop.f32.mrb[0].mxu0
        %4070 = vdwg.mxu0
        %v4071 = vadd.f32 %v3864, %v3997
        %v4072 = vxor.u32 %v4071, 2147483648
        %v4073 = vmul.f32 %v4072, 1.442695
        %v4074 = vpow.pop %v4073
        %v4075 = vadd.f32 %v4074, 1.0
        %v4076 = vrcp.pop %v4075
        %v4077 = vmul.f32 1.0, %v4076
        %v4079 = vrot.slane %v3864, 2
        %v4081 = vadd.f32 %v4079, %v3999
        %v4082 = vxor.u32 %v4081, 2147483648
        %v4083 = vmul.f32 %v4082, 1.442695
        %v4084 = vpow.pop %v4083
        %v4085 = vadd.f32 %v4084, 1.0
        %v4086 = vrcp.pop %v4085
        %v4087 = vmul.f32 1.0, %v4086
        %v4088 = vmul.f32 %v4077, %v4068
        %v4089 = vrot.slane %v3864, 4
        %v4091 = vadd.f32 %v4089, %v4088
        %v4092 = vtanh.pop %v4091
        %v4093 = vsub.f32 1.0, %v4087
        %v4094 = vmul.f32 %v4093, %v4092
        %v4095 = vmul.f32 %v4087, %v3427
        %v4096 = vadd.f32 %v4094, %v4095
        %v4097 = vld [vmem:[#allocation10] sm:$0xff]
        %v4098 = vld [vmem:[#allocation10 + $0x8] sm:$0xff]
        %v4099 = vld [vmem:[#allocation10 + $0x10] sm:$0xff]
        %v4100 = vld [vmem:[#allocation10 + $0x18] sm:$0xff]
        %v4101 = vld [vmem:[#allocation10 + $0x20] sm:$0xff]
        %v4102 = vld [vmem:[#allocation10 + $0x28] sm:$0xff]
        %v4103 = vld [vmem:[#allocation10 + $0x30] sm:$0xff]
        %v4104 = vld [vmem:[#allocation10 + $0x38] sm:$0xff]
        %v4105 = vld [vmem:[#allocation10 + $0x40] sm:$0xff]
        %v4106 = vld [vmem:[#allocation10 + $0x48] sm:$0xff]
        %v4107 = vld [vmem:[#allocation10 + $0x50] sm:$0xff]
        %v4108 = vld [vmem:[#allocation10 + $0x58] sm:$0xff]
        %v4109 = vld [vmem:[#allocation10 + $0x60] sm:$0xff]
        %v4110 = vld [vmem:[#allocation10 + $0x68] sm:$0xff]
        %v4111 = vld [vmem:[#allocation10 + $0x70] sm:$0xff]
        %v4112 = vld [vmem:[#allocation10 + $0x78] sm:$0xff]
        %v4113 = vld [vmem:[#allocation10 + $0x80] sm:$0xff]
        %v4114 = vld [vmem:[#allocation10 + $0x88] sm:$0xff]
        %v4115 = vld [vmem:[#allocation10 + $0x90] sm:$0xff]
        %v4116 = vld [vmem:[#allocation10 + $0x98] sm:$0xff]
        %v4117 = vld [vmem:[#allocation10 + $0xa0] sm:$0xff]
        %v4118 = vld [vmem:[#allocation10 + $0xa8] sm:$0xff]
        %v4119 = vld [vmem:[#allocation10 + $0xb0] sm:$0xff]
        %v4120 = vld [vmem:[#allocation10 + $0xb8] sm:$0xff]
        %v4121 = vld [vmem:[#allocation10 + $0xc0] sm:$0xff]
        %v4122 = vld [vmem:[#allocation10 + $0xc8] sm:$0xff]
        %v4123 = vld [vmem:[#allocation10 + $0xd0] sm:$0xff]
        %v4124 = vld [vmem:[#allocation10 + $0xd8] sm:$0xff]
        %v4125 = vld [vmem:[#allocation10 + $0xe0] sm:$0xff]
        %v4126 = vld [vmem:[#allocation10 + $0xe8] sm:$0xff]
        %v4127 = vld [vmem:[#allocation10 + $0xf0] sm:$0xff]
        %v4128 = vld [vmem:[#allocation10 + $0xf8] sm:$0xff]
        %v4129 = vld [vmem:[#allocation10 + $0x100] sm:$0xff]
        %v4130 = vld [vmem:[#allocation10 + $0x108] sm:$0xff]
        %v4131 = vld [vmem:[#allocation10 + $0x110] sm:$0xff]
        %v4132 = vld [vmem:[#allocation10 + $0x118] sm:$0xff]
        %v4133 = vld [vmem:[#allocation10 + $0x120] sm:$0xff]
        %v4134 = vld [vmem:[#allocation10 + $0x128] sm:$0xff]
        %v4135 = vld [vmem:[#allocation10 + $0x130] sm:$0xff]
        %v4136 = vld [vmem:[#allocation10 + $0x138] sm:$0xff]
        %v4137 = vld [vmem:[#allocation10 + $0x140] sm:$0xff]
        %v4138 = vld [vmem:[#allocation10 + $0x148] sm:$0xff]
        %v4139 = vld [vmem:[#allocation10 + $0x150] sm:$0xff]
        %v4140 = vld [vmem:[#allocation10 + $0x158] sm:$0xff]
        %v4141 = vld [vmem:[#allocation10 + $0x160] sm:$0xff]
        %v4142 = vld [vmem:[#allocation10 + $0x168] sm:$0xff]
        %v4143 = vld [vmem:[#allocation10 + $0x170] sm:$0xff]
        %v4144 = vld [vmem:[#allocation10 + $0x178] sm:$0xff]
        %v4145 = vld [vmem:[#allocation12] sm:$0x7]
        %v4147 = vlaneseq
        %v4148 = vshrl.u32 %v4147, 7
        %v4149 = vsub.s32 0, %v4148
        %v4150 = vrot.slane %v4145, %v4149
        %v4151 = vlaneseq
        %v4152 = vshrl.u32 %v4151, 7
        %v4153 = vsub.s32 1, %v4152
        %v4154 = vrot.slane %v4145, %v4153
        %v4155 = vlaneseq
        %v4156 = vshrl.u32 %v4155, 7
        %v4157 = vsub.s32 2, %v4156
        %v4158 = vrot.slane %v4145, %v4157
        %4162 = vmatprep.subr.mxu0 %v4098
        %4163 = vmatpush1.msra.mxu0 %v4097
        %4164 = vmatprep.subr.mxu0 %v4101
        %4165 = vmatpush1.msra.mxu0 %v4100
        %4166 = vmatprep.subr.mxu0 %v4104
        %4167 = vmatpush1.msra.mxu0 %v4103
        %4168 = vmatprep.subr.mxu0 %v4107
        %4169 = vmatpush1.msra.mxu0 %v4106
        %4170 = vmatprep.subr.mxu0 %v4110
        %4171 = vmatpush1.msra.mxu0 %v4109
        %4172 = vmatprep.subr.mxu0 %v4113
        %4173 = vmatpush1.msra.mxu0 %v4112
        %4174 = vmatprep.subr.mxu0 %v4116
        %4175 = vmatpush1.msra.mxu0 %v4115
        %4176 = vmatprep.subr.mxu0 %v4119
        %4177 = vmatpush1.msra.mxu0 %v4118
        %4178 = vmatprep.subr.mxu0 %v4122
        %4179 = vmatpush1.msra.mxu0 %v4121
        %4180 = vmatprep.subr.mxu0 %v4125
        %4181 = vmatpush1.msra.mxu0 %v4124
        %4182 = vmatprep.subr.mxu0 %v4128
        %4183 = vmatpush1.msra.mxu0 %v4127
        %4184 = vmatprep.subr.mxu0 %v4131
        %4185 = vmatpush1.msra.mxu0 %v4130
        %4186 = vmatprep.subr.mxu0 %v4134
        %4187 = vmatpush1.msra.mxu0 %v4133
        %4188 = vmatprep.subr.mxu0 %v4137
        %4189 = vmatpush1.msra.mxu0 %v4136
        %4190 = vmatprep.subr.mxu0 %v4140
        %4191 = vmatpush1.msra.mxu0 %v4139
        %4192 = vmatprep.subr.mxu0 %v4143
        %4193 = vmatpush1.msra.mxu0 %v4142
        %4194 = vmatprep.subr.mxu0 0.0
        %4195 = vmatpush1.msra.mxu0 0.0
        %4196 = vmatprep.subr.mxu0 0.0
        %4197 = vmatpush1.msra.mxu0 0.0
        %4198 = vmatprep.subr.mxu0 0.0
        %4199 = vmatpush1.msra.mxu0 0.0
        %4200 = vmatprep.subr.mxu0 0.0
        %4201 = vmatpush1.msra.mxu0 0.0
        %4202 = vmatprep.subr.mxu0 0.0
        %4203 = vmatpush1.msra.mxu0 0.0
        %4204 = vmatprep.subr.mxu0 0.0
        %4205 = vmatpush1.msra.mxu0 0.0
        %4206 = vmatprep.subr.mxu0 0.0
        %4207 = vmatpush1.msra.mxu0 0.0
        %4208 = vmatprep.subr.mxu0 0.0
        %4209 = vmatpush1.msra.mxu0 0.0
        %4210 = vmatprep.subr.mxu0 0.0
        %4211 = vmatpush1.msra.mxu0 0.0
        %4212 = vmatprep.subr.mxu0 0.0
        %4213 = vmatpush1.msra.mxu0 0.0
        %4214 = vmatprep.subr.mxu0 0.0
        %4215 = vmatpush1.msra.mxu0 0.0
        %4216 = vmatprep.subr.mxu0 0.0
        %4217 = vmatpush1.msra.mxu0 0.0
        %4218 = vmatprep.subr.mxu0 0.0
        %4219 = vmatpush1.msra.mxu0 0.0
        %4220 = vmatprep.subr.mxu0 0.0
        %4221 = vmatpush1.msra.mxu0 0.0
        %4222 = vmatprep.subr.mxu0 0.0
        %4223 = vmatpush1.msra.mxu0 0.0
        %4224 = vmatprep.subr.mxu0 0.0
        %4225 = vmatpush1.msra.mxu0 0.0
        %4226 = vmatprep.mubr.f32.mxu0 0.0
        %4227 = vmatmul.mubr.f32.gmra.mrb[0].mxu0 %v4096
        %v4228 = vpop.f32.mrb[0].mxu0
        %v4229 = vadd.f32 %v4150, %v4228
        %v4230 = vpop.f32.mrb[0].mxu0
        %v4231 = vadd.f32 %v4154, %v4230
        %4232 = vdwg.mxu0
        %4233 = vmatprep.subr.mxu0 0.0
        %4234 = vmatpush1.msra.mxu0 %v4099
        %4235 = vmatprep.subr.mxu0 0.0
        %4236 = vmatpush1.msra.mxu0 %v4102
        %4237 = vmatprep.subr.mxu0 0.0
        %4238 = vmatpush1.msra.mxu0 %v4105
        %4239 = vmatprep.subr.mxu0 0.0
        %4240 = vmatpush1.msra.mxu0 %v4108
        %4241 = vmatprep.subr.mxu0 0.0
        %4242 = vmatpush1.msra.mxu0 %v4111
        %4243 = vmatprep.subr.mxu0 0.0
        %4244 = vmatpush1.msra.mxu0 %v4114
        %4245 = vmatprep.subr.mxu0 0.0
        %4246 = vmatpush1.msra.mxu0 %v4117
        %4247 = vmatprep.subr.mxu0 0.0
        %4248 = vmatpush1.msra.mxu0 %v4120
        %4249 = vmatprep.subr.mxu0 0.0
        %4250 = vmatpush1.msra.mxu0 %v4123
        %4251 = vmatprep.subr.mxu0 0.0
        %4252 = vmatpush1.msra.mxu0 %v4126
        %4253 = vmatprep.subr.mxu0 0.0
        %4254 = vmatpush1.msra.mxu0 %v4129
        %4255 = vmatprep.subr.mxu0 0.0
        %4256 = vmatpush1.msra.mxu0 %v4132
        %4257 = vmatprep.subr.mxu0 0.0
        %4258 = vmatpush1.msra.mxu0 %v4135
        %4259 = vmatprep.subr.mxu0 0.0
        %4260 = vmatpush1.msra.mxu0 %v4138
        %4261 = vmatprep.subr.mxu0 0.0
        %4262 = vmatpush1.msra.mxu0 %v4141
        %4263 = vmatprep.subr.mxu0 0.0
        %4264 = vmatpush1.msra.mxu0 %v4144
        %4265 = vmatprep.subr.mxu0 0.0
        %4266 = vmatpush1.msra.mxu0 0.0
        %4267 = vmatprep.subr.mxu0 0.0
        %4268 = vmatpush1.msra.mxu0 0.0
        %4269 = vmatprep.subr.mxu0 0.0
        %4270 = vmatpush1.msra.mxu0 0.0
        %4271 = vmatprep.subr.mxu0 0.0
        %4272 = vmatpush1.msra.mxu0 0.0
        %4273 = vmatprep.subr.mxu0 0.0
        %4274 = vmatpush1.msra.mxu0 0.0
        %4275 = vmatprep.subr.mxu0 0.0
        %4276 = vmatpush1.msra.mxu0 0.0
        %4277 = vmatprep.subr.mxu0 0.0
        %4278 = vmatpush1.msra.mxu0 0.0
        %4279 = vmatprep.subr.mxu0 0.0
        %4280 = vmatpush1.msra.mxu0 0.0
        %4281 = vmatprep.subr.mxu0 0.0
        %4282 = vmatpush1.msra.mxu0 0.0
        %4283 = vmatprep.subr.mxu0 0.0
        %4284 = vmatpush1.msra.mxu0 0.0
        %4285 = vmatprep.subr.mxu0 0.0
        %4286 = vmatpush1.msra.mxu0 0.0
        %4287 = vmatprep.subr.mxu0 0.0
        %4288 = vmatpush1.msra.mxu0 0.0
        %4289 = vmatprep.subr.mxu0 0.0
        %4290 = vmatpush1.msra.mxu0 0.0
        %4291 = vmatprep.subr.mxu0 0.0
        %4292 = vmatpush1.msra.mxu0 0.0
        %4293 = vmatprep.subr.mxu0 0.0
        %4294 = vmatpush1.msra.mxu0 0.0
        %4295 = vmatprep.subr.mxu0 0.0
        %4296 = vmatpush1.msra.mxu0 0.0
        %4297 = vmatprep.mubr.f32.mxu0 0.0
        %4298 = vmatmul.mubr.f32.gmra.mrb[0].mxu0 %v4096
        %v4299 = vpop.f32.mrb[0].mxu0
        %v4300 = vadd.f32 %v4158, %v4299
        %v4301 = vpop.f32.mrb[0].mxu0
        %4302 = vdwg.mxu0
        %v4303 = vld [vmem:[#allocation13] sm:$0xff]
        %v4304 = vld [vmem:[#allocation13 + $0x8] sm:$0xff]
        %v4305 = vld [vmem:[#allocation13 + $0x10] sm:$0xff]
        %v4306 = vld [vmem:[#allocation13 + $0x18] sm:$0xff]
        %v4307 = vld [vmem:[#allocation13 + $0x20] sm:$0xff]
        %v4308 = vld [vmem:[#allocation13 + $0x28] sm:$0xff]
        %v4309 = vld [vmem:[#allocation13 + $0x30] sm:$0xff]
        %v4310 = vld [vmem:[#allocation13 + $0x38] sm:$0xff]
        %v4311 = vld [vmem:[#allocation13 + $0x40] sm:$0xff]
        %v4312 = vld [vmem:[#allocation13 + $0x48] sm:$0xff]
        %v4313 = vld [vmem:[#allocation13 + $0x50] sm:$0xff]
        %v4314 = vld [vmem:[#allocation13 + $0x58] sm:$0xff]
        %v4315 = vld [vmem:[#allocation13 + $0x60] sm:$0xff]
        %v4316 = vld [vmem:[#allocation13 + $0x68] sm:$0xff]
        %v4317 = vld [vmem:[#allocation13 + $0x70] sm:$0xff]
        %v4318 = vld [vmem:[#allocation13 + $0x78] sm:$0xff]
        %v4319 = vld [vmem:[#allocation13 + $0x80] sm:$0xff]
        %v4320 = vld [vmem:[#allocation13 + $0x88] sm:$0xff]
        %v4321 = vld [vmem:[#allocation13 + $0x90] sm:$0xff]
        %v4322 = vld [vmem:[#allocation13 + $0x98] sm:$0xff]
        %v4323 = vld [vmem:[#allocation13 + $0xa0] sm:$0xff]
        %v4324 = vld [vmem:[#allocation13 + $0xa8] sm:$0xff]
        %v4325 = vld [vmem:[#allocation13 + $0xb0] sm:$0xff]
        %v4326 = vld [vmem:[#allocation13 + $0xb8] sm:$0xff]
        %v4327 = vld [vmem:[#allocation13 + $0xc0] sm:$0xff]
        %v4328 = vld [vmem:[#allocation13 + $0xc8] sm:$0xff]
        %v4329 = vld [vmem:[#allocation13 + $0xd0] sm:$0xff]
        %v4330 = vld [vmem:[#allocation13 + $0xd8] sm:$0xff]
        %v4331 = vld [vmem:[#allocation13 + $0xe0] sm:$0xff]
        %v4332 = vld [vmem:[#allocation13 + $0xe8] sm:$0xff]
        %v4333 = vld [vmem:[#allocation13 + $0xf0] sm:$0xff]
        %v4334 = vld [vmem:[#allocation13 + $0xf8] sm:$0xff]
        %v4335 = vld [vmem:[#allocation13 + $0x100] sm:$0xff]
        %v4336 = vld [vmem:[#allocation13 + $0x108] sm:$0xff]
        %v4337 = vld [vmem:[#allocation13 + $0x110] sm:$0xff]
        %v4338 = vld [vmem:[#allocation13 + $0x118] sm:$0xff]
        %v4339 = vld [vmem:[#allocation13 + $0x120] sm:$0xff]
        %v4340 = vld [vmem:[#allocation13 + $0x128] sm:$0xff]
        %v4341 = vld [vmem:[#allocation13 + $0x130] sm:$0xff]
        %v4342 = vld [vmem:[#allocation13 + $0x138] sm:$0xff]
        %v4343 = vld [vmem:[#allocation13 + $0x140] sm:$0xff]
        %v4344 = vld [vmem:[#allocation13 + $0x148] sm:$0xff]
        %v4345 = vld [vmem:[#allocation13 + $0x150] sm:$0xff]
        %v4346 = vld [vmem:[#allocation13 + $0x158] sm:$0xff]
        %v4347 = vld [vmem:[#allocation13 + $0x160] sm:$0xff]
        %v4348 = vld [vmem:[#allocation13 + $0x168] sm:$0xff]
        %v4349 = vld [vmem:[#allocation13 + $0x170] sm:$0xff]
        %v4350 = vld [vmem:[#allocation13 + $0x178] sm:$0xff]
        %v4351 = vld [vmem:[#allocation15] sm:$0x7]
        %v4353 = vlaneseq
        %v4354 = vshrl.u32 %v4353, 7
        %v4355 = vsub.s32 0, %v4354
        %v4356 = vrot.slane %v4351, %v4355
        %v4357 = vlaneseq
        %v4358 = vshrl.u32 %v4357, 7
        %v4359 = vsub.s32 1, %v4358
        %v4360 = vrot.slane %v4351, %v4359
        %v4361 = vlaneseq
        %v4362 = vshrl.u32 %v4361, 7
        %v4363 = vsub.s32 2, %v4362
        %v4364 = vrot.slane %v4351, %v4363
        %4368 = vmatprep.subr.mxu0 %v4304
        %4369 = vmatpush1.msra.mxu0 %v4303
        %4370 = vmatprep.subr.mxu0 %v4307
        %4371 = vmatpush1.msra.mxu0 %v4306
        %4372 = vmatprep.subr.mxu0 %v4310
        %4373 = vmatpush1.msra.mxu0 %v4309
        %4374 = vmatprep.subr.mxu0 %v4313
        %4375 = vmatpush1.msra.mxu0 %v4312
        %4376 = vmatprep.subr.mxu0 %v4316
        %4377 = vmatpush1.msra.mxu0 %v4315
        %4378 = vmatprep.subr.mxu0 %v4319
        %4379 = vmatpush1.msra.mxu0 %v4318
        %4380 = vmatprep.subr.mxu0 %v4322
        %4381 = vmatpush1.msra.mxu0 %v4321
        %4382 = vmatprep.subr.mxu0 %v4325
        %4383 = vmatpush1.msra.mxu0 %v4324
        %4384 = vmatprep.subr.mxu0 %v4328
        %4385 = vmatpush1.msra.mxu0 %v4327
        %4386 = vmatprep.subr.mxu0 %v4331
        %4387 = vmatpush1.msra.mxu0 %v4330
        %4388 = vmatprep.subr.mxu0 %v4334
        %4389 = vmatpush1.msra.mxu0 %v4333
        %4390 = vmatprep.subr.mxu0 %v4337
        %4391 = vmatpush1.msra.mxu0 %v4336
        %4392 = vmatprep.subr.mxu0 %v4340
        %4393 = vmatpush1.msra.mxu0 %v4339
        %4394 = vmatprep.subr.mxu0 %v4343
        %4395 = vmatpush1.msra.mxu0 %v4342
        %4396 = vmatprep.subr.mxu0 %v4346
        %4397 = vmatpush1.msra.mxu0 %v4345
        %4398 = vmatprep.subr.mxu0 %v4349
        %4399 = vmatpush1.msra.mxu0 %v4348
        %4400 = vmatprep.subr.mxu0 0.0
        %4401 = vmatpush1.msra.mxu0 0.0
        %4402 = vmatprep.subr.mxu0 0.0
        %4403 = vmatpush1.msra.mxu0 0.0
        %4404 = vmatprep.subr.mxu0 0.0
        %4405 = vmatpush1.msra.mxu0 0.0
        %4406 = vmatprep.subr.mxu0 0.0
        %4407 = vmatpush1.msra.mxu0 0.0
        %4408 = vmatprep.subr.mxu0 0.0
        %4409 = vmatpush1.msra.mxu0 0.0
        %4410 = vmatprep.subr.mxu0 0.0
        %4411 = vmatpush1.msra.mxu0 0.0
        %4412 = vmatprep.subr.mxu0 0.0
        %4413 = vmatpush1.msra.mxu0 0.0
        %4414 = vmatprep.subr.mxu0 0.0
        %4415 = vmatpush1.msra.mxu0 0.0
        %4416 = vmatprep.subr.mxu0 0.0
        %4417 = vmatpush1.msra.mxu0 0.0
        %4418 = vmatprep.subr.mxu0 0.0
        %4419 = vmatpush1.msra.mxu0 0.0
        %4420 = vmatprep.subr.mxu0 0.0
        %4421 = vmatpush1.msra.mxu0 0.0
        %4422 = vmatprep.subr.mxu0 0.0
        %4423 = vmatpush1.msra.mxu0 0.0
        %4424 = vmatprep.subr.mxu0 0.0
        %4425 = vmatpush1.msra.mxu0 0.0
        %4426 = vmatprep.subr.mxu0 0.0
        %4427 = vmatpush1.msra.mxu0 0.0
        %4428 = vmatprep.subr.mxu0 0.0
        %4429 = vmatpush1.msra.mxu0 0.0
        %4430 = vmatprep.subr.mxu0 0.0
        %4431 = vmatpush1.msra.mxu0 0.0
        %4432 = vmatprep.mubr.f32.mxu0 0.0
        %4433 = vmatmul.mubr.f32.gmra.mrb[0].mxu0 %v3860
        %v4434 = vpop.f32.mrb[0].mxu0
        %v4435 = vadd.f32 %v4356, %v4434
        %v4436 = vpop.f32.mrb[0].mxu0
        %v4437 = vadd.f32 %v4360, %v4436
        %4438 = vdwg.mxu0
        %4439 = vmatprep.subr.mxu0 0.0
        %4440 = vmatpush1.msra.mxu0 %v4305
        %4441 = vmatprep.subr.mxu0 0.0
        %4442 = vmatpush1.msra.mxu0 %v4308
        %4443 = vmatprep.subr.mxu0 0.0
        %4444 = vmatpush1.msra.mxu0 %v4311
        %4445 = vmatprep.subr.mxu0 0.0
        %4446 = vmatpush1.msra.mxu0 %v4314
        %4447 = vmatprep.subr.mxu0 0.0
        %4448 = vmatpush1.msra.mxu0 %v4317
        %4449 = vmatprep.subr.mxu0 0.0
        %4450 = vmatpush1.msra.mxu0 %v4320
        %4451 = vmatprep.subr.mxu0 0.0
        %4452 = vmatpush1.msra.mxu0 %v4323
        %4453 = vmatprep.subr.mxu0 0.0
        %4454 = vmatpush1.msra.mxu0 %v4326
        %4455 = vmatprep.subr.mxu0 0.0
        %4456 = vmatpush1.msra.mxu0 %v4329
        %4457 = vmatprep.subr.mxu0 0.0
        %4458 = vmatpush1.msra.mxu0 %v4332
        %4459 = vmatprep.subr.mxu0 0.0
        %4460 = vmatpush1.msra.mxu0 %v4335
        %4461 = vmatprep.subr.mxu0 0.0
        %4462 = vmatpush1.msra.mxu0 %v4338
        %4463 = vmatprep.subr.mxu0 0.0
        %4464 = vmatpush1.msra.mxu0 %v4341
        %4465 = vmatprep.subr.mxu0 0.0
        %4466 = vmatpush1.msra.mxu0 %v4344
        %4467 = vmatprep.subr.mxu0 0.0
        %4468 = vmatpush1.msra.mxu0 %v4347
        %4469 = vmatprep.subr.mxu0 0.0
        %4470 = vmatpush1.msra.mxu0 %v4350
        %4471 = vmatprep.subr.mxu0 0.0
        %4472 = vmatpush1.msra.mxu0 0.0
        %4473 = vmatprep.subr.mxu0 0.0
        %4474 = vmatpush1.msra.mxu0 0.0
        %4475 = vmatprep.subr.mxu0 0.0
        %4476 = vmatpush1.msra.mxu0 0.0
        %4477 = vmatprep.subr.mxu0 0.0
        %4478 = vmatpush1.msra.mxu0 0.0
        %4479 = vmatprep.subr.mxu0 0.0
        %4480 = vmatpush1.msra.mxu0 0.0
        %4481 = vmatprep.subr.mxu0 0.0
        %4482 = vmatpush1.msra.mxu0 0.0
        %4483 = vmatprep.subr.mxu0 0.0
        %4484 = vmatpush1.msra.mxu0 0.0
        %4485 = vmatprep.subr.mxu0 0.0
        %4486 = vmatpush1.msra.mxu0 0.0
        %4487 = vmatprep.subr.mxu0 0.0
        %4488 = vmatpush1.msra.mxu0 0.0
        %4489 = vmatprep.subr.mxu0 0.0
        %4490 = vmatpush1.msra.mxu0 0.0
        %4491 = vmatprep.subr.mxu0 0.0
        %4492 = vmatpush1.msra.mxu0 0.0
        %4493 = vmatprep.subr.mxu0 0.0
        %4494 = vmatpush1.msra.mxu0 0.0
        %4495 = vmatprep.subr.mxu0 0.0
        %4496 = vmatpush1.msra.mxu0 0.0
        %4497 = vmatprep.subr.mxu0 0.0
        %4498 = vmatpush1.msra.mxu0 0.0
        %4499 = vmatprep.subr.mxu0 0.0
        %4500 = vmatpush1.msra.mxu0 0.0
        %4501 = vmatprep.subr.mxu0 0.0
        %4502 = vmatpush1.msra.mxu0 0.0
        %4503 = vmatprep.mubr.f32.mxu0 0.0
        %4504 = vmatmul.mubr.f32.gmra.mrb[0].mxu0 %v3860
        %v4505 = vpop.f32.mrb[0].mxu0
        %v4506 = vadd.f32 %v4364, %v4505
        %v4507 = vpop.f32.mrb[0].mxu0
        %4508 = vdwg.mxu0
        %v4509 = vadd.f32 %v4229, %v4435
        %v4510 = vxor.u32 %v4509, 2147483648
        %v4511 = vmul.f32 %v4510, 1.442695
        %v4512 = vpow.pop %v4511
        %v4513 = vadd.f32 %v4512, 1.0
        %v4514 = vrcp.pop %v4513
        %v4515 = vmul.f32 1.0, %v4514
        %v4516 = vadd.f32 %v4231, %v4437
        %v4517 = vxor.u32 %v4516, 2147483648
        %v4518 = vmul.f32 %v4517, 1.442695
        %v4519 = vpow.pop %v4518
        %v4520 = vadd.f32 %v4519, 1.0
        %v4521 = vrcp.pop %v4520
        %v4522 = vmul.f32 1.0, %v4521
        %v4523 = vmul.f32 %v4515, %v4506
        %v4524 = vadd.f32 %v4300, %v4523
        %v4525 = vtanh.pop %v4524
        %v4526 = vsub.f32 1.0, %v4522
        %v4527 = vmul.f32 %v4526, %v4525
        %v4528 = vmul.f32 %v4522, %v3860
        %v4529 = vadd.f32 %v4527, %v4528
        %s4530 = scalar_lea.vmem %s503, 10 [#allocation19]
        %4531 = vst [vmem:[%s4530] sm:$0x3] %v4529
        %s4532 = scalar_lea.vmem %s437, 36 [#allocation4]
        %v4533 = vld [vmem:[%s4532] sm:$0x3f]
        %v4534 = vld [vmem:[#allocation7] sm:$0xff]
        %v4535 = vld [vmem:[#allocation7 + $0x8] sm:$0xff]
        %v4536 = vld [vmem:[#allocation7 + $0x10] sm:$0xff]
        %v4537 = vld [vmem:[#allocation7 + $0x18] sm:$0xff]
        %v4538 = vld [vmem:[#allocation7 + $0x20] sm:$0xff]
        %v4539 = vld [vmem:[#allocation7 + $0x28] sm:$0xff]
        %v4540 = vld [vmem:[#allocation7 + $0x30] sm:$0xff]
        %v4541 = vld [vmem:[#allocation7 + $0x38] sm:$0xff]
        %v4542 = vld [vmem:[#allocation7 + $0x40] sm:$0xff]
        %v4543 = vld [vmem:[#allocation7 + $0x48] sm:$0xff]
        %v4544 = vld [vmem:[#allocation7 + $0x50] sm:$0xff]
        %v4545 = vld [vmem:[#allocation7 + $0x58] sm:$0xff]
        %v4546 = vld [vmem:[#allocation7 + $0x60] sm:$0xff]
        %v4547 = vld [vmem:[#allocation7 + $0x68] sm:$0xff]
        %v4548 = vld [vmem:[#allocation7 + $0x70] sm:$0xff]
        %v4549 = vld [vmem:[#allocation7 + $0x78] sm:$0xff]
        %v4550 = vld [vmem:[#allocation7 + $0x80] sm:$0xff]
        %v4551 = vld [vmem:[#allocation7 + $0x88] sm:$0xff]
        %v4552 = vld [vmem:[#allocation7 + $0x90] sm:$0xff]
        %v4553 = vld [vmem:[#allocation7 + $0x98] sm:$0xff]
        %v4554 = vld [vmem:[#allocation7 + $0xa0] sm:$0xff]
        %v4555 = vld [vmem:[#allocation7 + $0xa8] sm:$0xff]
        %v4556 = vld [vmem:[#allocation7 + $0xb0] sm:$0xff]
        %v4557 = vld [vmem:[#allocation7 + $0xb8] sm:$0xff]
        %v4558 = vld [vmem:[#allocation7 + $0xc0] sm:$0xff]
        %v4559 = vld [vmem:[#allocation7 + $0xc8] sm:$0xff]
        %v4560 = vld [vmem:[#allocation7 + $0xd0] sm:$0xff]
        %v4561 = vld [vmem:[#allocation7 + $0xd8] sm:$0xff]
        %v4562 = vld [vmem:[#allocation7 + $0xe0] sm:$0xff]
        %v4563 = vld [vmem:[#allocation7 + $0xe8] sm:$0xff]
        %v4564 = vld [vmem:[#allocation7 + $0xf0] sm:$0xff]
        %v4565 = vld [vmem:[#allocation7 + $0xf8] sm:$0xff]
        %v4566 = vld [vmem:[#allocation7 + $0x100] sm:$0xff]
        %v4567 = vld [vmem:[#allocation7 + $0x108] sm:$0xff]
        %v4568 = vld [vmem:[#allocation7 + $0x110] sm:$0xff]
        %v4569 = vld [vmem:[#allocation7 + $0x118] sm:$0xff]
        %v4570 = vld [vmem:[#allocation7 + $0x120] sm:$0xff]
        %v4571 = vld [vmem:[#allocation7 + $0x128] sm:$0xff]
        %v4572 = vld [vmem:[#allocation7 + $0x130] sm:$0xff]
        %v4573 = vld [vmem:[#allocation7 + $0x138] sm:$0xff]
        %v4574 = vld [vmem:[#allocation7 + $0x140] sm:$0xff]
        %v4575 = vld [vmem:[#allocation7 + $0x148] sm:$0xff]
        %v4576 = vld [vmem:[#allocation7 + $0x150] sm:$0xff]
        %v4577 = vld [vmem:[#allocation7 + $0x158] sm:$0xff]
        %v4578 = vld [vmem:[#allocation7 + $0x160] sm:$0xff]
        %v4579 = vld [vmem:[#allocation7 + $0x168] sm:$0xff]
        %v4580 = vld [vmem:[#allocation7 + $0x170] sm:$0xff]
        %v4581 = vld [vmem:[#allocation7 + $0x178] sm:$0xff]
        %v4582 = vld [vmem:[#allocation9] sm:$0x7]
        %v4584 = vlaneseq
        %v4585 = vshrl.u32 %v4584, 7
        %v4586 = vsub.s32 0, %v4585
        %v4587 = vrot.slane %v4582, %v4586
        %v4588 = vlaneseq
        %v4589 = vshrl.u32 %v4588, 7
        %v4590 = vsub.s32 1, %v4589
        %v4591 = vrot.slane %v4582, %v4590
        %v4592 = vlaneseq
        %v4593 = vshrl.u32 %v4592, 7
        %v4594 = vsub.s32 2, %v4593
        %v4595 = vrot.slane %v4582, %v4594
        %4599 = vmatprep.subr.mxu0 %v4535
        %4600 = vmatpush1.msra.mxu0 %v4534
        %4601 = vmatprep.subr.mxu0 %v4538
        %4602 = vmatpush1.msra.mxu0 %v4537
        %4603 = vmatprep.subr.mxu0 %v4541
        %4604 = vmatpush1.msra.mxu0 %v4540
        %4605 = vmatprep.subr.mxu0 %v4544
        %4606 = vmatpush1.msra.mxu0 %v4543
        %4607 = vmatprep.subr.mxu0 %v4547
        %4608 = vmatpush1.msra.mxu0 %v4546
        %4609 = vmatprep.subr.mxu0 %v4550
        %4610 = vmatpush1.msra.mxu0 %v4549
        %4611 = vmatprep.subr.mxu0 %v4553
        %4612 = vmatpush1.msra.mxu0 %v4552
        %4613 = vmatprep.subr.mxu0 %v4556
        %4614 = vmatpush1.msra.mxu0 %v4555
        %4615 = vmatprep.subr.mxu0 %v4559
        %4616 = vmatpush1.msra.mxu0 %v4558
        %4617 = vmatprep.subr.mxu0 %v4562
        %4618 = vmatpush1.msra.mxu0 %v4561
        %4619 = vmatprep.subr.mxu0 %v4565
        %4620 = vmatpush1.msra.mxu0 %v4564
        %4621 = vmatprep.subr.mxu0 %v4568
        %4622 = vmatpush1.msra.mxu0 %v4567
        %4623 = vmatprep.subr.mxu0 %v4571
        %4624 = vmatpush1.msra.mxu0 %v4570
        %4625 = vmatprep.subr.mxu0 %v4574
        %4626 = vmatpush1.msra.mxu0 %v4573
        %4627 = vmatprep.subr.mxu0 %v4577
        %4628 = vmatpush1.msra.mxu0 %v4576
        %4629 = vmatprep.subr.mxu0 %v4580
        %4630 = vmatpush1.msra.mxu0 %v4579
        %4631 = vmatprep.subr.mxu0 0.0
        %4632 = vmatpush1.msra.mxu0 0.0
        %4633 = vmatprep.subr.mxu0 0.0
        %4634 = vmatpush1.msra.mxu0 0.0
        %4635 = vmatprep.subr.mxu0 0.0
        %4636 = vmatpush1.msra.mxu0 0.0
        %4637 = vmatprep.subr.mxu0 0.0
        %4638 = vmatpush1.msra.mxu0 0.0
        %4639 = vmatprep.subr.mxu0 0.0
        %4640 = vmatpush1.msra.mxu0 0.0
        %4641 = vmatprep.subr.mxu0 0.0
        %4642 = vmatpush1.msra.mxu0 0.0
        %4643 = vmatprep.subr.mxu0 0.0
        %4644 = vmatpush1.msra.mxu0 0.0
        %4645 = vmatprep.subr.mxu0 0.0
        %4646 = vmatpush1.msra.mxu0 0.0
        %4647 = vmatprep.subr.mxu0 0.0
        %4648 = vmatpush1.msra.mxu0 0.0
        %4649 = vmatprep.subr.mxu0 0.0
        %4650 = vmatpush1.msra.mxu0 0.0
        %4651 = vmatprep.subr.mxu0 0.0
        %4652 = vmatpush1.msra.mxu0 0.0
        %4653 = vmatprep.subr.mxu0 0.0
        %4654 = vmatpush1.msra.mxu0 0.0
        %4655 = vmatprep.subr.mxu0 0.0
        %4656 = vmatpush1.msra.mxu0 0.0
        %4657 = vmatprep.subr.mxu0 0.0
        %4658 = vmatpush1.msra.mxu0 0.0
        %4659 = vmatprep.subr.mxu0 0.0
        %4660 = vmatpush1.msra.mxu0 0.0
        %4661 = vmatprep.subr.mxu0 0.0
        %4662 = vmatpush1.msra.mxu0 0.0
        %4663 = vmatprep.mubr.f32.mxu0 0.0
        %4664 = vmatmul.mubr.f32.gmra.mrb[0].mxu0 %v4096
        %v4665 = vpop.f32.mrb[0].mxu0
        %v4666 = vadd.f32 %v4587, %v4665
        %v4667 = vpop.f32.mrb[0].mxu0
        %v4668 = vadd.f32 %v4591, %v4667
        %4669 = vdwg.mxu0
        %4670 = vmatprep.subr.mxu0 0.0
        %4671 = vmatpush1.msra.mxu0 %v4536
        %4672 = vmatprep.subr.mxu0 0.0
        %4673 = vmatpush1.msra.mxu0 %v4539
        %4674 = vmatprep.subr.mxu0 0.0
        %4675 = vmatpush1.msra.mxu0 %v4542
        %4676 = vmatprep.subr.mxu0 0.0
        %4677 = vmatpush1.msra.mxu0 %v4545
        %4678 = vmatprep.subr.mxu0 0.0
        %4679 = vmatpush1.msra.mxu0 %v4548
        %4680 = vmatprep.subr.mxu0 0.0
        %4681 = vmatpush1.msra.mxu0 %v4551
        %4682 = vmatprep.subr.mxu0 0.0
        %4683 = vmatpush1.msra.mxu0 %v4554
        %4684 = vmatprep.subr.mxu0 0.0
        %4685 = vmatpush1.msra.mxu0 %v4557
        %4686 = vmatprep.subr.mxu0 0.0
        %4687 = vmatpush1.msra.mxu0 %v4560
        %4688 = vmatprep.subr.mxu0 0.0
        %4689 = vmatpush1.msra.mxu0 %v4563
        %4690 = vmatprep.subr.mxu0 0.0
        %4691 = vmatpush1.msra.mxu0 %v4566
        %4692 = vmatprep.subr.mxu0 0.0
        %4693 = vmatpush1.msra.mxu0 %v4569
        %4694 = vmatprep.subr.mxu0 0.0
        %4695 = vmatpush1.msra.mxu0 %v4572
        %4696 = vmatprep.subr.mxu0 0.0
        %4697 = vmatpush1.msra.mxu0 %v4575
        %4698 = vmatprep.subr.mxu0 0.0
        %4699 = vmatpush1.msra.mxu0 %v4578
        %4700 = vmatprep.subr.mxu0 0.0
        %4701 = vmatpush1.msra.mxu0 %v4581
        %4702 = vmatprep.subr.mxu0 0.0
        %4703 = vmatpush1.msra.mxu0 0.0
        %4704 = vmatprep.subr.mxu0 0.0
        %4705 = vmatpush1.msra.mxu0 0.0
        %4706 = vmatprep.subr.mxu0 0.0
        %4707 = vmatpush1.msra.mxu0 0.0
        %4708 = vmatprep.subr.mxu0 0.0
        %4709 = vmatpush1.msra.mxu0 0.0
        %4710 = vmatprep.subr.mxu0 0.0
        %4711 = vmatpush1.msra.mxu0 0.0
        %4712 = vmatprep.subr.mxu0 0.0
        %4713 = vmatpush1.msra.mxu0 0.0
        %4714 = vmatprep.subr.mxu0 0.0
        %4715 = vmatpush1.msra.mxu0 0.0
        %4716 = vmatprep.subr.mxu0 0.0
        %4717 = vmatpush1.msra.mxu0 0.0
        %4718 = vmatprep.subr.mxu0 0.0
        %4719 = vmatpush1.msra.mxu0 0.0
        %4720 = vmatprep.subr.mxu0 0.0
        %4721 = vmatpush1.msra.mxu0 0.0
        %4722 = vmatprep.subr.mxu0 0.0
        %4723 = vmatpush1.msra.mxu0 0.0
        %4724 = vmatprep.subr.mxu0 0.0
        %4725 = vmatpush1.msra.mxu0 0.0
        %4726 = vmatprep.subr.mxu0 0.0
        %4727 = vmatpush1.msra.mxu0 0.0
        %4728 = vmatprep.subr.mxu0 0.0
        %4729 = vmatpush1.msra.mxu0 0.0
        %4730 = vmatprep.subr.mxu0 0.0
        %4731 = vmatpush1.msra.mxu0 0.0
        %4732 = vmatprep.subr.mxu0 0.0
        %4733 = vmatpush1.msra.mxu0 0.0
        %4734 = vmatprep.mubr.f32.mxu0 0.0
        %4735 = vmatmul.mubr.f32.gmra.mrb[0].mxu0 %v4096
        %v4736 = vpop.f32.mrb[0].mxu0
        %v4737 = vadd.f32 %v4595, %v4736
        %v4738 = vpop.f32.mrb[0].mxu0
        %4739 = vdwg.mxu0
        %v4740 = vadd.f32 %v4533, %v4666
        %v4741 = vxor.u32 %v4740, 2147483648
        %v4742 = vmul.f32 %v4741, 1.442695
        %v4743 = vpow.pop %v4742
        %v4744 = vadd.f32 %v4743, 1.0
        %v4745 = vrcp.pop %v4744
        %v4746 = vmul.f32 1.0, %v4745
        %v4748 = vrot.slane %v4533, 2
        %v4750 = vadd.f32 %v4748, %v4668
        %v4751 = vxor.u32 %v4750, 2147483648
        %v4752 = vmul.f32 %v4751, 1.442695
        %v4753 = vpow.pop %v4752
        %v4754 = vadd.f32 %v4753, 1.0
        %v4755 = vrcp.pop %v4754
        %v4756 = vmul.f32 1.0, %v4755
        %v4757 = vmul.f32 %v4746, %v4737
        %v4758 = vrot.slane %v4533, 4
        %v4760 = vadd.f32 %v4758, %v4757
        %v4761 = vtanh.pop %v4760
        %v4762 = vsub.f32 1.0, %v4756
        %v4763 = vmul.f32 %v4762, %v4761
        %v4764 = vmul.f32 %v4756, %v4096
        %v4765 = vadd.f32 %v4763, %v4764
        %v4766 = vld [vmem:[#allocation10] sm:$0xff]
        %v4767 = vld [vmem:[#allocation10 + $0x8] sm:$0xff]
        %v4768 = vld [vmem:[#allocation10 + $0x10] sm:$0xff]
        %v4769 = vld [vmem:[#allocation10 + $0x18] sm:$0xff]
        %v4770 = vld [vmem:[#allocation10 + $0x20] sm:$0xff]
        %v4771 = vld [vmem:[#allocation10 + $0x28] sm:$0xff]
        %v4772 = vld [vmem:[#allocation10 + $0x30] sm:$0xff]
        %v4773 = vld [vmem:[#allocation10 + $0x38] sm:$0xff]
        %v4774 = vld [vmem:[#allocation10 + $0x40] sm:$0xff]
        %v4775 = vld [vmem:[#allocation10 + $0x48] sm:$0xff]
        %v4776 = vld [vmem:[#allocation10 + $0x50] sm:$0xff]
        %v4777 = vld [vmem:[#allocation10 + $0x58] sm:$0xff]
        %v4778 = vld [vmem:[#allocation10 + $0x60] sm:$0xff]
        %v4779 = vld [vmem:[#allocation10 + $0x68] sm:$0xff]
        %v4780 = vld [vmem:[#allocation10 + $0x70] sm:$0xff]
        %v4781 = vld [vmem:[#allocation10 + $0x78] sm:$0xff]
        %v4782 = vld [vmem:[#allocation10 + $0x80] sm:$0xff]
        %v4783 = vld [vmem:[#allocation10 + $0x88] sm:$0xff]
        %v4784 = vld [vmem:[#allocation10 + $0x90] sm:$0xff]
        %v4785 = vld [vmem:[#allocation10 + $0x98] sm:$0xff]
        %v4786 = vld [vmem:[#allocation10 + $0xa0] sm:$0xff]
        %v4787 = vld [vmem:[#allocation10 + $0xa8] sm:$0xff]
        %v4788 = vld [vmem:[#allocation10 + $0xb0] sm:$0xff]
        %v4789 = vld [vmem:[#allocation10 + $0xb8] sm:$0xff]
        %v4790 = vld [vmem:[#allocation10 + $0xc0] sm:$0xff]
        %v4791 = vld [vmem:[#allocation10 + $0xc8] sm:$0xff]
        %v4792 = vld [vmem:[#allocation10 + $0xd0] sm:$0xff]
        %v4793 = vld [vmem:[#allocation10 + $0xd8] sm:$0xff]
        %v4794 = vld [vmem:[#allocation10 + $0xe0] sm:$0xff]
        %v4795 = vld [vmem:[#allocation10 + $0xe8] sm:$0xff]
        %v4796 = vld [vmem:[#allocation10 + $0xf0] sm:$0xff]
        %v4797 = vld [vmem:[#allocation10 + $0xf8] sm:$0xff]
        %v4798 = vld [vmem:[#allocation10 + $0x100] sm:$0xff]
        %v4799 = vld [vmem:[#allocation10 + $0x108] sm:$0xff]
        %v4800 = vld [vmem:[#allocation10 + $0x110] sm:$0xff]
        %v4801 = vld [vmem:[#allocation10 + $0x118] sm:$0xff]
        %v4802 = vld [vmem:[#allocation10 + $0x120] sm:$0xff]
        %v4803 = vld [vmem:[#allocation10 + $0x128] sm:$0xff]
        %v4804 = vld [vmem:[#allocation10 + $0x130] sm:$0xff]
        %v4805 = vld [vmem:[#allocation10 + $0x138] sm:$0xff]
        %v4806 = vld [vmem:[#allocation10 + $0x140] sm:$0xff]
        %v4807 = vld [vmem:[#allocation10 + $0x148] sm:$0xff]
        %v4808 = vld [vmem:[#allocation10 + $0x150] sm:$0xff]
        %v4809 = vld [vmem:[#allocation10 + $0x158] sm:$0xff]
        %v4810 = vld [vmem:[#allocation10 + $0x160] sm:$0xff]
        %v4811 = vld [vmem:[#allocation10 + $0x168] sm:$0xff]
        %v4812 = vld [vmem:[#allocation10 + $0x170] sm:$0xff]
        %v4813 = vld [vmem:[#allocation10 + $0x178] sm:$0xff]
        %v4814 = vld [vmem:[#allocation12] sm:$0x7]
        %v4816 = vlaneseq
        %v4817 = vshrl.u32 %v4816, 7
        %v4818 = vsub.s32 0, %v4817
        %v4819 = vrot.slane %v4814, %v4818
        %v4820 = vlaneseq
        %v4821 = vshrl.u32 %v4820, 7
        %v4822 = vsub.s32 1, %v4821
        %v4823 = vrot.slane %v4814, %v4822
        %v4824 = vlaneseq
        %v4825 = vshrl.u32 %v4824, 7
        %v4826 = vsub.s32 2, %v4825
        %v4827 = vrot.slane %v4814, %v4826
        %4831 = vmatprep.subr.mxu0 %v4767
        %4832 = vmatpush1.msra.mxu0 %v4766
        %4833 = vmatprep.subr.mxu0 %v4770
        %4834 = vmatpush1.msra.mxu0 %v4769
        %4835 = vmatprep.subr.mxu0 %v4773
        %4836 = vmatpush1.msra.mxu0 %v4772
        %4837 = vmatprep.subr.mxu0 %v4776
        %4838 = vmatpush1.msra.mxu0 %v4775
        %4839 = vmatprep.subr.mxu0 %v4779
        %4840 = vmatpush1.msra.mxu0 %v4778
        %4841 = vmatprep.subr.mxu0 %v4782
        %4842 = vmatpush1.msra.mxu0 %v4781
        %4843 = vmatprep.subr.mxu0 %v4785
        %4844 = vmatpush1.msra.mxu0 %v4784
        %4845 = vmatprep.subr.mxu0 %v4788
        %4846 = vmatpush1.msra.mxu0 %v4787
        %4847 = vmatprep.subr.mxu0 %v4791
        %4848 = vmatpush1.msra.mxu0 %v4790
        %4849 = vmatprep.subr.mxu0 %v4794
        %4850 = vmatpush1.msra.mxu0 %v4793
        %4851 = vmatprep.subr.mxu0 %v4797
        %4852 = vmatpush1.msra.mxu0 %v4796
        %4853 = vmatprep.subr.mxu0 %v4800
        %4854 = vmatpush1.msra.mxu0 %v4799
        %4855 = vmatprep.subr.mxu0 %v4803
        %4856 = vmatpush1.msra.mxu0 %v4802
        %4857 = vmatprep.subr.mxu0 %v4806
        %4858 = vmatpush1.msra.mxu0 %v4805
        %4859 = vmatprep.subr.mxu0 %v4809
        %4860 = vmatpush1.msra.mxu0 %v4808
        %4861 = vmatprep.subr.mxu0 %v4812
        %4862 = vmatpush1.msra.mxu0 %v4811
        %4863 = vmatprep.subr.mxu0 0.0
        %4864 = vmatpush1.msra.mxu0 0.0
        %4865 = vmatprep.subr.mxu0 0.0
        %4866 = vmatpush1.msra.mxu0 0.0
        %4867 = vmatprep.subr.mxu0 0.0
        %4868 = vmatpush1.msra.mxu0 0.0
        %4869 = vmatprep.subr.mxu0 0.0
        %4870 = vmatpush1.msra.mxu0 0.0
        %4871 = vmatprep.subr.mxu0 0.0
        %4872 = vmatpush1.msra.mxu0 0.0
        %4873 = vmatprep.subr.mxu0 0.0
        %4874 = vmatpush1.msra.mxu0 0.0
        %4875 = vmatprep.subr.mxu0 0.0
        %4876 = vmatpush1.msra.mxu0 0.0
        %4877 = vmatprep.subr.mxu0 0.0
        %4878 = vmatpush1.msra.mxu0 0.0
        %4879 = vmatprep.subr.mxu0 0.0
        %4880 = vmatpush1.msra.mxu0 0.0
        %4881 = vmatprep.subr.mxu0 0.0
        %4882 = vmatpush1.msra.mxu0 0.0
        %4883 = vmatprep.subr.mxu0 0.0
        %4884 = vmatpush1.msra.mxu0 0.0
        %4885 = vmatprep.subr.mxu0 0.0
        %4886 = vmatpush1.msra.mxu0 0.0
        %4887 = vmatprep.subr.mxu0 0.0
        %4888 = vmatpush1.msra.mxu0 0.0
        %4889 = vmatprep.subr.mxu0 0.0
        %4890 = vmatpush1.msra.mxu0 0.0
        %4891 = vmatprep.subr.mxu0 0.0
        %4892 = vmatpush1.msra.mxu0 0.0
        %4893 = vmatprep.subr.mxu0 0.0
        %4894 = vmatpush1.msra.mxu0 0.0
        %4895 = vmatprep.mubr.f32.mxu0 0.0
        %4896 = vmatmul.mubr.f32.gmra.mrb[0].mxu0 %v4765
        %v4897 = vpop.f32.mrb[0].mxu0
        %v4898 = vadd.f32 %v4819, %v4897
        %v4899 = vpop.f32.mrb[0].mxu0
        %v4900 = vadd.f32 %v4823, %v4899
        %4901 = vdwg.mxu0
        %4902 = vmatprep.subr.mxu0 0.0
        %4903 = vmatpush1.msra.mxu0 %v4768
        %4904 = vmatprep.subr.mxu0 0.0
        %4905 = vmatpush1.msra.mxu0 %v4771
        %4906 = vmatprep.subr.mxu0 0.0
        %4907 = vmatpush1.msra.mxu0 %v4774
        %4908 = vmatprep.subr.mxu0 0.0
        %4909 = vmatpush1.msra.mxu0 %v4777
        %4910 = vmatprep.subr.mxu0 0.0
        %4911 = vmatpush1.msra.mxu0 %v4780
        %4912 = vmatprep.subr.mxu0 0.0
        %4913 = vmatpush1.msra.mxu0 %v4783
        %4914 = vmatprep.subr.mxu0 0.0
        %4915 = vmatpush1.msra.mxu0 %v4786
        %4916 = vmatprep.subr.mxu0 0.0
        %4917 = vmatpush1.msra.mxu0 %v4789
        %4918 = vmatprep.subr.mxu0 0.0
        %4919 = vmatpush1.msra.mxu0 %v4792
        %4920 = vmatprep.subr.mxu0 0.0
        %4921 = vmatpush1.msra.mxu0 %v4795
        %4922 = vmatprep.subr.mxu0 0.0
        %4923 = vmatpush1.msra.mxu0 %v4798
        %4924 = vmatprep.subr.mxu0 0.0
        %4925 = vmatpush1.msra.mxu0 %v4801
        %4926 = vmatprep.subr.mxu0 0.0
        %4927 = vmatpush1.msra.mxu0 %v4804
        %4928 = vmatprep.subr.mxu0 0.0
        %4929 = vmatpush1.msra.mxu0 %v4807
        %4930 = vmatprep.subr.mxu0 0.0
        %4931 = vmatpush1.msra.mxu0 %v4810
        %4932 = vmatprep.subr.mxu0 0.0
        %4933 = vmatpush1.msra.mxu0 %v4813
        %4934 = vmatprep.subr.mxu0 0.0
        %4935 = vmatpush1.msra.mxu0 0.0
        %4936 = vmatprep.subr.mxu0 0.0
        %4937 = vmatpush1.msra.mxu0 0.0
        %4938 = vmatprep.subr.mxu0 0.0
        %4939 = vmatpush1.msra.mxu0 0.0
        %4940 = vmatprep.subr.mxu0 0.0
        %4941 = vmatpush1.msra.mxu0 0.0
        %4942 = vmatprep.subr.mxu0 0.0
        %4943 = vmatpush1.msra.mxu0 0.0
        %4944 = vmatprep.subr.mxu0 0.0
        %4945 = vmatpush1.msra.mxu0 0.0
        %4946 = vmatprep.subr.mxu0 0.0
        %4947 = vmatpush1.msra.mxu0 0.0
        %4948 = vmatprep.subr.mxu0 0.0
        %4949 = vmatpush1.msra.mxu0 0.0
        %4950 = vmatprep.subr.mxu0 0.0
        %4951 = vmatpush1.msra.mxu0 0.0
        %4952 = vmatprep.subr.mxu0 0.0
        %4953 = vmatpush1.msra.mxu0 0.0
        %4954 = vmatprep.subr.mxu0 0.0
        %4955 = vmatpush1.msra.mxu0 0.0
        %4956 = vmatprep.subr.mxu0 0.0
        %4957 = vmatpush1.msra.mxu0 0.0
        %4958 = vmatprep.subr.mxu0 0.0
        %4959 = vmatpush1.msra.mxu0 0.0
        %4960 = vmatprep.subr.mxu0 0.0
        %4961 = vmatpush1.msra.mxu0 0.0
        %4962 = vmatprep.subr.mxu0 0.0
        %4963 = vmatpush1.msra.mxu0 0.0
        %4964 = vmatprep.subr.mxu0 0.0
        %4965 = vmatpush1.msra.mxu0 0.0
        %4966 = vmatprep.mubr.f32.mxu0 0.0
        %4967 = vmatmul.mubr.f32.gmra.mrb[0].mxu0 %v4765
        %v4968 = vpop.f32.mrb[0].mxu0
        %v4969 = vadd.f32 %v4827, %v4968
        %v4970 = vpop.f32.mrb[0].mxu0
        %4971 = vdwg.mxu0
        %v4972 = vld [vmem:[#allocation13] sm:$0xff]
        %v4973 = vld [vmem:[#allocation13 + $0x8] sm:$0xff]
        %v4974 = vld [vmem:[#allocation13 + $0x10] sm:$0xff]
        %v4975 = vld [vmem:[#allocation13 + $0x18] sm:$0xff]
        %v4976 = vld [vmem:[#allocation13 + $0x20] sm:$0xff]
        %v4977 = vld [vmem:[#allocation13 + $0x28] sm:$0xff]
        %v4978 = vld [vmem:[#allocation13 + $0x30] sm:$0xff]
        %v4979 = vld [vmem:[#allocation13 + $0x38] sm:$0xff]
        %v4980 = vld [vmem:[#allocation13 + $0x40] sm:$0xff]
        %v4981 = vld [vmem:[#allocation13 + $0x48] sm:$0xff]
        %v4982 = vld [vmem:[#allocation13 + $0x50] sm:$0xff]
        %v4983 = vld [vmem:[#allocation13 + $0x58] sm:$0xff]
        %v4984 = vld [vmem:[#allocation13 + $0x60] sm:$0xff]
        %v4985 = vld [vmem:[#allocation13 + $0x68] sm:$0xff]
        %v4986 = vld [vmem:[#allocation13 + $0x70] sm:$0xff]
        %v4987 = vld [vmem:[#allocation13 + $0x78] sm:$0xff]
        %v4988 = vld [vmem:[#allocation13 + $0x80] sm:$0xff]
        %v4989 = vld [vmem:[#allocation13 + $0x88] sm:$0xff]
        %v4990 = vld [vmem:[#allocation13 + $0x90] sm:$0xff]
        %v4991 = vld [vmem:[#allocation13 + $0x98] sm:$0xff]
        %v4992 = vld [vmem:[#allocation13 + $0xa0] sm:$0xff]
        %v4993 = vld [vmem:[#allocation13 + $0xa8] sm:$0xff]
        %v4994 = vld [vmem:[#allocation13 + $0xb0] sm:$0xff]
        %v4995 = vld [vmem:[#allocation13 + $0xb8] sm:$0xff]
        %v4996 = vld [vmem:[#allocation13 + $0xc0] sm:$0xff]
        %v4997 = vld [vmem:[#allocation13 + $0xc8] sm:$0xff]
        %v4998 = vld [vmem:[#allocation13 + $0xd0] sm:$0xff]
        %v4999 = vld [vmem:[#allocation13 + $0xd8] sm:$0xff]
        %v5000 = vld [vmem:[#allocation13 + $0xe0] sm:$0xff]
        %v5001 = vld [vmem:[#allocation13 + $0xe8] sm:$0xff]
        %v5002 = vld [vmem:[#allocation13 + $0xf0] sm:$0xff]
        %v5003 = vld [vmem:[#allocation13 + $0xf8] sm:$0xff]
        %v5004 = vld [vmem:[#allocation13 + $0x100] sm:$0xff]
        %v5005 = vld [vmem:[#allocation13 + $0x108] sm:$0xff]
        %v5006 = vld [vmem:[#allocation13 + $0x110] sm:$0xff]
        %v5007 = vld [vmem:[#allocation13 + $0x118] sm:$0xff]
        %v5008 = vld [vmem:[#allocation13 + $0x120] sm:$0xff]
        %v5009 = vld [vmem:[#allocation13 + $0x128] sm:$0xff]
        %v5010 = vld [vmem:[#allocation13 + $0x130] sm:$0xff]
        %v5011 = vld [vmem:[#allocation13 + $0x138] sm:$0xff]
        %v5012 = vld [vmem:[#allocation13 + $0x140] sm:$0xff]
        %v5013 = vld [vmem:[#allocation13 + $0x148] sm:$0xff]
        %v5014 = vld [vmem:[#allocation13 + $0x150] sm:$0xff]
        %v5015 = vld [vmem:[#allocation13 + $0x158] sm:$0xff]
        %v5016 = vld [vmem:[#allocation13 + $0x160] sm:$0xff]
        %v5017 = vld [vmem:[#allocation13 + $0x168] sm:$0xff]
        %v5018 = vld [vmem:[#allocation13 + $0x170] sm:$0xff]
        %v5019 = vld [vmem:[#allocation13 + $0x178] sm:$0xff]
        %v5020 = vld [vmem:[#allocation15] sm:$0x7]
        %v5022 = vlaneseq
        %v5023 = vshrl.u32 %v5022, 7
        %v5024 = vsub.s32 0, %v5023
        %v5025 = vrot.slane %v5020, %v5024
        %v5026 = vlaneseq
        %v5027 = vshrl.u32 %v5026, 7
        %v5028 = vsub.s32 1, %v5027
        %v5029 = vrot.slane %v5020, %v5028
        %v5030 = vlaneseq
        %v5031 = vshrl.u32 %v5030, 7
        %v5032 = vsub.s32 2, %v5031
        %v5033 = vrot.slane %v5020, %v5032
        %5037 = vmatprep.subr.mxu0 %v4973
        %5038 = vmatpush1.msra.mxu0 %v4972
        %5039 = vmatprep.subr.mxu0 %v4976
        %5040 = vmatpush1.msra.mxu0 %v4975
        %5041 = vmatprep.subr.mxu0 %v4979
        %5042 = vmatpush1.msra.mxu0 %v4978
        %5043 = vmatprep.subr.mxu0 %v4982
        %5044 = vmatpush1.msra.mxu0 %v4981
        %5045 = vmatprep.subr.mxu0 %v4985
        %5046 = vmatpush1.msra.mxu0 %v4984
        %5047 = vmatprep.subr.mxu0 %v4988
        %5048 = vmatpush1.msra.mxu0 %v4987
        %5049 = vmatprep.subr.mxu0 %v4991
        %5050 = vmatpush1.msra.mxu0 %v4990
        %5051 = vmatprep.subr.mxu0 %v4994
        %5052 = vmatpush1.msra.mxu0 %v4993
        %5053 = vmatprep.subr.mxu0 %v4997
        %5054 = vmatpush1.msra.mxu0 %v4996
        %5055 = vmatprep.subr.mxu0 %v5000
        %5056 = vmatpush1.msra.mxu0 %v4999
        %5057 = vmatprep.subr.mxu0 %v5003
        %5058 = vmatpush1.msra.mxu0 %v5002
        %5059 = vmatprep.subr.mxu0 %v5006
        %5060 = vmatpush1.msra.mxu0 %v5005
        %5061 = vmatprep.subr.mxu0 %v5009
        %5062 = vmatpush1.msra.mxu0 %v5008
        %5063 = vmatprep.subr.mxu0 %v5012
        %5064 = vmatpush1.msra.mxu0 %v5011
        %5065 = vmatprep.subr.mxu0 %v5015
        %5066 = vmatpush1.msra.mxu0 %v5014
        %5067 = vmatprep.subr.mxu0 %v5018
        %5068 = vmatpush1.msra.mxu0 %v5017
        %5069 = vmatprep.subr.mxu0 0.0
        %5070 = vmatpush1.msra.mxu0 0.0
        %5071 = vmatprep.subr.mxu0 0.0
        %5072 = vmatpush1.msra.mxu0 0.0
        %5073 = vmatprep.subr.mxu0 0.0
        %5074 = vmatpush1.msra.mxu0 0.0
        %5075 = vmatprep.subr.mxu0 0.0
        %5076 = vmatpush1.msra.mxu0 0.0
        %5077 = vmatprep.subr.mxu0 0.0
        %5078 = vmatpush1.msra.mxu0 0.0
        %5079 = vmatprep.subr.mxu0 0.0
        %5080 = vmatpush1.msra.mxu0 0.0
        %5081 = vmatprep.subr.mxu0 0.0
        %5082 = vmatpush1.msra.mxu0 0.0
        %5083 = vmatprep.subr.mxu0 0.0
        %5084 = vmatpush1.msra.mxu0 0.0
        %5085 = vmatprep.subr.mxu0 0.0
        %5086 = vmatpush1.msra.mxu0 0.0
        %5087 = vmatprep.subr.mxu0 0.0
        %5088 = vmatpush1.msra.mxu0 0.0
        %5089 = vmatprep.subr.mxu0 0.0
        %5090 = vmatpush1.msra.mxu0 0.0
        %5091 = vmatprep.subr.mxu0 0.0
        %5092 = vmatpush1.msra.mxu0 0.0
        %5093 = vmatprep.subr.mxu0 0.0
        %5094 = vmatpush1.msra.mxu0 0.0
        %5095 = vmatprep.subr.mxu0 0.0
        %5096 = vmatpush1.msra.mxu0 0.0
        %5097 = vmatprep.subr.mxu0 0.0
        %5098 = vmatpush1.msra.mxu0 0.0
        %5099 = vmatprep.subr.mxu0 0.0
        %5100 = vmatpush1.msra.mxu0 0.0
        %5101 = vmatprep.mubr.f32.mxu0 0.0
        %5102 = vmatmul.mubr.f32.gmra.mrb[0].mxu0 %v4529
        %v5103 = vpop.f32.mrb[0].mxu0
        %v5104 = vadd.f32 %v5025, %v5103
        %v5105 = vpop.f32.mrb[0].mxu0
        %v5106 = vadd.f32 %v5029, %v5105
        %5107 = vdwg.mxu0
        %5108 = vmatprep.subr.mxu0 0.0
        %5109 = vmatpush1.msra.mxu0 %v4974
        %5110 = vmatprep.subr.mxu0 0.0
        %5111 = vmatpush1.msra.mxu0 %v4977
        %5112 = vmatprep.subr.mxu0 0.0
        %5113 = vmatpush1.msra.mxu0 %v4980
        %5114 = vmatprep.subr.mxu0 0.0
        %5115 = vmatpush1.msra.mxu0 %v4983
        %5116 = vmatprep.subr.mxu0 0.0
        %5117 = vmatpush1.msra.mxu0 %v4986
        %5118 = vmatprep.subr.mxu0 0.0
        %5119 = vmatpush1.msra.mxu0 %v4989
        %5120 = vmatprep.subr.mxu0 0.0
        %5121 = vmatpush1.msra.mxu0 %v4992
        %5122 = vmatprep.subr.mxu0 0.0
        %5123 = vmatpush1.msra.mxu0 %v4995
        %5124 = vmatprep.subr.mxu0 0.0
        %5125 = vmatpush1.msra.mxu0 %v4998
        %5126 = vmatprep.subr.mxu0 0.0
        %5127 = vmatpush1.msra.mxu0 %v5001
        %5128 = vmatprep.subr.mxu0 0.0
        %5129 = vmatpush1.msra.mxu0 %v5004
        %5130 = vmatprep.subr.mxu0 0.0
        %5131 = vmatpush1.msra.mxu0 %v5007
        %5132 = vmatprep.subr.mxu0 0.0
        %5133 = vmatpush1.msra.mxu0 %v5010
        %5134 = vmatprep.subr.mxu0 0.0
        %5135 = vmatpush1.msra.mxu0 %v5013
        %5136 = vmatprep.subr.mxu0 0.0
        %5137 = vmatpush1.msra.mxu0 %v5016
        %5138 = vmatprep.subr.mxu0 0.0
        %5139 = vmatpush1.msra.mxu0 %v5019
        %5140 = vmatprep.subr.mxu0 0.0
        %5141 = vmatpush1.msra.mxu0 0.0
        %5142 = vmatprep.subr.mxu0 0.0
        %5143 = vmatpush1.msra.mxu0 0.0
        %5144 = vmatprep.subr.mxu0 0.0
        %5145 = vmatpush1.msra.mxu0 0.0
        %5146 = vmatprep.subr.mxu0 0.0
        %5147 = vmatpush1.msra.mxu0 0.0
        %5148 = vmatprep.subr.mxu0 0.0
        %5149 = vmatpush1.msra.mxu0 0.0
        %5150 = vmatprep.subr.mxu0 0.0
        %5151 = vmatpush1.msra.mxu0 0.0
        %5152 = vmatprep.subr.mxu0 0.0
        %5153 = vmatpush1.msra.mxu0 0.0
        %5154 = vmatprep.subr.mxu0 0.0
        %5155 = vmatpush1.msra.mxu0 0.0
        %5156 = vmatprep.subr.mxu0 0.0
        %5157 = vmatpush1.msra.mxu0 0.0
        %5158 = vmatprep.subr.mxu0 0.0
        %5159 = vmatpush1.msra.mxu0 0.0
        %5160 = vmatprep.subr.mxu0 0.0
        %5161 = vmatpush1.msra.mxu0 0.0
        %5162 = vmatprep.subr.mxu0 0.0
        %5163 = vmatpush1.msra.mxu0 0.0
        %5164 = vmatprep.subr.mxu0 0.0
        %5165 = vmatpush1.msra.mxu0 0.0
        %5166 = vmatprep.subr.mxu0 0.0
        %5167 = vmatpush1.msra.mxu0 0.0
        %5168 = vmatprep.subr.mxu0 0.0
        %5169 = vmatpush1.msra.mxu0 0.0
        %5170 = vmatprep.subr.mxu0 0.0
        %5171 = vmatpush1.msra.mxu0 0.0
        %5172 = vmatprep.mubr.f32.mxu0 0.0
        %5173 = vmatmul.mubr.f32.gmra.mrb[0].mxu0 %v4529
        %v5174 = vpop.f32.mrb[0].mxu0
        %v5175 = vadd.f32 %v5033, %v5174
        %v5176 = vpop.f32.mrb[0].mxu0
        %5177 = vdwg.mxu0
        %v5178 = vadd.f32 %v4898, %v5104
        %v5179 = vxor.u32 %v5178, 2147483648
        %v5180 = vmul.f32 %v5179, 1.442695
        %v5181 = vpow.pop %v5180
        %v5182 = vadd.f32 %v5181, 1.0
        %v5183 = vrcp.pop %v5182
        %v5184 = vmul.f32 1.0, %v5183
        %v5185 = vadd.f32 %v4900, %v5106
        %v5186 = vxor.u32 %v5185, 2147483648
        %v5187 = vmul.f32 %v5186, 1.442695
        %v5188 = vpow.pop %v5187
        %v5189 = vadd.f32 %v5188, 1.0
        %v5190 = vrcp.pop %v5189
        %v5191 = vmul.f32 1.0, %v5190
        %v5192 = vmul.f32 %v5184, %v5175
        %v5193 = vadd.f32 %v4969, %v5192
        %v5194 = vtanh.pop %v5193
        %v5195 = vsub.f32 1.0, %v5191
        %v5196 = vmul.f32 %v5195, %v5194
        %v5197 = vmul.f32 %v5191, %v4529
        %v5198 = vadd.f32 %v5196, %v5197
        %s5199 = scalar_lea.vmem %s503, 12 [#allocation19]
        %5200 = vst [vmem:[%s5199] sm:$0x3] %v5198
        %s5201 = scalar_lea.vmem %s437, 42 [#allocation4]
        %v5202 = vld [vmem:[%s5201] sm:$0x3f]
        %v5203 = vld [vmem:[#allocation7] sm:$0xff]
        %v5204 = vld [vmem:[#allocation7 + $0x8] sm:$0xff]
        %v5205 = vld [vmem:[#allocation7 + $0x10] sm:$0xff]
        %v5206 = vld [vmem:[#allocation7 + $0x18] sm:$0xff]
        %v5207 = vld [vmem:[#allocation7 + $0x20] sm:$0xff]
        %v5208 = vld [vmem:[#allocation7 + $0x28] sm:$0xff]
        %v5209 = vld [vmem:[#allocation7 + $0x30] sm:$0xff]
        %v5210 = vld [vmem:[#allocation7 + $0x38] sm:$0xff]
        %v5211 = vld [vmem:[#allocation7 + $0x40] sm:$0xff]
        %v5212 = vld [vmem:[#allocation7 + $0x48] sm:$0xff]
        %v5213 = vld [vmem:[#allocation7 + $0x50] sm:$0xff]
        %v5214 = vld [vmem:[#allocation7 + $0x58] sm:$0xff]
        %v5215 = vld [vmem:[#allocation7 + $0x60] sm:$0xff]
        %v5216 = vld [vmem:[#allocation7 + $0x68] sm:$0xff]
        %v5217 = vld [vmem:[#allocation7 + $0x70] sm:$0xff]
        %v5218 = vld [vmem:[#allocation7 + $0x78] sm:$0xff]
        %v5219 = vld [vmem:[#allocation7 + $0x80] sm:$0xff]
        %v5220 = vld [vmem:[#allocation7 + $0x88] sm:$0xff]
        %v5221 = vld [vmem:[#allocation7 + $0x90] sm:$0xff]
        %v5222 = vld [vmem:[#allocation7 + $0x98] sm:$0xff]
        %v5223 = vld [vmem:[#allocation7 + $0xa0] sm:$0xff]
        %v5224 = vld [vmem:[#allocation7 + $0xa8] sm:$0xff]
        %v5225 = vld [vmem:[#allocation7 + $0xb0] sm:$0xff]
        %v5226 = vld [vmem:[#allocation7 + $0xb8] sm:$0xff]
        %v5227 = vld [vmem:[#allocation7 + $0xc0] sm:$0xff]
        %v5228 = vld [vmem:[#allocation7 + $0xc8] sm:$0xff]
        %v5229 = vld [vmem:[#allocation7 + $0xd0] sm:$0xff]
        %v5230 = vld [vmem:[#allocation7 + $0xd8] sm:$0xff]
        %v5231 = vld [vmem:[#allocation7 + $0xe0] sm:$0xff]
        %v5232 = vld [vmem:[#allocation7 + $0xe8] sm:$0xff]
        %v5233 = vld [vmem:[#allocation7 + $0xf0] sm:$0xff]
        %v5234 = vld [vmem:[#allocation7 + $0xf8] sm:$0xff]
        %v5235 = vld [vmem:[#allocation7 + $0x100] sm:$0xff]
        %v5236 = vld [vmem:[#allocation7 + $0x108] sm:$0xff]
        %v5237 = vld [vmem:[#allocation7 + $0x110] sm:$0xff]
        %v5238 = vld [vmem:[#allocation7 + $0x118] sm:$0xff]
        %v5239 = vld [vmem:[#allocation7 + $0x120] sm:$0xff]
        %v5240 = vld [vmem:[#allocation7 + $0x128] sm:$0xff]
        %v5241 = vld [vmem:[#allocation7 + $0x130] sm:$0xff]
        %v5242 = vld [vmem:[#allocation7 + $0x138] sm:$0xff]
        %v5243 = vld [vmem:[#allocation7 + $0x140] sm:$0xff]
        %v5244 = vld [vmem:[#allocation7 + $0x148] sm:$0xff]
        %v5245 = vld [vmem:[#allocation7 + $0x150] sm:$0xff]
        %v5246 = vld [vmem:[#allocation7 + $0x158] sm:$0xff]
        %v5247 = vld [vmem:[#allocation7 + $0x160] sm:$0xff]
        %v5248 = vld [vmem:[#allocation7 + $0x168] sm:$0xff]
        %v5249 = vld [vmem:[#allocation7 + $0x170] sm:$0xff]
        %v5250 = vld [vmem:[#allocation7 + $0x178] sm:$0xff]
        %v5251 = vld [vmem:[#allocation9] sm:$0x7]
        %v5253 = vlaneseq
        %v5254 = vshrl.u32 %v5253, 7
        %v5255 = vsub.s32 0, %v5254
        %v5256 = vrot.slane %v5251, %v5255
        %v5257 = vlaneseq
        %v5258 = vshrl.u32 %v5257, 7
        %v5259 = vsub.s32 1, %v5258
        %v5260 = vrot.slane %v5251, %v5259
        %v5261 = vlaneseq
        %v5262 = vshrl.u32 %v5261, 7
        %v5263 = vsub.s32 2, %v5262
        %v5264 = vrot.slane %v5251, %v5263
        %5268 = vmatprep.subr.mxu0 %v5204
        %5269 = vmatpush1.msra.mxu0 %v5203
        %5270 = vmatprep.subr.mxu0 %v5207
        %5271 = vmatpush1.msra.mxu0 %v5206
        %5272 = vmatprep.subr.mxu0 %v5210
        %5273 = vmatpush1.msra.mxu0 %v5209
        %5274 = vmatprep.subr.mxu0 %v5213
        %5275 = vmatpush1.msra.mxu0 %v5212
        %5276 = vmatprep.subr.mxu0 %v5216
        %5277 = vmatpush1.msra.mxu0 %v5215
        %5278 = vmatprep.subr.mxu0 %v5219
        %5279 = vmatpush1.msra.mxu0 %v5218
        %5280 = vmatprep.subr.mxu0 %v5222
        %5281 = vmatpush1.msra.mxu0 %v5221
        %5282 = vmatprep.subr.mxu0 %v5225
        %5283 = vmatpush1.msra.mxu0 %v5224
        %5284 = vmatprep.subr.mxu0 %v5228
        %5285 = vmatpush1.msra.mxu0 %v5227
        %5286 = vmatprep.subr.mxu0 %v5231
        %5287 = vmatpush1.msra.mxu0 %v5230
        %5288 = vmatprep.subr.mxu0 %v5234
        %5289 = vmatpush1.msra.mxu0 %v5233
        %5290 = vmatprep.subr.mxu0 %v5237
        %5291 = vmatpush1.msra.mxu0 %v5236
        %5292 = vmatprep.subr.mxu0 %v5240
        %5293 = vmatpush1.msra.mxu0 %v5239
        %5294 = vmatprep.subr.mxu0 %v5243
        %5295 = vmatpush1.msra.mxu0 %v5242
        %5296 = vmatprep.subr.mxu0 %v5246
        %5297 = vmatpush1.msra.mxu0 %v5245
        %5298 = vmatprep.subr.mxu0 %v5249
        %5299 = vmatpush1.msra.mxu0 %v5248
        %5300 = vmatprep.subr.mxu0 0.0
        %5301 = vmatpush1.msra.mxu0 0.0
        %5302 = vmatprep.subr.mxu0 0.0
        %5303 = vmatpush1.msra.mxu0 0.0
        %5304 = vmatprep.subr.mxu0 0.0
        %5305 = vmatpush1.msra.mxu0 0.0
        %5306 = vmatprep.subr.mxu0 0.0
        %5307 = vmatpush1.msra.mxu0 0.0
        %5308 = vmatprep.subr.mxu0 0.0
        %5309 = vmatpush1.msra.mxu0 0.0
        %5310 = vmatprep.subr.mxu0 0.0
        %5311 = vmatpush1.msra.mxu0 0.0
        %5312 = vmatprep.subr.mxu0 0.0
        %5313 = vmatpush1.msra.mxu0 0.0
        %5314 = vmatprep.subr.mxu0 0.0
        %5315 = vmatpush1.msra.mxu0 0.0
        %5316 = vmatprep.subr.mxu0 0.0
        %5317 = vmatpush1.msra.mxu0 0.0
        %5318 = vmatprep.subr.mxu0 0.0
        %5319 = vmatpush1.msra.mxu0 0.0
        %5320 = vmatprep.subr.mxu0 0.0
        %5321 = vmatpush1.msra.mxu0 0.0
        %5322 = vmatprep.subr.mxu0 0.0
        %5323 = vmatpush1.msra.mxu0 0.0
        %5324 = vmatprep.subr.mxu0 0.0
        %5325 = vmatpush1.msra.mxu0 0.0
        %5326 = vmatprep.subr.mxu0 0.0
        %5327 = vmatpush1.msra.mxu0 0.0
        %5328 = vmatprep.subr.mxu0 0.0
        %5329 = vmatpush1.msra.mxu0 0.0
        %5330 = vmatprep.subr.mxu0 0.0
        %5331 = vmatpush1.msra.mxu0 0.0
        %5332 = vmatprep.mubr.f32.mxu0 0.0
        %5333 = vmatmul.mubr.f32.gmra.mrb[0].mxu0 %v4765
        %v5334 = vpop.f32.mrb[0].mxu0
        %v5335 = vadd.f32 %v5256, %v5334
        %v5336 = vpop.f32.mrb[0].mxu0
        %v5337 = vadd.f32 %v5260, %v5336
        %5338 = vdwg.mxu0
        %5339 = vmatprep.subr.mxu0 0.0
        %5340 = vmatpush1.msra.mxu0 %v5205
        %5341 = vmatprep.subr.mxu0 0.0
        %5342 = vmatpush1.msra.mxu0 %v5208
        %5343 = vmatprep.subr.mxu0 0.0
        %5344 = vmatpush1.msra.mxu0 %v5211
        %5345 = vmatprep.subr.mxu0 0.0
        %5346 = vmatpush1.msra.mxu0 %v5214
        %5347 = vmatprep.subr.mxu0 0.0
        %5348 = vmatpush1.msra.mxu0 %v5217
        %5349 = vmatprep.subr.mxu0 0.0
        %5350 = vmatpush1.msra.mxu0 %v5220
        %5351 = vmatprep.subr.mxu0 0.0
        %5352 = vmatpush1.msra.mxu0 %v5223
        %5353 = vmatprep.subr.mxu0 0.0
        %5354 = vmatpush1.msra.mxu0 %v5226
        %5355 = vmatprep.subr.mxu0 0.0
        %5356 = vmatpush1.msra.mxu0 %v5229
        %5357 = vmatprep.subr.mxu0 0.0
        %5358 = vmatpush1.msra.mxu0 %v5232
        %5359 = vmatprep.subr.mxu0 0.0
        %5360 = vmatpush1.msra.mxu0 %v5235
        %5361 = vmatprep.subr.mxu0 0.0
        %5362 = vmatpush1.msra.mxu0 %v5238
        %5363 = vmatprep.subr.mxu0 0.0
        %5364 = vmatpush1.msra.mxu0 %v5241
        %5365 = vmatprep.subr.mxu0 0.0
        %5366 = vmatpush1.msra.mxu0 %v5244
        %5367 = vmatprep.subr.mxu0 0.0
        %5368 = vmatpush1.msra.mxu0 %v5247
        %5369 = vmatprep.subr.mxu0 0.0
        %5370 = vmatpush1.msra.mxu0 %v5250
        %5371 = vmatprep.subr.mxu0 0.0
        %5372 = vmatpush1.msra.mxu0 0.0
        %5373 = vmatprep.subr.mxu0 0.0
        %5374 = vmatpush1.msra.mxu0 0.0
        %5375 = vmatprep.subr.mxu0 0.0
        %5376 = vmatpush1.msra.mxu0 0.0
        %5377 = vmatprep.subr.mxu0 0.0
        %5378 = vmatpush1.msra.mxu0 0.0
        %5379 = vmatprep.subr.mxu0 0.0
        %5380 = vmatpush1.msra.mxu0 0.0
        %5381 = vmatprep.subr.mxu0 0.0
        %5382 = vmatpush1.msra.mxu0 0.0
        %5383 = vmatprep.subr.mxu0 0.0
        %5384 = vmatpush1.msra.mxu0 0.0
        %5385 = vmatprep.subr.mxu0 0.0
        %5386 = vmatpush1.msra.mxu0 0.0
        %5387 = vmatprep.subr.mxu0 0.0
        %5388 = vmatpush1.msra.mxu0 0.0
        %5389 = vmatprep.subr.mxu0 0.0
        %5390 = vmatpush1.msra.mxu0 0.0
        %5391 = vmatprep.subr.mxu0 0.0
        %5392 = vmatpush1.msra.mxu0 0.0
        %5393 = vmatprep.subr.mxu0 0.0
        %5394 = vmatpush1.msra.mxu0 0.0
        %5395 = vmatprep.subr.mxu0 0.0
        %5396 = vmatpush1.msra.mxu0 0.0
        %5397 = vmatprep.subr.mxu0 0.0
        %5398 = vmatpush1.msra.mxu0 0.0
        %5399 = vmatprep.subr.mxu0 0.0
        %5400 = vmatpush1.msra.mxu0 0.0
        %5401 = vmatprep.subr.mxu0 0.0
        %5402 = vmatpush1.msra.mxu0 0.0
        %5403 = vmatprep.mubr.f32.mxu0 0.0
        %5404 = vmatmul.mubr.f32.gmra.mrb[0].mxu0 %v4765
        %v5405 = vpop.f32.mrb[0].mxu0
        %v5406 = vadd.f32 %v5264, %v5405
        %v5407 = vpop.f32.mrb[0].mxu0
        %5408 = vdwg.mxu0
        %v5409 = vadd.f32 %v5202, %v5335
        %v5410 = vxor.u32 %v5409, 2147483648
        %v5411 = vmul.f32 %v5410, 1.442695
        %v5412 = vpow.pop %v5411
        %v5413 = vadd.f32 %v5412, 1.0
        %v5414 = vrcp.pop %v5413
        %v5415 = vmul.f32 1.0, %v5414
        %v5417 = vrot.slane %v5202, 2
        %v5419 = vadd.f32 %v5417, %v5337
        %v5420 = vxor.u32 %v5419, 2147483648
        %v5421 = vmul.f32 %v5420, 1.442695
        %v5422 = vpow.pop %v5421
        %v5423 = vadd.f32 %v5422, 1.0
        %v5424 = vrcp.pop %v5423
        %v5425 = vmul.f32 1.0, %v5424
        %v5426 = vmul.f32 %v5415, %v5406
        %v5427 = vrot.slane %v5202, 4
        %v5429 = vadd.f32 %v5427, %v5426
        %v5430 = vtanh.pop %v5429
        %v5431 = vsub.f32 1.0, %v5425
        %v5432 = vmul.f32 %v5431, %v5430
        %v5433 = vmul.f32 %v5425, %v4765
        %v5434 = vadd.f32 %v5432, %v5433
        %v5435 = vld [vmem:[#allocation10] sm:$0xff]
        %v5436 = vld [vmem:[#allocation10 + $0x8] sm:$0xff]
        %v5437 = vld [vmem:[#allocation10 + $0x10] sm:$0xff]
        %v5438 = vld [vmem:[#allocation10 + $0x18] sm:$0xff]
        %v5439 = vld [vmem:[#allocation10 + $0x20] sm:$0xff]
        %v5440 = vld [vmem:[#allocation10 + $0x28] sm:$0xff]
        %v5441 = vld [vmem:[#allocation10 + $0x30] sm:$0xff]
        %v5442 = vld [vmem:[#allocation10 + $0x38] sm:$0xff]
        %v5443 = vld [vmem:[#allocation10 + $0x40] sm:$0xff]
        %v5444 = vld [vmem:[#allocation10 + $0x48] sm:$0xff]
        %v5445 = vld [vmem:[#allocation10 + $0x50] sm:$0xff]
        %v5446 = vld [vmem:[#allocation10 + $0x58] sm:$0xff]
        %v5447 = vld [vmem:[#allocation10 + $0x60] sm:$0xff]
        %v5448 = vld [vmem:[#allocation10 + $0x68] sm:$0xff]
        %v5449 = vld [vmem:[#allocation10 + $0x70] sm:$0xff]
        %v5450 = vld [vmem:[#allocation10 + $0x78] sm:$0xff]
        %v5451 = vld [vmem:[#allocation10 + $0x80] sm:$0xff]
        %v5452 = vld [vmem:[#allocation10 + $0x88] sm:$0xff]
        %v5453 = vld [vmem:[#allocation10 + $0x90] sm:$0xff]
        %v5454 = vld [vmem:[#allocation10 + $0x98] sm:$0xff]
        %v5455 = vld [vmem:[#allocation10 + $0xa0] sm:$0xff]
        %v5456 = vld [vmem:[#allocation10 + $0xa8] sm:$0xff]
        %v5457 = vld [vmem:[#allocation10 + $0xb0] sm:$0xff]
        %v5458 = vld [vmem:[#allocation10 + $0xb8] sm:$0xff]
        %v5459 = vld [vmem:[#allocation10 + $0xc0] sm:$0xff]
        %v5460 = vld [vmem:[#allocation10 + $0xc8] sm:$0xff]
        %v5461 = vld [vmem:[#allocation10 + $0xd0] sm:$0xff]
        %v5462 = vld [vmem:[#allocation10 + $0xd8] sm:$0xff]
        %v5463 = vld [vmem:[#allocation10 + $0xe0] sm:$0xff]
        %v5464 = vld [vmem:[#allocation10 + $0xe8] sm:$0xff]
        %v5465 = vld [vmem:[#allocation10 + $0xf0] sm:$0xff]
        %v5466 = vld [vmem:[#allocation10 + $0xf8] sm:$0xff]
        %v5467 = vld [vmem:[#allocation10 + $0x100] sm:$0xff]
        %v5468 = vld [vmem:[#allocation10 + $0x108] sm:$0xff]
        %v5469 = vld [vmem:[#allocation10 + $0x110] sm:$0xff]
        %v5470 = vld [vmem:[#allocation10 + $0x118] sm:$0xff]
        %v5471 = vld [vmem:[#allocation10 + $0x120] sm:$0xff]
        %v5472 = vld [vmem:[#allocation10 + $0x128] sm:$0xff]
        %v5473 = vld [vmem:[#allocation10 + $0x130] sm:$0xff]
        %v5474 = vld [vmem:[#allocation10 + $0x138] sm:$0xff]
        %v5475 = vld [vmem:[#allocation10 + $0x140] sm:$0xff]
        %v5476 = vld [vmem:[#allocation10 + $0x148] sm:$0xff]
        %v5477 = vld [vmem:[#allocation10 + $0x150] sm:$0xff]
        %v5478 = vld [vmem:[#allocation10 + $0x158] sm:$0xff]
        %v5479 = vld [vmem:[#allocation10 + $0x160] sm:$0xff]
        %v5480 = vld [vmem:[#allocation10 + $0x168] sm:$0xff]
        %v5481 = vld [vmem:[#allocation10 + $0x170] sm:$0xff]
        %v5482 = vld [vmem:[#allocation10 + $0x178] sm:$0xff]
        %v5483 = vld [vmem:[#allocation12] sm:$0x7]
        %v5485 = vlaneseq
        %v5486 = vshrl.u32 %v5485, 7
        %v5487 = vsub.s32 0, %v5486
        %v5488 = vrot.slane %v5483, %v5487
        %v5489 = vlaneseq
        %v5490 = vshrl.u32 %v5489, 7
        %v5491 = vsub.s32 1, %v5490
        %v5492 = vrot.slane %v5483, %v5491
        %v5493 = vlaneseq
        %v5494 = vshrl.u32 %v5493, 7
        %v5495 = vsub.s32 2, %v5494
        %v5496 = vrot.slane %v5483, %v5495
        %5500 = vmatprep.subr.mxu0 %v5436
        %5501 = vmatpush1.msra.mxu0 %v5435
        %5502 = vmatprep.subr.mxu0 %v5439
        %5503 = vmatpush1.msra.mxu0 %v5438
        %5504 = vmatprep.subr.mxu0 %v5442
        %5505 = vmatpush1.msra.mxu0 %v5441
        %5506 = vmatprep.subr.mxu0 %v5445
        %5507 = vmatpush1.msra.mxu0 %v5444
        %5508 = vmatprep.subr.mxu0 %v5448
        %5509 = vmatpush1.msra.mxu0 %v5447
        %5510 = vmatprep.subr.mxu0 %v5451
        %5511 = vmatpush1.msra.mxu0 %v5450
        %5512 = vmatprep.subr.mxu0 %v5454
        %5513 = vmatpush1.msra.mxu0 %v5453
        %5514 = vmatprep.subr.mxu0 %v5457
        %5515 = vmatpush1.msra.mxu0 %v5456
        %5516 = vmatprep.subr.mxu0 %v5460
        %5517 = vmatpush1.msra.mxu0 %v5459
        %5518 = vmatprep.subr.mxu0 %v5463
        %5519 = vmatpush1.msra.mxu0 %v5462
        %5520 = vmatprep.subr.mxu0 %v5466
        %5521 = vmatpush1.msra.mxu0 %v5465
        %5522 = vmatprep.subr.mxu0 %v5469
        %5523 = vmatpush1.msra.mxu0 %v5468
        %5524 = vmatprep.subr.mxu0 %v5472
        %5525 = vmatpush1.msra.mxu0 %v5471
        %5526 = vmatprep.subr.mxu0 %v5475
        %5527 = vmatpush1.msra.mxu0 %v5474
        %5528 = vmatprep.subr.mxu0 %v5478
        %5529 = vmatpush1.msra.mxu0 %v5477
        %5530 = vmatprep.subr.mxu0 %v5481
        %5531 = vmatpush1.msra.mxu0 %v5480
        %5532 = vmatprep.subr.mxu0 0.0
        %5533 = vmatpush1.msra.mxu0 0.0
        %5534 = vmatprep.subr.mxu0 0.0
        %5535 = vmatpush1.msra.mxu0 0.0
        %5536 = vmatprep.subr.mxu0 0.0
        %5537 = vmatpush1.msra.mxu0 0.0
        %5538 = vmatprep.subr.mxu0 0.0
        %5539 = vmatpush1.msra.mxu0 0.0
        %5540 = vmatprep.subr.mxu0 0.0
        %5541 = vmatpush1.msra.mxu0 0.0
        %5542 = vmatprep.subr.mxu0 0.0
        %5543 = vmatpush1.msra.mxu0 0.0
        %5544 = vmatprep.subr.mxu0 0.0
        %5545 = vmatpush1.msra.mxu0 0.0
        %5546 = vmatprep.subr.mxu0 0.0
        %5547 = vmatpush1.msra.mxu0 0.0
        %5548 = vmatprep.subr.mxu0 0.0
        %5549 = vmatpush1.msra.mxu0 0.0
        %5550 = vmatprep.subr.mxu0 0.0
        %5551 = vmatpush1.msra.mxu0 0.0
        %5552 = vmatprep.subr.mxu0 0.0
        %5553 = vmatpush1.msra.mxu0 0.0
        %5554 = vmatprep.subr.mxu0 0.0
        %5555 = vmatpush1.msra.mxu0 0.0
        %5556 = vmatprep.subr.mxu0 0.0
        %5557 = vmatpush1.msra.mxu0 0.0
        %5558 = vmatprep.subr.mxu0 0.0
        %5559 = vmatpush1.msra.mxu0 0.0
        %5560 = vmatprep.subr.mxu0 0.0
        %5561 = vmatpush1.msra.mxu0 0.0
        %5562 = vmatprep.subr.mxu0 0.0
        %5563 = vmatpush1.msra.mxu0 0.0
        %5564 = vmatprep.mubr.f32.mxu0 0.0
        %5565 = vmatmul.mubr.f32.gmra.mrb[0].mxu0 %v5434
        %v5566 = vpop.f32.mrb[0].mxu0
        %v5567 = vadd.f32 %v5488, %v5566
        %v5568 = vpop.f32.mrb[0].mxu0
        %v5569 = vadd.f32 %v5492, %v5568
        %5570 = vdwg.mxu0
        %5571 = vmatprep.subr.mxu0 0.0
        %5572 = vmatpush1.msra.mxu0 %v5437
        %5573 = vmatprep.subr.mxu0 0.0
        %5574 = vmatpush1.msra.mxu0 %v5440
        %5575 = vmatprep.subr.mxu0 0.0
        %5576 = vmatpush1.msra.mxu0 %v5443
        %5577 = vmatprep.subr.mxu0 0.0
        %5578 = vmatpush1.msra.mxu0 %v5446
        %5579 = vmatprep.subr.mxu0 0.0
        %5580 = vmatpush1.msra.mxu0 %v5449
        %5581 = vmatprep.subr.mxu0 0.0
        %5582 = vmatpush1.msra.mxu0 %v5452
        %5583 = vmatprep.subr.mxu0 0.0
        %5584 = vmatpush1.msra.mxu0 %v5455
        %5585 = vmatprep.subr.mxu0 0.0
        %5586 = vmatpush1.msra.mxu0 %v5458
        %5587 = vmatprep.subr.mxu0 0.0
        %5588 = vmatpush1.msra.mxu0 %v5461
        %5589 = vmatprep.subr.mxu0 0.0
        %5590 = vmatpush1.msra.mxu0 %v5464
        %5591 = vmatprep.subr.mxu0 0.0
        %5592 = vmatpush1.msra.mxu0 %v5467
        %5593 = vmatprep.subr.mxu0 0.0
        %5594 = vmatpush1.msra.mxu0 %v5470
        %5595 = vmatprep.subr.mxu0 0.0
        %5596 = vmatpush1.msra.mxu0 %v5473
        %5597 = vmatprep.subr.mxu0 0.0
        %5598 = vmatpush1.msra.mxu0 %v5476
        %5599 = vmatprep.subr.mxu0 0.0
        %5600 = vmatpush1.msra.mxu0 %v5479
        %5601 = vmatprep.subr.mxu0 0.0
        %5602 = vmatpush1.msra.mxu0 %v5482
        %5603 = vmatprep.subr.mxu0 0.0
        %5604 = vmatpush1.msra.mxu0 0.0
        %5605 = vmatprep.subr.mxu0 0.0
        %5606 = vmatpush1.msra.mxu0 0.0
        %5607 = vmatprep.subr.mxu0 0.0
        %5608 = vmatpush1.msra.mxu0 0.0
        %5609 = vmatprep.subr.mxu0 0.0
        %5610 = vmatpush1.msra.mxu0 0.0
        %5611 = vmatprep.subr.mxu0 0.0
        %5612 = vmatpush1.msra.mxu0 0.0
        %5613 = vmatprep.subr.mxu0 0.0
        %5614 = vmatpush1.msra.mxu0 0.0
        %5615 = vmatprep.subr.mxu0 0.0
        %5616 = vmatpush1.msra.mxu0 0.0
        %5617 = vmatprep.subr.mxu0 0.0
        %5618 = vmatpush1.msra.mxu0 0.0
        %5619 = vmatprep.subr.mxu0 0.0
        %5620 = vmatpush1.msra.mxu0 0.0
        %5621 = vmatprep.subr.mxu0 0.0
        %5622 = vmatpush1.msra.mxu0 0.0
        %5623 = vmatprep.subr.mxu0 0.0
        %5624 = vmatpush1.msra.mxu0 0.0
        %5625 = vmatprep.subr.mxu0 0.0
        %5626 = vmatpush1.msra.mxu0 0.0
        %5627 = vmatprep.subr.mxu0 0.0
        %5628 = vmatpush1.msra.mxu0 0.0
        %5629 = vmatprep.subr.mxu0 0.0
        %5630 = vmatpush1.msra.mxu0 0.0
        %5631 = vmatprep.subr.mxu0 0.0
        %5632 = vmatpush1.msra.mxu0 0.0
        %5633 = vmatprep.subr.mxu0 0.0
        %5634 = vmatpush1.msra.mxu0 0.0
        %5635 = vmatprep.mubr.f32.mxu0 0.0
        %5636 = vmatmul.mubr.f32.gmra.mrb[0].mxu0 %v5434
        %v5637 = vpop.f32.mrb[0].mxu0
        %v5638 = vadd.f32 %v5496, %v5637
        %v5639 = vpop.f32.mrb[0].mxu0
        %5640 = vdwg.mxu0
        %v5641 = vld [vmem:[#allocation13] sm:$0xff]
        %v5642 = vld [vmem:[#allocation13 + $0x8] sm:$0xff]
        %v5643 = vld [vmem:[#allocation13 + $0x10] sm:$0xff]
        %v5644 = vld [vmem:[#allocation13 + $0x18] sm:$0xff]
        %v5645 = vld [vmem:[#allocation13 + $0x20] sm:$0xff]
        %v5646 = vld [vmem:[#allocation13 + $0x28] sm:$0xff]
        %v5647 = vld [vmem:[#allocation13 + $0x30] sm:$0xff]
        %v5648 = vld [vmem:[#allocation13 + $0x38] sm:$0xff]
        %v5649 = vld [vmem:[#allocation13 + $0x40] sm:$0xff]
        %v5650 = vld [vmem:[#allocation13 + $0x48] sm:$0xff]
        %v5651 = vld [vmem:[#allocation13 + $0x50] sm:$0xff]
        %v5652 = vld [vmem:[#allocation13 + $0x58] sm:$0xff]
        %v5653 = vld [vmem:[#allocation13 + $0x60] sm:$0xff]
        %v5654 = vld [vmem:[#allocation13 + $0x68] sm:$0xff]
        %v5655 = vld [vmem:[#allocation13 + $0x70] sm:$0xff]
        %v5656 = vld [vmem:[#allocation13 + $0x78] sm:$0xff]
        %v5657 = vld [vmem:[#allocation13 + $0x80] sm:$0xff]
        %v5658 = vld [vmem:[#allocation13 + $0x88] sm:$0xff]
        %v5659 = vld [vmem:[#allocation13 + $0x90] sm:$0xff]
        %v5660 = vld [vmem:[#allocation13 + $0x98] sm:$0xff]
        %v5661 = vld [vmem:[#allocation13 + $0xa0] sm:$0xff]
        %v5662 = vld [vmem:[#allocation13 + $0xa8] sm:$0xff]
        %v5663 = vld [vmem:[#allocation13 + $0xb0] sm:$0xff]
        %v5664 = vld [vmem:[#allocation13 + $0xb8] sm:$0xff]
        %v5665 = vld [vmem:[#allocation13 + $0xc0] sm:$0xff]
        %v5666 = vld [vmem:[#allocation13 + $0xc8] sm:$0xff]
        %v5667 = vld [vmem:[#allocation13 + $0xd0] sm:$0xff]
        %v5668 = vld [vmem:[#allocation13 + $0xd8] sm:$0xff]
        %v5669 = vld [vmem:[#allocation13 + $0xe0] sm:$0xff]
        %v5670 = vld [vmem:[#allocation13 + $0xe8] sm:$0xff]
        %v5671 = vld [vmem:[#allocation13 + $0xf0] sm:$0xff]
        %v5672 = vld [vmem:[#allocation13 + $0xf8] sm:$0xff]
        %v5673 = vld [vmem:[#allocation13 + $0x100] sm:$0xff]
        %v5674 = vld [vmem:[#allocation13 + $0x108] sm:$0xff]
        %v5675 = vld [vmem:[#allocation13 + $0x110] sm:$0xff]
        %v5676 = vld [vmem:[#allocation13 + $0x118] sm:$0xff]
        %v5677 = vld [vmem:[#allocation13 + $0x120] sm:$0xff]
        %v5678 = vld [vmem:[#allocation13 + $0x128] sm:$0xff]
        %v5679 = vld [vmem:[#allocation13 + $0x130] sm:$0xff]
        %v5680 = vld [vmem:[#allocation13 + $0x138] sm:$0xff]
        %v5681 = vld [vmem:[#allocation13 + $0x140] sm:$0xff]
        %v5682 = vld [vmem:[#allocation13 + $0x148] sm:$0xff]
        %v5683 = vld [vmem:[#allocation13 + $0x150] sm:$0xff]
        %v5684 = vld [vmem:[#allocation13 + $0x158] sm:$0xff]
        %v5685 = vld [vmem:[#allocation13 + $0x160] sm:$0xff]
        %v5686 = vld [vmem:[#allocation13 + $0x168] sm:$0xff]
        %v5687 = vld [vmem:[#allocation13 + $0x170] sm:$0xff]
        %v5688 = vld [vmem:[#allocation13 + $0x178] sm:$0xff]
        %v5689 = vld [vmem:[#allocation15] sm:$0x7]
        %v5691 = vlaneseq
        %v5692 = vshrl.u32 %v5691, 7
        %v5693 = vsub.s32 0, %v5692
        %v5694 = vrot.slane %v5689, %v5693
        %v5695 = vlaneseq
        %v5696 = vshrl.u32 %v5695, 7
        %v5697 = vsub.s32 1, %v5696
        %v5698 = vrot.slane %v5689, %v5697
        %v5699 = vlaneseq
        %v5700 = vshrl.u32 %v5699, 7
        %v5701 = vsub.s32 2, %v5700
        %v5702 = vrot.slane %v5689, %v5701
        %5706 = vmatprep.subr.mxu0 %v5642
        %5707 = vmatpush1.msra.mxu0 %v5641
        %5708 = vmatprep.subr.mxu0 %v5645
        %5709 = vmatpush1.msra.mxu0 %v5644
        %5710 = vmatprep.subr.mxu0 %v5648
        %5711 = vmatpush1.msra.mxu0 %v5647
        %5712 = vmatprep.subr.mxu0 %v5651
        %5713 = vmatpush1.msra.mxu0 %v5650
        %5714 = vmatprep.subr.mxu0 %v5654
        %5715 = vmatpush1.msra.mxu0 %v5653
        %5716 = vmatprep.subr.mxu0 %v5657
        %5717 = vmatpush1.msra.mxu0 %v5656
        %5718 = vmatprep.subr.mxu0 %v5660
        %5719 = vmatpush1.msra.mxu0 %v5659
        %5720 = vmatprep.subr.mxu0 %v5663
        %5721 = vmatpush1.msra.mxu0 %v5662
        %5722 = vmatprep.subr.mxu0 %v5666
        %5723 = vmatpush1.msra.mxu0 %v5665
        %5724 = vmatprep.subr.mxu0 %v5669
        %5725 = vmatpush1.msra.mxu0 %v5668
        %5726 = vmatprep.subr.mxu0 %v5672
        %5727 = vmatpush1.msra.mxu0 %v5671
        %5728 = vmatprep.subr.mxu0 %v5675
        %5729 = vmatpush1.msra.mxu0 %v5674
        %5730 = vmatprep.subr.mxu0 %v5678
        %5731 = vmatpush1.msra.mxu0 %v5677
        %5732 = vmatprep.subr.mxu0 %v5681
        %5733 = vmatpush1.msra.mxu0 %v5680
        %5734 = vmatprep.subr.mxu0 %v5684
        %5735 = vmatpush1.msra.mxu0 %v5683
        %5736 = vmatprep.subr.mxu0 %v5687
        %5737 = vmatpush1.msra.mxu0 %v5686
        %5738 = vmatprep.subr.mxu0 0.0
        %5739 = vmatpush1.msra.mxu0 0.0
        %5740 = vmatprep.subr.mxu0 0.0
        %5741 = vmatpush1.msra.mxu0 0.0
        %5742 = vmatprep.subr.mxu0 0.0
        %5743 = vmatpush1.msra.mxu0 0.0
        %5744 = vmatprep.subr.mxu0 0.0
        %5745 = vmatpush1.msra.mxu0 0.0
        %5746 = vmatprep.subr.mxu0 0.0
        %5747 = vmatpush1.msra.mxu0 0.0
        %5748 = vmatprep.subr.mxu0 0.0
        %5749 = vmatpush1.msra.mxu0 0.0
        %5750 = vmatprep.subr.mxu0 0.0
        %5751 = vmatpush1.msra.mxu0 0.0
        %5752 = vmatprep.subr.mxu0 0.0
        %5753 = vmatpush1.msra.mxu0 0.0
        %5754 = vmatprep.subr.mxu0 0.0
        %5755 = vmatpush1.msra.mxu0 0.0
        %5756 = vmatprep.subr.mxu0 0.0
        %5757 = vmatpush1.msra.mxu0 0.0
        %5758 = vmatprep.subr.mxu0 0.0
        %5759 = vmatpush1.msra.mxu0 0.0
        %5760 = vmatprep.subr.mxu0 0.0
        %5761 = vmatpush1.msra.mxu0 0.0
        %5762 = vmatprep.subr.mxu0 0.0
        %5763 = vmatpush1.msra.mxu0 0.0
        %5764 = vmatprep.subr.mxu0 0.0
        %5765 = vmatpush1.msra.mxu0 0.0
        %5766 = vmatprep.subr.mxu0 0.0
        %5767 = vmatpush1.msra.mxu0 0.0
        %5768 = vmatprep.subr.mxu0 0.0
        %5769 = vmatpush1.msra.mxu0 0.0
        %5770 = vmatprep.mubr.f32.mxu0 0.0
        %5771 = vmatmul.mubr.f32.gmra.mrb[0].mxu0 %v5198
        %v5772 = vpop.f32.mrb[0].mxu0
        %v5773 = vadd.f32 %v5694, %v5772
        %v5774 = vpop.f32.mrb[0].mxu0
        %v5775 = vadd.f32 %v5698, %v5774
        %5776 = vdwg.mxu0
        %5777 = vmatprep.subr.mxu0 0.0
        %5778 = vmatpush1.msra.mxu0 %v5643
        %5779 = vmatprep.subr.mxu0 0.0
        %5780 = vmatpush1.msra.mxu0 %v5646
        %5781 = vmatprep.subr.mxu0 0.0
        %5782 = vmatpush1.msra.mxu0 %v5649
        %5783 = vmatprep.subr.mxu0 0.0
        %5784 = vmatpush1.msra.mxu0 %v5652
        %5785 = vmatprep.subr.mxu0 0.0
        %5786 = vmatpush1.msra.mxu0 %v5655
        %5787 = vmatprep.subr.mxu0 0.0
        %5788 = vmatpush1.msra.mxu0 %v5658
        %5789 = vmatprep.subr.mxu0 0.0
        %5790 = vmatpush1.msra.mxu0 %v5661
        %5791 = vmatprep.subr.mxu0 0.0
        %5792 = vmatpush1.msra.mxu0 %v5664
        %5793 = vmatprep.subr.mxu0 0.0
        %5794 = vmatpush1.msra.mxu0 %v5667
        %5795 = vmatprep.subr.mxu0 0.0
        %5796 = vmatpush1.msra.mxu0 %v5670
        %5797 = vmatprep.subr.mxu0 0.0
        %5798 = vmatpush1.msra.mxu0 %v5673
        %5799 = vmatprep.subr.mxu0 0.0
        %5800 = vmatpush1.msra.mxu0 %v5676
        %5801 = vmatprep.subr.mxu0 0.0
        %5802 = vmatpush1.msra.mxu0 %v5679
        %5803 = vmatprep.subr.mxu0 0.0
        %5804 = vmatpush1.msra.mxu0 %v5682
        %5805 = vmatprep.subr.mxu0 0.0
        %5806 = vmatpush1.msra.mxu0 %v5685
        %5807 = vmatprep.subr.mxu0 0.0
        %5808 = vmatpush1.msra.mxu0 %v5688
        %5809 = vmatprep.subr.mxu0 0.0
        %5810 = vmatpush1.msra.mxu0 0.0
        %5811 = vmatprep.subr.mxu0 0.0
        %5812 = vmatpush1.msra.mxu0 0.0
        %5813 = vmatprep.subr.mxu0 0.0
        %5814 = vmatpush1.msra.mxu0 0.0
        %5815 = vmatprep.subr.mxu0 0.0
        %5816 = vmatpush1.msra.mxu0 0.0
        %5817 = vmatprep.subr.mxu0 0.0
        %5818 = vmatpush1.msra.mxu0 0.0
        %5819 = vmatprep.subr.mxu0 0.0
        %5820 = vmatpush1.msra.mxu0 0.0
        %5821 = vmatprep.subr.mxu0 0.0
        %5822 = vmatpush1.msra.mxu0 0.0
        %5823 = vmatprep.subr.mxu0 0.0
        %5824 = vmatpush1.msra.mxu0 0.0
        %5825 = vmatprep.subr.mxu0 0.0
        %5826 = vmatpush1.msra.mxu0 0.0
        %5827 = vmatprep.subr.mxu0 0.0
        %5828 = vmatpush1.msra.mxu0 0.0
        %5829 = vmatprep.subr.mxu0 0.0
        %5830 = vmatpush1.msra.mxu0 0.0
        %5831 = vmatprep.subr.mxu0 0.0
        %5832 = vmatpush1.msra.mxu0 0.0
        %5833 = vmatprep.subr.mxu0 0.0
        %5834 = vmatpush1.msra.mxu0 0.0
        %5835 = vmatprep.subr.mxu0 0.0
        %5836 = vmatpush1.msra.mxu0 0.0
        %5837 = vmatprep.subr.mxu0 0.0
        %5838 = vmatpush1.msra.mxu0 0.0
        %5839 = vmatprep.subr.mxu0 0.0
        %5840 = vmatpush1.msra.mxu0 0.0
        %5841 = vmatprep.mubr.f32.mxu0 0.0
        %5842 = vmatmul.mubr.f32.gmra.mrb[0].mxu0 %v5198
        %v5843 = vpop.f32.mrb[0].mxu0
        %v5844 = vadd.f32 %v5702, %v5843
        %v5845 = vpop.f32.mrb[0].mxu0
        %5846 = vdwg.mxu0
        %v5847 = vadd.f32 %v5567, %v5773
        %v5848 = vxor.u32 %v5847, 2147483648
        %v5849 = vmul.f32 %v5848, 1.442695
        %v5850 = vpow.pop %v5849
        %v5851 = vadd.f32 %v5850, 1.0
        %v5852 = vrcp.pop %v5851
        %v5853 = vmul.f32 1.0, %v5852
        %v5854 = vadd.f32 %v5569, %v5775
        %v5855 = vxor.u32 %v5854, 2147483648
        %v5856 = vmul.f32 %v5855, 1.442695
        %v5857 = vpow.pop %v5856
        %v5858 = vadd.f32 %v5857, 1.0
        %v5859 = vrcp.pop %v5858
        %v5860 = vmul.f32 1.0, %v5859
        %v5861 = vmul.f32 %v5853, %v5844
        %v5862 = vadd.f32 %v5638, %v5861
        %v5863 = vtanh.pop %v5862
        %v5864 = vsub.f32 1.0, %v5860
        %v5865 = vmul.f32 %v5864, %v5863
        %v5866 = vmul.f32 %v5860, %v5198
        %v5867 = vadd.f32 %v5865, %v5866
        %s5868 = scalar_lea.vmem %s503, 14 [#allocation19]
        %5869 = vst [vmem:[%s5868] sm:$0x3] %v5867
        %5870 = vst [vmem:[#allocation2] sm:$0x3] %v5434
        %5871 = vst [vmem:[#allocation3] sm:$0x3] %v5867
        %p5872 = scmp.eq.s32.totalorder %s34, 2
        // Predicated region
        $region97: #{_lambda_.2} parent=55 // pred_check
          %p5873 = pneg %p5872
        $region98: #{_lambda_.2} parent=55 // pred_check_branch
          %5875 = sbr.rel (%p5873) target = $region100
        $region99: #{_lambda_.2} parent=55 // pred_region
          %5876 = vst [vmem:[#allocation20] sm:$0x3] %v5434
          %5877 = vst [vmem:[#allocation22] sm:$0x3] %v5867
        $region100: #{_lambda_.2} parent=55 // pred_fallthru
          _
        %s5878 = sand.u32 %s236, 1
        %s5879 = scalar_lea.sflag [#allocation6], %s5878
        %s5880 = sand.u32 %s236, 1
        %s5881 = smul.addr %s5880, 16
        %s5882 = scalar_lea.vmem [#allocation19], %s5881
        // Predicated region
        $region101: #{_lambda_.2} parent=55 // pred_check
          %p5883 = pneg %p246
        $region102: #{_lambda_.2} parent=55 // pred_check_branch
          %5885 = sbr.rel (%p5883) target = $region104
        $region103: #{_lambda_.2} parent=55 // pred_region
          %s5886 = smul.u32 8, %s34
          %s5888 = ssub.s32 256, 256
          %5889 = vsyncadd %s5879, %s5888
          %s5890 = smul.addr %s5886, 32
          %s5891 = scalar_lea.hbm %s9, %s5890
          %s5892 = sshll.u32 %s5882, 4
          %s5893 = int_to_ptr.vmem [resolvable:$true] %s5892
          %5898 = dma.vmem_to_hbm [thread:$0]  %s5893, 256, %s5891, %s5879, 32, 32, 2
        $region104: #{_lambda_.2} parent=55 // pred_fallthru
          _
        // Predicated region
        $region105: #{_lambda_.2} parent=55 // pred_check
          %p5899 = pneg %p267
        $region106: #{_lambda_.2} parent=55 // pred_check_branch
          %5901 = sbr.rel (%p5899) target = $region108
        $region107: #{_lambda_.2} parent=55 // pred_region
          %s5903 = ssub.s32 32, 32
          %5904 = vsyncadd [#allocation21], %s5903
          %s5906 = sshll.u32 [#allocation20], 4
          %s5907 = int_to_ptr.vmem [resolvable:$true] %s5906
          %5909 = dma.vmem_to_hbm [thread:$0]  %s5907, 32, %s10, [#allocation21]
        $region108: #{_lambda_.2} parent=55 // pred_fallthru
          _
        // Predicated region
        $region109: #{_lambda_.2} parent=55 // pred_check
          %p5910 = pneg %p288
        $region110: #{_lambda_.2} parent=55 // pred_check_branch
          %5912 = sbr.rel (%p5910) target = $region112
        $region111: #{_lambda_.2} parent=55 // pred_region
          %s5914 = ssub.s32 32, 32
          %5915 = vsyncadd [#allocation21], %s5914
          %s5917 = sshll.u32 [#allocation22], 4
          %s5918 = int_to_ptr.vmem [resolvable:$true] %s5917
          %5920 = dma.vmem_to_hbm [thread:$0]  %s5918, 32, %s11, [#allocation21]
        $region112: #{_lambda_.2} parent=55 // pred_fallthru
          _
        // Predicated region
        $region113: #{_lambda_.2} parent=55 // pred_check
          %p5921 = pneg %p267
        $region114: #{_lambda_.2} parent=55 // pred_check_branch
          %5923 = sbr.rel (%p5921) target = $region116
        $region115: #{_lambda_.2} parent=55 // pred_region
          %5924 = dma.done [#allocation21], 32
        $region116: #{_lambda_.2} parent=55 // pred_fallthru
          _
        // Predicated region
        $region117: #{_lambda_.2} parent=55 // pred_check
          %p5925 = pneg %p288
        $region118: #{_lambda_.2} parent=55 // pred_check_branch
          %5927 = sbr.rel (%p5925) target = $region120
        $region119: #{_lambda_.2} parent=55 // pred_region
          %5928 = dma.done [#allocation21], 32
        $region120: #{_lambda_.2} parent=55 // pred_fallthru
          _
      $region56: #{_lambda_.2} parent=5 // pred_fallthru
        _
      %p5929 = scmp.le.s32.totalorder 2, %s29
      // Predicated region
      $region121: #{_lambda_.2} parent=5 // pred_check
        %p5930 = pneg %p5929
      $region122: #{_lambda_.2} parent=5 // pred_check_branch
        %5932 = sbr.rel (%p5930) target = $region124
      $region123: #{_lambda_.2} parent=5 // pred_region
        %s5933 = ssub.s32 %s29, 2
        // Predicated region
        $region125: #{_lambda_.2} parent=123 // pred_check
          %p5934 = pneg %p252
        $region126: #{_lambda_.2} parent=123 // pred_check_branch
          %5936 = sbr.rel (%p5934) target = $region128
        $region127: #{_lambda_.2} parent=123 // pred_region
          %s5937 = sand.u32 %s237, 1
          %s5938 = scalar_lea.sflag [#allocation6], %s5937
          %s5939 = sand.u32 %s237, 1
          %s5940 = smul.addr %s5939, 16
          %s5941 = scalar_lea.vmem [#allocation19], %s5940
          %5942 = dma.done %s5938, 256
        $region128: #{_lambda_.2} parent=123 // pred_fallthru
          _
      $region124: #{_lambda_.2} parent=5 // pred_fallthru
        _
    $region6: #{_lambda_.2} parent=1 // loop_footer
      %s33 = sadd.s32 1, %s29
    $region7: #{_lambda_.2} parent=1 // loop_footer_branch
      %28 = sbr.rel target = $region3
    $region8: #{_lambda_.2} parent=1 // loop_exit
      _
    %5943 = vsyncpa [#allocation5], 1
    %s5944 = scalar_lea.sflag [#allocation5], 1
    %5945 = vsyncpa %s5944, 1
    %5946 = vsyncpa [#allocation8], 1
    %5947 = vsyncpa [#allocation11], 1
    %5948 = vsyncpa [#allocation14], 1
    %5949 = vsyncpa [#allocation17], 1
    %5950 = vsyncpa [#allocation6], 1
    %s5951 = scalar_lea.sflag [#allocation6], 1
    %5952 = vsyncpa %s5951, 1
    %5953 = vsyncpa [#allocation21], 1

</llo_original>
